<compile_context>
chip_gen: v7x
topology: tpu7x:2x2x1
jax: 0.10.0
libtpu: 0.0.40
codegen_flags: <defaults>
</compile_context>

<pallas_src>
import functools

import jax
import jax.numpy as jnp
from jax.experimental import pallas as pl
from jax.experimental.pallas import tpu as pltpu

BN_EPS = 1e-3
RATES = [1, 2, 1, 4, 1, 8, 1, 16, 1, 1, 1, 2, 1, 4, 1, 8]

_TM = 512                        # rows per M-tile (multiple of 16)
_VMEM_LIMIT = 48 * 1024 * 1024   # < v7x 64 MiB physical, > default scoped limits


# --------------------------------------------------------------------------
# Small helpers
# --------------------------------------------------------------------------
def _round_up(v, m):
    return (v + m - 1) // m * m


def _mosaic_params():
    return pltpu.CompilerParams(dimension_semantics=("parallel",),
                                vmem_limit_bytes=_VMEM_LIMIT)


def _m_tiling(M):
    """Pick an M tile (multiple of 16) and the padded M."""
    if M <= _TM:
        tm = _round_up(M, 16)
        return tm, tm
    return _TM, _round_up(M, _TM)


def _pad_rows(x2d, Mp):
    M = x2d.shape[0]
    if Mp == M:
        return x2d
    return jnp.pad(x2d, ((0, Mp - M), (0, 0)))


def bn_scale_bias(bn):
    scale = bn['gamma'] / jnp.sqrt(1.0 + BN_EPS)
    return scale, bn['beta']


# --------------------------------------------------------------------------
# Pallas kernels
# --------------------------------------------------------------------------
def _make_matmul_kernel(relu):
    """Fused (x @ w) + bias [relu] kernel (weights pre-scaled by BN gamma)."""
    def kernel(x_ref, w_ref, b_ref, o_ref):
        y = jnp.dot(x_ref[...], w_ref[...], preferred_element_type=jnp.float32)
        y = y + b_ref[...]
        if relu:
            y = jnp.maximum(y, 0.0)
        o_ref[...] = y
    return kernel


def _affine_relu_kernel(x_ref, s_ref, b_ref, o_ref):
    o_ref[...] = jnp.maximum(x_ref[...] * s_ref[...] + b_ref[...], 0.0)


def _sep_block_kernel(L, Wp, xp_ref, wdw_ref, bdw_ref, pw_ref, bo_ref, o_ref):
    """Fused ResidualConvModule: depthwise3x3(+BN folded)+ReLU -> pointwise
    (bf16 MXU, BN folded) -> +bias -> +residual -> ReLU.  One image per call.
    xp_ref: (Lp, C) flattened padded image (pad=1), o_ref: (L, C) with
    L = H * Wp rows (junk columns j >= W stripped by the wrapper)."""
    # Centre tap (kh=1, kw=1) == residual term: load once, reuse.
    center = xp_ref[Wp + 1:Wp + 1 + L, :]
    acc = center * wdw_ref[4]
    for kh in range(3):
        for kw in range(3):
            if kh == 1 and kw == 1:
                continue
            start = kh * Wp + kw
            acc = acc + xp_ref[start:start + L, :] * wdw_ref[3 * kh + kw]
    h = jnp.maximum(acc + bdw_ref[...], 0.0)
    y = jnp.dot(h.astype(jnp.bfloat16), pw_ref[...],
                preferred_element_type=jnp.float32)
    o_ref[...] = jnp.maximum(y + bo_ref[...] + center, 0.0)


def _multidil_block_kernel(L, Wp, rate, xp_ref, w1_ref, b1_ref, w2_ref, b2_ref,
                           pw_ref, bo_ref, o_ref):
    """Fused ResidualMultiDilationConvModule.  Physical pad P = rate; branch-1
    (dilation 1) taps start at (P-1+kh, P-1+kw), branch-2 (dilation rate) taps
    start at (kh*rate, kw*rate).  The centre tap of both branches coincides
    with the residual term: load it once and reuse."""
    P = rate
    center = xp_ref[P * Wp + P:P * Wp + P + L, :]
    acc1 = center * w1_ref[4]
    acc2 = center * w2_ref[4]
    for kh in range(3):
        for kw in range(3):
            if kh == 1 and kw == 1:
                continue
            k = 3 * kh + kw
            s1 = (P - 1 + kh) * Wp + (P - 1 + kw)
            acc1 = acc1 + xp_ref[s1:s1 + L, :] * w1_ref[k]
            s2 = (kh * rate) * Wp + (kw * rate)
            acc2 = acc2 + xp_ref[s2:s2 + L, :] * w2_ref[k]
    h = (jnp.maximum(acc1 + b1_ref[...], 0.0) +
         jnp.maximum(acc2 + b2_ref[...], 0.0))
    y = jnp.dot(h.astype(jnp.bfloat16), pw_ref[...],
                preferred_element_type=jnp.float32)
    o_ref[...] = jnp.maximum(y + bo_ref[...] + center, 0.0)


# --------------------------------------------------------------------------
# Pallas-call wrappers
# --------------------------------------------------------------------------
def matmul_bias(x2d, w2d_bf16, bias, relu=True):
    """(M,K)@(K,N) on the MXU (bf16 operands, f32 accumulate) + bias (+ReLU).
    Tiled over M with a 1-D 'parallel' grid."""
    M, K = x2d.shape
    Nc = w2d_bf16.shape[1]
    tm, Mp = _m_tiling(M)
    xb = _pad_rows(x2d.astype(jnp.bfloat16), Mp)
    cost = pl.CostEstimate(
        flops=2 * Mp * K * Nc, transcendentals=0,
        bytes_accessed=Mp * K * 2 + K * Nc * 2 + Mp * Nc * 4 + Nc * 4)
    out = pl.pallas_call(
        _make_matmul_kernel(relu),
        grid=(Mp // tm,),
        out_shape=jax.ShapeDtypeStruct((Mp, Nc), jnp.float32),
        in_specs=[pl.BlockSpec((tm, K), lambda i: (i, 0)),
                  pl.BlockSpec((K, Nc), lambda i: (0, 0)),
                  pl.BlockSpec((1, Nc), lambda i: (0, 0))],
        out_specs=pl.BlockSpec((tm, Nc), lambda i: (i, 0)),
        compiler_params=_mosaic_params(),
        cost_estimate=cost,
    )(xb, w2d_bf16, bias.reshape(1, Nc).astype(jnp.float32))
    return out[:M]


def affine_relu(x, scale, bias):
    N, H, W, C = x.shape
    M = N * H * W
    tm, Mp = _m_tiling(M)
    x2 = _pad_rows(x.reshape(M, C).astype(jnp.float32), Mp)
    out = pl.pallas_call(
        _affine_relu_kernel,
        grid=(Mp // tm,),
        out_shape=jax.ShapeDtypeStruct((Mp, C), jnp.float32),
        in_specs=[pl.BlockSpec((tm, C), lambda i: (i, 0)),
                  pl.BlockSpec((1, C), lambda i: (0, 0)),
                  pl.BlockSpec((1, C), lambda i: (0, 0))],
        out_specs=pl.BlockSpec((tm, C), lambda i: (i, 0)),
        compiler_params=_mosaic_params(),
    )(x2, scale.reshape(1, C).astype(jnp.float32),
      bias.reshape(1, C).astype(jnp.float32))
    return out[:M].reshape(N, H, W, C)


def _pad_flatten(x, P):
    """Zero-pad spatially by P (plus one extra bottom row so shifted flat
    slices never run out of bounds) and flatten spatial dims to rows."""
    N, H, W, C = x.shape
    xp = jnp.pad(x, ((0, 0), (P, P + 1), (P, P), (0, 0)))
    Wp = W + 2 * P
    Hp = H + 2 * P + 1
    return xp.reshape(N, Hp * Wp, C), Wp


def _dw9(w_dw, scale, C):
    """(C,1,3,3) torch depthwise weight -> (9,1,C) with BN gamma folded in."""
    w9 = jnp.transpose(w_dw.reshape(C, 9), (1, 0)).reshape(9, 1, C)
    return (w9 * scale.reshape(1, 1, C)).astype(jnp.float32)


def _pw(w_pw, scale, C):
    """(C,C,1,1) torch pointwise weight -> (Cin,Cout) bf16, BN gamma folded."""
    w2 = jnp.transpose(w_pw.reshape(C, C), (1, 0)) * scale.reshape(1, C)
    return w2.astype(jnp.bfloat16)


def residual_sep_forward(p, x):
    """ResidualConvModule: one fused Pallas kernel per image."""
    N, H, W, C = x.shape
    xp, Wp = _pad_flatten(x, 1)
    Lp = xp.shape[1]
    L = H * Wp
    s_dw, b_dw = bn_scale_bias(p['bn_dw'])
    s_o, b_o = bn_scale_bias(p['bn_out'])
    w9 = _dw9(p['dw'], s_dw, C)
    pw = _pw(p['pw'], s_o, C)
    cost = pl.CostEstimate(
        flops=2 * N * L * C * C + 20 * N * L * C, transcendentals=0,
        bytes_accessed=N * (Lp + L) * C * 4 + C * C * 2 + 12 * C * 4)
    out_flat = pl.pallas_call(
        functools.partial(_sep_block_kernel, L, Wp),
        grid=(N,),
        out_shape=jax.ShapeDtypeStruct((N, L, C), jnp.float32),
        in_specs=[pl.BlockSpec((None, Lp, C), lambda n: (n, 0, 0)),
                  pl.BlockSpec((9, 1, C), lambda n: (0, 0, 0)),
                  pl.BlockSpec((1, C), lambda n: (0, 0)),
                  pl.BlockSpec((C, C), lambda n: (0, 0)),
                  pl.BlockSpec((1, C), lambda n: (0, 0))],
        out_specs=pl.BlockSpec((None, L, C), lambda n: (n, 0, 0)),
        compiler_params=_mosaic_params(),
        cost_estimate=cost,
    )(xp.astype(jnp.float32), w9, b_dw.reshape(1, C).astype(jnp.float32),
      pw, b_o.reshape(1, C).astype(jnp.float32))
    return out_flat.reshape(N, H, Wp, C)[:, :, :W, :]


def residual_multidil_forward(p, x, rate):
    """ResidualMultiDilationConvModule: one fused Pallas kernel per image."""
    N, H, W, C = x.shape
    xp, Wp = _pad_flatten(x, rate)
    Lp = xp.shape[1]
    L = H * Wp
    s1, b1 = bn_scale_bias(p['bn1'])
    s2, b2 = bn_scale_bias(p['bn2'])
    so, bo = bn_scale_bias(p['bn_out'])
    w1 = _dw9(p['dw1'], s1, C)
    w2 = _dw9(p['dw2'], s2, C)
    pw = _pw(p['pw'], so, C)
    cost = pl.CostEstimate(
        flops=2 * N * L * C * C + 40 * N * L * C, transcendentals=0,
        bytes_accessed=N * (Lp + L) * C * 4 + C * C * 2 + 21 * C * 4)
    out_flat = pl.pallas_call(
        functools.partial(_multidil_block_kernel, L, Wp, rate),
        grid=(N,),
        out_shape=jax.ShapeDtypeStruct((N, L, C), jnp.float32),
        in_specs=[pl.BlockSpec((None, Lp, C), lambda n: (n, 0, 0)),
                  pl.BlockSpec((9, 1, C), lambda n: (0, 0, 0)),
                  pl.BlockSpec((1, C), lambda n: (0, 0)),
                  pl.BlockSpec((9, 1, C), lambda n: (0, 0, 0)),
                  pl.BlockSpec((1, C), lambda n: (0, 0)),
                  pl.BlockSpec((C, C), lambda n: (0, 0)),
                  pl.BlockSpec((1, C), lambda n: (0, 0))],
        out_specs=pl.BlockSpec((None, L, C), lambda n: (n, 0, 0)),
        compiler_params=_mosaic_params(),
        cost_estimate=cost,
    )(xp.astype(jnp.float32), w1, b1.reshape(1, C).astype(jnp.float32),
      w2, b2.reshape(1, C).astype(jnp.float32),
      pw, bo.reshape(1, C).astype(jnp.float32))
    return out_flat.reshape(N, H, Wp, C)[:, :, :W, :]


# --------------------------------------------------------------------------
# Strided / transposed convolutions (im2col glue in bf16 + tiled MXU matmul)
# --------------------------------------------------------------------------
def conv3x3_s2_bn_relu(x, w, scale, bias, relu=True):
    """Conv2d(k=3, stride=2, pad=1, no bias) + BN(+ReLU); w: (Cout,Cin,3,3)."""
    N, H, W, Cin = x.shape
    Cout = w.shape[0]
    Ho, Wo = H // 2, W // 2
    xb = x.astype(jnp.bfloat16)
    xp = jnp.pad(xb, ((0, 0), (1, 1), (1, 1), (0, 0)))
    cols = [xp[:, kh:kh + 2 * Ho:2, kw:kw + 2 * Wo:2, :]
            for kh in range(3) for kw in range(3)]
    patches = jnp.stack(cols, axis=3).reshape(N * Ho * Wo, 9 * Cin)
    w2d = jnp.transpose(w, (2, 3, 1, 0)).reshape(9 * Cin, Cout)
    w2d = (w2d * scale.reshape(1, Cout)).astype(jnp.bfloat16)
    y = matmul_bias(patches, w2d, bias, relu=relu)
    return y.reshape(N, Ho, Wo, Cout)


def convtranspose3x3_s2(x, w_t, scale, bias, relu):
    """ConvTranspose2d(k=3, s=2, p=1, output_pad=1) via sub-pixel phase
    decomposition (4 stride-1 matmuls, K <= 4*Cin).  w_t: (Cin, Cout, 3, 3)."""
    N, H, W, Cin = x.shape
    Cout = w_t.shape[1]
    xb = x.astype(jnp.bfloat16)
    zc = jnp.zeros((N, H, 1, Cin), jnp.bfloat16)
    zr = jnp.zeros((N, 1, W, Cin), jnp.bfloat16)
    x_r = jnp.concatenate([xb[:, :, 1:, :], zc], axis=2)      # x[., r, c+1]
    x_d = jnp.concatenate([xb[:, 1:, :, :], zr], axis=1)      # x[., r+1, c]
    x_dr = jnp.concatenate([x_d[:, :, 1:, :], zc], axis=2)    # x[., r+1, c+1]
    M = N * H * W

    def wk(kh, kw):
        return w_t[:, :, kh, kw]                              # (Cin, Cout)

    def run(patch_list, w_list):
        if len(patch_list) > 1:
            pm = jnp.concatenate([p.reshape(M, Cin) for p in patch_list], axis=1)
            wm = jnp.concatenate(w_list, axis=0)
        else:
            pm = patch_list[0].reshape(M, Cin)
            wm = w_list[0]
        wm = (wm * scale.reshape(1, Cout)).astype(jnp.bfloat16)
        return matmul_bias(pm, wm, bias, relu=relu).reshape(N, H, W, Cout)

    ee = run([xb], [wk(1, 1)])                                 # out[2r, 2c]
    eo = run([x_r, xb], [wk(1, 0), wk(1, 2)])                  # out[2r, 2c+1]
    oe = run([x_d, xb], [wk(0, 1), wk(2, 1)])                  # out[2r+1, 2c]
    oo = run([x_dr, x_d, x_r, xb],
             [wk(0, 0), wk(0, 2), wk(2, 0), wk(2, 2)])         # out[2r+1, 2c+1]

    ph = jnp.stack([jnp.stack([ee, eo], axis=3),
                    jnp.stack([oe, oo], axis=3)], axis=3)      # (N,H,W,a,b,C)
    out = ph.transpose(0, 1, 3, 2, 4, 5).reshape(N, 2 * H, 2 * W, Cout)
    return out


def maxpool2x2(x):
    N, H, W, C = x.shape
    return jnp.max(x.reshape(N, H // 2, 2, W // 2, 2, C), axis=(2, 4))


def bilinear_resize_align_corners(x, out_h, out_w):
    # glue: F.interpolate(mode='bilinear', align_corners=True)
    N, h, w, C = x.shape
    ys = jnp.linspace(0.0, h - 1.0, out_h)
    xs = jnp.linspace(0.0, w - 1.0, out_w)
    y0 = jnp.clip(jnp.floor(ys).astype(jnp.int32), 0, h - 2)
    x0 = jnp.clip(jnp.floor(xs).astype(jnp.int32), 0, w - 2)
    wy = (ys - y0.astype(jnp.float32))[None, :, None, None]
    wx = (xs - x0.astype(jnp.float32))[None, None, :, None]
    rows = x[:, y0, :, :] * (1.0 - wy) + x[:, y0 + 1, :, :] * wy
    out = rows[:, :, x0, :] * (1.0 - wx) + rows[:, :, x0 + 1, :] * wx
    return out


# --------------------------------------------------------------------------
# Modules
# --------------------------------------------------------------------------
def downsample_forward(p, x):
    """DownsampleModule: conv3x3/s2 (+ concat maxpool) -> BN -> ReLU."""
    cconv = p['w'].shape[0]
    cout = p['bn']['gamma'].shape[0]
    scale, bias = bn_scale_bias(p['bn'])
    out = conv3x3_s2_bn_relu(x, p['w'], scale[:cconv], bias[:cconv], relu=True)
    if cconv < cout:  # use_maxpool branch
        pooled = maxpool2x2(x)
        pooled = affine_relu(pooled, scale[cconv:], bias[cconv:])
        out = jnp.concatenate([out, pooled], axis=-1)
    return out


def mininet_forward(params, x_nchw):
    x = jnp.transpose(x_nchw, (0, 2, 3, 1)).astype(jnp.float32)  # NCHW -> NHWC
    H, W = x.shape[1], x.shape[2]

    # auxiliary branch
    aux = downsample_forward(params['aux4'], x)
    aux = downsample_forward(params['aux5'], aux)

    # encoder
    m = downsample_forward(params['enc_d1'], x)
    m = downsample_forward(params['enc_d2'], m)
    for p in params['enc_res']:
        m = residual_sep_forward(p, m)
    m = downsample_forward(params['enc_d3'], m)
    for p, rate in zip(params['enc_feat'], RATES):
        m = residual_multidil_forward(p, m, rate)

    # decoder
    scale, bias = bn_scale_bias(params['up1']['bn'])
    up1 = convtranspose3x3_s2(m, params['up1']['w'], scale, bias, relu=True)
    m = up1 + aux
    for p in params['up_res']:
        m = residual_sep_forward(p, m)
    nclass = params['out_w'].shape[1]
    out = convtranspose3x3_s2(m, params['out_w'],
                              jnp.ones((nclass,), jnp.float32),
                              params['out_b'], relu=False)

    out = bilinear_resize_align_corners(out, H, W)
    return jnp.transpose(out, (0, 3, 1, 2))                     # NHWC -> NCHW


# --------------------------------------------------------------------------
# Deterministic parameter initialization (synthetic; shapes match torch module)
# --------------------------------------------------------------------------
class ParamFactory:
    def __init__(self, seed=0):
        self._key = jax.random.PRNGKey(seed)

    def normal(self, shape, scale=0.05):
        self._key, sub = jax.random.split(self._key)
        return scale * jax.random.normal(sub, shape, dtype=jnp.float32)

    def bn(self, c):
        return dict(gamma=1.0 + self.normal((c,)), beta=self.normal((c,)))


def init_downsample(pf, cin, cout):
    use_maxpool = cin < cout
    cconv = cout - cin if use_maxpool else cout
    return dict(w=pf.normal((cconv, cin, 3, 3)), bn=pf.bn(cout))


def init_sep_res(pf, c):
    return dict(dw=pf.normal((c, 1, 3, 3)), bn_dw=pf.bn(c),
                pw=pf.normal((c, c, 1, 1)), bn_out=pf.bn(c))


def init_multidil_res(pf, c):
    return dict(dw1=pf.normal((c, 1, 3, 3)), bn1=pf.bn(c),
                dw2=pf.normal((c, 1, 3, 3)), bn2=pf.bn(c),
                pw=pf.normal((c, c, 1, 1)), bn_out=pf.bn(c))


def init_params(in_channels, num_classes):
    pf = ParamFactory(0)
    return dict(
        enc_d1=init_downsample(pf, in_channels, 16),
        enc_d2=init_downsample(pf, 16, 64),
        enc_res=[init_sep_res(pf, 64) for _ in range(10)],
        enc_d3=init_downsample(pf, 64, 128),
        enc_feat=[init_multidil_res(pf, 128) for _ in RATES],
        aux4=init_downsample(pf, in_channels, 16),
        aux5=init_downsample(pf, 16, 64),
        up1=dict(w=pf.normal((128, 64, 3, 3)), bn=pf.bn(64)),
        up_res=[init_sep_res(pf, 64) for _ in range(4)],
        out_w=pf.normal((64, num_classes, 3, 3)),
        out_b=pf.normal((num_classes,)),
    )


# --------------------------------------------------------------------------
if __name__ == "__main__":
    in_channels, num_classes = 3, 5
    x = jax.random.normal(jax.random.PRNGKey(0),
                          (2, in_channels, 16, 16), dtype=jnp.float32)
    params = init_params(in_channels, num_classes)

    fwd = jax.jit(mininet_forward)
    y = fwd(params, x)
    y = jax.block_until_ready(y)

    assert y.shape == (2, num_classes, 16, 16), y.shape
    assert bool(jnp.all(jnp.isfinite(y)))
    print("KERNEL_OK")
</pallas_src>

<mosaic_0001>
module attributes {stable_mosaic.version = 11 : i64} {
  func.func @kernel(%arg0: i32, %arg1: memref<128x27xbf16, #tpu.memory_space<vmem>>, %arg2: memref<27x13xbf16, #tpu.memory_space<vmem>>, %arg3: memref<1x13xf32, #tpu.memory_space<vmem>>, %arg4: memref<128x13xf32, #tpu.memory_space<vmem>>) attributes {dimension_semantics = [#tpu.dimension_semantics<parallel>], iteration_bounds = array<i64: 1>, scalar_prefetch = 0 : i64, scratch_operands = 0 : i64, tpu.core_type = #tpu.core_type<tc>, window_params = [{transform_indices = @transform_0, window_bounds = array<i64: 128, 27>}, {pipeline_mode = #tpu.pipeline_mode<synchronous>, transform_indices = @transform_1, window_bounds = array<i64: 27, 13>}, {pipeline_mode = #tpu.pipeline_mode<synchronous>, transform_indices = @transform_2, window_bounds = array<i64: 1, 13>}, {transform_indices = @transform_3, window_bounds = array<i64: 128, 13>}]} {
    %c0 = arith.constant 0 : index
    %c0_0 = arith.constant 0 : index
    %0 = vector.load %arg1[%c0, %c0_0] : memref<128x27xbf16, #tpu.memory_space<vmem>>, vector<128x27xbf16>
    %c0_1 = arith.constant 0 : index
    %c0_2 = arith.constant 0 : index
    %1 = vector.load %arg2[%c0_1, %c0_2] : memref<27x13xbf16, #tpu.memory_space<vmem>>, vector<27x13xbf16>
    %cst = arith.constant dense<0.000000e+00> : vector<128x13xf32>
    %2 = tpu.matmul %0, %1, %cst {dimension_numbers = #tpu.dot_dimension_numbers<[1], [0], [0], [1], [0, 0, 1, 1], [], []>} : vector<128x27xbf16>, vector<27x13xbf16>, vector<128x13xf32> -> vector<128x13xf32>
    %c0_3 = arith.constant 0 : index
    %c0_4 = arith.constant 0 : index
    %3 = vector.load %arg3[%c0_3, %c0_4] : memref<1x13xf32, #tpu.memory_space<vmem>>, vector<1x13xf32>
    %4 = vector.broadcast %3 : vector<1x13xf32> to vector<128x13xf32>
    %5 = arith.addf %2, %4 : vector<128x13xf32>
    %cst_5 = arith.constant 0.000000e+00 : f32
    %6 = vector.broadcast %cst_5 : f32 to vector<128x13xf32>
    %7 = arith.maximumf %5, %6 : vector<128x13xf32>
    %c0_6 = arith.constant 0 : index
    %c0_7 = arith.constant 0 : index
    %8 = vector.load %arg4[%c0_6, %c0_7] : memref<128x13xf32, #tpu.memory_space<vmem>>, vector<128x13xf32>
    tpu.vector_store %arg4[%c0_6, %c0_7], %7 {strides = array<i32>} : memref<128x13xf32, #tpu.memory_space<vmem>>, vector<128x13xf32>,
    return
  }
  func.func @transform_0(%arg0: i32) -> (i32, i32) {
    %c0_i32 = arith.constant 0 : i32
    %c0_i32_0 = arith.constant 0 : i32
    return %arg0, %c0_i32 : i32, i32
  }
  func.func @transform_1(%arg0: i32) -> (i32, i32) {
    %c0_i32 = arith.constant 0 : i32
    %c0_i32_0 = arith.constant 0 : i32
    %c0_i32_1 = arith.constant 0 : i32
    return %c0_i32, %c0_i32_0 : i32, i32
  }
  func.func @transform_2(%arg0: i32) -> (i32, i32) {
    %c0_i32 = arith.constant 0 : i32
    %c0_i32_0 = arith.constant 0 : i32
    %c0_i32_1 = arith.constant 0 : i32
    return %c0_i32, %c0_i32_0 : i32, i32
  }
  func.func @transform_3(%arg0: i32) -> (i32, i32) {
    %c0_i32 = arith.constant 0 : i32
    %c0_i32_0 = arith.constant 0 : i32
    return %arg0, %c0_i32 : i32, i32
  }
}

module attributes {stable_mosaic.version = 11 : i64} {
  func.func @_affine_relu_kernel(%arg0: i32, %arg1: memref<128x3xf32, #tpu.memory_space<vmem>>, %arg2: memref<1x3xf32, #tpu.memory_space<vmem>>, %arg3: memref<1x3xf32, #tpu.memory_space<vmem>>, %arg4: memref<128x3xf32, #tpu.memory_space<vmem>>) attributes {dimension_semantics = [#tpu.dimension_semantics<parallel>], iteration_bounds = array<i64: 1>, scalar_prefetch = 0 : i64, scratch_operands = 0 : i64, tpu.core_type = #tpu.core_type<tc>, window_params = [{transform_indices = @transform_0, window_bounds = array<i64: 128, 3>}, {pipeline_mode = #tpu.pipeline_mode<synchronous>, transform_indices = @transform_1, window_bounds = array<i64: 1, 3>}, {pipeline_mode = #tpu.pipeline_mode<synchronous>, transform_indices = @transform_2, window_bounds = array<i64: 1, 3>}, {transform_indices = @transform_3, window_bounds = array<i64: 128, 3>}]} {
    %c0 = arith.constant 0 : index
    %c0_0 = arith.constant 0 : index
    %0 = vector.load %arg1[%c0, %c0_0] : memref<128x3xf32, #tpu.memory_space<vmem>>, vector<128x3xf32>
    %c0_1 = arith.constant 0 : index
    %c0_2 = arith.constant 0 : index
    %1 = vector.load %arg2[%c0_1, %c0_2] : memref<1x3xf32, #tpu.memory_space<vmem>>, vector<1x3xf32>
    %2 = vector.broadcast %1 : vector<1x3xf32> to vector<128x3xf32>
    %3 = arith.mulf %0, %2 : vector<128x3xf32>
    %c0_3 = arith.constant 0 : index
    %c0_4 = arith.constant 0 : index
    %4 = vector.load %arg3[%c0_3, %c0_4] : memref<1x3xf32, #tpu.memory_space<vmem>>, vector<1x3xf32>
    %5 = vector.broadcast %4 : vector<1x3xf32> to vector<128x3xf32>
    %6 = arith.addf %3, %5 : vector<128x3xf32>
    %cst = arith.constant 0.000000e+00 : f32
    %7 = vector.broadcast %cst : f32 to vector<128x3xf32>
    %8 = arith.maximumf %6, %7 : vector<128x3xf32>
    %c0_5 = arith.constant 0 : index
    %c0_6 = arith.constant 0 : index
    %9 = vector.load %arg4[%c0_5, %c0_6] : memref<128x3xf32, #tpu.memory_space<vmem>>, vector<128x3xf32>
    tpu.vector_store %arg4[%c0_5, %c0_6], %8 {strides = array<i32>} : memref<128x3xf32, #tpu.memory_space<vmem>>, vector<128x3xf32>,
    return
  }
  func.func @transform_0(%arg0: i32) -> (i32, i32) {
    %c0_i32 = arith.constant 0 : i32
    %c0_i32_0 = arith.constant 0 : i32
    return %arg0, %c0_i32 : i32, i32
  }
  func.func @transform_1(%arg0: i32) -> (i32, i32) {
    %c0_i32 = arith.constant 0 : i32
    %c0_i32_0 = arith.constant 0 : i32
    %c0_i32_1 = arith.constant 0 : i32
    return %c0_i32, %c0_i32_0 : i32, i32
  }
  func.func @transform_2(%arg0: i32) -> (i32, i32) {
    %c0_i32 = arith.constant 0 : i32
    %c0_i32_0 = arith.constant 0 : i32
    %c0_i32_1 = arith.constant 0 : i32
    return %c0_i32, %c0_i32_0 : i32, i32
  }
  func.func @transform_3(%arg0: i32) -> (i32, i32) {
    %c0_i32 = arith.constant 0 : i32
    %c0_i32_0 = arith.constant 0 : i32
    return %arg0, %c0_i32 : i32, i32
  }
}

module attributes {stable_mosaic.version = 11 : i64} {
  func.func @kernel(%arg0: i32, %arg1: memref<32x144xbf16, #tpu.memory_space<vmem>>, %arg2: memref<144x48xbf16, #tpu.memory_space<vmem>>, %arg3: memref<1x48xf32, #tpu.memory_space<vmem>>, %arg4: memref<32x48xf32, #tpu.memory_space<vmem>>) attributes {dimension_semantics = [#tpu.dimension_semantics<parallel>], iteration_bounds = array<i64: 1>, scalar_prefetch = 0 : i64, scratch_operands = 0 : i64, tpu.core_type = #tpu.core_type<tc>, window_params = [{transform_indices = @transform_0, window_bounds = array<i64: 32, 144>}, {pipeline_mode = #tpu.pipeline_mode<synchronous>, transform_indices = @transform_1, window_bounds = array<i64: 144, 48>}, {pipeline_mode = #tpu.pipeline_mode<synchronous>, transform_indices = @transform_2, window_bounds = array<i64: 1, 48>}, {transform_indices = @transform_3, window_bounds = array<i64: 32, 48>}]} {
    %c0 = arith.constant 0 : index
    %c0_0 = arith.constant 0 : index
    %0 = vector.load %arg1[%c0, %c0_0] : memref<32x144xbf16, #tpu.memory_space<vmem>>, vector<32x144xbf16>
    %c0_1 = arith.constant 0 : index
    %c0_2 = arith.constant 0 : index
    %1 = vector.load %arg2[%c0_1, %c0_2] : memref<144x48xbf16, #tpu.memory_space<vmem>>, vector<144x48xbf16>
    %cst = arith.constant dense<0.000000e+00> : vector<32x48xf32>
    %2 = tpu.matmul %0, %1, %cst {dimension_numbers = #tpu.dot_dimension_numbers<[1], [0], [0], [1], [0, 0, 1, 1], [], []>} : vector<32x144xbf16>, vector<144x48xbf16>, vector<32x48xf32> -> vector<32x48xf32>
    %c0_3 = arith.constant 0 : index
    %c0_4 = arith.constant 0 : index
    %3 = vector.load %arg3[%c0_3, %c0_4] : memref<1x48xf32, #tpu.memory_space<vmem>>, vector<1x48xf32>
    %4 = vector.broadcast %3 : vector<1x48xf32> to vector<32x48xf32>
    %5 = arith.addf %2, %4 : vector<32x48xf32>
    %cst_5 = arith.constant 0.000000e+00 : f32
    %6 = vector.broadcast %cst_5 : f32 to vector<32x48xf32>
    %7 = arith.maximumf %5, %6 : vector<32x48xf32>
    %c0_6 = arith.constant 0 : index
    %c0_7 = arith.constant 0 : index
    %8 = vector.load %arg4[%c0_6, %c0_7] : memref<32x48xf32, #tpu.memory_space<vmem>>, vector<32x48xf32>
    tpu.vector_store %arg4[%c0_6, %c0_7], %7 {strides = array<i32>} : memref<32x48xf32, #tpu.memory_space<vmem>>, vector<32x48xf32>,
    return
  }
  func.func @transform_0(%arg0: i32) -> (i32, i32) {
    %c0_i32 = arith.constant 0 : i32
    %c0_i32_0 = arith.constant 0 : i32
    return %arg0, %c0_i32 : i32, i32
  }
  func.func @transform_1(%arg0: i32) -> (i32, i32) {
    %c0_i32 = arith.constant 0 : i32
    %c0_i32_0 = arith.constant 0 : i32
    %c0_i32_1 = arith.constant 0 : i32
    return %c0_i32, %c0_i32_0 : i32, i32
  }
  func.func @transform_2(%arg0: i32) -> (i32, i32) {
    %c0_i32 = arith.constant 0 : i32
    %c0_i32_0 = arith.constant 0 : i32
    %c0_i32_1 = arith.constant 0 : i32
    return %c0_i32, %c0_i32_0 : i32, i32
  }
  func.func @transform_3(%arg0: i32) -> (i32, i32) {
    %c0_i32 = arith.constant 0 : i32
    %c0_i32_0 = arith.constant 0 : i32
    return %arg0, %c0_i32 : i32, i32
  }
}

module attributes {stable_mosaic.version = 11 : i64} {
  func.func @_affine_relu_kernel(%arg0: i32, %arg1: memref<32x16xf32, #tpu.memory_space<vmem>>, %arg2: memref<1x16xf32, #tpu.memory_space<vmem>>, %arg3: memref<1x16xf32, #tpu.memory_space<vmem>>, %arg4: memref<32x16xf32, #tpu.memory_space<vmem>>) attributes {dimension_semantics = [#tpu.dimension_semantics<parallel>], iteration_bounds = array<i64: 1>, scalar_prefetch = 0 : i64, scratch_operands = 0 : i64, tpu.core_type = #tpu.core_type<tc>, window_params = [{transform_indices = @transform_0, window_bounds = array<i64: 32, 16>}, {pipeline_mode = #tpu.pipeline_mode<synchronous>, transform_indices = @transform_1, window_bounds = array<i64: 1, 16>}, {pipeline_mode = #tpu.pipeline_mode<synchronous>, transform_indices = @transform_2, window_bounds = array<i64: 1, 16>}, {transform_indices = @transform_3, window_bounds = array<i64: 32, 16>}]} {
    %c0 = arith.constant 0 : index
    %c0_0 = arith.constant 0 : index
    %0 = vector.load %arg1[%c0, %c0_0] : memref<32x16xf32, #tpu.memory_space<vmem>>, vector<32x16xf32>
    %c0_1 = arith.constant 0 : index
    %c0_2 = arith.constant 0 : index
    %1 = vector.load %arg2[%c0_1, %c0_2] : memref<1x16xf32, #tpu.memory_space<vmem>>, vector<1x16xf32>
    %2 = vector.broadcast %1 : vector<1x16xf32> to vector<32x16xf32>
    %3 = arith.mulf %0, %2 : vector<32x16xf32>
    %c0_3 = arith.constant 0 : index
    %c0_4 = arith.constant 0 : index
    %4 = vector.load %arg3[%c0_3, %c0_4] : memref<1x16xf32, #tpu.memory_space<vmem>>, vector<1x16xf32>
    %5 = vector.broadcast %4 : vector<1x16xf32> to vector<32x16xf32>
    %6 = arith.addf %3, %5 : vector<32x16xf32>
    %cst = arith.constant 0.000000e+00 : f32
    %7 = vector.broadcast %cst : f32 to vector<32x16xf32>
    %8 = arith.maximumf %6, %7 : vector<32x16xf32>
    %c0_5 = arith.constant 0 : index
    %c0_6 = arith.constant 0 : index
    %9 = vector.load %arg4[%c0_5, %c0_6] : memref<32x16xf32, #tpu.memory_space<vmem>>, vector<32x16xf32>
    tpu.vector_store %arg4[%c0_5, %c0_6], %8 {strides = array<i32>} : memref<32x16xf32, #tpu.memory_space<vmem>>, vector<32x16xf32>,
    return
  }
  func.func @transform_0(%arg0: i32) -> (i32, i32) {
    %c0_i32 = arith.constant 0 : i32
    %c0_i32_0 = arith.constant 0 : i32
    return %arg0, %c0_i32 : i32, i32
  }
  func.func @transform_1(%arg0: i32) -> (i32, i32) {
    %c0_i32 = arith.constant 0 : i32
    %c0_i32_0 = arith.constant 0 : i32
    %c0_i32_1 = arith.constant 0 : i32
    return %c0_i32, %c0_i32_0 : i32, i32
  }
  func.func @transform_2(%arg0: i32) -> (i32, i32) {
    %c0_i32 = arith.constant 0 : i32
    %c0_i32_0 = arith.constant 0 : i32
    %c0_i32_1 = arith.constant 0 : i32
    return %c0_i32, %c0_i32_0 : i32, i32
  }
  func.func @transform_3(%arg0: i32) -> (i32, i32) {
    %c0_i32 = arith.constant 0 : i32
    %c0_i32_0 = arith.constant 0 : i32
    return %arg0, %c0_i32 : i32, i32
  }
}

module attributes {stable_mosaic.version = 11 : i64} {
  func.func @_sep_block_kernel(%arg0: i32, %arg1: memref<1x42x64xf32, #tpu.memory_space<vmem>>, %arg2: memref<9x1x64xf32, #tpu.memory_space<vmem>>, %arg3: memref<1x64xf32, #tpu.memory_space<vmem>>, %arg4: memref<64x64xbf16, #tpu.memory_space<vmem>>, %arg5: memref<1x64xf32, #tpu.memory_space<vmem>>, %arg6: memref<1x24x64xf32, #tpu.memory_space<vmem>>) attributes {dimension_semantics = [#tpu.dimension_semantics<parallel>], iteration_bounds = array<i64: 2>, scalar_prefetch = 0 : i64, scratch_operands = 0 : i64, tpu.core_type = #tpu.core_type<tc>, window_params = [{transform_indices = @transform_0, window_bounds = array<i64: 1, 42, 64>}, {pipeline_mode = #tpu.pipeline_mode<synchronous>, transform_indices = @transform_1, window_bounds = array<i64: 9, 1, 64>}, {pipeline_mode = #tpu.pipeline_mode<synchronous>, transform_indices = @transform_2, window_bounds = array<i64: 1, 64>}, {pipeline_mode = #tpu.pipeline_mode<synchronous>, transform_indices = @transform_3, window_bounds = array<i64: 64, 64>}, {pipeline_mode = #tpu.pipeline_mode<synchronous>, transform_indices = @transform_4, window_bounds = array<i64: 1, 64>}, {transform_indices = @transform_5, window_bounds = array<i64: 1, 24, 64>}]} {
    %c0 = arith.constant 0 : index
    %c7 = arith.constant 7 : index
    %c0_0 = arith.constant 0 : index
    %0 = vector.load %arg1[%c0, %c7, %c0_0] : memref<1x42x64xf32, #tpu.memory_space<vmem>>, vector<1x24x64xf32>
    %1 = vector.shape_cast %0 : vector<1x24x64xf32> to vector<24x64xf32>
    %c4 = arith.constant 4 : index
    %c0_1 = arith.constant 0 : index
    %c0_2 = arith.constant 0 : index
    %2 = vector.load %arg2[%c4, %c0_1, %c0_2] : memref<9x1x64xf32, #tpu.memory_space<vmem>>, vector<1x1x64xf32>
    %3 = vector.shape_cast %2 : vector<1x1x64xf32> to vector<1x64xf32>
    %4 = vector.broadcast %3 : vector<1x64xf32> to vector<24x64xf32>
    %5 = arith.mulf %1, %4 : vector<24x64xf32>
    %c0_3 = arith.constant 0 : index
    %c0_4 = arith.constant 0 : index
    %c0_5 = arith.constant 0 : index
    %6 = vector.load %arg1[%c0_3, %c0_4, %c0_5] : memref<1x42x64xf32, #tpu.memory_space<vmem>>, vector<1x24x64xf32>
    %7 = vector.shape_cast %6 : vector<1x24x64xf32> to vector<24x64xf32>
    %c0_6 = arith.constant 0 : index
    %c0_7 = arith.constant 0 : index
    %c0_8 = arith.constant 0 : index
    %8 = vector.load %arg2[%c0_6, %c0_7, %c0_8] : memref<9x1x64xf32, #tpu.memory_space<vmem>>, vector<1x1x64xf32>
    %9 = vector.shape_cast %8 : vector<1x1x64xf32> to vector<1x64xf32>
    %10 = vector.broadcast %9 : vector<1x64xf32> to vector<24x64xf32>
    %11 = arith.mulf %7, %10 : vector<24x64xf32>
    %12 = arith.addf %5, %11 : vector<24x64xf32>
    %c0_9 = arith.constant 0 : index
    %c1 = arith.constant 1 : index
    %c0_10 = arith.constant 0 : index
    %13 = vector.load %arg1[%c0_9, %c1, %c0_10] : memref<1x42x64xf32, #tpu.memory_space<vmem>>, vector<1x24x64xf32>
    %14 = vector.shape_cast %13 : vector<1x24x64xf32> to vector<24x64xf32>
    %c1_11 = arith.constant 1 : index
    %c0_12 = arith.constant 0 : index
    %c0_13 = arith.constant 0 : index
    %15 = vector.load %arg2[%c1_11, %c0_12, %c0_13] : memref<9x1x64xf32, #tpu.memory_space<vmem>>, vector<1x1x64xf32>
    %16 = vector.shape_cast %15 : vector<1x1x64xf32> to vector<1x64xf32>
    %17 = vector.broadcast %16 : vector<1x64xf32> to vector<24x64xf32>
    %18 = arith.mulf %14, %17 : vector<24x64xf32>
    %19 = arith.addf %12, %18 : vector<24x64xf32>
    %c0_14 = arith.constant 0 : index
    %c2 = arith.constant 2 : index
    %c0_15 = arith.constant 0 : index
    %20 = vector.load %arg1[%c0_14, %c2, %c0_15] : memref<1x42x64xf32, #tpu.memory_space<vmem>>, vector<1x24x64xf32>
    %21 = vector.shape_cast %20 : vector<1x24x64xf32> to vector<24x64xf32>
    %c2_16 = arith.constant 2 : index
    %c0_17 = arith.constant 0 : index
    %c0_18 = arith.constant 0 : index
    %22 = vector.load %arg2[%c2_16, %c0_17, %c0_18] : memref<9x1x64xf32, #tpu.memory_space<vmem>>, vector<1x1x64xf32>
    %23 = vector.shape_cast %22 : vector<1x1x64xf32> to vector<1x64xf32>
    %24 = vector.broadcast %23 : vector<1x64xf32> to vector<24x64xf32>
    %25 = arith.mulf %21, %24 : vector<24x64xf32>
    %26 = arith.addf %19, %25 : vector<24x64xf32>
    %c0_19 = arith.constant 0 : index
    %c6 = arith.constant 6 : index
    %c0_20 = arith.constant 0 : index
    %27 = vector.load %arg1[%c0_19, %c6, %c0_20] : memref<1x42x64xf32, #tpu.memory_space<vmem>>, vector<1x24x64xf32>
    %28 = vector.shape_cast %27 : vector<1x24x64xf32> to vector<24x64xf32>
    %c3 = arith.constant 3 : index
    %c0_21 = arith.constant 0 : index
    %c0_22 = arith.constant 0 : index
    %29 = vector.load %arg2[%c3, %c0_21, %c0_22] : memref<9x1x64xf32, #tpu.memory_space<vmem>>, vector<1x1x64xf32>
    %30 = vector.shape_cast %29 : vector<1x1x64xf32> to vector<1x64xf32>
    %31 = vector.broadcast %30 : vector<1x64xf32> to vector<24x64xf32>
    %32 = arith.mulf %28, %31 : vector<24x64xf32>
    %33 = arith.addf %26, %32 : vector<24x64xf32>
    %c0_23 = arith.constant 0 : index
    %c8 = arith.constant 8 : index
    %c0_24 = arith.constant 0 : index
    %34 = vector.load %arg1[%c0_23, %c8, %c0_24] : memref<1x42x64xf32, #tpu.memory_space<vmem>>, vector<1x24x64xf32>
    %35 = vector.shape_cast %34 : vector<1x24x64xf32> to vector<24x64xf32>
    %c5 = arith.constant 5 : index
    %c0_25 = arith.constant 0 : index
    %c0_26 = arith.constant 0 : index
    %36 = vector.load %arg2[%c5, %c0_25, %c0_26] : memref<9x1x64xf32, #tpu.memory_space<vmem>>, vector<1x1x64xf32>
    %37 = vector.shape_cast %36 : vector<1x1x64xf32> to vector<1x64xf32>
    %38 = vector.broadcast %37 : vector<1x64xf32> to vector<24x64xf32>
    %39 = arith.mulf %35, %38 : vector<24x64xf32>
    %40 = arith.addf %33, %39 : vector<24x64xf32>
    %c0_27 = arith.constant 0 : index
    %c12 = arith.constant 12 : index
    %c0_28 = arith.constant 0 : index
    %41 = vector.load %arg1[%c0_27, %c12, %c0_28] : memref<1x42x64xf32, #tpu.memory_space<vmem>>, vector<1x24x64xf32>
    %42 = vector.shape_cast %41 : vector<1x24x64xf32> to vector<24x64xf32>
    %c6_29 = arith.constant 6 : index
    %c0_30 = arith.constant 0 : index
    %c0_31 = arith.constant 0 : index
    %43 = vector.load %arg2[%c6_29, %c0_30, %c0_31] : memref<9x1x64xf32, #tpu.memory_space<vmem>>, vector<1x1x64xf32>
    %44 = vector.shape_cast %43 : vector<1x1x64xf32> to vector<1x64xf32>
    %45 = vector.broadcast %44 : vector<1x64xf32> to vector<24x64xf32>
    %46 = arith.mulf %42, %45 : vector<24x64xf32>
    %47 = arith.addf %40, %46 : vector<24x64xf32>
    %c0_32 = arith.constant 0 : index
    %c13 = arith.constant 13 : index
    %c0_33 = arith.constant 0 : index
    %48 = vector.load %arg1[%c0_32, %c13, %c0_33] : memref<1x42x64xf32, #tpu.memory_space<vmem>>, vector<1x24x64xf32>
    %49 = vector.shape_cast %48 : vector<1x24x64xf32> to vector<24x64xf32>
    %c7_34 = arith.constant 7 : index
    %c0_35 = arith.constant 0 : index
    %c0_36 = arith.constant 0 : index
    %50 = vector.load %arg2[%c7_34, %c0_35, %c0_36] : memref<9x1x64xf32, #tpu.memory_space<vmem>>, vector<1x1x64xf32>
    %51 = vector.shape_cast %50 : vector<1x1x64xf32> to vector<1x64xf32>
    %52 = vector.broadcast %51 : vector<1x64xf32> to vector<24x64xf32>
    %53 = arith.mulf %49, %52 : vector<24x64xf32>
    %54 = arith.addf %47, %53 : vector<24x64xf32>
    %c0_37 = arith.constant 0 : index
    %c14 = arith.constant 14 : index
    %c0_38 = arith.constant 0 : index
    %55 = vector.load %arg1[%c0_37, %c14, %c0_38] : memref<1x42x64xf32, #tpu.memory_space<vmem>>, vector<1x24x64xf32>
    %56 = vector.shape_cast %55 : vector<1x24x64xf32> to vector<24x64xf32>
    %c8_39 = arith.constant 8 : index
    %c0_40 = arith.constant 0 : index
    %c0_41 = arith.constant 0 : index
    %57 = vector.load %arg2[%c8_39, %c0_40, %c0_41] : memref<9x1x64xf32, #tpu.memory_space<vmem>>, vector<1x1x64xf32>
    %58 = vector.shape_cast %57 : vector<1x1x64xf32> to vector<1x64xf32>
    %59 = vector.broadcast %58 : vector<1x64xf32> to vector<24x64xf32>
    %60 = arith.mulf %56, %59 : vector<24x64xf32>
    %61 = arith.addf %54, %60 : vector<24x64xf32>
    %c0_42 = arith.constant 0 : index
    %c0_43 = arith.constant 0 : index
    %62 = vector.load %arg3[%c0_42, %c0_43] : memref<1x64xf32, #tpu.memory_space<vmem>>, vector<1x64xf32>
    %63 = vector.broadcast %62 : vector<1x64xf32> to vector<24x64xf32>
    %64 = arith.addf %61, %63 : vector<24x64xf32>
    %cst = arith.constant 0.000000e+00 : f32
    %65 = vector.broadcast %cst : f32 to vector<24x64xf32>
    %66 = arith.maximumf %64, %65 : vector<24x64xf32>
    %67 = arith.truncf %66 : vector<24x64xf32> to vector<24x64xbf16>
    %c0_44 = arith.constant 0 : index
    %c0_45 = arith.constant 0 : index
    %68 = vector.load %arg4[%c0_44, %c0_45] : memref<64x64xbf16, #tpu.memory_space<vmem>>, vector<64x64xbf16>
    %cst_46 = arith.constant dense<0.000000e+00> : vector<24x64xf32>
    %69 = tpu.matmul %67, %68, %cst_46 {dimension_numbers = #tpu.dot_dimension_numbers<[1], [0], [0], [1], [0, 0, 1, 1], [], []>} : vector<24x64xbf16>, vector<64x64xbf16>, vector<24x64xf32> -> vector<24x64xf32>
    %c0_47 = arith.constant 0 : index
    %c0_48 = arith.constant 0 : index
    %70 = vector.load %arg5[%c0_47, %c0_48] : memref<1x64xf32, #tpu.memory_space<vmem>>, vector<1x64xf32>
    %71 = vector.broadcast %70 : vector<1x64xf32> to vector<24x64xf32>
    %72 = arith.addf %69, %71 : vector<24x64xf32>
    %73 = arith.addf %72, %1 : vector<24x64xf32>
    %cst_49 = arith.constant 0.000000e+00 : f32
    %74 = vector.broadcast %cst_49 : f32 to vector<24x64xf32>
    %75 = arith.maximumf %73, %74 : vector<24x64xf32>
    %c0_50 = arith.constant 0 : index
    %c0_51 = arith.constant 0 : index
    %c0_52 = arith.constant 0 : index
    %76 = vector.load %arg6[%c0_50, %c0_51, %c0_52] : memref<1x24x64xf32, #tpu.memory_space<vmem>>, vector<1x24x64xf32>
    %77 = vector.shape_cast %76 : vector<1x24x64xf32> to vector<24x64xf32>
    %78 = vector.shape_cast %75 : vector<24x64xf32> to vector<1x24x64xf32>
    tpu.vector_store %arg6[%c0_50, %c0_51, %c0_52], %78 {strides = array<i32>} : memref<1x24x64xf32, #tpu.memory_space<vmem>>, vector<1x24x64xf32>,
    return
  }
  func.func @transform_0(%arg0: i32) -> (i32, i32, i32) {
    %c0_i32 = arith.constant 0 : i32
    %c0_i32_0 = arith.constant 0 : i32
    %c0_i32_1 = arith.constant 0 : i32
    return %arg0, %c0_i32, %c0_i32_0 : i32, i32, i32
  }
  func.func @transform_1(%arg0: i32) -> (i32, i32, i32) {
    %c0_i32 = arith.constant 0 : i32
    %c0_i32_0 = arith.constant 0 : i32
    %c0_i32_1 = arith.constant 0 : i32
    %c0_i32_2 = arith.constant 0 : i32
    return %c0_i32, %c0_i32_0, %c0_i32_1 : i32, i32, i32
  }
  func.func @transform_2(%arg0: i32) -> (i32, i32) {
    %c0_i32 = arith.constant 0 : i32
    %c0_i32_0 = arith.constant 0 : i32
    %c0_i32_1 = arith.constant 0 : i32
    return %c0_i32, %c0_i32_0 : i32, i32
  }
  func.func @transform_3(%arg0: i32) -> (i32, i32) {
    %c0_i32 = arith.constant 0 : i32
    %c0_i32_0 = arith.constant 0 : i32
    %c0_i32_1 = arith.constant 0 : i32
    return %c0_i32, %c0_i32_0 : i32, i32
  }
  func.func @transform_4(%arg0: i32) -> (i32, i32) {
    %c0_i32 = arith.constant 0 : i32
    %c0_i32_0 = arith.constant 0 : i32
    %c0_i32_1 = arith.constant 0 : i32
    return %c0_i32, %c0_i32_0 : i32, i32
  }
  func.func @transform_5(%arg0: i32) -> (i32, i32, i32) {
    %c0_i32 = arith.constant 0 : i32
    %c0_i32_0 = arith.constant 0 : i32
    %c0_i32_1 = arith.constant 0 : i32
    return %arg0, %c0_i32, %c0_i32_0 : i32, i32, i32
  }
}

module attributes {stable_mosaic.version = 11 : i64} {
  func.func @kernel(%arg0: i32, %arg1: memref<16x576xbf16, #tpu.memory_space<vmem>>, %arg2: memref<576x64xbf16, #tpu.memory_space<vmem>>, %arg3: memref<1x64xf32, #tpu.memory_space<vmem>>, %arg4: memref<16x64xf32, #tpu.memory_space<vmem>>) attributes {dimension_semantics = [#tpu.dimension_semantics<parallel>], iteration_bounds = array<i64: 1>, scalar_prefetch = 0 : i64, scratch_operands = 0 : i64, tpu.core_type = #tpu.core_type<tc>, window_params = [{transform_indices = @transform_0, window_bounds = array<i64: 16, 576>}, {pipeline_mode = #tpu.pipeline_mode<synchronous>, transform_indices = @transform_1, window_bounds = array<i64: 576, 64>}, {pipeline_mode = #tpu.pipeline_mode<synchronous>, transform_indices = @transform_2, window_bounds = array<i64: 1, 64>}, {transform_indices = @transform_3, window_bounds = array<i64: 16, 64>}]} {
    %c0 = arith.constant 0 : index
    %c0_0 = arith.constant 0 : index
    %0 = vector.load %arg1[%c0, %c0_0] : memref<16x576xbf16, #tpu.memory_space<vmem>>, vector<16x576xbf16>
    %c0_1 = arith.constant 0 : index
    %c0_2 = arith.constant 0 : index
    %1 = vector.load %arg2[%c0_1, %c0_2] : memref<576x64xbf16, #tpu.memory_space<vmem>>, vector<576x64xbf16>
    %cst = arith.constant dense<0.000000e+00> : vector<16x64xf32>
    %2 = tpu.matmul %0, %1, %cst {dimension_numbers = #tpu.dot_dimension_numbers<[1], [0], [0], [1], [0, 0, 1, 1], [], []>} : vector<16x576xbf16>, vector<576x64xbf16>, vector<16x64xf32> -> vector<16x64xf32>
    %c0_3 = arith.constant 0 : index
    %c0_4 = arith.constant 0 : index
    %3 = vector.load %arg3[%c0_3, %c0_4] : memref<1x64xf32, #tpu.memory_space<vmem>>, vector<1x64xf32>
    %4 = vector.broadcast %3 : vector<1x64xf32> to vector<16x64xf32>
    %5 = arith.addf %2, %4 : vector<16x64xf32>
    %cst_5 = arith.constant 0.000000e+00 : f32
    %6 = vector.broadcast %cst_5 : f32 to vector<16x64xf32>
    %7 = arith.maximumf %5, %6 : vector<16x64xf32>
    %c0_6 = arith.constant 0 : index
    %c0_7 = arith.constant 0 : index
    %8 = vector.load %arg4[%c0_6, %c0_7] : memref<16x64xf32, #tpu.memory_space<vmem>>, vector<16x64xf32>
    tpu.vector_store %arg4[%c0_6, %c0_7], %7 {strides = array<i32>} : memref<16x64xf32, #tpu.memory_space<vmem>>, vector<16x64xf32>,
    return
  }
  func.func @transform_0(%arg0: i32) -> (i32, i32) {
    %c0_i32 = arith.constant 0 : i32
    %c0_i32_0 = arith.constant 0 : i32
    return %arg0, %c0_i32 : i32, i32
  }
  func.func @transform_1(%arg0: i32) -> (i32, i32) {
    %c0_i32 = arith.constant 0 : i32
    %c0_i32_0 = arith.constant 0 : i32
    %c0_i32_1 = arith.constant 0 : i32
    return %c0_i32, %c0_i32_0 : i32, i32
  }
  func.func @transform_2(%arg0: i32) -> (i32, i32) {
    %c0_i32 = arith.constant 0 : i32
    %c0_i32_0 = arith.constant 0 : i32
    %c0_i32_1 = arith.constant 0 : i32
    return %c0_i32, %c0_i32_0 : i32, i32
  }
  func.func @transform_3(%arg0: i32) -> (i32, i32) {
    %c0_i32 = arith.constant 0 : i32
    %c0_i32_0 = arith.constant 0 : i32
    return %arg0, %c0_i32 : i32, i32
  }
}

module attributes {stable_mosaic.version = 11 : i64} {
  func.func @_affine_relu_kernel(%arg0: i32, %arg1: memref<16x64xf32, #tpu.memory_space<vmem>>, %arg2: memref<1x64xf32, #tpu.memory_space<vmem>>, %arg3: memref<1x64xf32, #tpu.memory_space<vmem>>, %arg4: memref<16x64xf32, #tpu.memory_space<vmem>>) attributes {dimension_semantics = [#tpu.dimension_semantics<parallel>], iteration_bounds = array<i64: 1>, scalar_prefetch = 0 : i64, scratch_operands = 0 : i64, tpu.core_type = #tpu.core_type<tc>, window_params = [{transform_indices = @transform_0, window_bounds = array<i64: 16, 64>}, {pipeline_mode = #tpu.pipeline_mode<synchronous>, transform_indices = @transform_1, window_bounds = array<i64: 1, 64>}, {pipeline_mode = #tpu.pipeline_mode<synchronous>, transform_indices = @transform_2, window_bounds = array<i64: 1, 64>}, {transform_indices = @transform_3, window_bounds = array<i64: 16, 64>}]} {
    %c0 = arith.constant 0 : index
    %c0_0 = arith.constant 0 : index
    %0 = vector.load %arg1[%c0, %c0_0] : memref<16x64xf32, #tpu.memory_space<vmem>>, vector<16x64xf32>
    %c0_1 = arith.constant 0 : index
    %c0_2 = arith.constant 0 : index
    %1 = vector.load %arg2[%c0_1, %c0_2] : memref<1x64xf32, #tpu.memory_space<vmem>>, vector<1x64xf32>
    %2 = vector.broadcast %1 : vector<1x64xf32> to vector<16x64xf32>
    %3 = arith.mulf %0, %2 : vector<16x64xf32>
    %c0_3 = arith.constant 0 : index
    %c0_4 = arith.constant 0 : index
    %4 = vector.load %arg3[%c0_3, %c0_4] : memref<1x64xf32, #tpu.memory_space<vmem>>, vector<1x64xf32>
    %5 = vector.broadcast %4 : vector<1x64xf32> to vector<16x64xf32>
    %6 = arith.addf %3, %5 : vector<16x64xf32>
    %cst = arith.constant 0.000000e+00 : f32
    %7 = vector.broadcast %cst : f32 to vector<16x64xf32>
    %8 = arith.maximumf %6, %7 : vector<16x64xf32>
    %c0_5 = arith.constant 0 : index
    %c0_6 = arith.constant 0 : index
    %9 = vector.load %arg4[%c0_5, %c0_6] : memref<16x64xf32, #tpu.memory_space<vmem>>, vector<16x64xf32>
    tpu.vector_store %arg4[%c0_5, %c0_6], %8 {strides = array<i32>} : memref<16x64xf32, #tpu.memory_space<vmem>>, vector<16x64xf32>,
    return
  }
  func.func @transform_0(%arg0: i32) -> (i32, i32) {
    %c0_i32 = arith.constant 0 : i32
    %c0_i32_0 = arith.constant 0 : i32
    return %arg0, %c0_i32 : i32, i32
  }
  func.func @transform_1(%arg0: i32) -> (i32, i32) {
    %c0_i32 = arith.constant 0 : i32
    %c0_i32_0 = arith.constant 0 : i32
    %c0_i32_1 = arith.constant 0 : i32
    return %c0_i32, %c0_i32_0 : i32, i32
  }
  func.func @transform_2(%arg0: i32) -> (i32, i32) {
    %c0_i32 = arith.constant 0 : i32
    %c0_i32_0 = arith.constant 0 : i32
    %c0_i32_1 = arith.constant 0 : i32
    return %c0_i32, %c0_i32_0 : i32, i32
  }
  func.func @transform_3(%arg0: i32) -> (i32, i32) {
    %c0_i32 = arith.constant 0 : i32
    %c0_i32_0 = arith.constant 0 : i32
    return %arg0, %c0_i32 : i32, i32
  }
}

module attributes {stable_mosaic.version = 11 : i64} {
  func.func @_multidil_block_kernel(%arg0: i32, %arg1: memref<1x20x128xf32, #tpu.memory_space<vmem>>, %arg2: memref<9x1x128xf32, #tpu.memory_space<vmem>>, %arg3: memref<1x128xf32, #tpu.memory_space<vmem>>, %arg4: memref<9x1x128xf32, #tpu.memory_space<vmem>>, %arg5: memref<1x128xf32, #tpu.memory_space<vmem>>, %arg6: memref<128x128xbf16, #tpu.memory_space<vmem>>, %arg7: memref<1x128xf32, #tpu.memory_space<vmem>>, %arg8: memref<1x8x128xf32, #tpu.memory_space<vmem>>) attributes {dimension_semantics = [#tpu.dimension_semantics<parallel>], iteration_bounds = array<i64: 2>, scalar_prefetch = 0 : i64, scratch_operands = 0 : i64, tpu.core_type = #tpu.core_type<tc>, window_params = [{transform_indices = @transform_0, window_bounds = array<i64: 1, 20, 128>}, {pipeline_mode = #tpu.pipeline_mode<synchronous>, transform_indices = @transform_1, window_bounds = array<i64: 9, 1, 128>}, {pipeline_mode = #tpu.pipeline_mode<synchronous>, transform_indices = @transform_2, window_bounds = array<i64: 1, 128>}, {pipeline_mode = #tpu.pipeline_mode<synchronous>, transform_indices = @transform_3, window_bounds = array<i64: 9, 1, 128>}, {pipeline_mode = #tpu.pipeline_mode<synchronous>, transform_indices = @transform_4, window_bounds = array<i64: 1, 128>}, {pipeline_mode = #tpu.pipeline_mode<synchronous>, transform_indices = @transform_5, window_bounds = array<i64: 128, 128>}, {pipeline_mode = #tpu.pipeline_mode<synchronous>, transform_indices = @transform_6, window_bounds = array<i64: 1, 128>}, {transform_indices = @transform_7, window_bounds = array<i64: 1, 8, 128>}]} {
    %c0 = arith.constant 0 : index
    %c5 = arith.constant 5 : index
    %c0_0 = arith.constant 0 : index
    %0 = vector.load %arg1[%c0, %c5, %c0_0] : memref<1x20x128xf32, #tpu.memory_space<vmem>>, vector<1x8x128xf32>
    %1 = vector.shape_cast %0 : vector<1x8x128xf32> to vector<8x128xf32>
    %c4 = arith.constant 4 : index
    %c0_1 = arith.constant 0 : index
    %c0_2 = arith.constant 0 : index
    %2 = vector.load %arg2[%c4, %c0_1, %c0_2] : memref<9x1x128xf32, #tpu.memory_space<vmem>>, vector<1x1x128xf32>
    %3 = vector.shape_cast %2 : vector<1x1x128xf32> to vector<1x128xf32>
    %4 = vector.broadcast %3 : vector<1x128xf32> to vector<8x128xf32>
    %5 = arith.mulf %1, %4 : vector<8x128xf32>
    %c4_3 = arith.constant 4 : index
    %c0_4 = arith.constant 0 : index
    %c0_5 = arith.constant 0 : index
    %6 = vector.load %arg4[%c4_3, %c0_4, %c0_5] : memref<9x1x128xf32, #tpu.memory_space<vmem>>, vector<1x1x128xf32>
    %7 = vector.shape_cast %6 : vector<1x1x128xf32> to vector<1x128xf32>
    %8 = vector.broadcast %7 : vector<1x128xf32> to vector<8x128xf32>
    %9 = arith.mulf %1, %8 : vector<8x128xf32>
    %c0_6 = arith.constant 0 : index
    %c0_7 = arith.constant 0 : index
    %c0_8 = arith.constant 0 : index
    %10 = vector.load %arg1[%c0_6, %c0_7, %c0_8] : memref<1x20x128xf32, #tpu.memory_space<vmem>>, vector<1x8x128xf32>
    %11 = vector.shape_cast %10 : vector<1x8x128xf32> to vector<8x128xf32>
    %c0_9 = arith.constant 0 : index
    %c0_10 = arith.constant 0 : index
    %c0_11 = arith.constant 0 : index
    %12 = vector.load %arg2[%c0_9, %c0_10, %c0_11] : memref<9x1x128xf32, #tpu.memory_space<vmem>>, vector<1x1x128xf32>
    %13 = vector.shape_cast %12 : vector<1x1x128xf32> to vector<1x128xf32>
    %14 = vector.broadcast %13 : vector<1x128xf32> to vector<8x128xf32>
    %15 = arith.mulf %11, %14 : vector<8x128xf32>
    %16 = arith.addf %5, %15 : vector<8x128xf32>
    %c0_12 = arith.constant 0 : index
    %c0_13 = arith.constant 0 : index
    %c0_14 = arith.constant 0 : index
    %17 = vector.load %arg1[%c0_12, %c0_13, %c0_14] : memref<1x20x128xf32, #tpu.memory_space<vmem>>, vector<1x8x128xf32>
    %18 = vector.shape_cast %17 : vector<1x8x128xf32> to vector<8x128xf32>
    %c0_15 = arith.constant 0 : index
    %c0_16 = arith.constant 0 : index
    %c0_17 = arith.constant 0 : index
    %19 = vector.load %arg4[%c0_15, %c0_16, %c0_17] : memref<9x1x128xf32, #tpu.memory_space<vmem>>, vector<1x1x128xf32>
    %20 = vector.shape_cast %19 : vector<1x1x128xf32> to vector<1x128xf32>
    %21 = vector.broadcast %20 : vector<1x128xf32> to vector<8x128xf32>
    %22 = arith.mulf %18, %21 : vector<8x128xf32>
    %23 = arith.addf %9, %22 : vector<8x128xf32>
    %c0_18 = arith.constant 0 : index
    %c1 = arith.constant 1 : index
    %c0_19 = arith.constant 0 : index
    %24 = vector.load %arg1[%c0_18, %c1, %c0_19] : memref<1x20x128xf32, #tpu.memory_space<vmem>>, vector<1x8x128xf32>
    %25 = vector.shape_cast %24 : vector<1x8x128xf32> to vector<8x128xf32>
    %c1_20 = arith.constant 1 : index
    %c0_21 = arith.constant 0 : index
    %c0_22 = arith.constant 0 : index
    %26 = vector.load %arg2[%c1_20, %c0_21, %c0_22] : memref<9x1x128xf32, #tpu.memory_space<vmem>>, vector<1x1x128xf32>
    %27 = vector.shape_cast %26 : vector<1x1x128xf32> to vector<1x128xf32>
    %28 = vector.broadcast %27 : vector<1x128xf32> to vector<8x128xf32>
    %29 = arith.mulf %25, %28 : vector<8x128xf32>
    %30 = arith.addf %16, %29 : vector<8x128xf32>
    %c0_23 = arith.constant 0 : index
    %c1_24 = arith.constant 1 : index
    %c0_25 = arith.constant 0 : index
    %31 = vector.load %arg1[%c0_23, %c1_24, %c0_25] : memref<1x20x128xf32, #tpu.memory_space<vmem>>, vector<1x8x128xf32>
    %32 = vector.shape_cast %31 : vector<1x8x128xf32> to vector<8x128xf32>
    %c1_26 = arith.constant 1 : index
    %c0_27 = arith.constant 0 : index
    %c0_28 = arith.constant 0 : index
    %33 = vector.load %arg4[%c1_26, %c0_27, %c0_28] : memref<9x1x128xf32, #tpu.memory_space<vmem>>, vector<1x1x128xf32>
    %34 = vector.shape_cast %33 : vector<1x1x128xf32> to vector<1x128xf32>
    %35 = vector.broadcast %34 : vector<1x128xf32> to vector<8x128xf32>
    %36 = arith.mulf %32, %35 : vector<8x128xf32>
    %37 = arith.addf %23, %36 : vector<8x128xf32>
    %c0_29 = arith.constant 0 : index
    %c2 = arith.constant 2 : index
    %c0_30 = arith.constant 0 : index
    %38 = vector.load %arg1[%c0_29, %c2, %c0_30] : memref<1x20x128xf32, #tpu.memory_space<vmem>>, vector<1x8x128xf32>
    %39 = vector.shape_cast %38 : vector<1x8x128xf32> to vector<8x128xf32>
    %c2_31 = arith.constant 2 : index
    %c0_32 = arith.constant 0 : index
    %c0_33 = arith.constant 0 : index
    %40 = vector.load %arg2[%c2_31, %c0_32, %c0_33] : memref<9x1x128xf32, #tpu.memory_space<vmem>>, vector<1x1x128xf32>
    %41 = vector.shape_cast %40 : vector<1x1x128xf32> to vector<1x128xf32>
    %42 = vector.broadcast %41 : vector<1x128xf32> to vector<8x128xf32>
    %43 = arith.mulf %39, %42 : vector<8x128xf32>
    %44 = arith.addf %30, %43 : vector<8x128xf32>
    %c0_34 = arith.constant 0 : index
    %c2_35 = arith.constant 2 : index
    %c0_36 = arith.constant 0 : index
    %45 = vector.load %arg1[%c0_34, %c2_35, %c0_36] : memref<1x20x128xf32, #tpu.memory_space<vmem>>, vector<1x8x128xf32>
    %46 = vector.shape_cast %45 : vector<1x8x128xf32> to vector<8x128xf32>
    %c2_37 = arith.constant 2 : index
    %c0_38 = arith.constant 0 : index
    %c0_39 = arith.constant 0 : index
    %47 = vector.load %arg4[%c2_37, %c0_38, %c0_39] : memref<9x1x128xf32, #tpu.memory_space<vmem>>, vector<1x1x128xf32>
    %48 = vector.shape_cast %47 : vector<1x1x128xf32> to vector<1x128xf32>
    %49 = vector.broadcast %48 : vector<1x128xf32> to vector<8x128xf32>
    %50 = arith.mulf %46, %49 : vector<8x128xf32>
    %51 = arith.addf %37, %50 : vector<8x128xf32>
    %c0_40 = arith.constant 0 : index
    %c4_41 = arith.constant 4 : index
    %c0_42 = arith.constant 0 : index
    %52 = vector.load %arg1[%c0_40, %c4_41, %c0_42] : memref<1x20x128xf32, #tpu.memory_space<vmem>>, vector<1x8x128xf32>
    %53 = vector.shape_cast %52 : vector<1x8x128xf32> to vector<8x128xf32>
    %c3 = arith.constant 3 : index
    %c0_43 = arith.constant 0 : index
    %c0_44 = arith.constant 0 : index
    %54 = vector.load %arg2[%c3, %c0_43, %c0_44] : memref<9x1x128xf32, #tpu.memory_space<vmem>>, vector<1x1x128xf32>
    %55 = vector.shape_cast %54 : vector<1x1x128xf32> to vector<1x128xf32>
    %56 = vector.broadcast %55 : vector<1x128xf32> to vector<8x128xf32>
    %57 = arith.mulf %53, %56 : vector<8x128xf32>
    %58 = arith.addf %44, %57 : vector<8x128xf32>
    %c0_45 = arith.constant 0 : index
    %c4_46 = arith.constant 4 : index
    %c0_47 = arith.constant 0 : index
    %59 = vector.load %arg1[%c0_45, %c4_46, %c0_47] : memref<1x20x128xf32, #tpu.memory_space<vmem>>, vector<1x8x128xf32>
    %60 = vector.shape_cast %59 : vector<1x8x128xf32> to vector<8x128xf32>
    %c3_48 = arith.constant 3 : index
    %c0_49 = arith.constant 0 : index
    %c0_50 = arith.constant 0 : index
    %61 = vector.load %arg4[%c3_48, %c0_49, %c0_50] : memref<9x1x128xf32, #tpu.memory_space<vmem>>, vector<1x1x128xf32>
    %62 = vector.shape_cast %61 : vector<1x1x128xf32> to vector<1x128xf32>
    %63 = vector.broadcast %62 : vector<1x128xf32> to vector<8x128xf32>
    %64 = arith.mulf %60, %63 : vector<8x128xf32>
    %65 = arith.addf %51, %64 : vector<8x128xf32>
    %c0_51 = arith.constant 0 : index
    %c6 = arith.constant 6 : index
    %c0_52 = arith.constant 0 : index
    %66 = vector.load %arg1[%c0_51, %c6, %c0_52] : memref<1x20x128xf32, #tpu.memory_space<vmem>>, vector<1x8x128xf32>
    %67 = vector.shape_cast %66 : vector<1x8x128xf32> to vector<8x128xf32>
    %c5_53 = arith.constant 5 : index
    %c0_54 = arith.constant 0 : index
    %c0_55 = arith.constant 0 : index
    %68 = vector.load %arg2[%c5_53, %c0_54, %c0_55] : memref<9x1x128xf32, #tpu.memory_space<vmem>>, vector<1x1x128xf32>
    %69 = vector.shape_cast %68 : vector<1x1x128xf32> to vector<1x128xf32>
    %70 = vector.broadcast %69 : vector<1x128xf32> to vector<8x128xf32>
    %71 = arith.mulf %67, %70 : vector<8x128xf32>
    %72 = arith.addf %58, %71 : vector<8x128xf32>
    %c0_56 = arith.constant 0 : index
    %c6_57 = arith.constant 6 : index
    %c0_58 = arith.constant 0 : index
    %73 = vector.load %arg1[%c0_56, %c6_57, %c0_58] : memref<1x20x128xf32, #tpu.memory_space<vmem>>, vector<1x8x128xf32>
    %74 = vector.shape_cast %73 : vector<1x8x128xf32> to vector<8x128xf32>
    %c5_59 = arith.constant 5 : index
    %c0_60 = arith.constant 0 : index
    %c0_61 = arith.constant 0 : index
    %75 = vector.load %arg4[%c5_59, %c0_60, %c0_61] : memref<9x1x128xf32, #tpu.memory_space<vmem>>, vector<1x1x128xf32>
    %76 = vector.shape_cast %75 : vector<1x1x128xf32> to vector<1x128xf32>
    %77 = vector.broadcast %76 : vector<1x128xf32> to vector<8x128xf32>
    %78 = arith.mulf %74, %77 : vector<8x128xf32>
    %79 = arith.addf %65, %78 : vector<8x128xf32>
    %c0_62 = arith.constant 0 : index
    %c8 = arith.constant 8 : index
    %c0_63 = arith.constant 0 : index
    %80 = vector.load %arg1[%c0_62, %c8, %c0_63] : memref<1x20x128xf32, #tpu.memory_space<vmem>>, vector<1x8x128xf32>
    %81 = vector.shape_cast %80 : vector<1x8x128xf32> to vector<8x128xf32>
    %c6_64 = arith.constant 6 : index
    %c0_65 = arith.constant 0 : index
    %c0_66 = arith.constant 0 : index
    %82 = vector.load %arg2[%c6_64, %c0_65, %c0_66] : memref<9x1x128xf32, #tpu.memory_space<vmem>>, vector<1x1x128xf32>
    %83 = vector.shape_cast %82 : vector<1x1x128xf32> to vector<1x128xf32>
    %84 = vector.broadcast %83 : vector<1x128xf32> to vector<8x128xf32>
    %85 = arith.mulf %81, %84 : vector<8x128xf32>
    %86 = arith.addf %72, %85 : vector<8x128xf32>
    %c0_67 = arith.constant 0 : index
    %c8_68 = arith.constant 8 : index
    %c0_69 = arith.constant 0 : index
    %87 = vector.load %arg1[%c0_67, %c8_68, %c0_69] : memref<1x20x128xf32, #tpu.memory_space<vmem>>, vector<1x8x128xf32>
    %88 = vector.shape_cast %87 : vector<1x8x128xf32> to vector<8x128xf32>
    %c6_70 = arith.constant 6 : index
    %c0_71 = arith.constant 0 : index
    %c0_72 = arith.constant 0 : index
    %89 = vector.load %arg4[%c6_70, %c0_71, %c0_72] : memref<9x1x128xf32, #tpu.memory_space<vmem>>, vector<1x1x128xf32>
    %90 = vector.shape_cast %89 : vector<1x1x128xf32> to vector<1x128xf32>
    %91 = vector.broadcast %90 : vector<1x128xf32> to vector<8x128xf32>
    %92 = arith.mulf %88, %91 : vector<8x128xf32>
    %93 = arith.addf %79, %92 : vector<8x128xf32>
    %c0_73 = arith.constant 0 : index
    %c9 = arith.constant 9 : index
    %c0_74 = arith.constant 0 : index
    %94 = vector.load %arg1[%c0_73, %c9, %c0_74] : memref<1x20x128xf32, #tpu.memory_space<vmem>>, vector<1x8x128xf32>
    %95 = vector.shape_cast %94 : vector<1x8x128xf32> to vector<8x128xf32>
    %c7 = arith.constant 7 : index
    %c0_75 = arith.constant 0 : index
    %c0_76 = arith.constant 0 : index
    %96 = vector.load %arg2[%c7, %c0_75, %c0_76] : memref<9x1x128xf32, #tpu.memory_space<vmem>>, vector<1x1x128xf32>
    %97 = vector.shape_cast %96 : vector<1x1x128xf32> to vector<1x128xf32>
    %98 = vector.broadcast %97 : vector<1x128xf32> to vector<8x128xf32>
    %99 = arith.mulf %95, %98 : vector<8x128xf32>
    %100 = arith.addf %86, %99 : vector<8x128xf32>
    %c0_77 = arith.constant 0 : index
    %c9_78 = arith.constant 9 : index
    %c0_79 = arith.constant 0 : index
    %101 = vector.load %arg1[%c0_77, %c9_78, %c0_79] : memref<1x20x128xf32, #tpu.memory_space<vmem>>, vector<1x8x128xf32>
    %102 = vector.shape_cast %101 : vector<1x8x128xf32> to vector<8x128xf32>
    %c7_80 = arith.constant 7 : index
    %c0_81 = arith.constant 0 : index
    %c0_82 = arith.constant 0 : index
    %103 = vector.load %arg4[%c7_80, %c0_81, %c0_82] : memref<9x1x128xf32, #tpu.memory_space<vmem>>, vector<1x1x128xf32>
    %104 = vector.shape_cast %103 : vector<1x1x128xf32> to vector<1x128xf32>
    %105 = vector.broadcast %104 : vector<1x128xf32> to vector<8x128xf32>
    %106 = arith.mulf %102, %105 : vector<8x128xf32>
    %107 = arith.addf %93, %106 : vector<8x128xf32>
    %c0_83 = arith.constant 0 : index
    %c10 = arith.constant 10 : index
    %c0_84 = arith.constant 0 : index
    %108 = vector.load %arg1[%c0_83, %c10, %c0_84] : memref<1x20x128xf32, #tpu.memory_space<vmem>>, vector<1x8x128xf32>
    %109 = vector.shape_cast %108 : vector<1x8x128xf32> to vector<8x128xf32>
    %c8_85 = arith.constant 8 : index
    %c0_86 = arith.constant 0 : index
    %c0_87 = arith.constant 0 : index
    %110 = vector.load %arg2[%c8_85, %c0_86, %c0_87] : memref<9x1x128xf32, #tpu.memory_space<vmem>>, vector<1x1x128xf32>
    %111 = vector.shape_cast %110 : vector<1x1x128xf32> to vector<1x128xf32>
    %112 = vector.broadcast %111 : vector<1x128xf32> to vector<8x128xf32>
    %113 = arith.mulf %109, %112 : vector<8x128xf32>
    %114 = arith.addf %100, %113 : vector<8x128xf32>
    %c0_88 = arith.constant 0 : index
    %c10_89 = arith.constant 10 : index
    %c0_90 = arith.constant 0 : index
    %115 = vector.load %arg1[%c0_88, %c10_89, %c0_90] : memref<1x20x128xf32, #tpu.memory_space<vmem>>, vector<1x8x128xf32>
    %116 = vector.shape_cast %115 : vector<1x8x128xf32> to vector<8x128xf32>
    %c8_91 = arith.constant 8 : index
    %c0_92 = arith.constant 0 : index
    %c0_93 = arith.constant 0 : index
    %117 = vector.load %arg4[%c8_91, %c0_92, %c0_93] : memref<9x1x128xf32, #tpu.memory_space<vmem>>, vector<1x1x128xf32>
    %118 = vector.shape_cast %117 : vector<1x1x128xf32> to vector<1x128xf32>
    %119 = vector.broadcast %118 : vector<1x128xf32> to vector<8x128xf32>
    %120 = arith.mulf %116, %119 : vector<8x128xf32>
    %121 = arith.addf %107, %120 : vector<8x128xf32>
    %c0_94 = arith.constant 0 : index
    %c0_95 = arith.constant 0 : index
    %122 = vector.load %arg3[%c0_94, %c0_95] : memref<1x128xf32, #tpu.memory_space<vmem>>, vector<1x128xf32>
    %123 = vector.broadcast %122 : vector<1x128xf32> to vector<8x128xf32>
    %124 = arith.addf %114, %123 : vector<8x128xf32>
    %cst = arith.constant 0.000000e+00 : f32
    %125 = vector.broadcast %cst : f32 to vector<8x128xf32>
    %126 = arith.maximumf %124, %125 : vector<8x128xf32>
    %c0_96 = arith.constant 0 : index
    %c0_97 = arith.constant 0 : index
    %127 = vector.load %arg5[%c0_96, %c0_97] : memref<1x128xf32, #tpu.memory_space<vmem>>, vector<1x128xf32>
    %128 = vector.broadcast %127 : vector<1x128xf32> to vector<8x128xf32>
    %129 = arith.addf %121, %128 : vector<8x128xf32>
    %cst_98 = arith.constant 0.000000e+00 : f32
    %130 = vector.broadcast %cst_98 : f32 to vector<8x128xf32>
    %131 = arith.maximumf %129, %130 : vector<8x128xf32>
    %132 = arith.addf %126, %131 : vector<8x128xf32>
    %133 = arith.truncf %132 : vector<8x128xf32> to vector<8x128xbf16>
    %c0_99 = arith.constant 0 : index
    %c0_100 = arith.constant 0 : index
    %134 = vector.load %arg6[%c0_99, %c0_100] : memref<128x128xbf16, #tpu.memory_space<vmem>>, vector<128x128xbf16>
    %cst_101 = arith.constant dense<0.000000e+00> : vector<8x128xf32>
    %135 = tpu.matmul %133, %134, %cst_101 {dimension_numbers = #tpu.dot_dimension_numbers<[1], [0], [0], [1], [0, 0, 1, 1], [], []>} : vector<8x128xbf16>, vector<128x128xbf16>, vector<8x128xf32> -> vector<8x128xf32>
    %c0_102 = arith.constant 0 : index
    %c0_103 = arith.constant 0 : index
    %136 = vector.load %arg7[%c0_102, %c0_103] : memref<1x128xf32, #tpu.memory_space<vmem>>, vector<1x128xf32>
    %137 = vector.broadcast %136 : vector<1x128xf32> to vector<8x128xf32>
    %138 = arith.addf %135, %137 : vector<8x128xf32>
    %139 = arith.addf %138, %1 : vector<8x128xf32>
    %cst_104 = arith.constant 0.000000e+00 : f32
    %140 = vector.broadcast %cst_104 : f32 to vector<8x128xf32>
    %141 = arith.maximumf %139, %140 : vector<8x128xf32>
    %c0_105 = arith.constant 0 : index
    %c0_106 = arith.constant 0 : index
    %c0_107 = arith.constant 0 : index
    %142 = vector.load %arg8[%c0_105, %c0_106, %c0_107] : memref<1x8x128xf32, #tpu.memory_space<vmem>>, vector<1x8x128xf32>
    %143 = vector.shape_cast %142 : vector<1x8x128xf32> to vector<8x128xf32>
    %144 = vector.shape_cast %141 : vector<8x128xf32> to vector<1x8x128xf32>
    tpu.vector_store %arg8[%c0_105, %c0_106, %c0_107], %144 {strides = array<i32>} : memref<1x8x128xf32, #tpu.memory_space<vmem>>, vector<1x8x128xf32>,
    return
  }
  func.func @transform_0(%arg0: i32) -> (i32, i32, i32) {
    %c0_i32 = arith.constant 0 : i32
    %c0_i32_0 = arith.constant 0 : i32
    %c0_i32_1 = arith.constant 0 : i32
    return %arg0, %c0_i32, %c0_i32_0 : i32, i32, i32
  }
  func.func @transform_1(%arg0: i32) -> (i32, i32, i32) {
    %c0_i32 = arith.constant 0 : i32
    %c0_i32_0 = arith.constant 0 : i32
    %c0_i32_1 = arith.constant 0 : i32
    %c0_i32_2 = arith.constant 0 : i32
    return %c0_i32, %c0_i32_0, %c0_i32_1 : i32, i32, i32
  }
  func.func @transform_2(%arg0: i32) -> (i32, i32) {
    %c0_i32 = arith.constant 0 : i32
    %c0_i32_0 = arith.constant 0 : i32
    %c0_i32_1 = arith.constant 0 : i32
    return %c0_i32, %c0_i32_0 : i32, i32
  }
  func.func @transform_3(%arg0: i32) -> (i32, i32, i32) {
    %c0_i32 = arith.constant 0 : i32
    %c0_i32_0 = arith.constant 0 : i32
    %c0_i32_1 = arith.constant 0 : i32
    %c0_i32_2 = arith.constant 0 : i32
    return %c0_i32, %c0_i32_0, %c0_i32_1 : i32, i32, i32
  }
  func.func @transform_4(%arg0: i32) -> (i32, i32) {
    %c0_i32 = arith.constant 0 : i32
    %c0_i32_0 = arith.constant 0 : i32
    %c0_i32_1 = arith.constant 0 : i32
    return %c0_i32, %c0_i32_0 : i32, i32
  }
  func.func @transform_5(%arg0: i32) -> (i32, i32) {
    %c0_i32 = arith.constant 0 : i32
    %c0_i32_0 = arith.constant 0 : i32
    %c0_i32_1 = arith.constant 0 : i32
    return %c0_i32, %c0_i32_0 : i32, i32
  }
  func.func @transform_6(%arg0: i32) -> (i32, i32) {
    %c0_i32 = arith.constant 0 : i32
    %c0_i32_0 = arith.constant 0 : i32
    %c0_i32_1 = arith.constant 0 : i32
    return %c0_i32, %c0_i32_0 : i32, i32
  }
  func.func @transform_7(%arg0: i32) -> (i32, i32, i32) {
    %c0_i32 = arith.constant 0 : i32
    %c0_i32_0 = arith.constant 0 : i32
    %c0_i32_1 = arith.constant 0 : i32
    return %arg0, %c0_i32, %c0_i32_0 : i32, i32, i32
  }
}

module attributes {stable_mosaic.version = 11 : i64} {
  func.func @_multidil_block_kernel(%arg0: i32, %arg1: memref<1x42x128xf32, #tpu.memory_space<vmem>>, %arg2: memref<9x1x128xf32, #tpu.memory_space<vmem>>, %arg3: memref<1x128xf32, #tpu.memory_space<vmem>>, %arg4: memref<9x1x128xf32, #tpu.memory_space<vmem>>, %arg5: memref<1x128xf32, #tpu.memory_space<vmem>>, %arg6: memref<128x128xbf16, #tpu.memory_space<vmem>>, %arg7: memref<1x128xf32, #tpu.memory_space<vmem>>, %arg8: memref<1x12x128xf32, #tpu.memory_space<vmem>>) attributes {dimension_semantics = [#tpu.dimension_semantics<parallel>], iteration_bounds = array<i64: 2>, scalar_prefetch = 0 : i64, scratch_operands = 0 : i64, tpu.core_type = #tpu.core_type<tc>, window_params = [{transform_indices = @transform_0, window_bounds = array<i64: 1, 42, 128>}, {pipeline_mode = #tpu.pipeline_mode<synchronous>, transform_indices = @transform_1, window_bounds = array<i64: 9, 1, 128>}, {pipeline_mode = #tpu.pipeline_mode<synchronous>, transform_indices = @transform_2, window_bounds = array<i64: 1, 128>}, {pipeline_mode = #tpu.pipeline_mode<synchronous>, transform_indices = @transform_3, window_bounds = array<i64: 9, 1, 128>}, {pipeline_mode = #tpu.pipeline_mode<synchronous>, transform_indices = @transform_4, window_bounds = array<i64: 1, 128>}, {pipeline_mode = #tpu.pipeline_mode<synchronous>, transform_indices = @transform_5, window_bounds = array<i64: 128, 128>}, {pipeline_mode = #tpu.pipeline_mode<synchronous>, transform_indices = @transform_6, window_bounds = array<i64: 1, 128>}, {transform_indices = @transform_7, window_bounds = array<i64: 1, 12, 128>}]} {
    %c0 = arith.constant 0 : index
    %c14 = arith.constant 14 : index
    %c0_0 = arith.constant 0 : index
    %0 = vector.load %arg1[%c0, %c14, %c0_0] : memref<1x42x128xf32, #tpu.memory_space<vmem>>, vector<1x12x128xf32>
    %1 = vector.shape_cast %0 : vector<1x12x128xf32> to vector<12x128xf32>
    %c4 = arith.constant 4 : index
    %c0_1 = arith.constant 0 : index
    %c0_2 = arith.constant 0 : index
    %2 = vector.load %arg2[%c4, %c0_1, %c0_2] : memref<9x1x128xf32, #tpu.memory_space<vmem>>, vector<1x1x128xf32>
    %3 = vector.shape_cast %2 : vector<1x1x128xf32> to vector<1x128xf32>
    %4 = vector.broadcast %3 : vector<1x128xf32> to vector<12x128xf32>
    %5 = arith.mulf %1, %4 : vector<12x128xf32>
    %c4_3 = arith.constant 4 : index
    %c0_4 = arith.constant 0 : index
    %c0_5 = arith.constant 0 : index
    %6 = vector.load %arg4[%c4_3, %c0_4, %c0_5] : memref<9x1x128xf32, #tpu.memory_space<vmem>>, vector<1x1x128xf32>
    %7 = vector.shape_cast %6 : vector<1x1x128xf32> to vector<1x128xf32>
    %8 = vector.broadcast %7 : vector<1x128xf32> to vector<12x128xf32>
    %9 = arith.mulf %1, %8 : vector<12x128xf32>
    %c0_6 = arith.constant 0 : index
    %c7 = arith.constant 7 : index
    %c0_7 = arith.constant 0 : index
    %10 = vector.load %arg1[%c0_6, %c7, %c0_7] : memref<1x42x128xf32, #tpu.memory_space<vmem>>, vector<1x12x128xf32>
    %11 = vector.shape_cast %10 : vector<1x12x128xf32> to vector<12x128xf32>
    %c0_8 = arith.constant 0 : index
    %c0_9 = arith.constant 0 : index
    %c0_10 = arith.constant 0 : index
    %12 = vector.load %arg2[%c0_8, %c0_9, %c0_10] : memref<9x1x128xf32, #tpu.memory_space<vmem>>, vector<1x1x128xf32>
    %13 = vector.shape_cast %12 : vector<1x1x128xf32> to vector<1x128xf32>
    %14 = vector.broadcast %13 : vector<1x128xf32> to vector<12x128xf32>
    %15 = arith.mulf %11, %14 : vector<12x128xf32>
    %16 = arith.addf %5, %15 : vector<12x128xf32>
    %c0_11 = arith.constant 0 : index
    %c0_12 = arith.constant 0 : index
    %c0_13 = arith.constant 0 : index
    %17 = vector.load %arg1[%c0_11, %c0_12, %c0_13] : memref<1x42x128xf32, #tpu.memory_space<vmem>>, vector<1x12x128xf32>
    %18 = vector.shape_cast %17 : vector<1x12x128xf32> to vector<12x128xf32>
    %c0_14 = arith.constant 0 : index
    %c0_15 = arith.constant 0 : index
    %c0_16 = arith.constant 0 : index
    %19 = vector.load %arg4[%c0_14, %c0_15, %c0_16] : memref<9x1x128xf32, #tpu.memory_space<vmem>>, vector<1x1x128xf32>
    %20 = vector.shape_cast %19 : vector<1x1x128xf32> to vector<1x128xf32>
    %21 = vector.broadcast %20 : vector<1x128xf32> to vector<12x128xf32>
    %22 = arith.mulf %18, %21 : vector<12x128xf32>
    %23 = arith.addf %9, %22 : vector<12x128xf32>
    %c0_17 = arith.constant 0 : index
    %c8 = arith.constant 8 : index
    %c0_18 = arith.constant 0 : index
    %24 = vector.load %arg1[%c0_17, %c8, %c0_18] : memref<1x42x128xf32, #tpu.memory_space<vmem>>, vector<1x12x128xf32>
    %25 = vector.shape_cast %24 : vector<1x12x128xf32> to vector<12x128xf32>
    %c1 = arith.constant 1 : index
    %c0_19 = arith.constant 0 : index
    %c0_20 = arith.constant 0 : index
    %26 = vector.load %arg2[%c1, %c0_19, %c0_20] : memref<9x1x128xf32, #tpu.memory_space<vmem>>, vector<1x1x128xf32>
    %27 = vector.shape_cast %26 : vector<1x1x128xf32> to vector<1x128xf32>
    %28 = vector.broadcast %27 : vector<1x128xf32> to vector<12x128xf32>
    %29 = arith.mulf %25, %28 : vector<12x128xf32>
    %30 = arith.addf %16, %29 : vector<12x128xf32>
    %c0_21 = arith.constant 0 : index
    %c2 = arith.constant 2 : index
    %c0_22 = arith.constant 0 : index
    %31 = vector.load %arg1[%c0_21, %c2, %c0_22] : memref<1x42x128xf32, #tpu.memory_space<vmem>>, vector<1x12x128xf32>
    %32 = vector.shape_cast %31 : vector<1x12x128xf32> to vector<12x128xf32>
    %c1_23 = arith.constant 1 : index
    %c0_24 = arith.constant 0 : index
    %c0_25 = arith.constant 0 : index
    %33 = vector.load %arg4[%c1_23, %c0_24, %c0_25] : memref<9x1x128xf32, #tpu.memory_space<vmem>>, vector<1x1x128xf32>
    %34 = vector.shape_cast %33 : vector<1x1x128xf32> to vector<1x128xf32>
    %35 = vector.broadcast %34 : vector<1x128xf32> to vector<12x128xf32>
    %36 = arith.mulf %32, %35 : vector<12x128xf32>
    %37 = arith.addf %23, %36 : vector<12x128xf32>
    %c0_26 = arith.constant 0 : index
    %c9 = arith.constant 9 : index
    %c0_27 = arith.constant 0 : index
    %38 = vector.load %arg1[%c0_26, %c9, %c0_27] : memref<1x42x128xf32, #tpu.memory_space<vmem>>, vector<1x12x128xf32>
    %39 = vector.shape_cast %38 : vector<1x12x128xf32> to vector<12x128xf32>
    %c2_28 = arith.constant 2 : index
    %c0_29 = arith.constant 0 : index
    %c0_30 = arith.constant 0 : index
    %40 = vector.load %arg2[%c2_28, %c0_29, %c0_30] : memref<9x1x128xf32, #tpu.memory_space<vmem>>, vector<1x1x128xf32>
    %41 = vector.shape_cast %40 : vector<1x1x128xf32> to vector<1x128xf32>
    %42 = vector.broadcast %41 : vector<1x128xf32> to vector<12x128xf32>
    %43 = arith.mulf %39, %42 : vector<12x128xf32>
    %44 = arith.addf %30, %43 : vector<12x128xf32>
    %c0_31 = arith.constant 0 : index
    %c4_32 = arith.constant 4 : index
    %c0_33 = arith.constant 0 : index
    %45 = vector.load %arg1[%c0_31, %c4_32, %c0_33] : memref<1x42x128xf32, #tpu.memory_space<vmem>>, vector<1x12x128xf32>
    %46 = vector.shape_cast %45 : vector<1x12x128xf32> to vector<12x128xf32>
    %c2_34 = arith.constant 2 : index
    %c0_35 = arith.constant 0 : index
    %c0_36 = arith.constant 0 : index
    %47 = vector.load %arg4[%c2_34, %c0_35, %c0_36] : memref<9x1x128xf32, #tpu.memory_space<vmem>>, vector<1x1x128xf32>
    %48 = vector.shape_cast %47 : vector<1x1x128xf32> to vector<1x128xf32>
    %49 = vector.broadcast %48 : vector<1x128xf32> to vector<12x128xf32>
    %50 = arith.mulf %46, %49 : vector<12x128xf32>
    %51 = arith.addf %37, %50 : vector<12x128xf32>
    %c0_37 = arith.constant 0 : index
    %c13 = arith.constant 13 : index
    %c0_38 = arith.constant 0 : index
    %52 = vector.load %arg1[%c0_37, %c13, %c0_38] : memref<1x42x128xf32, #tpu.memory_space<vmem>>, vector<1x12x128xf32>
    %53 = vector.shape_cast %52 : vector<1x12x128xf32> to vector<12x128xf32>
    %c3 = arith.constant 3 : index
    %c0_39 = arith.constant 0 : index
    %c0_40 = arith.constant 0 : index
    %54 = vector.load %arg2[%c3, %c0_39, %c0_40] : memref<9x1x128xf32, #tpu.memory_space<vmem>>, vector<1x1x128xf32>
    %55 = vector.shape_cast %54 : vector<1x1x128xf32> to vector<1x128xf32>
    %56 = vector.broadcast %55 : vector<1x128xf32> to vector<12x128xf32>
    %57 = arith.mulf %53, %56 : vector<12x128xf32>
    %58 = arith.addf %44, %57 : vector<12x128xf32>
    %c0_41 = arith.constant 0 : index
    %c12 = arith.constant 12 : index
    %c0_42 = arith.constant 0 : index
    %59 = vector.load %arg1[%c0_41, %c12, %c0_42] : memref<1x42x128xf32, #tpu.memory_space<vmem>>, vector<1x12x128xf32>
    %60 = vector.shape_cast %59 : vector<1x12x128xf32> to vector<12x128xf32>
    %c3_43 = arith.constant 3 : index
    %c0_44 = arith.constant 0 : index
    %c0_45 = arith.constant 0 : index
    %61 = vector.load %arg4[%c3_43, %c0_44, %c0_45] : memref<9x1x128xf32, #tpu.memory_space<vmem>>, vector<1x1x128xf32>
    %62 = vector.shape_cast %61 : vector<1x1x128xf32> to vector<1x128xf32>
    %63 = vector.broadcast %62 : vector<1x128xf32> to vector<12x128xf32>
    %64 = arith.mulf %60, %63 : vector<12x128xf32>
    %65 = arith.addf %51, %64 : vector<12x128xf32>
    %c0_46 = arith.constant 0 : index
    %c15 = arith.constant 15 : index
    %c0_47 = arith.constant 0 : index
    %66 = vector.load %arg1[%c0_46, %c15, %c0_47] : memref<1x42x128xf32, #tpu.memory_space<vmem>>, vector<1x12x128xf32>
    %67 = vector.shape_cast %66 : vector<1x12x128xf32> to vector<12x128xf32>
    %c5 = arith.constant 5 : index
    %c0_48 = arith.constant 0 : index
    %c0_49 = arith.constant 0 : index
    %68 = vector.load %arg2[%c5, %c0_48, %c0_49] : memref<9x1x128xf32, #tpu.memory_space<vmem>>, vector<1x1x128xf32>
    %69 = vector.shape_cast %68 : vector<1x1x128xf32> to vector<1x128xf32>
    %70 = vector.broadcast %69 : vector<1x128xf32> to vector<12x128xf32>
    %71 = arith.mulf %67, %70 : vector<12x128xf32>
    %72 = arith.addf %58, %71 : vector<12x128xf32>
    %c0_50 = arith.constant 0 : index
    %c16 = arith.constant 16 : index
    %c0_51 = arith.constant 0 : index
    %73 = vector.load %arg1[%c0_50, %c16, %c0_51] : memref<1x42x128xf32, #tpu.memory_space<vmem>>, vector<1x12x128xf32>
    %74 = vector.shape_cast %73 : vector<1x12x128xf32> to vector<12x128xf32>
    %c5_52 = arith.constant 5 : index
    %c0_53 = arith.constant 0 : index
    %c0_54 = arith.constant 0 : index
    %75 = vector.load %arg4[%c5_52, %c0_53, %c0_54] : memref<9x1x128xf32, #tpu.memory_space<vmem>>, vector<1x1x128xf32>
    %76 = vector.shape_cast %75 : vector<1x1x128xf32> to vector<1x128xf32>
    %77 = vector.broadcast %76 : vector<1x128xf32> to vector<12x128xf32>
    %78 = arith.mulf %74, %77 : vector<12x128xf32>
    %79 = arith.addf %65, %78 : vector<12x128xf32>
    %c0_55 = arith.constant 0 : index
    %c19 = arith.constant 19 : index
    %c0_56 = arith.constant 0 : index
    %80 = vector.load %arg1[%c0_55, %c19, %c0_56] : memref<1x42x128xf32, #tpu.memory_space<vmem>>, vector<1x12x128xf32>
    %81 = vector.shape_cast %80 : vector<1x12x128xf32> to vector<12x128xf32>
    %c6 = arith.constant 6 : index
    %c0_57 = arith.constant 0 : index
    %c0_58 = arith.constant 0 : index
    %82 = vector.load %arg2[%c6, %c0_57, %c0_58] : memref<9x1x128xf32, #tpu.memory_space<vmem>>, vector<1x1x128xf32>
    %83 = vector.shape_cast %82 : vector<1x1x128xf32> to vector<1x128xf32>
    %84 = vector.broadcast %83 : vector<1x128xf32> to vector<12x128xf32>
    %85 = arith.mulf %81, %84 : vector<12x128xf32>
    %86 = arith.addf %72, %85 : vector<12x128xf32>
    %c0_59 = arith.constant 0 : index
    %c24 = arith.constant 24 : index
    %c0_60 = arith.constant 0 : index
    %87 = vector.load %arg1[%c0_59, %c24, %c0_60] : memref<1x42x128xf32, #tpu.memory_space<vmem>>, vector<1x12x128xf32>
    %88 = vector.shape_cast %87 : vector<1x12x128xf32> to vector<12x128xf32>
    %c6_61 = arith.constant 6 : index
    %c0_62 = arith.constant 0 : index
    %c0_63 = arith.constant 0 : index
    %89 = vector.load %arg4[%c6_61, %c0_62, %c0_63] : memref<9x1x128xf32, #tpu.memory_space<vmem>>, vector<1x1x128xf32>
    %90 = vector.shape_cast %89 : vector<1x1x128xf32> to vector<1x128xf32>
    %91 = vector.broadcast %90 : vector<1x128xf32> to vector<12x128xf32>
    %92 = arith.mulf %88, %91 : vector<12x128xf32>
    %93 = arith.addf %79, %92 : vector<12x128xf32>
    %c0_64 = arith.constant 0 : index
    %c20 = arith.constant 20 : index
    %c0_65 = arith.constant 0 : index
    %94 = vector.load %arg1[%c0_64, %c20, %c0_65] : memref<1x42x128xf32, #tpu.memory_space<vmem>>, vector<1x12x128xf32>
    %95 = vector.shape_cast %94 : vector<1x12x128xf32> to vector<12x128xf32>
    %c7_66 = arith.constant 7 : index
    %c0_67 = arith.constant 0 : index
    %c0_68 = arith.constant 0 : index
    %96 = vector.load %arg2[%c7_66, %c0_67, %c0_68] : memref<9x1x128xf32, #tpu.memory_space<vmem>>, vector<1x1x128xf32>
    %97 = vector.shape_cast %96 : vector<1x1x128xf32> to vector<1x128xf32>
    %98 = vector.broadcast %97 : vector<1x128xf32> to vector<12x128xf32>
    %99 = arith.mulf %95, %98 : vector<12x128xf32>
    %100 = arith.addf %86, %99 : vector<12x128xf32>
    %c0_69 = arith.constant 0 : index
    %c26 = arith.constant 26 : index
    %c0_70 = arith.constant 0 : index
    %101 = vector.load %arg1[%c0_69, %c26, %c0_70] : memref<1x42x128xf32, #tpu.memory_space<vmem>>, vector<1x12x128xf32>
    %102 = vector.shape_cast %101 : vector<1x12x128xf32> to vector<12x128xf32>
    %c7_71 = arith.constant 7 : index
    %c0_72 = arith.constant 0 : index
    %c0_73 = arith.constant 0 : index
    %103 = vector.load %arg4[%c7_71, %c0_72, %c0_73] : memref<9x1x128xf32, #tpu.memory_space<vmem>>, vector<1x1x128xf32>
    %104 = vector.shape_cast %103 : vector<1x1x128xf32> to vector<1x128xf32>
    %105 = vector.broadcast %104 : vector<1x128xf32> to vector<12x128xf32>
    %106 = arith.mulf %102, %105 : vector<12x128xf32>
    %107 = arith.addf %93, %106 : vector<12x128xf32>
    %c0_74 = arith.constant 0 : index
    %c21 = arith.constant 21 : index
    %c0_75 = arith.constant 0 : index
    %108 = vector.load %arg1[%c0_74, %c21, %c0_75] : memref<1x42x128xf32, #tpu.memory_space<vmem>>, vector<1x12x128xf32>
    %109 = vector.shape_cast %108 : vector<1x12x128xf32> to vector<12x128xf32>
    %c8_76 = arith.constant 8 : index
    %c0_77 = arith.constant 0 : index
    %c0_78 = arith.constant 0 : index
    %110 = vector.load %arg2[%c8_76, %c0_77, %c0_78] : memref<9x1x128xf32, #tpu.memory_space<vmem>>, vector<1x1x128xf32>
    %111 = vector.shape_cast %110 : vector<1x1x128xf32> to vector<1x128xf32>
    %112 = vector.broadcast %111 : vector<1x128xf32> to vector<12x128xf32>
    %113 = arith.mulf %109, %112 : vector<12x128xf32>
    %114 = arith.addf %100, %113 : vector<12x128xf32>
    %c0_79 = arith.constant 0 : index
    %c28 = arith.constant 28 : index
    %c0_80 = arith.constant 0 : index
    %115 = vector.load %arg1[%c0_79, %c28, %c0_80] : memref<1x42x128xf32, #tpu.memory_space<vmem>>, vector<1x12x128xf32>
    %116 = vector.shape_cast %115 : vector<1x12x128xf32> to vector<12x128xf32>
    %c8_81 = arith.constant 8 : index
    %c0_82 = arith.constant 0 : index
    %c0_83 = arith.constant 0 : index
    %117 = vector.load %arg4[%c8_81, %c0_82, %c0_83] : memref<9x1x128xf32, #tpu.memory_space<vmem>>, vector<1x1x128xf32>
    %118 = vector.shape_cast %117 : vector<1x1x128xf32> to vector<1x128xf32>
    %119 = vector.broadcast %118 : vector<1x128xf32> to vector<12x128xf32>
    %120 = arith.mulf %116, %119 : vector<12x128xf32>
    %121 = arith.addf %107, %120 : vector<12x128xf32>
    %c0_84 = arith.constant 0 : index
    %c0_85 = arith.constant 0 : index
    %122 = vector.load %arg3[%c0_84, %c0_85] : memref<1x128xf32, #tpu.memory_space<vmem>>, vector<1x128xf32>
    %123 = vector.broadcast %122 : vector<1x128xf32> to vector<12x128xf32>
    %124 = arith.addf %114, %123 : vector<12x128xf32>
    %cst = arith.constant 0.000000e+00 : f32
    %125 = vector.broadcast %cst : f32 to vector<12x128xf32>
    %126 = arith.maximumf %124, %125 : vector<12x128xf32>
    %c0_86 = arith.constant 0 : index
    %c0_87 = arith.constant 0 : index
    %127 = vector.load %arg5[%c0_86, %c0_87] : memref<1x128xf32, #tpu.memory_space<vmem>>, vector<1x128xf32>
    %128 = vector.broadcast %127 : vector<1x128xf32> to vector<12x128xf32>
    %129 = arith.addf %121, %128 : vector<12x128xf32>
    %cst_88 = arith.constant 0.000000e+00 : f32
    %130 = vector.broadcast %cst_88 : f32 to vector<12x128xf32>
    %131 = arith.maximumf %129, %130 : vector<12x128xf32>
    %132 = arith.addf %126, %131 : vector<12x128xf32>
    %133 = arith.truncf %132 : vector<12x128xf32> to vector<12x128xbf16>
    %c0_89 = arith.constant 0 : index
    %c0_90 = arith.constant 0 : index
    %134 = vector.load %arg6[%c0_89, %c0_90] : memref<128x128xbf16, #tpu.memory_space<vmem>>, vector<128x128xbf16>
    %cst_91 = arith.constant dense<0.000000e+00> : vector<12x128xf32>
    %135 = tpu.matmul %133, %134, %cst_91 {dimension_numbers = #tpu.dot_dimension_numbers<[1], [0], [0], [1], [0, 0, 1, 1], [], []>} : vector<12x128xbf16>, vector<128x128xbf16>, vector<12x128xf32> -> vector<12x128xf32>
    %c0_92 = arith.constant 0 : index
    %c0_93 = arith.constant 0 : index
    %136 = vector.load %arg7[%c0_92, %c0_93] : memref<1x128xf32, #tpu.memory_space<vmem>>, vector<1x128xf32>
    %137 = vector.broadcast %136 : vector<1x128xf32> to vector<12x128xf32>
    %138 = arith.addf %135, %137 : vector<12x128xf32>
    %139 = arith.addf %138, %1 : vector<12x128xf32>
    %cst_94 = arith.constant 0.000000e+00 : f32
    %140 = vector.broadcast %cst_94 : f32 to vector<12x128xf32>
    %141 = arith.maximumf %139, %140 : vector<12x128xf32>
    %c0_95 = arith.constant 0 : index
    %c0_96 = arith.constant 0 : index
    %c0_97 = arith.constant 0 : index
    %142 = vector.load %arg8[%c0_95, %c0_96, %c0_97] : memref<1x12x128xf32, #tpu.memory_space<vmem>>, vector<1x12x128xf32>
    %143 = vector.shape_cast %142 : vector<1x12x128xf32> to vector<12x128xf32>
    %144 = vector.shape_cast %141 : vector<12x128xf32> to vector<1x12x128xf32>
    tpu.vector_store %arg8[%c0_95, %c0_96, %c0_97], %144 {strides = array<i32>} : memref<1x12x128xf32, #tpu.memory_space<vmem>>, vector<1x12x128xf32>,
    return
  }
  func.func @transform_0(%arg0: i32) -> (i32, i32, i32) {
    %c0_i32 = arith.constant 0 : i32
    %c0_i32_0 = arith.constant 0 : i32
    %c0_i32_1 = arith.constant 0 : i32
    return %arg0, %c0_i32, %c0_i32_0 : i32, i32, i32
  }
  func.func @transform_1(%arg0: i32) -> (i32, i32, i32) {
    %c0_i32 = arith.constant 0 : i32
    %c0_i32_0 = arith.constant 0 : i32
    %c0_i32_1 = arith.constant 0 : i32
    %c0_i32_2 = arith.constant 0 : i32
    return %c0_i32, %c0_i32_0, %c0_i32_1 : i32, i32, i32
  }
  func.func @transform_2(%arg0: i32) -> (i32, i32) {
    %c0_i32 = arith.constant 0 : i32
    %c0_i32_0 = arith.constant 0 : i32
    %c0_i32_1 = arith.constant 0 : i32
    return %c0_i32, %c0_i32_0 : i32, i32
  }
  func.func @transform_3(%arg0: i32) -> (i32, i32, i32) {
    %c0_i32 = arith.constant 0 : i32
    %c0_i32_0 = arith.constant 0 : i32
    %c0_i32_1 = arith.constant 0 : i32
    %c0_i32_2 = arith.constant 0 : i32
    return %c0_i32, %c0_i32_0, %c0_i32_1 : i32, i32, i32
  }
  func.func @transform_4(%arg0: i32) -> (i32, i32) {
    %c0_i32 = arith.constant 0 : i32
    %c0_i32_0 = arith.constant 0 : i32
    %c0_i32_1 = arith.constant 0 : i32
    return %c0_i32, %c0_i32_0 : i32, i32
  }
  func.func @transform_5(%arg0: i32) -> (i32, i32) {
    %c0_i32 = arith.constant 0 : i32
    %c0_i32_0 = arith.constant 0 : i32
    %c0_i32_1 = arith.constant 0 : i32
    return %c0_i32, %c0_i32_0 : i32, i32
  }
  func.func @transform_6(%arg0: i32) -> (i32, i32) {
    %c0_i32 = arith.constant 0 : i32
    %c0_i32_0 = arith.constant 0 : i32
    %c0_i32_1 = arith.constant 0 : i32
    return %c0_i32, %c0_i32_0 : i32, i32
  }
  func.func @transform_7(%arg0: i32) -> (i32, i32, i32) {
    %c0_i32 = arith.constant 0 : i32
    %c0_i32_0 = arith.constant 0 : i32
    %c0_i32_1 = arith.constant 0 : i32
    return %arg0, %c0_i32, %c0_i32_0 : i32, i32, i32
  }
}

module attributes {stable_mosaic.version = 11 : i64} {
  func.func @_multidil_block_kernel(%arg0: i32, %arg1: memref<1x110x128xf32, #tpu.memory_space<vmem>>, %arg2: memref<9x1x128xf32, #tpu.memory_space<vmem>>, %arg3: memref<1x128xf32, #tpu.memory_space<vmem>>, %arg4: memref<9x1x128xf32, #tpu.memory_space<vmem>>, %arg5: memref<1x128xf32, #tpu.memory_space<vmem>>, %arg6: memref<128x128xbf16, #tpu.memory_space<vmem>>, %arg7: memref<1x128xf32, #tpu.memory_space<vmem>>, %arg8: memref<1x20x128xf32, #tpu.memory_space<vmem>>) attributes {dimension_semantics = [#tpu.dimension_semantics<parallel>], iteration_bounds = array<i64: 2>, scalar_prefetch = 0 : i64, scratch_operands = 0 : i64, tpu.core_type = #tpu.core_type<tc>, window_params = [{transform_indices = @transform_0, window_bounds = array<i64: 1, 110, 128>}, {pipeline_mode = #tpu.pipeline_mode<synchronous>, transform_indices = @transform_1, window_bounds = array<i64: 9, 1, 128>}, {pipeline_mode = #tpu.pipeline_mode<synchronous>, transform_indices = @transform_2, window_bounds = array<i64: 1, 128>}, {pipeline_mode = #tpu.pipeline_mode<synchronous>, transform_indices = @transform_3, window_bounds = array<i64: 9, 1, 128>}, {pipeline_mode = #tpu.pipeline_mode<synchronous>, transform_indices = @transform_4, window_bounds = array<i64: 1, 128>}, {pipeline_mode = #tpu.pipeline_mode<synchronous>, transform_indices = @transform_5, window_bounds = array<i64: 128, 128>}, {pipeline_mode = #tpu.pipeline_mode<synchronous>, transform_indices = @transform_6, window_bounds = array<i64: 1, 128>}, {transform_indices = @transform_7, window_bounds = array<i64: 1, 20, 128>}]} {
    %c0 = arith.constant 0 : index
    %c44 = arith.constant 44 : index
    %c0_0 = arith.constant 0 : index
    %0 = vector.load %arg1[%c0, %c44, %c0_0] : memref<1x110x128xf32, #tpu.memory_space<vmem>>, vector<1x20x128xf32>
    %1 = vector.shape_cast %0 : vector<1x20x128xf32> to vector<20x128xf32>
    %c4 = arith.constant 4 : index
    %c0_1 = arith.constant 0 : index
    %c0_2 = arith.constant 0 : index
    %2 = vector.load %arg2[%c4, %c0_1, %c0_2] : memref<9x1x128xf32, #tpu.memory_space<vmem>>, vector<1x1x128xf32>
    %3 = vector.shape_cast %2 : vector<1x1x128xf32> to vector<1x128xf32>
    %4 = vector.broadcast %3 : vector<1x128xf32> to vector<20x128xf32>
    %5 = arith.mulf %1, %4 : vector<20x128xf32>
    %c4_3 = arith.constant 4 : index
    %c0_4 = arith.constant 0 : index
    %c0_5 = arith.constant 0 : index
    %6 = vector.load %arg4[%c4_3, %c0_4, %c0_5] : memref<9x1x128xf32, #tpu.memory_space<vmem>>, vector<1x1x128xf32>
    %7 = vector.shape_cast %6 : vector<1x1x128xf32> to vector<1x128xf32>
    %8 = vector.broadcast %7 : vector<1x128xf32> to vector<20x128xf32>
    %9 = arith.mulf %1, %8 : vector<20x128xf32>
    %c0_6 = arith.constant 0 : index
    %c33 = arith.constant 33 : index
    %c0_7 = arith.constant 0 : index
    %10 = vector.load %arg1[%c0_6, %c33, %c0_7] : memref<1x110x128xf32, #tpu.memory_space<vmem>>, vector<1x20x128xf32>
    %11 = vector.shape_cast %10 : vector<1x20x128xf32> to vector<20x128xf32>
    %c0_8 = arith.constant 0 : index
    %c0_9 = arith.constant 0 : index
    %c0_10 = arith.constant 0 : index
    %12 = vector.load %arg2[%c0_8, %c0_9, %c0_10] : memref<9x1x128xf32, #tpu.memory_space<vmem>>, vector<1x1x128xf32>
    %13 = vector.shape_cast %12 : vector<1x1x128xf32> to vector<1x128xf32>
    %14 = vector.broadcast %13 : vector<1x128xf32> to vector<20x128xf32>
    %15 = arith.mulf %11, %14 : vector<20x128xf32>
    %16 = arith.addf %5, %15 : vector<20x128xf32>
    %c0_11 = arith.constant 0 : index
    %c0_12 = arith.constant 0 : index
    %c0_13 = arith.constant 0 : index
    %17 = vector.load %arg1[%c0_11, %c0_12, %c0_13] : memref<1x110x128xf32, #tpu.memory_space<vmem>>, vector<1x20x128xf32>
    %18 = vector.shape_cast %17 : vector<1x20x128xf32> to vector<20x128xf32>
    %c0_14 = arith.constant 0 : index
    %c0_15 = arith.constant 0 : index
    %c0_16 = arith.constant 0 : index
    %19 = vector.load %arg4[%c0_14, %c0_15, %c0_16] : memref<9x1x128xf32, #tpu.memory_space<vmem>>, vector<1x1x128xf32>
    %20 = vector.shape_cast %19 : vector<1x1x128xf32> to vector<1x128xf32>
    %21 = vector.broadcast %20 : vector<1x128xf32> to vector<20x128xf32>
    %22 = arith.mulf %18, %21 : vector<20x128xf32>
    %23 = arith.addf %9, %22 : vector<20x128xf32>
    %c0_17 = arith.constant 0 : index
    %c34 = arith.constant 34 : index
    %c0_18 = arith.constant 0 : index
    %24 = vector.load %arg1[%c0_17, %c34, %c0_18] : memref<1x110x128xf32, #tpu.memory_space<vmem>>, vector<1x20x128xf32>
    %25 = vector.shape_cast %24 : vector<1x20x128xf32> to vector<20x128xf32>
    %c1 = arith.constant 1 : index
    %c0_19 = arith.constant 0 : index
    %c0_20 = arith.constant 0 : index
    %26 = vector.load %arg2[%c1, %c0_19, %c0_20] : memref<9x1x128xf32, #tpu.memory_space<vmem>>, vector<1x1x128xf32>
    %27 = vector.shape_cast %26 : vector<1x1x128xf32> to vector<1x128xf32>
    %28 = vector.broadcast %27 : vector<1x128xf32> to vector<20x128xf32>
    %29 = arith.mulf %25, %28 : vector<20x128xf32>
    %30 = arith.addf %16, %29 : vector<20x128xf32>
    %c0_21 = arith.constant 0 : index
    %c4_22 = arith.constant 4 : index
    %c0_23 = arith.constant 0 : index
    %31 = vector.load %arg1[%c0_21, %c4_22, %c0_23] : memref<1x110x128xf32, #tpu.memory_space<vmem>>, vector<1x20x128xf32>
    %32 = vector.shape_cast %31 : vector<1x20x128xf32> to vector<20x128xf32>
    %c1_24 = arith.constant 1 : index
    %c0_25 = arith.constant 0 : index
    %c0_26 = arith.constant 0 : index
    %33 = vector.load %arg4[%c1_24, %c0_25, %c0_26] : memref<9x1x128xf32, #tpu.memory_space<vmem>>, vector<1x1x128xf32>
    %34 = vector.shape_cast %33 : vector<1x1x128xf32> to vector<1x128xf32>
    %35 = vector.broadcast %34 : vector<1x128xf32> to vector<20x128xf32>
    %36 = arith.mulf %32, %35 : vector<20x128xf32>
    %37 = arith.addf %23, %36 : vector<20x128xf32>
    %c0_27 = arith.constant 0 : index
    %c35 = arith.constant 35 : index
    %c0_28 = arith.constant 0 : index
    %38 = vector.load %arg1[%c0_27, %c35, %c0_28] : memref<1x110x128xf32, #tpu.memory_space<vmem>>, vector<1x20x128xf32>
    %39 = vector.shape_cast %38 : vector<1x20x128xf32> to vector<20x128xf32>
    %c2 = arith.constant 2 : index
    %c0_29 = arith.constant 0 : index
    %c0_30 = arith.constant 0 : index
    %40 = vector.load %arg2[%c2, %c0_29, %c0_30] : memref<9x1x128xf32, #tpu.memory_space<vmem>>, vector<1x1x128xf32>
    %41 = vector.shape_cast %40 : vector<1x1x128xf32> to vector<1x128xf32>
    %42 = vector.broadcast %41 : vector<1x128xf32> to vector<20x128xf32>
    %43 = arith.mulf %39, %42 : vector<20x128xf32>
    %44 = arith.addf %30, %43 : vector<20x128xf32>
    %c0_31 = arith.constant 0 : index
    %c8 = arith.constant 8 : index
    %c0_32 = arith.constant 0 : index
    %45 = vector.load %arg1[%c0_31, %c8, %c0_32] : memref<1x110x128xf32, #tpu.memory_space<vmem>>, vector<1x20x128xf32>
    %46 = vector.shape_cast %45 : vector<1x20x128xf32> to vector<20x128xf32>
    %c2_33 = arith.constant 2 : index
    %c0_34 = arith.constant 0 : index
    %c0_35 = arith.constant 0 : index
    %47 = vector.load %arg4[%c2_33, %c0_34, %c0_35] : memref<9x1x128xf32, #tpu.memory_space<vmem>>, vector<1x1x128xf32>
    %48 = vector.shape_cast %47 : vector<1x1x128xf32> to vector<1x128xf32>
    %49 = vector.broadcast %48 : vector<1x128xf32> to vector<20x128xf32>
    %50 = arith.mulf %46, %49 : vector<20x128xf32>
    %51 = arith.addf %37, %50 : vector<20x128xf32>
    %c0_36 = arith.constant 0 : index
    %c43 = arith.constant 43 : index
    %c0_37 = arith.constant 0 : index
    %52 = vector.load %arg1[%c0_36, %c43, %c0_37] : memref<1x110x128xf32, #tpu.memory_space<vmem>>, vector<1x20x128xf32>
    %53 = vector.shape_cast %52 : vector<1x20x128xf32> to vector<20x128xf32>
    %c3 = arith.constant 3 : index
    %c0_38 = arith.constant 0 : index
    %c0_39 = arith.constant 0 : index
    %54 = vector.load %arg2[%c3, %c0_38, %c0_39] : memref<9x1x128xf32, #tpu.memory_space<vmem>>, vector<1x1x128xf32>
    %55 = vector.shape_cast %54 : vector<1x1x128xf32> to vector<1x128xf32>
    %56 = vector.broadcast %55 : vector<1x128xf32> to vector<20x128xf32>
    %57 = arith.mulf %53, %56 : vector<20x128xf32>
    %58 = arith.addf %44, %57 : vector<20x128xf32>
    %c0_40 = arith.constant 0 : index
    %c40 = arith.constant 40 : index
    %c0_41 = arith.constant 0 : index
    %59 = vector.load %arg1[%c0_40, %c40, %c0_41] : memref<1x110x128xf32, #tpu.memory_space<vmem>>, vector<1x20x128xf32>
    %60 = vector.shape_cast %59 : vector<1x20x128xf32> to vector<20x128xf32>
    %c3_42 = arith.constant 3 : index
    %c0_43 = arith.constant 0 : index
    %c0_44 = arith.constant 0 : index
    %61 = vector.load %arg4[%c3_42, %c0_43, %c0_44] : memref<9x1x128xf32, #tpu.memory_space<vmem>>, vector<1x1x128xf32>
    %62 = vector.shape_cast %61 : vector<1x1x128xf32> to vector<1x128xf32>
    %63 = vector.broadcast %62 : vector<1x128xf32> to vector<20x128xf32>
    %64 = arith.mulf %60, %63 : vector<20x128xf32>
    %65 = arith.addf %51, %64 : vector<20x128xf32>
    %c0_45 = arith.constant 0 : index
    %c45 = arith.constant 45 : index
    %c0_46 = arith.constant 0 : index
    %66 = vector.load %arg1[%c0_45, %c45, %c0_46] : memref<1x110x128xf32, #tpu.memory_space<vmem>>, vector<1x20x128xf32>
    %67 = vector.shape_cast %66 : vector<1x20x128xf32> to vector<20x128xf32>
    %c5 = arith.constant 5 : index
    %c0_47 = arith.constant 0 : index
    %c0_48 = arith.constant 0 : index
    %68 = vector.load %arg2[%c5, %c0_47, %c0_48] : memref<9x1x128xf32, #tpu.memory_space<vmem>>, vector<1x1x128xf32>
    %69 = vector.shape_cast %68 : vector<1x1x128xf32> to vector<1x128xf32>
    %70 = vector.broadcast %69 : vector<1x128xf32> to vector<20x128xf32>
    %71 = arith.mulf %67, %70 : vector<20x128xf32>
    %72 = arith.addf %58, %71 : vector<20x128xf32>
    %c0_49 = arith.constant 0 : index
    %c48 = arith.constant 48 : index
    %c0_50 = arith.constant 0 : index
    %73 = vector.load %arg1[%c0_49, %c48, %c0_50] : memref<1x110x128xf32, #tpu.memory_space<vmem>>, vector<1x20x128xf32>
    %74 = vector.shape_cast %73 : vector<1x20x128xf32> to vector<20x128xf32>
    %c5_51 = arith.constant 5 : index
    %c0_52 = arith.constant 0 : index
    %c0_53 = arith.constant 0 : index
    %75 = vector.load %arg4[%c5_51, %c0_52, %c0_53] : memref<9x1x128xf32, #tpu.memory_space<vmem>>, vector<1x1x128xf32>
    %76 = vector.shape_cast %75 : vector<1x1x128xf32> to vector<1x128xf32>
    %77 = vector.broadcast %76 : vector<1x128xf32> to vector<20x128xf32>
    %78 = arith.mulf %74, %77 : vector<20x128xf32>
    %79 = arith.addf %65, %78 : vector<20x128xf32>
    %c0_54 = arith.constant 0 : index
    %c53 = arith.constant 53 : index
    %c0_55 = arith.constant 0 : index
    %80 = vector.load %arg1[%c0_54, %c53, %c0_55] : memref<1x110x128xf32, #tpu.memory_space<vmem>>, vector<1x20x128xf32>
    %81 = vector.shape_cast %80 : vector<1x20x128xf32> to vector<20x128xf32>
    %c6 = arith.constant 6 : index
    %c0_56 = arith.constant 0 : index
    %c0_57 = arith.constant 0 : index
    %82 = vector.load %arg2[%c6, %c0_56, %c0_57] : memref<9x1x128xf32, #tpu.memory_space<vmem>>, vector<1x1x128xf32>
    %83 = vector.shape_cast %82 : vector<1x1x128xf32> to vector<1x128xf32>
    %84 = vector.broadcast %83 : vector<1x128xf32> to vector<20x128xf32>
    %85 = arith.mulf %81, %84 : vector<20x128xf32>
    %86 = arith.addf %72, %85 : vector<20x128xf32>
    %c0_58 = arith.constant 0 : index
    %c80 = arith.constant 80 : index
    %c0_59 = arith.constant 0 : index
    %87 = vector.load %arg1[%c0_58, %c80, %c0_59] : memref<1x110x128xf32, #tpu.memory_space<vmem>>, vector<1x20x128xf32>
    %88 = vector.shape_cast %87 : vector<1x20x128xf32> to vector<20x128xf32>
    %c6_60 = arith.constant 6 : index
    %c0_61 = arith.constant 0 : index
    %c0_62 = arith.constant 0 : index
    %89 = vector.load %arg4[%c6_60, %c0_61, %c0_62] : memref<9x1x128xf32, #tpu.memory_space<vmem>>, vector<1x1x128xf32>
    %90 = vector.shape_cast %89 : vector<1x1x128xf32> to vector<1x128xf32>
    %91 = vector.broadcast %90 : vector<1x128xf32> to vector<20x128xf32>
    %92 = arith.mulf %88, %91 : vector<20x128xf32>
    %93 = arith.addf %79, %92 : vector<20x128xf32>
    %c0_63 = arith.constant 0 : index
    %c54 = arith.constant 54 : index
    %c0_64 = arith.constant 0 : index
    %94 = vector.load %arg1[%c0_63, %c54, %c0_64] : memref<1x110x128xf32, #tpu.memory_space<vmem>>, vector<1x20x128xf32>
    %95 = vector.shape_cast %94 : vector<1x20x128xf32> to vector<20x128xf32>
    %c7 = arith.constant 7 : index
    %c0_65 = arith.constant 0 : index
    %c0_66 = arith.constant 0 : index
    %96 = vector.load %arg2[%c7, %c0_65, %c0_66] : memref<9x1x128xf32, #tpu.memory_space<vmem>>, vector<1x1x128xf32>
    %97 = vector.shape_cast %96 : vector<1x1x128xf32> to vector<1x128xf32>
    %98 = vector.broadcast %97 : vector<1x128xf32> to vector<20x128xf32>
    %99 = arith.mulf %95, %98 : vector<20x128xf32>
    %100 = arith.addf %86, %99 : vector<20x128xf32>
    %c0_67 = arith.constant 0 : index
    %c84 = arith.constant 84 : index
    %c0_68 = arith.constant 0 : index
    %101 = vector.load %arg1[%c0_67, %c84, %c0_68] : memref<1x110x128xf32, #tpu.memory_space<vmem>>, vector<1x20x128xf32>
    %102 = vector.shape_cast %101 : vector<1x20x128xf32> to vector<20x128xf32>
    %c7_69 = arith.constant 7 : index
    %c0_70 = arith.constant 0 : index
    %c0_71 = arith.constant 0 : index
    %103 = vector.load %arg4[%c7_69, %c0_70, %c0_71] : memref<9x1x128xf32, #tpu.memory_space<vmem>>, vector<1x1x128xf32>
    %104 = vector.shape_cast %103 : vector<1x1x128xf32> to vector<1x128xf32>
    %105 = vector.broadcast %104 : vector<1x128xf32> to vector<20x128xf32>
    %106 = arith.mulf %102, %105 : vector<20x128xf32>
    %107 = arith.addf %93, %106 : vector<20x128xf32>
    %c0_72 = arith.constant 0 : index
    %c55 = arith.constant 55 : index
    %c0_73 = arith.constant 0 : index
    %108 = vector.load %arg1[%c0_72, %c55, %c0_73] : memref<1x110x128xf32, #tpu.memory_space<vmem>>, vector<1x20x128xf32>
    %109 = vector.shape_cast %108 : vector<1x20x128xf32> to vector<20x128xf32>
    %c8_74 = arith.constant 8 : index
    %c0_75 = arith.constant 0 : index
    %c0_76 = arith.constant 0 : index
    %110 = vector.load %arg2[%c8_74, %c0_75, %c0_76] : memref<9x1x128xf32, #tpu.memory_space<vmem>>, vector<1x1x128xf32>
    %111 = vector.shape_cast %110 : vector<1x1x128xf32> to vector<1x128xf32>
    %112 = vector.broadcast %111 : vector<1x128xf32> to vector<20x128xf32>
    %113 = arith.mulf %109, %112 : vector<20x128xf32>
    %114 = arith.addf %100, %113 : vector<20x128xf32>
    %c0_77 = arith.constant 0 : index
    %c88 = arith.constant 88 : index
    %c0_78 = arith.constant 0 : index
    %115 = vector.load %arg1[%c0_77, %c88, %c0_78] : memref<1x110x128xf32, #tpu.memory_space<vmem>>, vector<1x20x128xf32>
    %116 = vector.shape_cast %115 : vector<1x20x128xf32> to vector<20x128xf32>
    %c8_79 = arith.constant 8 : index
    %c0_80 = arith.constant 0 : index
    %c0_81 = arith.constant 0 : index
    %117 = vector.load %arg4[%c8_79, %c0_80, %c0_81] : memref<9x1x128xf32, #tpu.memory_space<vmem>>, vector<1x1x128xf32>
    %118 = vector.shape_cast %117 : vector<1x1x128xf32> to vector<1x128xf32>
    %119 = vector.broadcast %118 : vector<1x128xf32> to vector<20x128xf32>
    %120 = arith.mulf %116, %119 : vector<20x128xf32>
    %121 = arith.addf %107, %120 : vector<20x128xf32>
    %c0_82 = arith.constant 0 : index
    %c0_83 = arith.constant 0 : index
    %122 = vector.load %arg3[%c0_82, %c0_83] : memref<1x128xf32, #tpu.memory_space<vmem>>, vector<1x128xf32>
    %123 = vector.broadcast %122 : vector<1x128xf32> to vector<20x128xf32>
    %124 = arith.addf %114, %123 : vector<20x128xf32>
    %cst = arith.constant 0.000000e+00 : f32
    %125 = vector.broadcast %cst : f32 to vector<20x128xf32>
    %126 = arith.maximumf %124, %125 : vector<20x128xf32>
    %c0_84 = arith.constant 0 : index
    %c0_85 = arith.constant 0 : index
    %127 = vector.load %arg5[%c0_84, %c0_85] : memref<1x128xf32, #tpu.memory_space<vmem>>, vector<1x128xf32>
    %128 = vector.broadcast %127 : vector<1x128xf32> to vector<20x128xf32>
    %129 = arith.addf %121, %128 : vector<20x128xf32>
    %cst_86 = arith.constant 0.000000e+00 : f32
    %130 = vector.broadcast %cst_86 : f32 to vector<20x128xf32>
    %131 = arith.maximumf %129, %130 : vector<20x128xf32>
    %132 = arith.addf %126, %131 : vector<20x128xf32>
    %133 = arith.truncf %132 : vector<20x128xf32> to vector<20x128xbf16>
    %c0_87 = arith.constant 0 : index
    %c0_88 = arith.constant 0 : index
    %134 = vector.load %arg6[%c0_87, %c0_88] : memref<128x128xbf16, #tpu.memory_space<vmem>>, vector<128x128xbf16>
    %cst_89 = arith.constant dense<0.000000e+00> : vector<20x128xf32>
    %135 = tpu.matmul %133, %134, %cst_89 {dimension_numbers = #tpu.dot_dimension_numbers<[1], [0], [0], [1], [0, 0, 1, 1], [], []>} : vector<20x128xbf16>, vector<128x128xbf16>, vector<20x128xf32> -> vector<20x128xf32>
    %c0_90 = arith.constant 0 : index
    %c0_91 = arith.constant 0 : index
    %136 = vector.load %arg7[%c0_90, %c0_91] : memref<1x128xf32, #tpu.memory_space<vmem>>, vector<1x128xf32>
    %137 = vector.broadcast %136 : vector<1x128xf32> to vector<20x128xf32>
    %138 = arith.addf %135, %137 : vector<20x128xf32>
    %139 = arith.addf %138, %1 : vector<20x128xf32>
    %cst_92 = arith.constant 0.000000e+00 : f32
    %140 = vector.broadcast %cst_92 : f32 to vector<20x128xf32>
    %141 = arith.maximumf %139, %140 : vector<20x128xf32>
    %c0_93 = arith.constant 0 : index
    %c0_94 = arith.constant 0 : index
    %c0_95 = arith.constant 0 : index
    %142 = vector.load %arg8[%c0_93, %c0_94, %c0_95] : memref<1x20x128xf32, #tpu.memory_space<vmem>>, vector<1x20x128xf32>
    %143 = vector.shape_cast %142 : vector<1x20x128xf32> to vector<20x128xf32>
    %144 = vector.shape_cast %141 : vector<20x128xf32> to vector<1x20x128xf32>
    tpu.vector_store %arg8[%c0_93, %c0_94, %c0_95], %144 {strides = array<i32>} : memref<1x20x128xf32, #tpu.memory_space<vmem>>, vector<1x20x128xf32>,
    return
  }
  func.func @transform_0(%arg0: i32) -> (i32, i32, i32) {
    %c0_i32 = arith.constant 0 : i32
    %c0_i32_0 = arith.constant 0 : i32
    %c0_i32_1 = arith.constant 0 : i32
    return %arg0, %c0_i32, %c0_i32_0 : i32, i32, i32
  }
  func.func @transform_1(%arg0: i32) -> (i32, i32, i32) {
    %c0_i32 = arith.constant 0 : i32
    %c0_i32_0 = arith.constant 0 : i32
    %c0_i32_1 = arith.constant 0 : i32
    %c0_i32_2 = arith.constant 0 : i32
    return %c0_i32, %c0_i32_0, %c0_i32_1 : i32, i32, i32
  }
  func.func @transform_2(%arg0: i32) -> (i32, i32) {
    %c0_i32 = arith.constant 0 : i32
    %c0_i32_0 = arith.constant 0 : i32
    %c0_i32_1 = arith.constant 0 : i32
    return %c0_i32, %c0_i32_0 : i32, i32
  }
  func.func @transform_3(%arg0: i32) -> (i32, i32, i32) {
    %c0_i32 = arith.constant 0 : i32
    %c0_i32_0 = arith.constant 0 : i32
    %c0_i32_1 = arith.constant 0 : i32
    %c0_i32_2 = arith.constant 0 : i32
    return %c0_i32, %c0_i32_0, %c0_i32_1 : i32, i32, i32
  }
  func.func @transform_4(%arg0: i32) -> (i32, i32) {
    %c0_i32 = arith.constant 0 : i32
    %c0_i32_0 = arith.constant 0 : i32
    %c0_i32_1 = arith.constant 0 : i32
    return %c0_i32, %c0_i32_0 : i32, i32
  }
  func.func @transform_5(%arg0: i32) -> (i32, i32) {
    %c0_i32 = arith.constant 0 : i32
    %c0_i32_0 = arith.constant 0 : i32
    %c0_i32_1 = arith.constant 0 : i32
    return %c0_i32, %c0_i32_0 : i32, i32
  }
  func.func @transform_6(%arg0: i32) -> (i32, i32) {
    %c0_i32 = arith.constant 0 : i32
    %c0_i32_0 = arith.constant 0 : i32
    %c0_i32_1 = arith.constant 0 : i32
    return %c0_i32, %c0_i32_0 : i32, i32
  }
  func.func @transform_7(%arg0: i32) -> (i32, i32, i32) {
    %c0_i32 = arith.constant 0 : i32
    %c0_i32_0 = arith.constant 0 : i32
    %c0_i32_1 = arith.constant 0 : i32
    return %arg0, %c0_i32, %c0_i32_0 : i32, i32, i32
  }
}

module attributes {stable_mosaic.version = 11 : i64} {
  func.func @_multidil_block_kernel(%arg0: i32, %arg1: memref<1x342x128xf32, #tpu.memory_space<vmem>>, %arg2: memref<9x1x128xf32, #tpu.memory_space<vmem>>, %arg3: memref<1x128xf32, #tpu.memory_space<vmem>>, %arg4: memref<9x1x128xf32, #tpu.memory_space<vmem>>, %arg5: memref<1x128xf32, #tpu.memory_space<vmem>>, %arg6: memref<128x128xbf16, #tpu.memory_space<vmem>>, %arg7: memref<1x128xf32, #tpu.memory_space<vmem>>, %arg8: memref<1x36x128xf32, #tpu.memory_space<vmem>>) attributes {dimension_semantics = [#tpu.dimension_semantics<parallel>], iteration_bounds = array<i64: 2>, scalar_prefetch = 0 : i64, scratch_operands = 0 : i64, tpu.core_type = #tpu.core_type<tc>, window_params = [{transform_indices = @transform_0, window_bounds = array<i64: 1, 342, 128>}, {pipeline_mode = #tpu.pipeline_mode<synchronous>, transform_indices = @transform_1, window_bounds = array<i64: 9, 1, 128>}, {pipeline_mode = #tpu.pipeline_mode<synchronous>, transform_indices = @transform_2, window_bounds = array<i64: 1, 128>}, {pipeline_mode = #tpu.pipeline_mode<synchronous>, transform_indices = @transform_3, window_bounds = array<i64: 9, 1, 128>}, {pipeline_mode = #tpu.pipeline_mode<synchronous>, transform_indices = @transform_4, window_bounds = array<i64: 1, 128>}, {pipeline_mode = #tpu.pipeline_mode<synchronous>, transform_indices = @transform_5, window_bounds = array<i64: 128, 128>}, {pipeline_mode = #tpu.pipeline_mode<synchronous>, transform_indices = @transform_6, window_bounds = array<i64: 1, 128>}, {transform_indices = @transform_7, window_bounds = array<i64: 1, 36, 128>}]} {
    %c0 = arith.constant 0 : index
    %c152 = arith.constant 152 : index
    %c0_0 = arith.constant 0 : index
    %0 = vector.load %arg1[%c0, %c152, %c0_0] : memref<1x342x128xf32, #tpu.memory_space<vmem>>, vector<1x36x128xf32>
    %1 = vector.shape_cast %0 : vector<1x36x128xf32> to vector<36x128xf32>
    %c4 = arith.constant 4 : index
    %c0_1 = arith.constant 0 : index
    %c0_2 = arith.constant 0 : index
    %2 = vector.load %arg2[%c4, %c0_1, %c0_2] : memref<9x1x128xf32, #tpu.memory_space<vmem>>, vector<1x1x128xf32>
    %3 = vector.shape_cast %2 : vector<1x1x128xf32> to vector<1x128xf32>
    %4 = vector.broadcast %3 : vector<1x128xf32> to vector<36x128xf32>
    %5 = arith.mulf %1, %4 : vector<36x128xf32>
    %c4_3 = arith.constant 4 : index
    %c0_4 = arith.constant 0 : index
    %c0_5 = arith.constant 0 : index
    %6 = vector.load %arg4[%c4_3, %c0_4, %c0_5] : memref<9x1x128xf32, #tpu.memory_space<vmem>>, vector<1x1x128xf32>
    %7 = vector.shape_cast %6 : vector<1x1x128xf32> to vector<1x128xf32>
    %8 = vector.broadcast %7 : vector<1x128xf32> to vector<36x128xf32>
    %9 = arith.mulf %1, %8 : vector<36x128xf32>
    %c0_6 = arith.constant 0 : index
    %c133 = arith.constant 133 : index
    %c0_7 = arith.constant 0 : index
    %10 = vector.load %arg1[%c0_6, %c133, %c0_7] : memref<1x342x128xf32, #tpu.memory_space<vmem>>, vector<1x36x128xf32>
    %11 = vector.shape_cast %10 : vector<1x36x128xf32> to vector<36x128xf32>
    %c0_8 = arith.constant 0 : index
    %c0_9 = arith.constant 0 : index
    %c0_10 = arith.constant 0 : index
    %12 = vector.load %arg2[%c0_8, %c0_9, %c0_10] : memref<9x1x128xf32, #tpu.memory_space<vmem>>, vector<1x1x128xf32>
    %13 = vector.shape_cast %12 : vector<1x1x128xf32> to vector<1x128xf32>
    %14 = vector.broadcast %13 : vector<1x128xf32> to vector<36x128xf32>
    %15 = arith.mulf %11, %14 : vector<36x128xf32>
    %16 = arith.addf %5, %15 : vector<36x128xf32>
    %c0_11 = arith.constant 0 : index
    %c0_12 = arith.constant 0 : index
    %c0_13 = arith.constant 0 : index
    %17 = vector.load %arg1[%c0_11, %c0_12, %c0_13] : memref<1x342x128xf32, #tpu.memory_space<vmem>>, vector<1x36x128xf32>
    %18 = vector.shape_cast %17 : vector<1x36x128xf32> to vector<36x128xf32>
    %c0_14 = arith.constant 0 : index
    %c0_15 = arith.constant 0 : index
    %c0_16 = arith.constant 0 : index
    %19 = vector.load %arg4[%c0_14, %c0_15, %c0_16] : memref<9x1x128xf32, #tpu.memory_space<vmem>>, vector<1x1x128xf32>
    %20 = vector.shape_cast %19 : vector<1x1x128xf32> to vector<1x128xf32>
    %21 = vector.broadcast %20 : vector<1x128xf32> to vector<36x128xf32>
    %22 = arith.mulf %18, %21 : vector<36x128xf32>
    %23 = arith.addf %9, %22 : vector<36x128xf32>
    %c0_17 = arith.constant 0 : index
    %c134 = arith.constant 134 : index
    %c0_18 = arith.constant 0 : index
    %24 = vector.load %arg1[%c0_17, %c134, %c0_18] : memref<1x342x128xf32, #tpu.memory_space<vmem>>, vector<1x36x128xf32>
    %25 = vector.shape_cast %24 : vector<1x36x128xf32> to vector<36x128xf32>
    %c1 = arith.constant 1 : index
    %c0_19 = arith.constant 0 : index
    %c0_20 = arith.constant 0 : index
    %26 = vector.load %arg2[%c1, %c0_19, %c0_20] : memref<9x1x128xf32, #tpu.memory_space<vmem>>, vector<1x1x128xf32>
    %27 = vector.shape_cast %26 : vector<1x1x128xf32> to vector<1x128xf32>
    %28 = vector.broadcast %27 : vector<1x128xf32> to vector<36x128xf32>
    %29 = arith.mulf %25, %28 : vector<36x128xf32>
    %30 = arith.addf %16, %29 : vector<36x128xf32>
    %c0_21 = arith.constant 0 : index
    %c8 = arith.constant 8 : index
    %c0_22 = arith.constant 0 : index
    %31 = vector.load %arg1[%c0_21, %c8, %c0_22] : memref<1x342x128xf32, #tpu.memory_space<vmem>>, vector<1x36x128xf32>
    %32 = vector.shape_cast %31 : vector<1x36x128xf32> to vector<36x128xf32>
    %c1_23 = arith.constant 1 : index
    %c0_24 = arith.constant 0 : index
    %c0_25 = arith.constant 0 : index
    %33 = vector.load %arg4[%c1_23, %c0_24, %c0_25] : memref<9x1x128xf32, #tpu.memory_space<vmem>>, vector<1x1x128xf32>
    %34 = vector.shape_cast %33 : vector<1x1x128xf32> to vector<1x128xf32>
    %35 = vector.broadcast %34 : vector<1x128xf32> to vector<36x128xf32>
    %36 = arith.mulf %32, %35 : vector<36x128xf32>
    %37 = arith.addf %23, %36 : vector<36x128xf32>
    %c0_26 = arith.constant 0 : index
    %c135 = arith.constant 135 : index
    %c0_27 = arith.constant 0 : index
    %38 = vector.load %arg1[%c0_26, %c135, %c0_27] : memref<1x342x128xf32, #tpu.memory_space<vmem>>, vector<1x36x128xf32>
    %39 = vector.shape_cast %38 : vector<1x36x128xf32> to vector<36x128xf32>
    %c2 = arith.constant 2 : index
    %c0_28 = arith.constant 0 : index
    %c0_29 = arith.constant 0 : index
    %40 = vector.load %arg2[%c2, %c0_28, %c0_29] : memref<9x1x128xf32, #tpu.memory_space<vmem>>, vector<1x1x128xf32>
    %41 = vector.shape_cast %40 : vector<1x1x128xf32> to vector<1x128xf32>
    %42 = vector.broadcast %41 : vector<1x128xf32> to vector<36x128xf32>
    %43 = arith.mulf %39, %42 : vector<36x128xf32>
    %44 = arith.addf %30, %43 : vector<36x128xf32>
    %c0_30 = arith.constant 0 : index
    %c16 = arith.constant 16 : index
    %c0_31 = arith.constant 0 : index
    %45 = vector.load %arg1[%c0_30, %c16, %c0_31] : memref<1x342x128xf32, #tpu.memory_space<vmem>>, vector<1x36x128xf32>
    %46 = vector.shape_cast %45 : vector<1x36x128xf32> to vector<36x128xf32>
    %c2_32 = arith.constant 2 : index
    %c0_33 = arith.constant 0 : index
    %c0_34 = arith.constant 0 : index
    %47 = vector.load %arg4[%c2_32, %c0_33, %c0_34] : memref<9x1x128xf32, #tpu.memory_space<vmem>>, vector<1x1x128xf32>
    %48 = vector.shape_cast %47 : vector<1x1x128xf32> to vector<1x128xf32>
    %49 = vector.broadcast %48 : vector<1x128xf32> to vector<36x128xf32>
    %50 = arith.mulf %46, %49 : vector<36x128xf32>
    %51 = arith.addf %37, %50 : vector<36x128xf32>
    %c0_35 = arith.constant 0 : index
    %c151 = arith.constant 151 : index
    %c0_36 = arith.constant 0 : index
    %52 = vector.load %arg1[%c0_35, %c151, %c0_36] : memref<1x342x128xf32, #tpu.memory_space<vmem>>, vector<1x36x128xf32>
    %53 = vector.shape_cast %52 : vector<1x36x128xf32> to vector<36x128xf32>
    %c3 = arith.constant 3 : index
    %c0_37 = arith.constant 0 : index
    %c0_38 = arith.constant 0 : index
    %54 = vector.load %arg2[%c3, %c0_37, %c0_38] : memref<9x1x128xf32, #tpu.memory_space<vmem>>, vector<1x1x128xf32>
    %55 = vector.shape_cast %54 : vector<1x1x128xf32> to vector<1x128xf32>
    %56 = vector.broadcast %55 : vector<1x128xf32> to vector<36x128xf32>
    %57 = arith.mulf %53, %56 : vector<36x128xf32>
    %58 = arith.addf %44, %57 : vector<36x128xf32>
    %c0_39 = arith.constant 0 : index
    %c144 = arith.constant 144 : index
    %c0_40 = arith.constant 0 : index
    %59 = vector.load %arg1[%c0_39, %c144, %c0_40] : memref<1x342x128xf32, #tpu.memory_space<vmem>>, vector<1x36x128xf32>
    %60 = vector.shape_cast %59 : vector<1x36x128xf32> to vector<36x128xf32>
    %c3_41 = arith.constant 3 : index
    %c0_42 = arith.constant 0 : index
    %c0_43 = arith.constant 0 : index
    %61 = vector.load %arg4[%c3_41, %c0_42, %c0_43] : memref<9x1x128xf32, #tpu.memory_space<vmem>>, vector<1x1x128xf32>
    %62 = vector.shape_cast %61 : vector<1x1x128xf32> to vector<1x128xf32>
    %63 = vector.broadcast %62 : vector<1x128xf32> to vector<36x128xf32>
    %64 = arith.mulf %60, %63 : vector<36x128xf32>
    %65 = arith.addf %51, %64 : vector<36x128xf32>
    %c0_44 = arith.constant 0 : index
    %c153 = arith.constant 153 : index
    %c0_45 = arith.constant 0 : index
    %66 = vector.load %arg1[%c0_44, %c153, %c0_45] : memref<1x342x128xf32, #tpu.memory_space<vmem>>, vector<1x36x128xf32>
    %67 = vector.shape_cast %66 : vector<1x36x128xf32> to vector<36x128xf32>
    %c5 = arith.constant 5 : index
    %c0_46 = arith.constant 0 : index
    %c0_47 = arith.constant 0 : index
    %68 = vector.load %arg2[%c5, %c0_46, %c0_47] : memref<9x1x128xf32, #tpu.memory_space<vmem>>, vector<1x1x128xf32>
    %69 = vector.shape_cast %68 : vector<1x1x128xf32> to vector<1x128xf32>
    %70 = vector.broadcast %69 : vector<1x128xf32> to vector<36x128xf32>
    %71 = arith.mulf %67, %70 : vector<36x128xf32>
    %72 = arith.addf %58, %71 : vector<36x128xf32>
    %c0_48 = arith.constant 0 : index
    %c160 = arith.constant 160 : index
    %c0_49 = arith.constant 0 : index
    %73 = vector.load %arg1[%c0_48, %c160, %c0_49] : memref<1x342x128xf32, #tpu.memory_space<vmem>>, vector<1x36x128xf32>
    %74 = vector.shape_cast %73 : vector<1x36x128xf32> to vector<36x128xf32>
    %c5_50 = arith.constant 5 : index
    %c0_51 = arith.constant 0 : index
    %c0_52 = arith.constant 0 : index
    %75 = vector.load %arg4[%c5_50, %c0_51, %c0_52] : memref<9x1x128xf32, #tpu.memory_space<vmem>>, vector<1x1x128xf32>
    %76 = vector.shape_cast %75 : vector<1x1x128xf32> to vector<1x128xf32>
    %77 = vector.broadcast %76 : vector<1x128xf32> to vector<36x128xf32>
    %78 = arith.mulf %74, %77 : vector<36x128xf32>
    %79 = arith.addf %65, %78 : vector<36x128xf32>
    %c0_53 = arith.constant 0 : index
    %c169 = arith.constant 169 : index
    %c0_54 = arith.constant 0 : index
    %80 = vector.load %arg1[%c0_53, %c169, %c0_54] : memref<1x342x128xf32, #tpu.memory_space<vmem>>, vector<1x36x128xf32>
    %81 = vector.shape_cast %80 : vector<1x36x128xf32> to vector<36x128xf32>
    %c6 = arith.constant 6 : index
    %c0_55 = arith.constant 0 : index
    %c0_56 = arith.constant 0 : index
    %82 = vector.load %arg2[%c6, %c0_55, %c0_56] : memref<9x1x128xf32, #tpu.memory_space<vmem>>, vector<1x1x128xf32>
    %83 = vector.shape_cast %82 : vector<1x1x128xf32> to vector<1x128xf32>
    %84 = vector.broadcast %83 : vector<1x128xf32> to vector<36x128xf32>
    %85 = arith.mulf %81, %84 : vector<36x128xf32>
    %86 = arith.addf %72, %85 : vector<36x128xf32>
    %c0_57 = arith.constant 0 : index
    %c288 = arith.constant 288 : index
    %c0_58 = arith.constant 0 : index
    %87 = vector.load %arg1[%c0_57, %c288, %c0_58] : memref<1x342x128xf32, #tpu.memory_space<vmem>>, vector<1x36x128xf32>
    %88 = vector.shape_cast %87 : vector<1x36x128xf32> to vector<36x128xf32>
    %c6_59 = arith.constant 6 : index
    %c0_60 = arith.constant 0 : index
    %c0_61 = arith.constant 0 : index
    %89 = vector.load %arg4[%c6_59, %c0_60, %c0_61] : memref<9x1x128xf32, #tpu.memory_space<vmem>>, vector<1x1x128xf32>
    %90 = vector.shape_cast %89 : vector<1x1x128xf32> to vector<1x128xf32>
    %91 = vector.broadcast %90 : vector<1x128xf32> to vector<36x128xf32>
    %92 = arith.mulf %88, %91 : vector<36x128xf32>
    %93 = arith.addf %79, %92 : vector<36x128xf32>
    %c0_62 = arith.constant 0 : index
    %c170 = arith.constant 170 : index
    %c0_63 = arith.constant 0 : index
    %94 = vector.load %arg1[%c0_62, %c170, %c0_63] : memref<1x342x128xf32, #tpu.memory_space<vmem>>, vector<1x36x128xf32>
    %95 = vector.shape_cast %94 : vector<1x36x128xf32> to vector<36x128xf32>
    %c7 = arith.constant 7 : index
    %c0_64 = arith.constant 0 : index
    %c0_65 = arith.constant 0 : index
    %96 = vector.load %arg2[%c7, %c0_64, %c0_65] : memref<9x1x128xf32, #tpu.memory_space<vmem>>, vector<1x1x128xf32>
    %97 = vector.shape_cast %96 : vector<1x1x128xf32> to vector<1x128xf32>
    %98 = vector.broadcast %97 : vector<1x128xf32> to vector<36x128xf32>
    %99 = arith.mulf %95, %98 : vector<36x128xf32>
    %100 = arith.addf %86, %99 : vector<36x128xf32>
    %c0_66 = arith.constant 0 : index
    %c296 = arith.constant 296 : index
    %c0_67 = arith.constant 0 : index
    %101 = vector.load %arg1[%c0_66, %c296, %c0_67] : memref<1x342x128xf32, #tpu.memory_space<vmem>>, vector<1x36x128xf32>
    %102 = vector.shape_cast %101 : vector<1x36x128xf32> to vector<36x128xf32>
    %c7_68 = arith.constant 7 : index
    %c0_69 = arith.constant 0 : index
    %c0_70 = arith.constant 0 : index
    %103 = vector.load %arg4[%c7_68, %c0_69, %c0_70] : memref<9x1x128xf32, #tpu.memory_space<vmem>>, vector<1x1x128xf32>
    %104 = vector.shape_cast %103 : vector<1x1x128xf32> to vector<1x128xf32>
    %105 = vector.broadcast %104 : vector<1x128xf32> to vector<36x128xf32>
    %106 = arith.mulf %102, %105 : vector<36x128xf32>
    %107 = arith.addf %93, %106 : vector<36x128xf32>
    %c0_71 = arith.constant 0 : index
    %c171 = arith.constant 171 : index
    %c0_72 = arith.constant 0 : index
    %108 = vector.load %arg1[%c0_71, %c171, %c0_72] : memref<1x342x128xf32, #tpu.memory_space<vmem>>, vector<1x36x128xf32>
    %109 = vector.shape_cast %108 : vector<1x36x128xf32> to vector<36x128xf32>
    %c8_73 = arith.constant 8 : index
    %c0_74 = arith.constant 0 : index
    %c0_75 = arith.constant 0 : index
    %110 = vector.load %arg2[%c8_73, %c0_74, %c0_75] : memref<9x1x128xf32, #tpu.memory_space<vmem>>, vector<1x1x128xf32>
    %111 = vector.shape_cast %110 : vector<1x1x128xf32> to vector<1x128xf32>
    %112 = vector.broadcast %111 : vector<1x128xf32> to vector<36x128xf32>
    %113 = arith.mulf %109, %112 : vector<36x128xf32>
    %114 = arith.addf %100, %113 : vector<36x128xf32>
    %c0_76 = arith.constant 0 : index
    %c304 = arith.constant 304 : index
    %c0_77 = arith.constant 0 : index
    %115 = vector.load %arg1[%c0_76, %c304, %c0_77] : memref<1x342x128xf32, #tpu.memory_space<vmem>>, vector<1x36x128xf32>
    %116 = vector.shape_cast %115 : vector<1x36x128xf32> to vector<36x128xf32>
    %c8_78 = arith.constant 8 : index
    %c0_79 = arith.constant 0 : index
    %c0_80 = arith.constant 0 : index
    %117 = vector.load %arg4[%c8_78, %c0_79, %c0_80] : memref<9x1x128xf32, #tpu.memory_space<vmem>>, vector<1x1x128xf32>
    %118 = vector.shape_cast %117 : vector<1x1x128xf32> to vector<1x128xf32>
    %119 = vector.broadcast %118 : vector<1x128xf32> to vector<36x128xf32>
    %120 = arith.mulf %116, %119 : vector<36x128xf32>
    %121 = arith.addf %107, %120 : vector<36x128xf32>
    %c0_81 = arith.constant 0 : index
    %c0_82 = arith.constant 0 : index
    %122 = vector.load %arg3[%c0_81, %c0_82] : memref<1x128xf32, #tpu.memory_space<vmem>>, vector<1x128xf32>
    %123 = vector.broadcast %122 : vector<1x128xf32> to vector<36x128xf32>
    %124 = arith.addf %114, %123 : vector<36x128xf32>
    %cst = arith.constant 0.000000e+00 : f32
    %125 = vector.broadcast %cst : f32 to vector<36x128xf32>
    %126 = arith.maximumf %124, %125 : vector<36x128xf32>
    %c0_83 = arith.constant 0 : index
    %c0_84 = arith.constant 0 : index
    %127 = vector.load %arg5[%c0_83, %c0_84] : memref<1x128xf32, #tpu.memory_space<vmem>>, vector<1x128xf32>
    %128 = vector.broadcast %127 : vector<1x128xf32> to vector<36x128xf32>
    %129 = arith.addf %121, %128 : vector<36x128xf32>
    %cst_85 = arith.constant 0.000000e+00 : f32
    %130 = vector.broadcast %cst_85 : f32 to vector<36x128xf32>
    %131 = arith.maximumf %129, %130 : vector<36x128xf32>
    %132 = arith.addf %126, %131 : vector<36x128xf32>
    %133 = arith.truncf %132 : vector<36x128xf32> to vector<36x128xbf16>
    %c0_86 = arith.constant 0 : index
    %c0_87 = arith.constant 0 : index
    %134 = vector.load %arg6[%c0_86, %c0_87] : memref<128x128xbf16, #tpu.memory_space<vmem>>, vector<128x128xbf16>
    %cst_88 = arith.constant dense<0.000000e+00> : vector<36x128xf32>
    %135 = tpu.matmul %133, %134, %cst_88 {dimension_numbers = #tpu.dot_dimension_numbers<[1], [0], [0], [1], [0, 0, 1, 1], [], []>} : vector<36x128xbf16>, vector<128x128xbf16>, vector<36x128xf32> -> vector<36x128xf32>
    %c0_89 = arith.constant 0 : index
    %c0_90 = arith.constant 0 : index
    %136 = vector.load %arg7[%c0_89, %c0_90] : memref<1x128xf32, #tpu.memory_space<vmem>>, vector<1x128xf32>
    %137 = vector.broadcast %136 : vector<1x128xf32> to vector<36x128xf32>
    %138 = arith.addf %135, %137 : vector<36x128xf32>
    %139 = arith.addf %138, %1 : vector<36x128xf32>
    %cst_91 = arith.constant 0.000000e+00 : f32
    %140 = vector.broadcast %cst_91 : f32 to vector<36x128xf32>
    %141 = arith.maximumf %139, %140 : vector<36x128xf32>
    %c0_92 = arith.constant 0 : index
    %c0_93 = arith.constant 0 : index
    %c0_94 = arith.constant 0 : index
    %142 = vector.load %arg8[%c0_92, %c0_93, %c0_94] : memref<1x36x128xf32, #tpu.memory_space<vmem>>, vector<1x36x128xf32>
    %143 = vector.shape_cast %142 : vector<1x36x128xf32> to vector<36x128xf32>
    %144 = vector.shape_cast %141 : vector<36x128xf32> to vector<1x36x128xf32>
    tpu.vector_store %arg8[%c0_92, %c0_93, %c0_94], %144 {strides = array<i32>} : memref<1x36x128xf32, #tpu.memory_space<vmem>>, vector<1x36x128xf32>,
    return
  }
  func.func @transform_0(%arg0: i32) -> (i32, i32, i32) {
    %c0_i32 = arith.constant 0 : i32
    %c0_i32_0 = arith.constant 0 : i32
    %c0_i32_1 = arith.constant 0 : i32
    return %arg0, %c0_i32, %c0_i32_0 : i32, i32, i32
  }
  func.func @transform_1(%arg0: i32) -> (i32, i32, i32) {
    %c0_i32 = arith.constant 0 : i32
    %c0_i32_0 = arith.constant 0 : i32
    %c0_i32_1 = arith.constant 0 : i32
    %c0_i32_2 = arith.constant 0 : i32
    return %c0_i32, %c0_i32_0, %c0_i32_1 : i32, i32, i32
  }
  func.func @transform_2(%arg0: i32) -> (i32, i32) {
    %c0_i32 = arith.constant 0 : i32
    %c0_i32_0 = arith.constant 0 : i32
    %c0_i32_1 = arith.constant 0 : i32
    return %c0_i32, %c0_i32_0 : i32, i32
  }
  func.func @transform_3(%arg0: i32) -> (i32, i32, i32) {
    %c0_i32 = arith.constant 0 : i32
    %c0_i32_0 = arith.constant 0 : i32
    %c0_i32_1 = arith.constant 0 : i32
    %c0_i32_2 = arith.constant 0 : i32
    return %c0_i32, %c0_i32_0, %c0_i32_1 : i32, i32, i32
  }
  func.func @transform_4(%arg0: i32) -> (i32, i32) {
    %c0_i32 = arith.constant 0 : i32
    %c0_i32_0 = arith.constant 0 : i32
    %c0_i32_1 = arith.constant 0 : i32
    return %c0_i32, %c0_i32_0 : i32, i32
  }
  func.func @transform_5(%arg0: i32) -> (i32, i32) {
    %c0_i32 = arith.constant 0 : i32
    %c0_i32_0 = arith.constant 0 : i32
    %c0_i32_1 = arith.constant 0 : i32
    return %c0_i32, %c0_i32_0 : i32, i32
  }
  func.func @transform_6(%arg0: i32) -> (i32, i32) {
    %c0_i32 = arith.constant 0 : i32
    %c0_i32_0 = arith.constant 0 : i32
    %c0_i32_1 = arith.constant 0 : i32
    return %c0_i32, %c0_i32_0 : i32, i32
  }
  func.func @transform_7(%arg0: i32) -> (i32, i32, i32) {
    %c0_i32 = arith.constant 0 : i32
    %c0_i32_0 = arith.constant 0 : i32
    %c0_i32_1 = arith.constant 0 : i32
    return %arg0, %c0_i32, %c0_i32_0 : i32, i32, i32
  }
}

module attributes {stable_mosaic.version = 11 : i64} {
  func.func @_multidil_block_kernel(%arg0: i32, %arg1: memref<1x1190x128xf32, #tpu.memory_space<vmem>>, %arg2: memref<9x1x128xf32, #tpu.memory_space<vmem>>, %arg3: memref<1x128xf32, #tpu.memory_space<vmem>>, %arg4: memref<9x1x128xf32, #tpu.memory_space<vmem>>, %arg5: memref<1x128xf32, #tpu.memory_space<vmem>>, %arg6: memref<128x128xbf16, #tpu.memory_space<vmem>>, %arg7: memref<1x128xf32, #tpu.memory_space<vmem>>, %arg8: memref<1x68x128xf32, #tpu.memory_space<vmem>>) attributes {dimension_semantics = [#tpu.dimension_semantics<parallel>], iteration_bounds = array<i64: 2>, scalar_prefetch = 0 : i64, scratch_operands = 0 : i64, tpu.core_type = #tpu.core_type<tc>, window_params = [{transform_indices = @transform_0, window_bounds = array<i64: 1, 1190, 128>}, {pipeline_mode = #tpu.pipeline_mode<synchronous>, transform_indices = @transform_1, window_bounds = array<i64: 9, 1, 128>}, {pipeline_mode = #tpu.pipeline_mode<synchronous>, transform_indices = @transform_2, window_bounds = array<i64: 1, 128>}, {pipeline_mode = #tpu.pipeline_mode<synchronous>, transform_indices = @transform_3, window_bounds = array<i64: 9, 1, 128>}, {pipeline_mode = #tpu.pipeline_mode<synchronous>, transform_indices = @transform_4, window_bounds = array<i64: 1, 128>}, {pipeline_mode = #tpu.pipeline_mode<synchronous>, transform_indices = @transform_5, window_bounds = array<i64: 128, 128>}, {pipeline_mode = #tpu.pipeline_mode<synchronous>, transform_indices = @transform_6, window_bounds = array<i64: 1, 128>}, {transform_indices = @transform_7, window_bounds = array<i64: 1, 68, 128>}]} {
    %c0 = arith.constant 0 : index
    %c560 = arith.constant 560 : index
    %c0_0 = arith.constant 0 : index
    %0 = vector.load %arg1[%c0, %c560, %c0_0] : memref<1x1190x128xf32, #tpu.memory_space<vmem>>, vector<1x68x128xf32>
    %1 = vector.shape_cast %0 : vector<1x68x128xf32> to vector<68x128xf32>
    %c4 = arith.constant 4 : index
    %c0_1 = arith.constant 0 : index
    %c0_2 = arith.constant 0 : index
    %2 = vector.load %arg2[%c4, %c0_1, %c0_2] : memref<9x1x128xf32, #tpu.memory_space<vmem>>, vector<1x1x128xf32>
    %3 = vector.shape_cast %2 : vector<1x1x128xf32> to vector<1x128xf32>
    %4 = vector.broadcast %3 : vector<1x128xf32> to vector<68x128xf32>
    %5 = arith.mulf %1, %4 : vector<68x128xf32>
    %c4_3 = arith.constant 4 : index
    %c0_4 = arith.constant 0 : index
    %c0_5 = arith.constant 0 : index
    %6 = vector.load %arg4[%c4_3, %c0_4, %c0_5] : memref<9x1x128xf32, #tpu.memory_space<vmem>>, vector<1x1x128xf32>
    %7 = vector.shape_cast %6 : vector<1x1x128xf32> to vector<1x128xf32>
    %8 = vector.broadcast %7 : vector<1x128xf32> to vector<68x128xf32>
    %9 = arith.mulf %1, %8 : vector<68x128xf32>
    %c0_6 = arith.constant 0 : index
    %c525 = arith.constant 525 : index
    %c0_7 = arith.constant 0 : index
    %10 = vector.load %arg1[%c0_6, %c525, %c0_7] : memref<1x1190x128xf32, #tpu.memory_space<vmem>>, vector<1x68x128xf32>
    %11 = vector.shape_cast %10 : vector<1x68x128xf32> to vector<68x128xf32>
    %c0_8 = arith.constant 0 : index
    %c0_9 = arith.constant 0 : index
    %c0_10 = arith.constant 0 : index
    %12 = vector.load %arg2[%c0_8, %c0_9, %c0_10] : memref<9x1x128xf32, #tpu.memory_space<vmem>>, vector<1x1x128xf32>
    %13 = vector.shape_cast %12 : vector<1x1x128xf32> to vector<1x128xf32>
    %14 = vector.broadcast %13 : vector<1x128xf32> to vector<68x128xf32>
    %15 = arith.mulf %11, %14 : vector<68x128xf32>
    %16 = arith.addf %5, %15 : vector<68x128xf32>
    %c0_11 = arith.constant 0 : index
    %c0_12 = arith.constant 0 : index
    %c0_13 = arith.constant 0 : index
    %17 = vector.load %arg1[%c0_11, %c0_12, %c0_13] : memref<1x1190x128xf32, #tpu.memory_space<vmem>>, vector<1x68x128xf32>
    %18 = vector.shape_cast %17 : vector<1x68x128xf32> to vector<68x128xf32>
    %c0_14 = arith.constant 0 : index
    %c0_15 = arith.constant 0 : index
    %c0_16 = arith.constant 0 : index
    %19 = vector.load %arg4[%c0_14, %c0_15, %c0_16] : memref<9x1x128xf32, #tpu.memory_space<vmem>>, vector<1x1x128xf32>
    %20 = vector.shape_cast %19 : vector<1x1x128xf32> to vector<1x128xf32>
    %21 = vector.broadcast %20 : vector<1x128xf32> to vector<68x128xf32>
    %22 = arith.mulf %18, %21 : vector<68x128xf32>
    %23 = arith.addf %9, %22 : vector<68x128xf32>
    %c0_17 = arith.constant 0 : index
    %c526 = arith.constant 526 : index
    %c0_18 = arith.constant 0 : index
    %24 = vector.load %arg1[%c0_17, %c526, %c0_18] : memref<1x1190x128xf32, #tpu.memory_space<vmem>>, vector<1x68x128xf32>
    %25 = vector.shape_cast %24 : vector<1x68x128xf32> to vector<68x128xf32>
    %c1 = arith.constant 1 : index
    %c0_19 = arith.constant 0 : index
    %c0_20 = arith.constant 0 : index
    %26 = vector.load %arg2[%c1, %c0_19, %c0_20] : memref<9x1x128xf32, #tpu.memory_space<vmem>>, vector<1x1x128xf32>
    %27 = vector.shape_cast %26 : vector<1x1x128xf32> to vector<1x128xf32>
    %28 = vector.broadcast %27 : vector<1x128xf32> to vector<68x128xf32>
    %29 = arith.mulf %25, %28 : vector<68x128xf32>
    %30 = arith.addf %16, %29 : vector<68x128xf32>
    %c0_21 = arith.constant 0 : index
    %c16 = arith.constant 16 : index
    %c0_22 = arith.constant 0 : index
    %31 = vector.load %arg1[%c0_21, %c16, %c0_22] : memref<1x1190x128xf32, #tpu.memory_space<vmem>>, vector<1x68x128xf32>
    %32 = vector.shape_cast %31 : vector<1x68x128xf32> to vector<68x128xf32>
    %c1_23 = arith.constant 1 : index
    %c0_24 = arith.constant 0 : index
    %c0_25 = arith.constant 0 : index
    %33 = vector.load %arg4[%c1_23, %c0_24, %c0_25] : memref<9x1x128xf32, #tpu.memory_space<vmem>>, vector<1x1x128xf32>
    %34 = vector.shape_cast %33 : vector<1x1x128xf32> to vector<1x128xf32>
    %35 = vector.broadcast %34 : vector<1x128xf32> to vector<68x128xf32>
    %36 = arith.mulf %32, %35 : vector<68x128xf32>
    %37 = arith.addf %23, %36 : vector<68x128xf32>
    %c0_26 = arith.constant 0 : index
    %c527 = arith.constant 527 : index
    %c0_27 = arith.constant 0 : index
    %38 = vector.load %arg1[%c0_26, %c527, %c0_27] : memref<1x1190x128xf32, #tpu.memory_space<vmem>>, vector<1x68x128xf32>
    %39 = vector.shape_cast %38 : vector<1x68x128xf32> to vector<68x128xf32>
    %c2 = arith.constant 2 : index
    %c0_28 = arith.constant 0 : index
    %c0_29 = arith.constant 0 : index
    %40 = vector.load %arg2[%c2, %c0_28, %c0_29] : memref<9x1x128xf32, #tpu.memory_space<vmem>>, vector<1x1x128xf32>
    %41 = vector.shape_cast %40 : vector<1x1x128xf32> to vector<1x128xf32>
    %42 = vector.broadcast %41 : vector<1x128xf32> to vector<68x128xf32>
    %43 = arith.mulf %39, %42 : vector<68x128xf32>
    %44 = arith.addf %30, %43 : vector<68x128xf32>
    %c0_30 = arith.constant 0 : index
    %c32 = arith.constant 32 : index
    %c0_31 = arith.constant 0 : index
    %45 = vector.load %arg1[%c0_30, %c32, %c0_31] : memref<1x1190x128xf32, #tpu.memory_space<vmem>>, vector<1x68x128xf32>
    %46 = vector.shape_cast %45 : vector<1x68x128xf32> to vector<68x128xf32>
    %c2_32 = arith.constant 2 : index
    %c0_33 = arith.constant 0 : index
    %c0_34 = arith.constant 0 : index
    %47 = vector.load %arg4[%c2_32, %c0_33, %c0_34] : memref<9x1x128xf32, #tpu.memory_space<vmem>>, vector<1x1x128xf32>
    %48 = vector.shape_cast %47 : vector<1x1x128xf32> to vector<1x128xf32>
    %49 = vector.broadcast %48 : vector<1x128xf32> to vector<68x128xf32>
    %50 = arith.mulf %46, %49 : vector<68x128xf32>
    %51 = arith.addf %37, %50 : vector<68x128xf32>
    %c0_35 = arith.constant 0 : index
    %c559 = arith.constant 559 : index
    %c0_36 = arith.constant 0 : index
    %52 = vector.load %arg1[%c0_35, %c559, %c0_36] : memref<1x1190x128xf32, #tpu.memory_space<vmem>>, vector<1x68x128xf32>
    %53 = vector.shape_cast %52 : vector<1x68x128xf32> to vector<68x128xf32>
    %c3 = arith.constant 3 : index
    %c0_37 = arith.constant 0 : index
    %c0_38 = arith.constant 0 : index
    %54 = vector.load %arg2[%c3, %c0_37, %c0_38] : memref<9x1x128xf32, #tpu.memory_space<vmem>>, vector<1x1x128xf32>
    %55 = vector.shape_cast %54 : vector<1x1x128xf32> to vector<1x128xf32>
    %56 = vector.broadcast %55 : vector<1x128xf32> to vector<68x128xf32>
    %57 = arith.mulf %53, %56 : vector<68x128xf32>
    %58 = arith.addf %44, %57 : vector<68x128xf32>
    %c0_39 = arith.constant 0 : index
    %c544 = arith.constant 544 : index
    %c0_40 = arith.constant 0 : index
    %59 = vector.load %arg1[%c0_39, %c544, %c0_40] : memref<1x1190x128xf32, #tpu.memory_space<vmem>>, vector<1x68x128xf32>
    %60 = vector.shape_cast %59 : vector<1x68x128xf32> to vector<68x128xf32>
    %c3_41 = arith.constant 3 : index
    %c0_42 = arith.constant 0 : index
    %c0_43 = arith.constant 0 : index
    %61 = vector.load %arg4[%c3_41, %c0_42, %c0_43] : memref<9x1x128xf32, #tpu.memory_space<vmem>>, vector<1x1x128xf32>
    %62 = vector.shape_cast %61 : vector<1x1x128xf32> to vector<1x128xf32>
    %63 = vector.broadcast %62 : vector<1x128xf32> to vector<68x128xf32>
    %64 = arith.mulf %60, %63 : vector<68x128xf32>
    %65 = arith.addf %51, %64 : vector<68x128xf32>
    %c0_44 = arith.constant 0 : index
    %c561 = arith.constant 561 : index
    %c0_45 = arith.constant 0 : index
    %66 = vector.load %arg1[%c0_44, %c561, %c0_45] : memref<1x1190x128xf32, #tpu.memory_space<vmem>>, vector<1x68x128xf32>
    %67 = vector.shape_cast %66 : vector<1x68x128xf32> to vector<68x128xf32>
    %c5 = arith.constant 5 : index
    %c0_46 = arith.constant 0 : index
    %c0_47 = arith.constant 0 : index
    %68 = vector.load %arg2[%c5, %c0_46, %c0_47] : memref<9x1x128xf32, #tpu.memory_space<vmem>>, vector<1x1x128xf32>
    %69 = vector.shape_cast %68 : vector<1x1x128xf32> to vector<1x128xf32>
    %70 = vector.broadcast %69 : vector<1x128xf32> to vector<68x128xf32>
    %71 = arith.mulf %67, %70 : vector<68x128xf32>
    %72 = arith.addf %58, %71 : vector<68x128xf32>
    %c0_48 = arith.constant 0 : index
    %c576 = arith.constant 576 : index
    %c0_49 = arith.constant 0 : index
    %73 = vector.load %arg1[%c0_48, %c576, %c0_49] : memref<1x1190x128xf32, #tpu.memory_space<vmem>>, vector<1x68x128xf32>
    %74 = vector.shape_cast %73 : vector<1x68x128xf32> to vector<68x128xf32>
    %c5_50 = arith.constant 5 : index
    %c0_51 = arith.constant 0 : index
    %c0_52 = arith.constant 0 : index
    %75 = vector.load %arg4[%c5_50, %c0_51, %c0_52] : memref<9x1x128xf32, #tpu.memory_space<vmem>>, vector<1x1x128xf32>
    %76 = vector.shape_cast %75 : vector<1x1x128xf32> to vector<1x128xf32>
    %77 = vector.broadcast %76 : vector<1x128xf32> to vector<68x128xf32>
    %78 = arith.mulf %74, %77 : vector<68x128xf32>
    %79 = arith.addf %65, %78 : vector<68x128xf32>
    %c0_53 = arith.constant 0 : index
    %c593 = arith.constant 593 : index
    %c0_54 = arith.constant 0 : index
    %80 = vector.load %arg1[%c0_53, %c593, %c0_54] : memref<1x1190x128xf32, #tpu.memory_space<vmem>>, vector<1x68x128xf32>
    %81 = vector.shape_cast %80 : vector<1x68x128xf32> to vector<68x128xf32>
    %c6 = arith.constant 6 : index
    %c0_55 = arith.constant 0 : index
    %c0_56 = arith.constant 0 : index
    %82 = vector.load %arg2[%c6, %c0_55, %c0_56] : memref<9x1x128xf32, #tpu.memory_space<vmem>>, vector<1x1x128xf32>
    %83 = vector.shape_cast %82 : vector<1x1x128xf32> to vector<1x128xf32>
    %84 = vector.broadcast %83 : vector<1x128xf32> to vector<68x128xf32>
    %85 = arith.mulf %81, %84 : vector<68x128xf32>
    %86 = arith.addf %72, %85 : vector<68x128xf32>
    %c0_57 = arith.constant 0 : index
    %c1088 = arith.constant 1088 : index
    %c0_58 = arith.constant 0 : index
    %87 = vector.load %arg1[%c0_57, %c1088, %c0_58] : memref<1x1190x128xf32, #tpu.memory_space<vmem>>, vector<1x68x128xf32>
    %88 = vector.shape_cast %87 : vector<1x68x128xf32> to vector<68x128xf32>
    %c6_59 = arith.constant 6 : index
    %c0_60 = arith.constant 0 : index
    %c0_61 = arith.constant 0 : index
    %89 = vector.load %arg4[%c6_59, %c0_60, %c0_61] : memref<9x1x128xf32, #tpu.memory_space<vmem>>, vector<1x1x128xf32>
    %90 = vector.shape_cast %89 : vector<1x1x128xf32> to vector<1x128xf32>
    %91 = vector.broadcast %90 : vector<1x128xf32> to vector<68x128xf32>
    %92 = arith.mulf %88, %91 : vector<68x128xf32>
    %93 = arith.addf %79, %92 : vector<68x128xf32>
    %c0_62 = arith.constant 0 : index
    %c594 = arith.constant 594 : index
    %c0_63 = arith.constant 0 : index
    %94 = vector.load %arg1[%c0_62, %c594, %c0_63] : memref<1x1190x128xf32, #tpu.memory_space<vmem>>, vector<1x68x128xf32>
    %95 = vector.shape_cast %94 : vector<1x68x128xf32> to vector<68x128xf32>
    %c7 = arith.constant 7 : index
    %c0_64 = arith.constant 0 : index
    %c0_65 = arith.constant 0 : index
    %96 = vector.load %arg2[%c7, %c0_64, %c0_65] : memref<9x1x128xf32, #tpu.memory_space<vmem>>, vector<1x1x128xf32>
    %97 = vector.shape_cast %96 : vector<1x1x128xf32> to vector<1x128xf32>
    %98 = vector.broadcast %97 : vector<1x128xf32> to vector<68x128xf32>
    %99 = arith.mulf %95, %98 : vector<68x128xf32>
    %100 = arith.addf %86, %99 : vector<68x128xf32>
    %c0_66 = arith.constant 0 : index
    %c1104 = arith.constant 1104 : index
    %c0_67 = arith.constant 0 : index
    %101 = vector.load %arg1[%c0_66, %c1104, %c0_67] : memref<1x1190x128xf32, #tpu.memory_space<vmem>>, vector<1x68x128xf32>
    %102 = vector.shape_cast %101 : vector<1x68x128xf32> to vector<68x128xf32>
    %c7_68 = arith.constant 7 : index
    %c0_69 = arith.constant 0 : index
    %c0_70 = arith.constant 0 : index
    %103 = vector.load %arg4[%c7_68, %c0_69, %c0_70] : memref<9x1x128xf32, #tpu.memory_space<vmem>>, vector<1x1x128xf32>
    %104 = vector.shape_cast %103 : vector<1x1x128xf32> to vector<1x128xf32>
    %105 = vector.broadcast %104 : vector<1x128xf32> to vector<68x128xf32>
    %106 = arith.mulf %102, %105 : vector<68x128xf32>
    %107 = arith.addf %93, %106 : vector<68x128xf32>
    %c0_71 = arith.constant 0 : index
    %c595 = arith.constant 595 : index
    %c0_72 = arith.constant 0 : index
    %108 = vector.load %arg1[%c0_71, %c595, %c0_72] : memref<1x1190x128xf32, #tpu.memory_space<vmem>>, vector<1x68x128xf32>
    %109 = vector.shape_cast %108 : vector<1x68x128xf32> to vector<68x128xf32>
    %c8 = arith.constant 8 : index
    %c0_73 = arith.constant 0 : index
    %c0_74 = arith.constant 0 : index
    %110 = vector.load %arg2[%c8, %c0_73, %c0_74] : memref<9x1x128xf32, #tpu.memory_space<vmem>>, vector<1x1x128xf32>
    %111 = vector.shape_cast %110 : vector<1x1x128xf32> to vector<1x128xf32>
    %112 = vector.broadcast %111 : vector<1x128xf32> to vector<68x128xf32>
    %113 = arith.mulf %109, %112 : vector<68x128xf32>
    %114 = arith.addf %100, %113 : vector<68x128xf32>
    %c0_75 = arith.constant 0 : index
    %c1120 = arith.constant 1120 : index
    %c0_76 = arith.constant 0 : index
    %115 = vector.load %arg1[%c0_75, %c1120, %c0_76] : memref<1x1190x128xf32, #tpu.memory_space<vmem>>, vector<1x68x128xf32>
    %116 = vector.shape_cast %115 : vector<1x68x128xf32> to vector<68x128xf32>
    %c8_77 = arith.constant 8 : index
    %c0_78 = arith.constant 0 : index
    %c0_79 = arith.constant 0 : index
    %117 = vector.load %arg4[%c8_77, %c0_78, %c0_79] : memref<9x1x128xf32, #tpu.memory_space<vmem>>, vector<1x1x128xf32>
    %118 = vector.shape_cast %117 : vector<1x1x128xf32> to vector<1x128xf32>
    %119 = vector.broadcast %118 : vector<1x128xf32> to vector<68x128xf32>
    %120 = arith.mulf %116, %119 : vector<68x128xf32>
    %121 = arith.addf %107, %120 : vector<68x128xf32>
    %c0_80 = arith.constant 0 : index
    %c0_81 = arith.constant 0 : index
    %122 = vector.load %arg3[%c0_80, %c0_81] : memref<1x128xf32, #tpu.memory_space<vmem>>, vector<1x128xf32>
    %123 = vector.broadcast %122 : vector<1x128xf32> to vector<68x128xf32>
    %124 = arith.addf %114, %123 : vector<68x128xf32>
    %cst = arith.constant 0.000000e+00 : f32
    %125 = vector.broadcast %cst : f32 to vector<68x128xf32>
    %126 = arith.maximumf %124, %125 : vector<68x128xf32>
    %c0_82 = arith.constant 0 : index
    %c0_83 = arith.constant 0 : index
    %127 = vector.load %arg5[%c0_82, %c0_83] : memref<1x128xf32, #tpu.memory_space<vmem>>, vector<1x128xf32>
    %128 = vector.broadcast %127 : vector<1x128xf32> to vector<68x128xf32>
    %129 = arith.addf %121, %128 : vector<68x128xf32>
    %cst_84 = arith.constant 0.000000e+00 : f32
    %130 = vector.broadcast %cst_84 : f32 to vector<68x128xf32>
    %131 = arith.maximumf %129, %130 : vector<68x128xf32>
    %132 = arith.addf %126, %131 : vector<68x128xf32>
    %133 = arith.truncf %132 : vector<68x128xf32> to vector<68x128xbf16>
    %c0_85 = arith.constant 0 : index
    %c0_86 = arith.constant 0 : index
    %134 = vector.load %arg6[%c0_85, %c0_86] : memref<128x128xbf16, #tpu.memory_space<vmem>>, vector<128x128xbf16>
    %cst_87 = arith.constant dense<0.000000e+00> : vector<68x128xf32>
    %135 = tpu.matmul %133, %134, %cst_87 {dimension_numbers = #tpu.dot_dimension_numbers<[1], [0], [0], [1], [0, 0, 1, 1], [], []>} : vector<68x128xbf16>, vector<128x128xbf16>, vector<68x128xf32> -> vector<68x128xf32>
    %c0_88 = arith.constant 0 : index
    %c0_89 = arith.constant 0 : index
    %136 = vector.load %arg7[%c0_88, %c0_89] : memref<1x128xf32, #tpu.memory_space<vmem>>, vector<1x128xf32>
    %137 = vector.broadcast %136 : vector<1x128xf32> to vector<68x128xf32>
    %138 = arith.addf %135, %137 : vector<68x128xf32>
    %139 = arith.addf %138, %1 : vector<68x128xf32>
    %cst_90 = arith.constant 0.000000e+00 : f32
    %140 = vector.broadcast %cst_90 : f32 to vector<68x128xf32>
    %141 = arith.maximumf %139, %140 : vector<68x128xf32>
    %c0_91 = arith.constant 0 : index
    %c0_92 = arith.constant 0 : index
    %c0_93 = arith.constant 0 : index
    %142 = vector.load %arg8[%c0_91, %c0_92, %c0_93] : memref<1x68x128xf32, #tpu.memory_space<vmem>>, vector<1x68x128xf32>
    %143 = vector.shape_cast %142 : vector<1x68x128xf32> to vector<68x128xf32>
    %144 = vector.shape_cast %141 : vector<68x128xf32> to vector<1x68x128xf32>
    tpu.vector_store %arg8[%c0_91, %c0_92, %c0_93], %144 {strides = array<i32>} : memref<1x68x128xf32, #tpu.memory_space<vmem>>, vector<1x68x128xf32>,
    return
  }
  func.func @transform_0(%arg0: i32) -> (i32, i32, i32) {
    %c0_i32 = arith.constant 0 : i32
    %c0_i32_0 = arith.constant 0 : i32
    %c0_i32_1 = arith.constant 0 : i32
    return %arg0, %c0_i32, %c0_i32_0 : i32, i32, i32
  }
  func.func @transform_1(%arg0: i32) -> (i32, i32, i32) {
    %c0_i32 = arith.constant 0 : i32
    %c0_i32_0 = arith.constant 0 : i32
    %c0_i32_1 = arith.constant 0 : i32
    %c0_i32_2 = arith.constant 0 : i32
    return %c0_i32, %c0_i32_0, %c0_i32_1 : i32, i32, i32
  }
  func.func @transform_2(%arg0: i32) -> (i32, i32) {
    %c0_i32 = arith.constant 0 : i32
    %c0_i32_0 = arith.constant 0 : i32
    %c0_i32_1 = arith.constant 0 : i32
    return %c0_i32, %c0_i32_0 : i32, i32
  }
  func.func @transform_3(%arg0: i32) -> (i32, i32, i32) {
    %c0_i32 = arith.constant 0 : i32
    %c0_i32_0 = arith.constant 0 : i32
    %c0_i32_1 = arith.constant 0 : i32
    %c0_i32_2 = arith.constant 0 : i32
    return %c0_i32, %c0_i32_0, %c0_i32_1 : i32, i32, i32
  }
  func.func @transform_4(%arg0: i32) -> (i32, i32) {
    %c0_i32 = arith.constant 0 : i32
    %c0_i32_0 = arith.constant 0 : i32
    %c0_i32_1 = arith.constant 0 : i32
    return %c0_i32, %c0_i32_0 : i32, i32
  }
  func.func @transform_5(%arg0: i32) -> (i32, i32) {
    %c0_i32 = arith.constant 0 : i32
    %c0_i32_0 = arith.constant 0 : i32
    %c0_i32_1 = arith.constant 0 : i32
    return %c0_i32, %c0_i32_0 : i32, i32
  }
  func.func @transform_6(%arg0: i32) -> (i32, i32) {
    %c0_i32 = arith.constant 0 : i32
    %c0_i32_0 = arith.constant 0 : i32
    %c0_i32_1 = arith.constant 0 : i32
    return %c0_i32, %c0_i32_0 : i32, i32
  }
  func.func @transform_7(%arg0: i32) -> (i32, i32, i32) {
    %c0_i32 = arith.constant 0 : i32
    %c0_i32_0 = arith.constant 0 : i32
    %c0_i32_1 = arith.constant 0 : i32
    return %arg0, %c0_i32, %c0_i32_0 : i32, i32, i32
  }
}

module attributes {stable_mosaic.version = 11 : i64} {
  func.func @kernel(%arg0: i32, %arg1: memref<16x256xbf16, #tpu.memory_space<vmem>>, %arg2: memref<256x64xbf16, #tpu.memory_space<vmem>>, %arg3: memref<1x64xf32, #tpu.memory_space<vmem>>, %arg4: memref<16x64xf32, #tpu.memory_space<vmem>>) attributes {dimension_semantics = [#tpu.dimension_semantics<parallel>], iteration_bounds = array<i64: 1>, scalar_prefetch = 0 : i64, scratch_operands = 0 : i64, tpu.core_type = #tpu.core_type<tc>, window_params = [{transform_indices = @transform_0, window_bounds = array<i64: 16, 256>}, {pipeline_mode = #tpu.pipeline_mode<synchronous>, transform_indices = @transform_1, window_bounds = array<i64: 256, 64>}, {pipeline_mode = #tpu.pipeline_mode<synchronous>, transform_indices = @transform_2, window_bounds = array<i64: 1, 64>}, {transform_indices = @transform_3, window_bounds = array<i64: 16, 64>}]} {
    %c0 = arith.constant 0 : index
    %c0_0 = arith.constant 0 : index
    %0 = vector.load %arg1[%c0, %c0_0] : memref<16x256xbf16, #tpu.memory_space<vmem>>, vector<16x256xbf16>
    %c0_1 = arith.constant 0 : index
    %c0_2 = arith.constant 0 : index
    %1 = vector.load %arg2[%c0_1, %c0_2] : memref<256x64xbf16, #tpu.memory_space<vmem>>, vector<256x64xbf16>
    %cst = arith.constant dense<0.000000e+00> : vector<16x64xf32>
    %2 = tpu.matmul %0, %1, %cst {dimension_numbers = #tpu.dot_dimension_numbers<[1], [0], [0], [1], [0, 0, 1, 1], [], []>} : vector<16x256xbf16>, vector<256x64xbf16>, vector<16x64xf32> -> vector<16x64xf32>
    %c0_3 = arith.constant 0 : index
    %c0_4 = arith.constant 0 : index
    %3 = vector.load %arg3[%c0_3, %c0_4] : memref<1x64xf32, #tpu.memory_space<vmem>>, vector<1x64xf32>
    %4 = vector.broadcast %3 : vector<1x64xf32> to vector<16x64xf32>
    %5 = arith.addf %2, %4 : vector<16x64xf32>
    %cst_5 = arith.constant 0.000000e+00 : f32
    %6 = vector.broadcast %cst_5 : f32 to vector<16x64xf32>
    %7 = arith.maximumf %5, %6 : vector<16x64xf32>
    %c0_6 = arith.constant 0 : index
    %c0_7 = arith.constant 0 : index
    %8 = vector.load %arg4[%c0_6, %c0_7] : memref<16x64xf32, #tpu.memory_space<vmem>>, vector<16x64xf32>
    tpu.vector_store %arg4[%c0_6, %c0_7], %7 {strides = array<i32>} : memref<16x64xf32, #tpu.memory_space<vmem>>, vector<16x64xf32>,
    return
  }
  func.func @transform_0(%arg0: i32) -> (i32, i32) {
    %c0_i32 = arith.constant 0 : i32
    %c0_i32_0 = arith.constant 0 : i32
    return %arg0, %c0_i32 : i32, i32
  }
  func.func @transform_1(%arg0: i32) -> (i32, i32) {
    %c0_i32 = arith.constant 0 : i32
    %c0_i32_0 = arith.constant 0 : i32
    %c0_i32_1 = arith.constant 0 : i32
    return %c0_i32, %c0_i32_0 : i32, i32
  }
  func.func @transform_2(%arg0: i32) -> (i32, i32) {
    %c0_i32 = arith.constant 0 : i32
    %c0_i32_0 = arith.constant 0 : i32
    %c0_i32_1 = arith.constant 0 : i32
    return %c0_i32, %c0_i32_0 : i32, i32
  }
  func.func @transform_3(%arg0: i32) -> (i32, i32) {
    %c0_i32 = arith.constant 0 : i32
    %c0_i32_0 = arith.constant 0 : i32
    return %arg0, %c0_i32 : i32, i32
  }
}

module attributes {stable_mosaic.version = 11 : i64} {
  func.func @kernel(%arg0: i32, %arg1: memref<16x128xbf16, #tpu.memory_space<vmem>>, %arg2: memref<128x64xbf16, #tpu.memory_space<vmem>>, %arg3: memref<1x64xf32, #tpu.memory_space<vmem>>, %arg4: memref<16x64xf32, #tpu.memory_space<vmem>>) attributes {dimension_semantics = [#tpu.dimension_semantics<parallel>], iteration_bounds = array<i64: 1>, scalar_prefetch = 0 : i64, scratch_operands = 0 : i64, tpu.core_type = #tpu.core_type<tc>, window_params = [{transform_indices = @transform_0, window_bounds = array<i64: 16, 128>}, {pipeline_mode = #tpu.pipeline_mode<synchronous>, transform_indices = @transform_1, window_bounds = array<i64: 128, 64>}, {pipeline_mode = #tpu.pipeline_mode<synchronous>, transform_indices = @transform_2, window_bounds = array<i64: 1, 64>}, {transform_indices = @transform_3, window_bounds = array<i64: 16, 64>}]} {
    %c0 = arith.constant 0 : index
    %c0_0 = arith.constant 0 : index
    %0 = vector.load %arg1[%c0, %c0_0] : memref<16x128xbf16, #tpu.memory_space<vmem>>, vector<16x128xbf16>
    %c0_1 = arith.constant 0 : index
    %c0_2 = arith.constant 0 : index
    %1 = vector.load %arg2[%c0_1, %c0_2] : memref<128x64xbf16, #tpu.memory_space<vmem>>, vector<128x64xbf16>
    %cst = arith.constant dense<0.000000e+00> : vector<16x64xf32>
    %2 = tpu.matmul %0, %1, %cst {dimension_numbers = #tpu.dot_dimension_numbers<[1], [0], [0], [1], [0, 0, 1, 1], [], []>} : vector<16x128xbf16>, vector<128x64xbf16>, vector<16x64xf32> -> vector<16x64xf32>
    %c0_3 = arith.constant 0 : index
    %c0_4 = arith.constant 0 : index
    %3 = vector.load %arg3[%c0_3, %c0_4] : memref<1x64xf32, #tpu.memory_space<vmem>>, vector<1x64xf32>
    %4 = vector.broadcast %3 : vector<1x64xf32> to vector<16x64xf32>
    %5 = arith.addf %2, %4 : vector<16x64xf32>
    %cst_5 = arith.constant 0.000000e+00 : f32
    %6 = vector.broadcast %cst_5 : f32 to vector<16x64xf32>
    %7 = arith.maximumf %5, %6 : vector<16x64xf32>
    %c0_6 = arith.constant 0 : index
    %c0_7 = arith.constant 0 : index
    %8 = vector.load %arg4[%c0_6, %c0_7] : memref<16x64xf32, #tpu.memory_space<vmem>>, vector<16x64xf32>
    tpu.vector_store %arg4[%c0_6, %c0_7], %7 {strides = array<i32>} : memref<16x64xf32, #tpu.memory_space<vmem>>, vector<16x64xf32>,
    return
  }
  func.func @transform_0(%arg0: i32) -> (i32, i32) {
    %c0_i32 = arith.constant 0 : i32
    %c0_i32_0 = arith.constant 0 : i32
    return %arg0, %c0_i32 : i32, i32
  }
  func.func @transform_1(%arg0: i32) -> (i32, i32) {
    %c0_i32 = arith.constant 0 : i32
    %c0_i32_0 = arith.constant 0 : i32
    %c0_i32_1 = arith.constant 0 : i32
    return %c0_i32, %c0_i32_0 : i32, i32
  }
  func.func @transform_2(%arg0: i32) -> (i32, i32) {
    %c0_i32 = arith.constant 0 : i32
    %c0_i32_0 = arith.constant 0 : i32
    %c0_i32_1 = arith.constant 0 : i32
    return %c0_i32, %c0_i32_0 : i32, i32
  }
  func.func @transform_3(%arg0: i32) -> (i32, i32) {
    %c0_i32 = arith.constant 0 : i32
    %c0_i32_0 = arith.constant 0 : i32
    return %arg0, %c0_i32 : i32, i32
  }
}

module attributes {stable_mosaic.version = 11 : i64} {
  func.func @kernel(%arg0: i32, %arg1: memref<16x512xbf16, #tpu.memory_space<vmem>>, %arg2: memref<512x64xbf16, #tpu.memory_space<vmem>>, %arg3: memref<1x64xf32, #tpu.memory_space<vmem>>, %arg4: memref<16x64xf32, #tpu.memory_space<vmem>>) attributes {dimension_semantics = [#tpu.dimension_semantics<parallel>], iteration_bounds = array<i64: 1>, scalar_prefetch = 0 : i64, scratch_operands = 0 : i64, tpu.core_type = #tpu.core_type<tc>, window_params = [{transform_indices = @transform_0, window_bounds = array<i64: 16, 512>}, {pipeline_mode = #tpu.pipeline_mode<synchronous>, transform_indices = @transform_1, window_bounds = array<i64: 512, 64>}, {pipeline_mode = #tpu.pipeline_mode<synchronous>, transform_indices = @transform_2, window_bounds = array<i64: 1, 64>}, {transform_indices = @transform_3, window_bounds = array<i64: 16, 64>}]} {
    %c0 = arith.constant 0 : index
    %c0_0 = arith.constant 0 : index
    %0 = vector.load %arg1[%c0, %c0_0] : memref<16x512xbf16, #tpu.memory_space<vmem>>, vector<16x512xbf16>
    %c0_1 = arith.constant 0 : index
    %c0_2 = arith.constant 0 : index
    %1 = vector.load %arg2[%c0_1, %c0_2] : memref<512x64xbf16, #tpu.memory_space<vmem>>, vector<512x64xbf16>
    %cst = arith.constant dense<0.000000e+00> : vector<16x64xf32>
    %2 = tpu.matmul %0, %1, %cst {dimension_numbers = #tpu.dot_dimension_numbers<[1], [0], [0], [1], [0, 0, 1, 1], [], []>} : vector<16x512xbf16>, vector<512x64xbf16>, vector<16x64xf32> -> vector<16x64xf32>
    %c0_3 = arith.constant 0 : index
    %c0_4 = arith.constant 0 : index
    %3 = vector.load %arg3[%c0_3, %c0_4] : memref<1x64xf32, #tpu.memory_space<vmem>>, vector<1x64xf32>
    %4 = vector.broadcast %3 : vector<1x64xf32> to vector<16x64xf32>
    %5 = arith.addf %2, %4 : vector<16x64xf32>
    %cst_5 = arith.constant 0.000000e+00 : f32
    %6 = vector.broadcast %cst_5 : f32 to vector<16x64xf32>
    %7 = arith.maximumf %5, %6 : vector<16x64xf32>
    %c0_6 = arith.constant 0 : index
    %c0_7 = arith.constant 0 : index
    %8 = vector.load %arg4[%c0_6, %c0_7] : memref<16x64xf32, #tpu.memory_space<vmem>>, vector<16x64xf32>
    tpu.vector_store %arg4[%c0_6, %c0_7], %7 {strides = array<i32>} : memref<16x64xf32, #tpu.memory_space<vmem>>, vector<16x64xf32>,
    return
  }
  func.func @transform_0(%arg0: i32) -> (i32, i32) {
    %c0_i32 = arith.constant 0 : i32
    %c0_i32_0 = arith.constant 0 : i32
    return %arg0, %c0_i32 : i32, i32
  }
  func.func @transform_1(%arg0: i32) -> (i32, i32) {
    %c0_i32 = arith.constant 0 : i32
    %c0_i32_0 = arith.constant 0 : i32
    %c0_i32_1 = arith.constant 0 : i32
    return %c0_i32, %c0_i32_0 : i32, i32
  }
  func.func @transform_2(%arg0: i32) -> (i32, i32) {
    %c0_i32 = arith.constant 0 : i32
    %c0_i32_0 = arith.constant 0 : i32
    %c0_i32_1 = arith.constant 0 : i32
    return %c0_i32, %c0_i32_0 : i32, i32
  }
  func.func @transform_3(%arg0: i32) -> (i32, i32) {
    %c0_i32 = arith.constant 0 : i32
    %c0_i32_0 = arith.constant 0 : i32
    return %arg0, %c0_i32 : i32, i32
  }
}

module attributes {stable_mosaic.version = 11 : i64} {
  func.func @kernel(%arg0: i32, %arg1: memref<32x64xbf16, #tpu.memory_space<vmem>>, %arg2: memref<64x5xbf16, #tpu.memory_space<vmem>>, %arg3: memref<1x5xf32, #tpu.memory_space<vmem>>, %arg4: memref<32x5xf32, #tpu.memory_space<vmem>>) attributes {dimension_semantics = [#tpu.dimension_semantics<parallel>], iteration_bounds = array<i64: 1>, scalar_prefetch = 0 : i64, scratch_operands = 0 : i64, tpu.core_type = #tpu.core_type<tc>, window_params = [{transform_indices = @transform_0, window_bounds = array<i64: 32, 64>}, {pipeline_mode = #tpu.pipeline_mode<synchronous>, transform_indices = @transform_1, window_bounds = array<i64: 64, 5>}, {pipeline_mode = #tpu.pipeline_mode<synchronous>, transform_indices = @transform_2, window_bounds = array<i64: 1, 5>}, {transform_indices = @transform_3, window_bounds = array<i64: 32, 5>}]} {
    %c0 = arith.constant 0 : index
    %c0_0 = arith.constant 0 : index
    %0 = vector.load %arg1[%c0, %c0_0] : memref<32x64xbf16, #tpu.memory_space<vmem>>, vector<32x64xbf16>
    %c0_1 = arith.constant 0 : index
    %c0_2 = arith.constant 0 : index
    %1 = vector.load %arg2[%c0_1, %c0_2] : memref<64x5xbf16, #tpu.memory_space<vmem>>, vector<64x5xbf16>
    %cst = arith.constant dense<0.000000e+00> : vector<32x5xf32>
    %2 = tpu.matmul %0, %1, %cst {dimension_numbers = #tpu.dot_dimension_numbers<[1], [0], [0], [1], [0, 0, 1, 1], [], []>} : vector<32x64xbf16>, vector<64x5xbf16>, vector<32x5xf32> -> vector<32x5xf32>
    %c0_3 = arith.constant 0 : index
    %c0_4 = arith.constant 0 : index
    %3 = vector.load %arg3[%c0_3, %c0_4] : memref<1x5xf32, #tpu.memory_space<vmem>>, vector<1x5xf32>
    %4 = vector.broadcast %3 : vector<1x5xf32> to vector<32x5xf32>
    %5 = arith.addf %2, %4 : vector<32x5xf32>
    %c0_5 = arith.constant 0 : index
    %c0_6 = arith.constant 0 : index
    %6 = vector.load %arg4[%c0_5, %c0_6] : memref<32x5xf32, #tpu.memory_space<vmem>>, vector<32x5xf32>
    tpu.vector_store %arg4[%c0_5, %c0_6], %5 {strides = array<i32>} : memref<32x5xf32, #tpu.memory_space<vmem>>, vector<32x5xf32>,
    return
  }
  func.func @transform_0(%arg0: i32) -> (i32, i32) {
    %c0_i32 = arith.constant 0 : i32
    %c0_i32_0 = arith.constant 0 : i32
    return %arg0, %c0_i32 : i32, i32
  }
  func.func @transform_1(%arg0: i32) -> (i32, i32) {
    %c0_i32 = arith.constant 0 : i32
    %c0_i32_0 = arith.constant 0 : i32
    %c0_i32_1 = arith.constant 0 : i32
    return %c0_i32, %c0_i32_0 : i32, i32
  }
  func.func @transform_2(%arg0: i32) -> (i32, i32) {
    %c0_i32 = arith.constant 0 : i32
    %c0_i32_0 = arith.constant 0 : i32
    %c0_i32_1 = arith.constant 0 : i32
    return %c0_i32, %c0_i32_0 : i32, i32
  }
  func.func @transform_3(%arg0: i32) -> (i32, i32) {
    %c0_i32 = arith.constant 0 : i32
    %c0_i32_0 = arith.constant 0 : i32
    return %arg0, %c0_i32 : i32, i32
  }
}

module attributes {stable_mosaic.version = 11 : i64} {
  func.func @kernel(%arg0: i32, %arg1: memref<32x128xbf16, #tpu.memory_space<vmem>>, %arg2: memref<128x5xbf16, #tpu.memory_space<vmem>>, %arg3: memref<1x5xf32, #tpu.memory_space<vmem>>, %arg4: memref<32x5xf32, #tpu.memory_space<vmem>>) attributes {dimension_semantics = [#tpu.dimension_semantics<parallel>], iteration_bounds = array<i64: 1>, scalar_prefetch = 0 : i64, scratch_operands = 0 : i64, tpu.core_type = #tpu.core_type<tc>, window_params = [{transform_indices = @transform_0, window_bounds = array<i64: 32, 128>}, {pipeline_mode = #tpu.pipeline_mode<synchronous>, transform_indices = @transform_1, window_bounds = array<i64: 128, 5>}, {pipeline_mode = #tpu.pipeline_mode<synchronous>, transform_indices = @transform_2, window_bounds = array<i64: 1, 5>}, {transform_indices = @transform_3, window_bounds = array<i64: 32, 5>}]} {
    %c0 = arith.constant 0 : index
    %c0_0 = arith.constant 0 : index
    %0 = vector.load %arg1[%c0, %c0_0] : memref<32x128xbf16, #tpu.memory_space<vmem>>, vector<32x128xbf16>
    %c0_1 = arith.constant 0 : index
    %c0_2 = arith.constant 0 : index
    %1 = vector.load %arg2[%c0_1, %c0_2] : memref<128x5xbf16, #tpu.memory_space<vmem>>, vector<128x5xbf16>
    %cst = arith.constant dense<0.000000e+00> : vector<32x5xf32>
    %2 = tpu.matmul %0, %1, %cst {dimension_numbers = #tpu.dot_dimension_numbers<[1], [0], [0], [1], [0, 0, 1, 1], [], []>} : vector<32x128xbf16>, vector<128x5xbf16>, vector<32x5xf32> -> vector<32x5xf32>
    %c0_3 = arith.constant 0 : index
    %c0_4 = arith.constant 0 : index
    %3 = vector.load %arg3[%c0_3, %c0_4] : memref<1x5xf32, #tpu.memory_space<vmem>>, vector<1x5xf32>
    %4 = vector.broadcast %3 : vector<1x5xf32> to vector<32x5xf32>
    %5 = arith.addf %2, %4 : vector<32x5xf32>
    %c0_5 = arith.constant 0 : index
    %c0_6 = arith.constant 0 : index
    %6 = vector.load %arg4[%c0_5, %c0_6] : memref<32x5xf32, #tpu.memory_space<vmem>>, vector<32x5xf32>
    tpu.vector_store %arg4[%c0_5, %c0_6], %5 {strides = array<i32>} : memref<32x5xf32, #tpu.memory_space<vmem>>, vector<32x5xf32>,
    return
  }
  func.func @transform_0(%arg0: i32) -> (i32, i32) {
    %c0_i32 = arith.constant 0 : i32
    %c0_i32_0 = arith.constant 0 : i32
    return %arg0, %c0_i32 : i32, i32
  }
  func.func @transform_1(%arg0: i32) -> (i32, i32) {
    %c0_i32 = arith.constant 0 : i32
    %c0_i32_0 = arith.constant 0 : i32
    %c0_i32_1 = arith.constant 0 : i32
    return %c0_i32, %c0_i32_0 : i32, i32
  }
  func.func @transform_2(%arg0: i32) -> (i32, i32) {
    %c0_i32 = arith.constant 0 : i32
    %c0_i32_0 = arith.constant 0 : i32
    %c0_i32_1 = arith.constant 0 : i32
    return %c0_i32, %c0_i32_0 : i32, i32
  }
  func.func @transform_3(%arg0: i32) -> (i32, i32) {
    %c0_i32 = arith.constant 0 : i32
    %c0_i32_0 = arith.constant 0 : i32
    return %arg0, %c0_i32 : i32, i32
  }
}

module attributes {stable_mosaic.version = 11 : i64} {
  func.func @kernel(%arg0: i32, %arg1: memref<32x256xbf16, #tpu.memory_space<vmem>>, %arg2: memref<256x5xbf16, #tpu.memory_space<vmem>>, %arg3: memref<1x5xf32, #tpu.memory_space<vmem>>, %arg4: memref<32x5xf32, #tpu.memory_space<vmem>>) attributes {dimension_semantics = [#tpu.dimension_semantics<parallel>], iteration_bounds = array<i64: 1>, scalar_prefetch = 0 : i64, scratch_operands = 0 : i64, tpu.core_type = #tpu.core_type<tc>, window_params = [{transform_indices = @transform_0, window_bounds = array<i64: 32, 256>}, {pipeline_mode = #tpu.pipeline_mode<synchronous>, transform_indices = @transform_1, window_bounds = array<i64: 256, 5>}, {pipeline_mode = #tpu.pipeline_mode<synchronous>, transform_indices = @transform_2, window_bounds = array<i64: 1, 5>}, {transform_indices = @transform_3, window_bounds = array<i64: 32, 5>}]} {
    %c0 = arith.constant 0 : index
    %c0_0 = arith.constant 0 : index
    %0 = vector.load %arg1[%c0, %c0_0] : memref<32x256xbf16, #tpu.memory_space<vmem>>, vector<32x256xbf16>
    %c0_1 = arith.constant 0 : index
    %c0_2 = arith.constant 0 : index
    %1 = vector.load %arg2[%c0_1, %c0_2] : memref<256x5xbf16, #tpu.memory_space<vmem>>, vector<256x5xbf16>
    %cst = arith.constant dense<0.000000e+00> : vector<32x5xf32>
    %2 = tpu.matmul %0, %1, %cst {dimension_numbers = #tpu.dot_dimension_numbers<[1], [0], [0], [1], [0, 0, 1, 1], [], []>} : vector<32x256xbf16>, vector<256x5xbf16>, vector<32x5xf32> -> vector<32x5xf32>
    %c0_3 = arith.constant 0 : index
    %c0_4 = arith.constant 0 : index
    %3 = vector.load %arg3[%c0_3, %c0_4] : memref<1x5xf32, #tpu.memory_space<vmem>>, vector<1x5xf32>
    %4 = vector.broadcast %3 : vector<1x5xf32> to vector<32x5xf32>
    %5 = arith.addf %2, %4 : vector<32x5xf32>
    %c0_5 = arith.constant 0 : index
    %c0_6 = arith.constant 0 : index
    %6 = vector.load %arg4[%c0_5, %c0_6] : memref<32x5xf32, #tpu.memory_space<vmem>>, vector<32x5xf32>
    tpu.vector_store %arg4[%c0_5, %c0_6], %5 {strides = array<i32>} : memref<32x5xf32, #tpu.memory_space<vmem>>, vector<32x5xf32>,
    return
  }
  func.func @transform_0(%arg0: i32) -> (i32, i32) {
    %c0_i32 = arith.constant 0 : i32
    %c0_i32_0 = arith.constant 0 : i32
    return %arg0, %c0_i32 : i32, i32
  }
  func.func @transform_1(%arg0: i32) -> (i32, i32) {
    %c0_i32 = arith.constant 0 : i32
    %c0_i32_0 = arith.constant 0 : i32
    %c0_i32_1 = arith.constant 0 : i32
    return %c0_i32, %c0_i32_0 : i32, i32
  }
  func.func @transform_2(%arg0: i32) -> (i32, i32) {
    %c0_i32 = arith.constant 0 : i32
    %c0_i32_0 = arith.constant 0 : i32
    %c0_i32_1 = arith.constant 0 : i32
    return %c0_i32, %c0_i32_0 : i32, i32
  }
  func.func @transform_3(%arg0: i32) -> (i32, i32) {
    %c0_i32 = arith.constant 0 : i32
    %c0_i32_0 = arith.constant 0 : i32
    return %arg0, %c0_i32 : i32, i32
  }
}

</mosaic_0001>

<llo_original>
// kernel: mininet_forward.53
$region0: #{mininet_forward.53}
  #allocation0 [shape = 'u32[]', space=smem, size = 0x4, offset = 0x4, fixed_abs, tag = 'smem constant byte address 0x4 - core index']
  #allocation1 [shape = 'u32[144,128]{1,0:T(1,128)}', space=vmem, size = 0x12000, scoped, tag = 'internal scratch']
  %s0 = inlined_call_operand.vmem [shape: f32[128,3], index: 0, kind: input, shape index: {}]
  %s1 = inlined_call_operand.vmem [shape: f32[1,3], index: 1, kind: input, shape index: {}]
  %s2 = inlined_call_operand.vmem [shape: f32[1,3], index: 2, kind: input, shape index: {}]
  %s3 = inlined_call_operand.vmem [shape: f32[128,3], index: 3, kind: output, shape index: {}]
  %s4 = sld [smem:[#allocation0]]
  $region22: #{mininet_forward.53} parent=0
    _
  %s6 = ssub.s32 1, %s4
  %s7 = scalar_select 0, %s6, %s4
  // Predicated region
  $region2: #{mininet_forward.53} parent=0 // pred_check
    _
  $region3: #{mininet_forward.53} parent=0 // pred_check_branch
    %9 = sbr.rel (0) target = $region5
  $region4: #{mininet_forward.53} parent=0 // pred_region
    _
  $region5: #{mininet_forward.53} parent=0 // pred_fallthru
    _
  // Predicated region
  $region6: #{mininet_forward.53} parent=0 // pred_check
    _
  $region7: #{mininet_forward.53} parent=0 // pred_check_branch
    %11 = sbr.rel (0) target = $region9
  $region8: #{mininet_forward.53} parent=0 // pred_region
    _
  $region9: #{mininet_forward.53} parent=0 // pred_fallthru
    _
  // Predicated region
  $region10: #{mininet_forward.53} parent=0 // pred_check
    _
  $region11: #{mininet_forward.53} parent=0 // pred_check_branch
    %13 = sbr.rel (0) target = $region13
  $region12: #{mininet_forward.53} parent=0 // pred_region
    _
  $region13: #{mininet_forward.53} parent=0 // pred_fallthru
    _
  %v14 = vld [vmem:[%s0] sm:$0xff]
  %v15 = vld [vmem:[%s0 + $0x8] sm:$0xff]
  %v16 = vld [vmem:[%s0 + $0x10] sm:$0xff]
  %v17 = vld [vmem:[%s0 + $0x18] sm:$0xff]
  %v18 = vld [vmem:[%s0 + $0x20] sm:$0xff]
  %v19 = vld [vmem:[%s0 + $0x28] sm:$0xff]
  %v20 = vld [vmem:[%s0 + $0x30] sm:$0xff]
  %v21 = vld [vmem:[%s0 + $0x38] sm:$0xff]
  %v22 = vld [vmem:[%s0 + $0x40] sm:$0xff]
  %v23 = vld [vmem:[%s0 + $0x48] sm:$0xff]
  %v24 = vld [vmem:[%s0 + $0x50] sm:$0xff]
  %v25 = vld [vmem:[%s0 + $0x58] sm:$0xff]
  %v26 = vld [vmem:[%s0 + $0x60] sm:$0xff]
  %v27 = vld [vmem:[%s0 + $0x68] sm:$0xff]
  %v28 = vld [vmem:[%s0 + $0x70] sm:$0xff]
  %v29 = vld [vmem:[%s0 + $0x78] sm:$0xff]
  %v30 = vld [vmem:[%s1] sm:$0x1]
  %v32 = vlaneseq
  %v33 = vshrl.u32 %v32, 7
  %v34 = vsub.s32 0, %v33
  %v35 = vrot.slane %v30, %v34
  %v37 = vmul.f32 %v14, %v35
  %v38 = vmul.f32 %v15, %v35
  %v39 = vmul.f32 %v16, %v35
  %v40 = vmul.f32 %v17, %v35
  %v41 = vmul.f32 %v18, %v35
  %v42 = vmul.f32 %v19, %v35
  %v43 = vmul.f32 %v20, %v35
  %v44 = vmul.f32 %v21, %v35
  %v45 = vmul.f32 %v22, %v35
  %v46 = vmul.f32 %v23, %v35
  %v47 = vmul.f32 %v24, %v35
  %v48 = vmul.f32 %v25, %v35
  %v49 = vmul.f32 %v26, %v35
  %v50 = vmul.f32 %v27, %v35
  %v51 = vmul.f32 %v28, %v35
  %v52 = vmul.f32 %v29, %v35
  %v53 = vld [vmem:[%s2] sm:$0x1]
  %v55 = vlaneseq
  %v56 = vshrl.u32 %v55, 7
  %v57 = vsub.s32 0, %v56
  %v58 = vrot.slane %v53, %v57
  %v60 = vadd.f32 %v37, %v58
  %v61 = vadd.f32 %v38, %v58
  %v62 = vadd.f32 %v39, %v58
  %v63 = vadd.f32 %v40, %v58
  %v64 = vadd.f32 %v41, %v58
  %v65 = vadd.f32 %v42, %v58
  %v66 = vadd.f32 %v43, %v58
  %v67 = vadd.f32 %v44, %v58
  %v68 = vadd.f32 %v45, %v58
  %v69 = vadd.f32 %v46, %v58
  %v70 = vadd.f32 %v47, %v58
  %v71 = vadd.f32 %v48, %v58
  %v72 = vadd.f32 %v49, %v58
  %v73 = vadd.f32 %v50, %v58
  %v74 = vadd.f32 %v51, %v58
  %v75 = vadd.f32 %v52, %v58
  %v76 = vmax.f32 %v60, 0.0
  %v77 = vmax.f32 %v61, 0.0
  %v78 = vmax.f32 %v62, 0.0
  %v79 = vmax.f32 %v63, 0.0
  %v80 = vmax.f32 %v64, 0.0
  %v81 = vmax.f32 %v65, 0.0
  %v82 = vmax.f32 %v66, 0.0
  %v83 = vmax.f32 %v67, 0.0
  %v84 = vmax.f32 %v68, 0.0
  %v85 = vmax.f32 %v69, 0.0
  %v86 = vmax.f32 %v70, 0.0
  %v87 = vmax.f32 %v71, 0.0
  %v88 = vmax.f32 %v72, 0.0
  %v89 = vmax.f32 %v73, 0.0
  %v90 = vmax.f32 %v74, 0.0
  %v91 = vmax.f32 %v75, 0.0
  %vm92 = vcmask 23552
  %93 = vst.msk [vmem:[%s3] sm:$0xff] %vm92, %v76
  %94 = vst.msk [vmem:[%s3 + $0x8] sm:$0xff] %vm92, %v77
  %95 = vst.msk [vmem:[%s3 + $0x10] sm:$0xff] %vm92, %v78
  %96 = vst.msk [vmem:[%s3 + $0x18] sm:$0xff] %vm92, %v79
  %97 = vst.msk [vmem:[%s3 + $0x20] sm:$0xff] %vm92, %v80
  %98 = vst.msk [vmem:[%s3 + $0x28] sm:$0xff] %vm92, %v81
  %99 = vst.msk [vmem:[%s3 + $0x30] sm:$0xff] %vm92, %v82
  %100 = vst.msk [vmem:[%s3 + $0x38] sm:$0xff] %vm92, %v83
  %101 = vst.msk [vmem:[%s3 + $0x40] sm:$0xff] %vm92, %v84
  %102 = vst.msk [vmem:[%s3 + $0x48] sm:$0xff] %vm92, %v85
  %103 = vst.msk [vmem:[%s3 + $0x50] sm:$0xff] %vm92, %v86
  %104 = vst.msk [vmem:[%s3 + $0x58] sm:$0xff] %vm92, %v87
  %105 = vst.msk [vmem:[%s3 + $0x60] sm:$0xff] %vm92, %v88
  %106 = vst.msk [vmem:[%s3 + $0x68] sm:$0xff] %vm92, %v89
  %107 = vst.msk [vmem:[%s3 + $0x70] sm:$0xff] %vm92, %v90
  %108 = vst.msk [vmem:[%s3 + $0x78] sm:$0xff] %vm92, %v91
  // Predicated region
  $region14: #{mininet_forward.53} parent=0 // pred_check
    _
  $region15: #{mininet_forward.53} parent=0 // pred_check_branch
    %110 = sbr.rel (0) target = $region17
  $region16: #{mininet_forward.53} parent=0 // pred_region
    _
  $region17: #{mininet_forward.53} parent=0 // pred_fallthru
    _
  // Predicated region
  $region18: #{mininet_forward.53} parent=0 // pred_check
    _
  $region19: #{mininet_forward.53} parent=0 // pred_check_branch
    %112 = sbr.rel (0) target = $region21
  $region20: #{mininet_forward.53} parent=0 // pred_region
    _
  $region21: #{mininet_forward.53} parent=0 // pred_fallthru
    _

// kernel: mininet_forward.52
$region0: #{mininet_forward.52}
  #allocation0 [shape = 'u32[]', space=smem, size = 0x4, offset = 0x4, fixed_abs, tag = 'smem constant byte address 0x4 - core index']
  #allocation1 [shape = 'u32[144,128]{1,0:T(1,128)}', space=vmem, size = 0x12000, scoped, tag = 'internal scratch']
  %s0 = inlined_call_operand.vmem [shape: bf16[128,27], index: 0, kind: input, shape index: {}]
  %s1 = inlined_call_operand.vmem [shape: bf16[27,13], index: 1, kind: input, shape index: {}]
  %s2 = inlined_call_operand.vmem [shape: f32[1,13], index: 2, kind: input, shape index: {}]
  %s3 = inlined_call_operand.vmem [shape: f32[128,13], index: 3, kind: output, shape index: {}]
  %s4 = sld [smem:[#allocation0]]
  $region22: #{mininet_forward.52} parent=0
    _
  %s6 = ssub.s32 1, %s4
  %s7 = scalar_select 0, %s6, %s4
  // Predicated region
  $region2: #{mininet_forward.52} parent=0 // pred_check
    _
  $region3: #{mininet_forward.52} parent=0 // pred_check_branch
    %9 = sbr.rel (0) target = $region5
  $region4: #{mininet_forward.52} parent=0 // pred_region
    _
  $region5: #{mininet_forward.52} parent=0 // pred_fallthru
    _
  // Predicated region
  $region6: #{mininet_forward.52} parent=0 // pred_check
    _
  $region7: #{mininet_forward.52} parent=0 // pred_check_branch
    %11 = sbr.rel (0) target = $region9
  $region8: #{mininet_forward.52} parent=0 // pred_region
    _
  $region9: #{mininet_forward.52} parent=0 // pred_fallthru
    _
  // Predicated region
  $region10: #{mininet_forward.52} parent=0 // pred_check
    _
  $region11: #{mininet_forward.52} parent=0 // pred_check_branch
    %13 = sbr.rel (0) target = $region13
  $region12: #{mininet_forward.52} parent=0 // pred_region
    _
  $region13: #{mininet_forward.52} parent=0 // pred_fallthru
    _
  %v15 = vld [vmem:[%s0] sm:$0xf]
  %v16 = vld [vmem:[%s0 + $0x4] sm:$0xf]
  %v17 = vld [vmem:[%s0 + $0x8] sm:$0xf]
  %v18 = vld [vmem:[%s0 + $0xc] sm:$0xf]
  %v19 = vld [vmem:[%s0 + $0x10] sm:$0xf]
  %v20 = vld [vmem:[%s0 + $0x14] sm:$0xf]
  %v21 = vld [vmem:[%s0 + $0x18] sm:$0xf]
  %v22 = vld [vmem:[%s0 + $0x1c] sm:$0xf]
  %v23 = vld [vmem:[%s0 + $0x20] sm:$0xf]
  %v24 = vld [vmem:[%s0 + $0x24] sm:$0xf]
  %v25 = vld [vmem:[%s0 + $0x28] sm:$0xf]
  %v26 = vld [vmem:[%s0 + $0x2c] sm:$0xf]
  %v27 = vld [vmem:[%s0 + $0x30] sm:$0xf]
  %v28 = vld [vmem:[%s0 + $0x34] sm:$0xf]
  %v29 = vld [vmem:[%s0 + $0x38] sm:$0xf]
  %v30 = vld [vmem:[%s0 + $0x3c] sm:$0xf]
  %v31 = vld [vmem:[%s1] sm:$0xf]
  %v32 = vld [vmem:[%s1 + $0x4] sm:$0xf]
  %v33 = vld [vmem:[%s1 + $0x8] sm:$0xf]
  %v34 = vld [vmem:[%s1 + $0xc] sm:$0x3]
  %v35 = vld [vmem:[%s2] sm:$0x1]
  %v37 = vlaneseq
  %v38 = vshrl.u32 %v37, 7
  %v39 = vsub.s32 0, %v38
  %v40 = vrot.slane %v35, %v39
  %v58 = vunpack.c.l.b16 %v15
  %v59 = vunpack.c.l.b16 %v16
  %v60 = vunpack.c.l.b16 %v17
  %v61 = vunpack.c.l.b16 %v18
  %v62 = vunpack.c.l.b16 %v19
  %v63 = vunpack.c.l.b16 %v20
  %v64 = vunpack.c.l.b16 %v21
  %v65 = vunpack.c.l.b16 %v22
  %v66 = vunpack.c.l.b16 %v23
  %v67 = vunpack.c.l.b16 %v24
  %v68 = vunpack.c.l.b16 %v25
  %v69 = vunpack.c.l.b16 %v26
  %v70 = vunpack.c.l.b16 %v27
  %v71 = vunpack.c.l.b16 %v28
  %v72 = vunpack.c.l.b16 %v29
  %v73 = vunpack.c.l.b16 %v30
  %v74 = vpack.c.b16 %v59, %v58
  %v75 = vpack.c.b16 %v61, %v60
  %v76 = vpack.c.b16 %v63, %v62
  %v77 = vpack.c.b16 %v65, %v64
  %v78 = vpack.c.b16 %v67, %v66
  %v79 = vpack.c.b16 %v69, %v68
  %v80 = vpack.c.b16 %v71, %v70
  %v81 = vpack.c.b16 %v73, %v72
  %v86 = vunpack.c.l.b16 %v31
  %v87 = vunpack.c.l.b16 %v32
  %v88 = vunpack.c.l.b16 %v33
  %v89 = vunpack.c.l.b16 %v34
  %v90 = vpack.c.b16 %v87, %v86
  %v91 = vpack.c.b16 %v89, %v88
  %vm93 = vcmask 220160
  %v95 = vsel %vm93, %v74, 0
  %v98 = vsel %vm93, %v75, 0
  %v101 = vsel %vm93, %v76, 0
  %v104 = vsel %vm93, %v77, 0
  %v107 = vsel %vm93, %v78, 0
  %v110 = vsel %vm93, %v79, 0
  %v113 = vsel %vm93, %v80, 0
  %v116 = vsel %vm93, %v81, 0
  %vm118 = vcmask 1044480
  %vm119 = vcmask 1045504
  %v120 = vsel %vm118, 4294967295, 65535
  %v121 = vsel %vm119, %v120, 0
  %v123 = vand.u32 %v91, %v121
  %125 = vmatprep.subr.bf16.mxu0 0
  %126 = vmatpush1.bf16.msra.mxu0 %v90
  %127 = vmatprep.subr.bf16.mxu0 0
  %128 = vmatpush1.bf16.msra.mxu0 %v123
  %129 = vmatprep.subr.bf16.mxu0 0
  %130 = vmatpush1.bf16.msra.mxu0 0
  %131 = vmatprep.subr.bf16.mxu0 0
  %132 = vmatpush1.bf16.msra.mxu0 0
  %133 = vmatprep.subr.bf16.mxu0 0
  %134 = vmatpush1.bf16.msra.mxu0 0
  %135 = vmatprep.subr.bf16.mxu0 0
  %136 = vmatpush1.bf16.msra.mxu0 0
  %137 = vmatprep.subr.bf16.mxu0 0
  %138 = vmatpush1.bf16.msra.mxu0 0
  %139 = vmatprep.subr.bf16.mxu0 0
  %140 = vmatpush1.bf16.msra.mxu0 0
  %141 = vmatprep.subr.bf16.mxu0 0
  %142 = vmatpush1.bf16.msra.mxu0 0
  %143 = vmatprep.subr.bf16.mxu0 0
  %144 = vmatpush1.bf16.msra.mxu0 0
  %145 = vmatprep.subr.bf16.mxu0 0
  %146 = vmatpush1.bf16.msra.mxu0 0
  %147 = vmatprep.subr.bf16.mxu0 0
  %148 = vmatpush1.bf16.msra.mxu0 0
  %149 = vmatprep.subr.bf16.mxu0 0
  %150 = vmatpush1.bf16.msra.mxu0 0
  %151 = vmatprep.subr.bf16.mxu0 0
  %152 = vmatpush1.bf16.msra.mxu0 0
  %153 = vmatprep.subr.bf16.mxu0 0
  %154 = vmatpush1.bf16.msra.mxu0 0
  %155 = vmatprep.subr.bf16.mxu0 0
  %156 = vmatpush1.bf16.msra.mxu0 0
  %157 = vmatprep.mubr.bf16.mxu0 0
  %158 = vmatmul.mubr.bf16.gmra.mrb[0].mxu0 %v95
  %v159 = vpop.f32.mrb[0].mxu0
  %v160 = vadd.f32 %v40, %v159
  %v161 = vpop.f32.mrb[0].mxu0
  %v162 = vpop.f32.mrb[0].mxu0
  %v163 = vadd.f32 %v40, %v162
  %v164 = vpop.f32.mrb[0].mxu0
  %165 = vmatprep.mubr.bf16.mxu0 0
  %166 = vmatmul.mubr.bf16.gmra.mrb[0].mxu0 %v98
  %v167 = vpop.f32.mrb[0].mxu0
  %v168 = vadd.f32 %v40, %v167
  %v169 = vpop.f32.mrb[0].mxu0
  %v170 = vpop.f32.mrb[0].mxu0
  %v171 = vadd.f32 %v40, %v170
  %v172 = vpop.f32.mrb[0].mxu0
  %173 = vmatprep.mubr.bf16.mxu0 0
  %174 = vmatmul.mubr.bf16.gmra.mrb[0].mxu0 %v101
  %v175 = vpop.f32.mrb[0].mxu0
  %v176 = vadd.f32 %v40, %v175
  %v177 = vpop.f32.mrb[0].mxu0
  %v178 = vpop.f32.mrb[0].mxu0
  %v179 = vadd.f32 %v40, %v178
  %v180 = vpop.f32.mrb[0].mxu0
  %181 = vmatprep.mubr.bf16.mxu0 0
  %182 = vmatmul.mubr.bf16.gmra.mrb[0].mxu0 %v104
  %v183 = vpop.f32.mrb[0].mxu0
  %v184 = vadd.f32 %v40, %v183
  %v185 = vpop.f32.mrb[0].mxu0
  %v186 = vpop.f32.mrb[0].mxu0
  %v187 = vadd.f32 %v40, %v186
  %v188 = vpop.f32.mrb[0].mxu0
  %189 = vmatprep.mubr.bf16.mxu0 0
  %190 = vmatmul.mubr.bf16.gmra.mrb[0].mxu0 %v107
  %v191 = vpop.f32.mrb[0].mxu0
  %v192 = vadd.f32 %v40, %v191
  %v193 = vpop.f32.mrb[0].mxu0
  %v194 = vpop.f32.mrb[0].mxu0
  %v195 = vadd.f32 %v40, %v194
  %v196 = vpop.f32.mrb[0].mxu0
  %197 = vmatprep.mubr.bf16.mxu0 0
  %198 = vmatmul.mubr.bf16.gmra.mrb[0].mxu0 %v110
  %v199 = vpop.f32.mrb[0].mxu0
  %v200 = vadd.f32 %v40, %v199
  %v201 = vpop.f32.mrb[0].mxu0
  %v202 = vpop.f32.mrb[0].mxu0
  %v203 = vadd.f32 %v40, %v202
  %v204 = vpop.f32.mrb[0].mxu0
  %205 = vmatprep.mubr.bf16.mxu0 0
  %206 = vmatmul.mubr.bf16.gmra.mrb[0].mxu0 %v113
  %v207 = vpop.f32.mrb[0].mxu0
  %v208 = vadd.f32 %v40, %v207
  %v209 = vpop.f32.mrb[0].mxu0
  %v210 = vpop.f32.mrb[0].mxu0
  %v211 = vadd.f32 %v40, %v210
  %v212 = vpop.f32.mrb[0].mxu0
  %213 = vmatprep.mubr.bf16.mxu0 0
  %214 = vmatmul.mubr.bf16.gmra.mrb[0].mxu0 %v116
  %v215 = vpop.f32.mrb[0].mxu0
  %v216 = vadd.f32 %v40, %v215
  %v217 = vpop.f32.mrb[0].mxu0
  %v218 = vpop.f32.mrb[0].mxu0
  %v219 = vadd.f32 %v40, %v218
  %v220 = vpop.f32.mrb[0].mxu0
  %221 = vdwg.mxu0
  %v222 = vmax.f32 %v160, 0.0
  %v223 = vmax.f32 %v163, 0.0
  %v224 = vmax.f32 %v168, 0.0
  %v225 = vmax.f32 %v171, 0.0
  %v226 = vmax.f32 %v176, 0.0
  %v227 = vmax.f32 %v179, 0.0
  %v228 = vmax.f32 %v184, 0.0
  %v229 = vmax.f32 %v187, 0.0
  %v230 = vmax.f32 %v192, 0.0
  %v231 = vmax.f32 %v195, 0.0
  %v232 = vmax.f32 %v200, 0.0
  %v233 = vmax.f32 %v203, 0.0
  %v234 = vmax.f32 %v208, 0.0
  %v235 = vmax.f32 %v211, 0.0
  %v236 = vmax.f32 %v216, 0.0
  %v237 = vmax.f32 %v219, 0.0
  %vm238 = vcmask 105472
  %239 = vst.msk [vmem:[%s3] sm:$0xff] %vm238, %v222
  %240 = vst.msk [vmem:[%s3 + $0x8] sm:$0xff] %vm238, %v223
  %241 = vst.msk [vmem:[%s3 + $0x10] sm:$0xff] %vm238, %v224
  %242 = vst.msk [vmem:[%s3 + $0x18] sm:$0xff] %vm238, %v225
  %243 = vst.msk [vmem:[%s3 + $0x20] sm:$0xff] %vm238, %v226
  %244 = vst.msk [vmem:[%s3 + $0x28] sm:$0xff] %vm238, %v227
  %245 = vst.msk [vmem:[%s3 + $0x30] sm:$0xff] %vm238, %v228
  %246 = vst.msk [vmem:[%s3 + $0x38] sm:$0xff] %vm238, %v229
  %247 = vst.msk [vmem:[%s3 + $0x40] sm:$0xff] %vm238, %v230
  %248 = vst.msk [vmem:[%s3 + $0x48] sm:$0xff] %vm238, %v231
  %249 = vst.msk [vmem:[%s3 + $0x50] sm:$0xff] %vm238, %v232
  %250 = vst.msk [vmem:[%s3 + $0x58] sm:$0xff] %vm238, %v233
  %251 = vst.msk [vmem:[%s3 + $0x60] sm:$0xff] %vm238, %v234
  %252 = vst.msk [vmem:[%s3 + $0x68] sm:$0xff] %vm238, %v235
  %253 = vst.msk [vmem:[%s3 + $0x70] sm:$0xff] %vm238, %v236
  %254 = vst.msk [vmem:[%s3 + $0x78] sm:$0xff] %vm238, %v237
  // Predicated region
  $region14: #{mininet_forward.52} parent=0 // pred_check
    _
  $region15: #{mininet_forward.52} parent=0 // pred_check_branch
    %256 = sbr.rel (0) target = $region17
  $region16: #{mininet_forward.52} parent=0 // pred_region
    _
  $region17: #{mininet_forward.52} parent=0 // pred_fallthru
    _
  // Predicated region
  $region18: #{mininet_forward.52} parent=0 // pred_check
    _
  $region19: #{mininet_forward.52} parent=0 // pred_check_branch
    %258 = sbr.rel (0) target = $region21
  $region20: #{mininet_forward.52} parent=0 // pred_region
    _
  $region21: #{mininet_forward.52} parent=0 // pred_fallthru
    _

// kernel: mininet_forward.54
$region0: #{mininet_forward.54}
  #allocation0 [shape = 'u32[]', space=smem, size = 0x4, offset = 0x4, fixed_abs, tag = 'smem constant byte address 0x4 - core index']
  #allocation1 [shape = 'u32[144,128]{1,0:T(1,128)}', space=vmem, size = 0x12000, scoped, tag = 'internal scratch']
  %s0 = inlined_call_operand.vmem [shape: bf16[32,144], index: 0, kind: input, shape index: {}]
  %s1 = inlined_call_operand.vmem [shape: bf16[144,48], index: 1, kind: input, shape index: {}]
  %s2 = inlined_call_operand.vmem [shape: f32[1,48], index: 2, kind: input, shape index: {}]
  %s3 = inlined_call_operand.vmem [shape: f32[32,48], index: 3, kind: output, shape index: {}]
  %s4 = sld [smem:[#allocation0]]
  $region22: #{mininet_forward.54} parent=0
    _
  %s6 = ssub.s32 1, %s4
  %s7 = scalar_select 0, %s6, %s4
  // Predicated region
  $region2: #{mininet_forward.54} parent=0 // pred_check
    _
  $region3: #{mininet_forward.54} parent=0 // pred_check_branch
    %9 = sbr.rel (0) target = $region5
  $region4: #{mininet_forward.54} parent=0 // pred_region
    _
  $region5: #{mininet_forward.54} parent=0 // pred_fallthru
    _
  // Predicated region
  $region6: #{mininet_forward.54} parent=0 // pred_check
    _
  $region7: #{mininet_forward.54} parent=0 // pred_check_branch
    %11 = sbr.rel (0) target = $region9
  $region8: #{mininet_forward.54} parent=0 // pred_region
    _
  $region9: #{mininet_forward.54} parent=0 // pred_fallthru
    _
  // Predicated region
  $region10: #{mininet_forward.54} parent=0 // pred_check
    _
  $region11: #{mininet_forward.54} parent=0 // pred_check_branch
    %13 = sbr.rel (0) target = $region13
  $region12: #{mininet_forward.54} parent=0 // pred_region
    _
  $region13: #{mininet_forward.54} parent=0 // pred_fallthru
    _
  %v15 = vld [vmem:[%s0] sm:$0xff]
  %v16 = vld [vmem:[%s0 + $0x8] sm:$0xff]
  %v17 = vld [vmem:[%s0 + $0x10] sm:$0xff]
  %v18 = vld [vmem:[%s0 + $0x18] sm:$0xff]
  %v19 = vld [vmem:[%s1] sm:$0xf]
  %v20 = vld [vmem:[%s1 + $0x4] sm:$0xf]
  %v21 = vld [vmem:[%s1 + $0x8] sm:$0xf]
  %v22 = vld [vmem:[%s1 + $0xc] sm:$0xf]
  %v23 = vld [vmem:[%s1 + $0x10] sm:$0xf]
  %v24 = vld [vmem:[%s1 + $0x14] sm:$0xf]
  %v25 = vld [vmem:[%s1 + $0x18] sm:$0xf]
  %v26 = vld [vmem:[%s1 + $0x1c] sm:$0xf]
  %v27 = vld [vmem:[%s1 + $0x20] sm:$0xf]
  %v28 = vld [vmem:[%s1 + $0x24] sm:$0xf]
  %v29 = vld [vmem:[%s1 + $0x28] sm:$0xf]
  %v30 = vld [vmem:[%s1 + $0x2c] sm:$0xf]
  %v31 = vld [vmem:[%s1 + $0x30] sm:$0xf]
  %v32 = vld [vmem:[%s1 + $0x34] sm:$0xf]
  %v33 = vld [vmem:[%s1 + $0x38] sm:$0xf]
  %v34 = vld [vmem:[%s1 + $0x3c] sm:$0xf]
  %v35 = vld [vmem:[%s1 + $0x40] sm:$0xf]
  %v36 = vld [vmem:[%s1 + $0x44] sm:$0xf]
  %v37 = vld [vmem:[%s2] sm:$0x1]
  %v39 = vlaneseq
  %v40 = vshrl.u32 %v39, 7
  %v41 = vsub.s32 0, %v40
  %v42 = vrot.slane %v37, %v41
  %v48 = vunpack.c.l.b16 %v15
  %v49 = vunpack.c.h.b16 %v15
  %v50 = vunpack.c.l.b16 %v16
  %v51 = vunpack.c.h.b16 %v16
  %v52 = vunpack.c.l.b16 %v17
  %v53 = vunpack.c.h.b16 %v17
  %v54 = vunpack.c.l.b16 %v18
  %v55 = vunpack.c.h.b16 %v18
  %v56 = vpack.c.b16 %v50, %v48
  %v57 = vpack.c.b16 %v51, %v49
  %v58 = vpack.c.b16 %v54, %v52
  %v59 = vpack.c.b16 %v55, %v53
  %v80 = vunpack.c.l.b16 %v19
  %v81 = vunpack.c.l.b16 %v20
  %v82 = vunpack.c.l.b16 %v21
  %v83 = vunpack.c.l.b16 %v22
  %v84 = vunpack.c.l.b16 %v23
  %v85 = vunpack.c.l.b16 %v24
  %v86 = vunpack.c.l.b16 %v25
  %v87 = vunpack.c.l.b16 %v26
  %v88 = vunpack.c.l.b16 %v27
  %v89 = vunpack.c.l.b16 %v28
  %v90 = vunpack.c.l.b16 %v29
  %v91 = vunpack.c.l.b16 %v30
  %v92 = vunpack.c.l.b16 %v31
  %v93 = vunpack.c.l.b16 %v32
  %v94 = vunpack.c.l.b16 %v33
  %v95 = vunpack.c.l.b16 %v34
  %v96 = vunpack.c.l.b16 %v35
  %v97 = vunpack.c.l.b16 %v36
  %v98 = vpack.c.b16 %v81, %v80
  %v99 = vpack.c.b16 %v83, %v82
  %v100 = vpack.c.b16 %v85, %v84
  %v101 = vpack.c.b16 %v87, %v86
  %v102 = vpack.c.b16 %v89, %v88
  %v103 = vpack.c.b16 %v91, %v90
  %v104 = vpack.c.b16 %v93, %v92
  %v105 = vpack.c.b16 %v95, %v94
  %v106 = vpack.c.b16 %v97, %v96
  %vm116 = vcmask 130048
  %v118 = vsel %vm116, %v57, 0
  %v121 = vsel %vm116, %v59, 0
  %123 = vmatprep.subr.bf16.mxu0 0
  %124 = vmatpush1.bf16.msra.mxu0 %v98
  %125 = vmatprep.subr.bf16.mxu0 0
  %126 = vmatpush1.bf16.msra.mxu0 %v99
  %127 = vmatprep.subr.bf16.mxu0 0
  %128 = vmatpush1.bf16.msra.mxu0 %v100
  %129 = vmatprep.subr.bf16.mxu0 0
  %130 = vmatpush1.bf16.msra.mxu0 %v101
  %131 = vmatprep.subr.bf16.mxu0 0
  %132 = vmatpush1.bf16.msra.mxu0 %v102
  %133 = vmatprep.subr.bf16.mxu0 0
  %134 = vmatpush1.bf16.msra.mxu0 %v103
  %135 = vmatprep.subr.bf16.mxu0 0
  %136 = vmatpush1.bf16.msra.mxu0 %v104
  %137 = vmatprep.subr.bf16.mxu0 0
  %138 = vmatpush1.bf16.msra.mxu0 %v105
  %139 = vmatprep.subr.bf16.mxu0 0
  %140 = vmatpush1.bf16.msra.mxu0 %v106
  %141 = vmatprep.subr.bf16.mxu0 0
  %142 = vmatpush1.bf16.msra.mxu0 0
  %143 = vmatprep.subr.bf16.mxu0 0
  %144 = vmatpush1.bf16.msra.mxu0 0
  %145 = vmatprep.subr.bf16.mxu0 0
  %146 = vmatpush1.bf16.msra.mxu0 0
  %147 = vmatprep.subr.bf16.mxu0 0
  %148 = vmatpush1.bf16.msra.mxu0 0
  %149 = vmatprep.subr.bf16.mxu0 0
  %150 = vmatpush1.bf16.msra.mxu0 0
  %151 = vmatprep.subr.bf16.mxu0 0
  %152 = vmatpush1.bf16.msra.mxu0 0
  %153 = vmatprep.subr.bf16.mxu0 0
  %154 = vmatpush1.bf16.msra.mxu0 0
  %155 = vmatprep.mubr.bf16.mxu0 %v118
  %156 = vmatmul.mubr.bf16.gmra.mrb[0].mxu0 %v56
  %v157 = vpop.f32.mrb[0].mxu0
  %v158 = vadd.f32 %v42, %v157
  %v159 = vpop.f32.mrb[0].mxu0
  %v160 = vpop.f32.mrb[0].mxu0
  %v161 = vadd.f32 %v42, %v160
  %v162 = vpop.f32.mrb[0].mxu0
  %163 = vmatprep.mubr.bf16.mxu0 %v121
  %164 = vmatmul.mubr.bf16.gmra.mrb[0].mxu0 %v58
  %v165 = vpop.f32.mrb[0].mxu0
  %v166 = vadd.f32 %v42, %v165
  %v167 = vpop.f32.mrb[0].mxu0
  %v168 = vpop.f32.mrb[0].mxu0
  %v169 = vadd.f32 %v42, %v168
  %v170 = vpop.f32.mrb[0].mxu0
  %171 = vdwg.mxu0
  %v172 = vmax.f32 %v158, 0.0
  %v173 = vmax.f32 %v161, 0.0
  %v174 = vmax.f32 %v166, 0.0
  %v175 = vmax.f32 %v169, 0.0
  %vm176 = vcmask 392192
  %177 = vst.msk [vmem:[%s3] sm:$0xff] %vm176, %v172
  %178 = vst.msk [vmem:[%s3 + $0x8] sm:$0xff] %vm176, %v173
  %179 = vst.msk [vmem:[%s3 + $0x10] sm:$0xff] %vm176, %v174
  %180 = vst.msk [vmem:[%s3 + $0x18] sm:$0xff] %vm176, %v175
  // Predicated region
  $region14: #{mininet_forward.54} parent=0 // pred_check
    _
  $region15: #{mininet_forward.54} parent=0 // pred_check_branch
    %182 = sbr.rel (0) target = $region17
  $region16: #{mininet_forward.54} parent=0 // pred_region
    _
  $region17: #{mininet_forward.54} parent=0 // pred_fallthru
    _
  // Predicated region
  $region18: #{mininet_forward.54} parent=0 // pred_check
    _
  $region19: #{mininet_forward.54} parent=0 // pred_check_branch
    %184 = sbr.rel (0) target = $region21
  $region20: #{mininet_forward.54} parent=0 // pred_region
    _
  $region21: #{mininet_forward.54} parent=0 // pred_fallthru
    _

// kernel: mininet_forward.55
$region0: #{mininet_forward.55}
  #allocation0 [shape = 'u32[]', space=smem, size = 0x4, offset = 0x4, fixed_abs, tag = 'smem constant byte address 0x4 - core index']
  #allocation1 [shape = 'u32[144,128]{1,0:T(1,128)}', space=vmem, size = 0x12000, scoped, tag = 'internal scratch']
  %s0 = inlined_call_operand.vmem [shape: f32[32,16], index: 0, kind: input, shape index: {}]
  %s1 = inlined_call_operand.vmem [shape: f32[1,16], index: 1, kind: input, shape index: {}]
  %s2 = inlined_call_operand.vmem [shape: f32[1,16], index: 2, kind: input, shape index: {}]
  %s3 = inlined_call_operand.vmem [shape: f32[32,16], index: 3, kind: output, shape index: {}]
  %s4 = sld [smem:[#allocation0]]
  $region22: #{mininet_forward.55} parent=0
    _
  %s6 = ssub.s32 1, %s4
  %s7 = scalar_select 0, %s6, %s4
  // Predicated region
  $region2: #{mininet_forward.55} parent=0 // pred_check
    _
  $region3: #{mininet_forward.55} parent=0 // pred_check_branch
    %9 = sbr.rel (0) target = $region5
  $region4: #{mininet_forward.55} parent=0 // pred_region
    _
  $region5: #{mininet_forward.55} parent=0 // pred_fallthru
    _
  // Predicated region
  $region6: #{mininet_forward.55} parent=0 // pred_check
    _
  $region7: #{mininet_forward.55} parent=0 // pred_check_branch
    %11 = sbr.rel (0) target = $region9
  $region8: #{mininet_forward.55} parent=0 // pred_region
    _
  $region9: #{mininet_forward.55} parent=0 // pred_fallthru
    _
  // Predicated region
  $region10: #{mininet_forward.55} parent=0 // pred_check
    _
  $region11: #{mininet_forward.55} parent=0 // pred_check_branch
    %13 = sbr.rel (0) target = $region13
  $region12: #{mininet_forward.55} parent=0 // pred_region
    _
  $region13: #{mininet_forward.55} parent=0 // pred_fallthru
    _
  %v14 = vld [vmem:[%s0] sm:$0xff]
  %v15 = vld [vmem:[%s0 + $0x8] sm:$0xff]
  %v16 = vld [vmem:[%s0 + $0x10] sm:$0xff]
  %v17 = vld [vmem:[%s0 + $0x18] sm:$0xff]
  %v18 = vld [vmem:[%s1] sm:$0x1]
  %v20 = vlaneseq
  %v21 = vshrl.u32 %v20, 7
  %v22 = vsub.s32 0, %v21
  %v23 = vrot.slane %v18, %v22
  %v25 = vmul.f32 %v14, %v23
  %v26 = vmul.f32 %v15, %v23
  %v27 = vmul.f32 %v16, %v23
  %v28 = vmul.f32 %v17, %v23
  %v29 = vld [vmem:[%s2] sm:$0x1]
  %v31 = vlaneseq
  %v32 = vshrl.u32 %v31, 7
  %v33 = vsub.s32 0, %v32
  %v34 = vrot.slane %v29, %v33
  %v36 = vadd.f32 %v25, %v34
  %v37 = vadd.f32 %v26, %v34
  %v38 = vadd.f32 %v27, %v34
  %v39 = vadd.f32 %v28, %v34
  %v40 = vmax.f32 %v36, 0.0
  %v41 = vmax.f32 %v37, 0.0
  %v42 = vmax.f32 %v38, 0.0
  %v43 = vmax.f32 %v39, 0.0
  %vm44 = vcmask 130048
  %45 = vst.msk [vmem:[%s3] sm:$0xff] %vm44, %v40
  %46 = vst.msk [vmem:[%s3 + $0x8] sm:$0xff] %vm44, %v41
  %47 = vst.msk [vmem:[%s3 + $0x10] sm:$0xff] %vm44, %v42
  %48 = vst.msk [vmem:[%s3 + $0x18] sm:$0xff] %vm44, %v43
  // Predicated region
  $region14: #{mininet_forward.55} parent=0 // pred_check
    _
  $region15: #{mininet_forward.55} parent=0 // pred_check_branch
    %50 = sbr.rel (0) target = $region17
  $region16: #{mininet_forward.55} parent=0 // pred_region
    _
  $region17: #{mininet_forward.55} parent=0 // pred_fallthru
    _
  // Predicated region
  $region18: #{mininet_forward.55} parent=0 // pred_check
    _
  $region19: #{mininet_forward.55} parent=0 // pred_check_branch
    %52 = sbr.rel (0) target = $region21
  $region20: #{mininet_forward.55} parent=0 // pred_region
    _
  $region21: #{mininet_forward.55} parent=0 // pred_fallthru
    _

// kernel: mininet_forward.56
$region0: #{mininet_forward.56}
  #allocation0 [shape = 'u32[]', space=smem, size = 0x4, offset = 0x4, fixed_abs, tag = 'smem constant byte address 0x4 - core index']
  #allocation1 [shape = 'u32[144,128]{1,0:T(1,128)}', space=vmem, size = 0x12000, scoped, tag = 'internal scratch']
  %s0 = inlined_call_operand.vmem [shape: f32[2,42,64], index: 0, kind: input, shape index: {}]
  %s1 = inlined_call_operand.vmem [shape: f32[9,1,64], index: 1, kind: input, shape index: {}]
  %s2 = inlined_call_operand.vmem [shape: f32[1,64], index: 2, kind: input, shape index: {}]
  %s3 = inlined_call_operand.vmem [shape: bf16[64,64], index: 3, kind: input, shape index: {}]
  %s4 = inlined_call_operand.vmem [shape: f32[1,64], index: 4, kind: input, shape index: {}]
  %s5 = inlined_call_operand.vmem [shape: f32[2,24,64], index: 5, kind: output, shape index: {}]
  %s6 = sld [smem:[#allocation0]]
  $region53: #{mininet_forward.56} parent=0
    _
  %s8 = ssub.s32 1, %s6
  %s9 = scalar_select 0, %s8, %s6
  loop: start=0, step=1, limit=4
  $region2: #{mininet_forward.56} parent=0 // loop_pre_header
    _
  $region3: #{mininet_forward.56} parent=0 // loop_header
    %s11 = sphi 0, %s15
    %p12 = scmp.ge.s32.totalorder %s11, 4
    %s21 = sphi 0, %s23
    %s24 = sphi 0, %s21
    %s25 = sphi 0, %s24
    %s41 = sphi 0, %s25
    %s45 = sphi 0, %s45
    %s47 = sphi 0, %s45
    %s48 = sphi 0, %s47
    %s62 = sphi 0, %s48
    %s66 = sphi 0, %s66
    %s68 = sphi 0, %s66
    %s69 = sphi 0, %s68
    %s83 = sphi 0, %s69
    %s87 = sphi 0, %s87
    %s89 = sphi 0, %s87
    %s90 = sphi 0, %s89
    %s104 = sphi 0, %s90
    %s108 = sphi 0, %s108
    %s110 = sphi 0, %s108
    %s111 = sphi 0, %s110
    %s125 = sphi 0, %s111
    %s131 = sphi 0, %s133
    %s134 = sphi 0, %s131
    %s135 = sphi 0, %s134
    %s151 = sphi 0, %s135
  $region4: #{mininet_forward.56} parent=0 // loop_header_branch
    %14 = sbr.rel (%p12) target = $region8
  $region5: #{mininet_forward.56} parent=0 // loop_body
    %s16 = ssub.s32 %s11, 1
    %s17 = ssub.s32 %s11, 2
    %s18 = sadd.s32 %s11, 1
    %s19 = ssub.s32 %s11, %s18
    %p20 = scmp.eq.s32.totalorder %s19, 0
    %s22 = sadd.s32 %s21, 1
    %s23 = scalar_select %p20, %s21, %s22
    %p26 = pneg %p20
    %p27 = scmp.eq.s32.totalorder %s11, 1
    %p28 = por %p26, %p27
    %p29 = scmp.ne.s32.totalorder %s21, %s24
    %p30 = scmp.eq.s32.totalorder %s11, 0
    %p31 = por %p29, %p30
    %p32 = scmp.ne.s32.totalorder %s21, %s24
    %p33 = scmp.eq.s32.totalorder %s16, 1
    %p34 = por %p32, %p33
    %p35 = scmp.ne.s32.totalorder %s24, %s25
    %p36 = scmp.eq.s32.totalorder %s16, 0
    %p37 = por %p35, %p36
    %p38 = scmp.ne.s32.totalorder %s24, %s25
    %p39 = scmp.eq.s32.totalorder %s17, 1
    %p40 = por %p38, %p39
    %p42 = scmp.ne.s32.totalorder %s25, %s41
    %p43 = scmp.eq.s32.totalorder %s17, 0
    %p44 = por %p42, %p43
    %s46 = sadd.s32 %s45, 1
    %p49 = scmp.eq.s32.totalorder %s11, 1
    %p50 = scmp.ne.s32.totalorder %s45, %s47
    %p51 = scmp.eq.s32.totalorder %s11, 0
    %p52 = por %p50, %p51
    %p53 = scmp.ne.s32.totalorder %s45, %s47
    %p54 = scmp.eq.s32.totalorder %s16, 1
    %p55 = por %p53, %p54
    %p56 = scmp.ne.s32.totalorder %s47, %s48
    %p57 = scmp.eq.s32.totalorder %s16, 0
    %p58 = por %p56, %p57
    %p59 = scmp.ne.s32.totalorder %s47, %s48
    %p60 = scmp.eq.s32.totalorder %s17, 1
    %p61 = por %p59, %p60
    %p63 = scmp.ne.s32.totalorder %s48, %s62
    %p64 = scmp.eq.s32.totalorder %s17, 0
    %p65 = por %p63, %p64
    %s67 = sadd.s32 %s66, 1
    %p70 = scmp.eq.s32.totalorder %s11, 1
    %p71 = scmp.ne.s32.totalorder %s66, %s68
    %p72 = scmp.eq.s32.totalorder %s11, 0
    %p73 = por %p71, %p72
    %p74 = scmp.ne.s32.totalorder %s66, %s68
    %p75 = scmp.eq.s32.totalorder %s16, 1
    %p76 = por %p74, %p75
    %p77 = scmp.ne.s32.totalorder %s68, %s69
    %p78 = scmp.eq.s32.totalorder %s16, 0
    %p79 = por %p77, %p78
    %p80 = scmp.ne.s32.totalorder %s68, %s69
    %p81 = scmp.eq.s32.totalorder %s17, 1
    %p82 = por %p80, %p81
    %p84 = scmp.ne.s32.totalorder %s69, %s83
    %p85 = scmp.eq.s32.totalorder %s17, 0
    %p86 = por %p84, %p85
    %s88 = sadd.s32 %s87, 1
    %p91 = scmp.eq.s32.totalorder %s11, 1
    %p92 = scmp.ne.s32.totalorder %s87, %s89
    %p93 = scmp.eq.s32.totalorder %s11, 0
    %p94 = por %p92, %p93
    %p95 = scmp.ne.s32.totalorder %s87, %s89
    %p96 = scmp.eq.s32.totalorder %s16, 1
    %p97 = por %p95, %p96
    %p98 = scmp.ne.s32.totalorder %s89, %s90
    %p99 = scmp.eq.s32.totalorder %s16, 0
    %p100 = por %p98, %p99
    %p101 = scmp.ne.s32.totalorder %s89, %s90
    %p102 = scmp.eq.s32.totalorder %s17, 1
    %p103 = por %p101, %p102
    %p105 = scmp.ne.s32.totalorder %s90, %s104
    %p106 = scmp.eq.s32.totalorder %s17, 0
    %p107 = por %p105, %p106
    %s109 = sadd.s32 %s108, 1
    %p112 = scmp.eq.s32.totalorder %s11, 1
    %p113 = scmp.ne.s32.totalorder %s108, %s110
    %p114 = scmp.eq.s32.totalorder %s11, 0
    %p115 = por %p113, %p114
    %p116 = scmp.ne.s32.totalorder %s108, %s110
    %p117 = scmp.eq.s32.totalorder %s16, 1
    %p118 = por %p116, %p117
    %p119 = scmp.ne.s32.totalorder %s110, %s111
    %p120 = scmp.eq.s32.totalorder %s16, 0
    %p121 = por %p119, %p120
    %p122 = scmp.ne.s32.totalorder %s110, %s111
    %p123 = scmp.eq.s32.totalorder %s17, 1
    %p124 = por %p122, %p123
    %p126 = scmp.ne.s32.totalorder %s111, %s125
    %p127 = scmp.eq.s32.totalorder %s17, 0
    %p128 = por %p126, %p127
    %s129 = ssub.s32 %s11, %s18
    %p130 = scmp.eq.s32.totalorder %s129, 0
    %s132 = sadd.s32 %s131, 1
    %s133 = scalar_select %p130, %s131, %s132
    %p136 = pneg %p130
    %p137 = scmp.eq.s32.totalorder %s11, 1
    %p138 = por %p136, %p137
    %p139 = scmp.ne.s32.totalorder %s131, %s134
    %p140 = scmp.eq.s32.totalorder %s11, 0
    %p141 = por %p139, %p140
    %p142 = scmp.ne.s32.totalorder %s131, %s134
    %p143 = scmp.eq.s32.totalorder %s16, 1
    %p144 = por %p142, %p143
    %p145 = scmp.ne.s32.totalorder %s134, %s135
    %p146 = scmp.eq.s32.totalorder %s16, 0
    %p147 = por %p145, %p146
    %p148 = scmp.ne.s32.totalorder %s134, %s135
    %p149 = scmp.eq.s32.totalorder %s17, 1
    %p150 = por %p148, %p149
    %p152 = scmp.ne.s32.totalorder %s135, %s151
    %p153 = scmp.eq.s32.totalorder %s17, 0
    %p154 = por %p152, %p153
    %p155 = scmp.le.s32.totalorder 1, %s11
    %p156 = scmp.lt.s32.totalorder %s11, 3
    %p157 = pnand %p155, %p156
    %p158 = pneg %p157
    // Predicated region
    $region9: #{mininet_forward.56} parent=5 // pred_check
      _
    $region10: #{mininet_forward.56} parent=5 // pred_check_branch
      %160 = sbr.rel (%p157) target = $region12
    $region11: #{mininet_forward.56} parent=5 // pred_region
      %s161 = ssub.s32 %s11, 1
      // Predicated region
      $region13: #{mininet_forward.56} parent=11 // pred_check
        %p162 = pneg %p58
      $region14: #{mininet_forward.56} parent=11 // pred_check_branch
        %164 = sbr.rel (%p162) target = $region16
      $region15: #{mininet_forward.56} parent=11 // pred_region
        _
      $region16: #{mininet_forward.56} parent=11 // pred_fallthru
        _
      // Predicated region
      $region17: #{mininet_forward.56} parent=11 // pred_check
        %p165 = pneg %p79
      $region18: #{mininet_forward.56} parent=11 // pred_check_branch
        %167 = sbr.rel (%p165) target = $region20
      $region19: #{mininet_forward.56} parent=11 // pred_region
        _
      $region20: #{mininet_forward.56} parent=11 // pred_fallthru
        _
      // Predicated region
      $region21: #{mininet_forward.56} parent=11 // pred_check
        %p168 = pneg %p100
      $region22: #{mininet_forward.56} parent=11 // pred_check_branch
        %170 = sbr.rel (%p168) target = $region24
      $region23: #{mininet_forward.56} parent=11 // pred_region
        _
      $region24: #{mininet_forward.56} parent=11 // pred_fallthru
        _
      // Predicated region
      $region25: #{mininet_forward.56} parent=11 // pred_check
        %p171 = pneg %p121
      $region26: #{mininet_forward.56} parent=11 // pred_check_branch
        %173 = sbr.rel (%p171) target = $region28
      $region27: #{mininet_forward.56} parent=11 // pred_region
        _
      $region28: #{mininet_forward.56} parent=11 // pred_fallthru
        _
    $region12: #{mininet_forward.56} parent=5 // pred_fallthru
      _
    %p174 = scmp.lt.s32.totalorder %s11, 2
    // Predicated region
    $region29: #{mininet_forward.56} parent=5 // pred_check
      %p175 = pneg %p174
    $region30: #{mininet_forward.56} parent=5 // pred_check_branch
      %177 = sbr.rel (%p175) target = $region32
    $region31: #{mininet_forward.56} parent=5 // pred_region
      // Predicated region
      $region33: #{mininet_forward.56} parent=31 // pred_check
        %p178 = pneg %p31
      $region34: #{mininet_forward.56} parent=31 // pred_check_branch
        %180 = sbr.rel (%p178) target = $region36
      $region35: #{mininet_forward.56} parent=31 // pred_region
        %p181 = scmp.lt.s32.totalorder %s11, 1
        %s182 = scalar_select %p181, %s11, 1
        %s183 = smul.addr %s182, 6
        %s184 = smul.addr %s183, 8
        %s185 = scalar_lea.vmem %s0, %s184
      $region36: #{mininet_forward.56} parent=31 // pred_fallthru
        _
    $region32: #{mininet_forward.56} parent=5 // pred_fallthru
      _
    %p186 = scmp.le.s32.totalorder 1, %s11
    %p187 = scmp.lt.s32.totalorder %s11, 3
    %p188 = pnand %p186, %p187
    %p189 = pneg %p188
    // Predicated region
    $region37: #{mininet_forward.56} parent=5 // pred_check
      _
    $region38: #{mininet_forward.56} parent=5 // pred_check_branch
      %191 = sbr.rel (%p188) target = $region40
    $region39: #{mininet_forward.56} parent=5 // pred_region
      %s192 = ssub.s32 %s11, 1
      %p193 = scmp.lt.s32.totalorder %s16, 1
      %s194 = scalar_select %p193, %s16, 1
      %s195 = smul.addr %s194, 6
      %s196 = smul.addr %s195, 8
      %s197 = scalar_lea.vmem %s0, %s196
      %p198 = pneg %p37
      %p199 = pneg %p34
      %p200 = pneg %p58
      %p201 = pneg %p55
      %p202 = pneg %p79
      %p203 = pneg %p76
      %p204 = pneg %p100
      %p205 = pneg %p97
      %p206 = pneg %p121
      %p207 = pneg %p118
      %p208 = pneg %p147
      %p209 = pneg %p144
      %p210 = scmp.lt.s32.totalorder %s16, 1
      %s211 = scalar_select %p210, %s16, 1
      %s212 = smul.addr %s211, 3
      %s213 = smul.addr %s212, 8
      %s214 = scalar_lea.vmem %s5, %s213
      %p215 = scmp.lt.s32.totalorder %s16, 1
      %s216 = scalar_select %p215, %s16, 1
      %s217 = smul.addr %s216, 6
      %s218 = smul.addr %s217, 8
      %s219 = scalar_lea.vmem %s0, %s218
      %p220 = scmp.lt.s32.totalorder %s16, 1
      %s221 = scalar_select %p220, %s16, 1
      %s222 = smul.addr %s221, 3
      %s223 = smul.addr %s222, 8
      %s224 = scalar_lea.vmem %s5, %s223
      %v226 = vld [vmem:[%s219 + $0x7] sm:$0xff]
      %v227 = vld [vmem:[%s219 + $0xf] sm:$0xff]
      %v228 = vld [vmem:[%s219 + $0x17] sm:$0xff]
      %s229 = scalar_lea.vmem %s1, 4
      %v230 = vld [vmem:[%s229] sm:$0x1]
      %v232 = vlaneseq
      %v233 = vshrl.u32 %v232, 7
      %v234 = vsub.s32 0, %v233
      %v235 = vrot.slane %v230, %v234
      %v237 = vmul.f32 %v226, %v235
      %v238 = vmul.f32 %v227, %v235
      %v239 = vmul.f32 %v228, %v235
      %v240 = vld [vmem:[%s219] sm:$0xff]
      %v241 = vld [vmem:[%s219 + $0x8] sm:$0xff]
      %v242 = vld [vmem:[%s219 + $0x10] sm:$0xff]
      %v243 = vld [vmem:[%s1] sm:$0x1]
      %v245 = vlaneseq
      %v246 = vshrl.u32 %v245, 7
      %v247 = vsub.s32 0, %v246
      %v248 = vrot.slane %v243, %v247
      %v250 = vmul.f32 %v240, %v248
      %v251 = vmul.f32 %v241, %v248
      %v252 = vmul.f32 %v242, %v248
      %v253 = vadd.f32 %v237, %v250
      %v254 = vadd.f32 %v238, %v251
      %v255 = vadd.f32 %v239, %v252
      %v256 = vld [vmem:[%s219 + $0x1] sm:$0xff]
      %v257 = vld [vmem:[%s219 + $0x9] sm:$0xff]
      %v258 = vld [vmem:[%s219 + $0x11] sm:$0xff]
      %s259 = scalar_lea.vmem %s1, 1
      %v260 = vld [vmem:[%s259] sm:$0x1]
      %v262 = vlaneseq
      %v263 = vshrl.u32 %v262, 7
      %v264 = vsub.s32 0, %v263
      %v265 = vrot.slane %v260, %v264
      %v267 = vmul.f32 %v256, %v265
      %v268 = vmul.f32 %v257, %v265
      %v269 = vmul.f32 %v258, %v265
      %v270 = vadd.f32 %v253, %v267
      %v271 = vadd.f32 %v254, %v268
      %v272 = vadd.f32 %v255, %v269
      %v273 = vld [vmem:[%s219 + $0x2] sm:$0xff]
      %v274 = vld [vmem:[%s219 + $0xa] sm:$0xff]
      %v275 = vld [vmem:[%s219 + $0x12] sm:$0xff]
      %s276 = scalar_lea.vmem %s1, 2
      %v277 = vld [vmem:[%s276] sm:$0x1]
      %v279 = vlaneseq
      %v280 = vshrl.u32 %v279, 7
      %v281 = vsub.s32 0, %v280
      %v282 = vrot.slane %v277, %v281
      %v284 = vmul.f32 %v273, %v282
      %v285 = vmul.f32 %v274, %v282
      %v286 = vmul.f32 %v275, %v282
      %v287 = vadd.f32 %v270, %v284
      %v288 = vadd.f32 %v271, %v285
      %v289 = vadd.f32 %v272, %v286
      %v290 = vld [vmem:[%s219 + $0x6] sm:$0xff]
      %v291 = vld [vmem:[%s219 + $0xe] sm:$0xff]
      %v292 = vld [vmem:[%s219 + $0x16] sm:$0xff]
      %s293 = scalar_lea.vmem %s1, 3
      %v294 = vld [vmem:[%s293] sm:$0x1]
      %v296 = vlaneseq
      %v297 = vshrl.u32 %v296, 7
      %v298 = vsub.s32 0, %v297
      %v299 = vrot.slane %v294, %v298
      %v301 = vmul.f32 %v290, %v299
      %v302 = vmul.f32 %v291, %v299
      %v303 = vmul.f32 %v292, %v299
      %v304 = vadd.f32 %v287, %v301
      %v305 = vadd.f32 %v288, %v302
      %v306 = vadd.f32 %v289, %v303
      %v307 = vld [vmem:[%s219 + $0x18] sm:$0xff]
      %s308 = scalar_lea.vmem %s1, 5
      %v309 = vld [vmem:[%s308] sm:$0x1]
      %v311 = vlaneseq
      %v312 = vshrl.u32 %v311, 7
      %v313 = vsub.s32 0, %v312
      %v314 = vrot.slane %v309, %v313
      %v316 = vmul.f32 %v241, %v314
      %v317 = vmul.f32 %v242, %v314
      %v318 = vmul.f32 %v307, %v314
      %v319 = vadd.f32 %v304, %v316
      %v320 = vadd.f32 %v305, %v317
      %v321 = vadd.f32 %v306, %v318
      %v322 = vld [vmem:[%s219 + $0xc] sm:$0xff]
      %v323 = vld [vmem:[%s219 + $0x14] sm:$0xff]
      %v324 = vld [vmem:[%s219 + $0x1c] sm:$0xff]
      %s325 = scalar_lea.vmem %s1, 6
      %v326 = vld [vmem:[%s325] sm:$0x1]
      %v328 = vlaneseq
      %v329 = vshrl.u32 %v328, 7
      %v330 = vsub.s32 0, %v329
      %v331 = vrot.slane %v326, %v330
      %v333 = vmul.f32 %v322, %v331
      %v334 = vmul.f32 %v323, %v331
      %v335 = vmul.f32 %v324, %v331
      %v336 = vadd.f32 %v319, %v333
      %v337 = vadd.f32 %v320, %v334
      %v338 = vadd.f32 %v321, %v335
      %v339 = vld [vmem:[%s219 + $0xd] sm:$0xff]
      %v340 = vld [vmem:[%s219 + $0x15] sm:$0xff]
      %v341 = vld [vmem:[%s219 + $0x1d] sm:$0xff]
      %s342 = scalar_lea.vmem %s1, 7
      %v343 = vld [vmem:[%s342] sm:$0x1]
      %v345 = vlaneseq
      %v346 = vshrl.u32 %v345, 7
      %v347 = vsub.s32 0, %v346
      %v348 = vrot.slane %v343, %v347
      %v350 = vmul.f32 %v339, %v348
      %v351 = vmul.f32 %v340, %v348
      %v352 = vmul.f32 %v341, %v348
      %v353 = vadd.f32 %v336, %v350
      %v354 = vadd.f32 %v337, %v351
      %v355 = vadd.f32 %v338, %v352
      %v356 = vld [vmem:[%s219 + $0x1e] sm:$0xff]
      %s357 = scalar_lea.vmem %s1, 8
      %v358 = vld [vmem:[%s357] sm:$0x1]
      %v360 = vlaneseq
      %v361 = vshrl.u32 %v360, 7
      %v362 = vsub.s32 0, %v361
      %v363 = vrot.slane %v358, %v362
      %v365 = vmul.f32 %v291, %v363
      %v366 = vmul.f32 %v292, %v363
      %v367 = vmul.f32 %v356, %v363
      %v368 = vadd.f32 %v353, %v365
      %v369 = vadd.f32 %v354, %v366
      %v370 = vadd.f32 %v355, %v367
      %v371 = vld [vmem:[%s2] sm:$0x1]
      %v373 = vlaneseq
      %v374 = vshrl.u32 %v373, 7
      %v375 = vsub.s32 0, %v374
      %v376 = vrot.slane %v371, %v375
      %v378 = vadd.f32 %v368, %v376
      %v379 = vadd.f32 %v369, %v376
      %v380 = vadd.f32 %v370, %v376
      %v381 = vmax.f32 %v378, 0.0
      %v382 = vmax.f32 %v379, 0.0
      %v383 = vmax.f32 %v380, 0.0
      %v384 = vpack.c.bf16 %v382, %v381
      %v385 = vpack.c.bf16 %v383, %v383
      %v386 = vld [vmem:[%s3] sm:$0xf]
      %v387 = vld [vmem:[%s3 + $0x4] sm:$0xf]
      %v388 = vld [vmem:[%s3 + $0x8] sm:$0xf]
      %v389 = vld [vmem:[%s3 + $0xc] sm:$0xf]
      %v390 = vld [vmem:[%s3 + $0x10] sm:$0xf]
      %v391 = vld [vmem:[%s3 + $0x14] sm:$0xf]
      %v392 = vld [vmem:[%s3 + $0x18] sm:$0xf]
      %v393 = vld [vmem:[%s3 + $0x1c] sm:$0xf]
      %v394 = vld [vmem:[%s4] sm:$0x1]
      %v396 = vlaneseq
      %v397 = vshrl.u32 %v396, 7
      %v398 = vsub.s32 0, %v397
      %v399 = vrot.slane %v394, %v398
      %v409 = vunpack.c.l.b16 %v386
      %v410 = vunpack.c.l.b16 %v387
      %v411 = vunpack.c.l.b16 %v388
      %v412 = vunpack.c.l.b16 %v389
      %v413 = vunpack.c.l.b16 %v390
      %v414 = vunpack.c.l.b16 %v391
      %v415 = vunpack.c.l.b16 %v392
      %v416 = vunpack.c.l.b16 %v393
      %v417 = vpack.c.b16 %v410, %v409
      %v418 = vpack.c.b16 %v412, %v411
      %v419 = vpack.c.b16 %v414, %v413
      %v420 = vpack.c.b16 %v416, %v415
      %vm425 = vcmask 523264
      %v427 = vsel %vm425, %v384, 0
      %v430 = vsel %vm425, %v385, 0
      %432 = vmatprep.subr.bf16.mxu0 0
      %433 = vmatpush1.bf16.msra.mxu0 %v417
      %434 = vmatprep.subr.bf16.mxu0 0
      %435 = vmatpush1.bf16.msra.mxu0 %v418
      %436 = vmatprep.subr.bf16.mxu0 0
      %437 = vmatpush1.bf16.msra.mxu0 %v419
      %438 = vmatprep.subr.bf16.mxu0 0
      %439 = vmatpush1.bf16.msra.mxu0 %v420
      %440 = vmatprep.subr.bf16.mxu0 0
      %441 = vmatpush1.bf16.msra.mxu0 0
      %442 = vmatprep.subr.bf16.mxu0 0
      %443 = vmatpush1.bf16.msra.mxu0 0
      %444 = vmatprep.subr.bf16.mxu0 0
      %445 = vmatpush1.bf16.msra.mxu0 0
      %446 = vmatprep.subr.bf16.mxu0 0
      %447 = vmatpush1.bf16.msra.mxu0 0
      %448 = vmatprep.subr.bf16.mxu0 0
      %449 = vmatpush1.bf16.msra.mxu0 0
      %450 = vmatprep.subr.bf16.mxu0 0
      %451 = vmatpush1.bf16.msra.mxu0 0
      %452 = vmatprep.subr.bf16.mxu0 0
      %453 = vmatpush1.bf16.msra.mxu0 0
      %454 = vmatprep.subr.bf16.mxu0 0
      %455 = vmatpush1.bf16.msra.mxu0 0
      %456 = vmatprep.subr.bf16.mxu0 0
      %457 = vmatpush1.bf16.msra.mxu0 0
      %458 = vmatprep.subr.bf16.mxu0 0
      %459 = vmatpush1.bf16.msra.mxu0 0
      %460 = vmatprep.subr.bf16.mxu0 0
      %461 = vmatpush1.bf16.msra.mxu0 0
      %462 = vmatprep.subr.bf16.mxu0 0
      %463 = vmatpush1.bf16.msra.mxu0 0
      %464 = vmatprep.mubr.bf16.mxu0 0
      %465 = vmatmul.mubr.bf16.gmra.mrb[0].mxu0 %v427
      %v466 = vpop.f32.mrb[0].mxu0
      %v467 = vadd.f32 %v399, %v466
      %v468 = vpop.f32.mrb[0].mxu0
      %v469 = vpop.f32.mrb[0].mxu0
      %v470 = vadd.f32 %v399, %v469
      %v471 = vpop.f32.mrb[0].mxu0
      %472 = vmatprep.mubr.bf16.mxu0 0
      %473 = vmatmul.mubr.bf16.gmra.mrb[0].mxu0 %v430
      %v474 = vpop.f32.mrb[0].mxu0
      %v475 = vadd.f32 %v399, %v474
      %v476 = vpop.f32.mrb[0].mxu0
      %v477 = vpop.f32.mrb[0].mxu0
      %v478 = vpop.f32.mrb[0].mxu0
      %479 = vdwg.mxu0
      %v480 = vadd.f32 %v467, %v226
      %v481 = vadd.f32 %v470, %v227
      %v482 = vadd.f32 %v475, %v228
      %v483 = vmax.f32 %v480, 0.0
      %v484 = vmax.f32 %v481, 0.0
      %v485 = vmax.f32 %v482, 0.0
      %486 = vst.msk [vmem:[%s224] sm:$0xff] %vm425, %v483
      %487 = vst.msk [vmem:[%s224 + $0x8] sm:$0xff] %vm425, %v484
      %488 = vst.msk [vmem:[%s224 + $0x10] sm:$0xff] %vm425, %v485
      %p489 = scmp.lt.s32.totalorder %s16, 1
      %s490 = scalar_select %p489, %s16, 1
      %s491 = smul.addr %s490, 3
      %s492 = smul.addr %s491, 8
      %s493 = scalar_lea.vmem %s5, %s492
      // Predicated region
      $region41: #{mininet_forward.56} parent=39 // pred_check
        %p494 = pneg %p144
      $region42: #{mininet_forward.56} parent=39 // pred_check_branch
        %496 = sbr.rel (%p494) target = $region44
      $region43: #{mininet_forward.56} parent=39 // pred_region
        _
      $region44: #{mininet_forward.56} parent=39 // pred_fallthru
        _
    $region40: #{mininet_forward.56} parent=5 // pred_fallthru
      _
    %p497 = scmp.le.s32.totalorder 2, %s11
    // Predicated region
    $region45: #{mininet_forward.56} parent=5 // pred_check
      %p498 = pneg %p497
    $region46: #{mininet_forward.56} parent=5 // pred_check_branch
      %500 = sbr.rel (%p498) target = $region48
    $region47: #{mininet_forward.56} parent=5 // pred_region
      %s501 = ssub.s32 %s11, 2
      // Predicated region
      $region49: #{mininet_forward.56} parent=47 // pred_check
        %p502 = pneg %p150
      $region50: #{mininet_forward.56} parent=47 // pred_check_branch
        %504 = sbr.rel (%p502) target = $region52
      $region51: #{mininet_forward.56} parent=47 // pred_region
        %p505 = scmp.lt.s32.totalorder %s17, 1
        %s506 = scalar_select %p505, %s17, 1
        %s507 = smul.addr %s506, 3
        %s508 = smul.addr %s507, 8
        %s509 = scalar_lea.vmem %s5, %s508
      $region52: #{mininet_forward.56} parent=47 // pred_fallthru
        _
    $region48: #{mininet_forward.56} parent=5 // pred_fallthru
      _
  $region6: #{mininet_forward.56} parent=0 // loop_footer
    %s15 = sadd.s32 1, %s11
  $region7: #{mininet_forward.56} parent=0 // loop_footer_branch
    %10 = sbr.rel target = $region3
  $region8: #{mininet_forward.56} parent=0 // loop_exit
    _

// kernel: mininet_forward.67
$region0: #{mininet_forward.67}
  #allocation0 [shape = 'u32[]', space=smem, size = 0x4, offset = 0x4, fixed_abs, tag = 'smem constant byte address 0x4 - core index']
  #allocation1 [shape = 'u32[144,128]{1,0:T(1,128)}', space=vmem, size = 0x12000, scoped, tag = 'internal scratch']
  %s0 = inlined_call_operand.vmem [shape: f32[16,64], index: 0, kind: input, shape index: {}]
  %s1 = inlined_call_operand.vmem [shape: f32[1,64], index: 1, kind: input, shape index: {}]
  %s2 = inlined_call_operand.vmem [shape: f32[1,64], index: 2, kind: input, shape index: {}]
  %s3 = inlined_call_operand.vmem [shape: f32[16,64], index: 3, kind: output, shape index: {}]
  %s4 = sld [smem:[#allocation0]]
  $region22: #{mininet_forward.67} parent=0
    _
  %s6 = ssub.s32 1, %s4
  %s7 = scalar_select 0, %s6, %s4
  // Predicated region
  $region2: #{mininet_forward.67} parent=0 // pred_check
    _
  $region3: #{mininet_forward.67} parent=0 // pred_check_branch
    %9 = sbr.rel (0) target = $region5
  $region4: #{mininet_forward.67} parent=0 // pred_region
    _
  $region5: #{mininet_forward.67} parent=0 // pred_fallthru
    _
  // Predicated region
  $region6: #{mininet_forward.67} parent=0 // pred_check
    _
  $region7: #{mininet_forward.67} parent=0 // pred_check_branch
    %11 = sbr.rel (0) target = $region9
  $region8: #{mininet_forward.67} parent=0 // pred_region
    _
  $region9: #{mininet_forward.67} parent=0 // pred_fallthru
    _
  // Predicated region
  $region10: #{mininet_forward.67} parent=0 // pred_check
    _
  $region11: #{mininet_forward.67} parent=0 // pred_check_branch
    %13 = sbr.rel (0) target = $region13
  $region12: #{mininet_forward.67} parent=0 // pred_region
    _
  $region13: #{mininet_forward.67} parent=0 // pred_fallthru
    _
  %v14 = vld [vmem:[%s0] sm:$0xff]
  %v15 = vld [vmem:[%s0 + $0x8] sm:$0xff]
  %v16 = vld [vmem:[%s1] sm:$0x1]
  %v18 = vlaneseq
  %v19 = vshrl.u32 %v18, 7
  %v20 = vsub.s32 0, %v19
  %v21 = vrot.slane %v16, %v20
  %v23 = vmul.f32 %v14, %v21
  %v24 = vmul.f32 %v15, %v21
  %v25 = vld [vmem:[%s2] sm:$0x1]
  %v27 = vlaneseq
  %v28 = vshrl.u32 %v27, 7
  %v29 = vsub.s32 0, %v28
  %v30 = vrot.slane %v25, %v29
  %v32 = vadd.f32 %v23, %v30
  %v33 = vadd.f32 %v24, %v30
  %v34 = vmax.f32 %v32, 0.0
  %v35 = vmax.f32 %v33, 0.0
  %vm36 = vcmask 523264
  %37 = vst.msk [vmem:[%s3] sm:$0xff] %vm36, %v34
  %38 = vst.msk [vmem:[%s3 + $0x8] sm:$0xff] %vm36, %v35
  // Predicated region
  $region14: #{mininet_forward.67} parent=0 // pred_check
    _
  $region15: #{mininet_forward.67} parent=0 // pred_check_branch
    %40 = sbr.rel (0) target = $region17
  $region16: #{mininet_forward.67} parent=0 // pred_region
    _
  $region17: #{mininet_forward.67} parent=0 // pred_fallthru
    _
  // Predicated region
  $region18: #{mininet_forward.67} parent=0 // pred_check
    _
  $region19: #{mininet_forward.67} parent=0 // pred_check_branch
    %42 = sbr.rel (0) target = $region21
  $region20: #{mininet_forward.67} parent=0 // pred_region
    _
  $region21: #{mininet_forward.67} parent=0 // pred_fallthru
    _

// kernel: mininet_forward.66
$region0: #{mininet_forward.66}
  #allocation0 [shape = 'u32[]', space=smem, size = 0x4, offset = 0x4, fixed_abs, tag = 'smem constant byte address 0x4 - core index']
  #allocation1 [shape = 'u32[144,128]{1,0:T(1,128)}', space=vmem, size = 0x12000, scoped, tag = 'internal scratch']
  %s0 = inlined_call_operand.vmem [shape: bf16[16,576], index: 0, kind: input, shape index: {}]
  %s1 = inlined_call_operand.vmem [shape: bf16[576,64], index: 1, kind: input, shape index: {}]
  %s2 = inlined_call_operand.vmem [shape: f32[1,64], index: 2, kind: input, shape index: {}]
  %s3 = inlined_call_operand.vmem [shape: f32[16,64], index: 3, kind: output, shape index: {}]
  %s4 = sld [smem:[#allocation0]]
  $region22: #{mininet_forward.66} parent=0
    _
  %s6 = ssub.s32 1, %s4
  %s7 = scalar_select 0, %s6, %s4
  // Predicated region
  $region2: #{mininet_forward.66} parent=0 // pred_check
    _
  $region3: #{mininet_forward.66} parent=0 // pred_check_branch
    %9 = sbr.rel (0) target = $region5
  $region4: #{mininet_forward.66} parent=0 // pred_region
    _
  $region5: #{mininet_forward.66} parent=0 // pred_fallthru
    _
  // Predicated region
  $region6: #{mininet_forward.66} parent=0 // pred_check
    _
  $region7: #{mininet_forward.66} parent=0 // pred_check_branch
    %11 = sbr.rel (0) target = $region9
  $region8: #{mininet_forward.66} parent=0 // pred_region
    _
  $region9: #{mininet_forward.66} parent=0 // pred_fallthru
    _
  // Predicated region
  $region10: #{mininet_forward.66} parent=0 // pred_check
    _
  $region11: #{mininet_forward.66} parent=0 // pred_check_branch
    %13 = sbr.rel (0) target = $region13
  $region12: #{mininet_forward.66} parent=0 // pred_region
    _
  $region13: #{mininet_forward.66} parent=0 // pred_fallthru
    _
  %v15 = vld [vmem:[%s0] sm:$0xff]
  %v16 = vld [vmem:[%s0 + $0x8] sm:$0xff]
  %v17 = vld [vmem:[%s0 + $0x10] sm:$0xf]
  %v18 = vld [vmem:[%s0 + $0x14] sm:$0xff]
  %v19 = vld [vmem:[%s0 + $0x1c] sm:$0xff]
  %v20 = vld [vmem:[%s0 + $0x24] sm:$0xf]
  %v21 = vld [vmem:[%s1] sm:$0xf]
  %v22 = vld [vmem:[%s1 + $0x4] sm:$0xf]
  %v23 = vld [vmem:[%s1 + $0x8] sm:$0xf]
  %v24 = vld [vmem:[%s1 + $0xc] sm:$0xf]
  %v25 = vld [vmem:[%s1 + $0x10] sm:$0xf]
  %v26 = vld [vmem:[%s1 + $0x14] sm:$0xf]
  %v27 = vld [vmem:[%s1 + $0x18] sm:$0xf]
  %v28 = vld [vmem:[%s1 + $0x1c] sm:$0xf]
  %v29 = vld [vmem:[%s1 + $0x20] sm:$0xf]
  %v30 = vld [vmem:[%s1 + $0x24] sm:$0xf]
  %v31 = vld [vmem:[%s1 + $0x28] sm:$0xf]
  %v32 = vld [vmem:[%s1 + $0x2c] sm:$0xf]
  %v33 = vld [vmem:[%s1 + $0x30] sm:$0xf]
  %v34 = vld [vmem:[%s1 + $0x34] sm:$0xf]
  %v35 = vld [vmem:[%s1 + $0x38] sm:$0xf]
  %v36 = vld [vmem:[%s1 + $0x3c] sm:$0xf]
  %v37 = vld [vmem:[%s1 + $0x40] sm:$0xf]
  %v38 = vld [vmem:[%s1 + $0x44] sm:$0xf]
  %v39 = vld [vmem:[%s1 + $0x48] sm:$0xf]
  %v40 = vld [vmem:[%s1 + $0x4c] sm:$0xf]
  %v41 = vld [vmem:[%s1 + $0x50] sm:$0xf]
  %v42 = vld [vmem:[%s1 + $0x54] sm:$0xf]
  %v43 = vld [vmem:[%s1 + $0x58] sm:$0xf]
  %v44 = vld [vmem:[%s1 + $0x5c] sm:$0xf]
  %v45 = vld [vmem:[%s1 + $0x60] sm:$0xf]
  %v46 = vld [vmem:[%s1 + $0x64] sm:$0xf]
  %v47 = vld [vmem:[%s1 + $0x68] sm:$0xf]
  %v48 = vld [vmem:[%s1 + $0x6c] sm:$0xf]
  %v49 = vld [vmem:[%s1 + $0x70] sm:$0xf]
  %v50 = vld [vmem:[%s1 + $0x74] sm:$0xf]
  %v51 = vld [vmem:[%s1 + $0x78] sm:$0xf]
  %v52 = vld [vmem:[%s1 + $0x7c] sm:$0xf]
  %v53 = vld [vmem:[%s1 + $0x80] sm:$0xf]
  %v54 = vld [vmem:[%s1 + $0x84] sm:$0xf]
  %v55 = vld [vmem:[%s1 + $0x88] sm:$0xf]
  %v56 = vld [vmem:[%s1 + $0x8c] sm:$0xf]
  %v57 = vld [vmem:[%s1 + $0x90] sm:$0xf]
  %v58 = vld [vmem:[%s1 + $0x94] sm:$0xf]
  %v59 = vld [vmem:[%s1 + $0x98] sm:$0xf]
  %v60 = vld [vmem:[%s1 + $0x9c] sm:$0xf]
  %v61 = vld [vmem:[%s1 + $0xa0] sm:$0xf]
  %v62 = vld [vmem:[%s1 + $0xa4] sm:$0xf]
  %v63 = vld [vmem:[%s1 + $0xa8] sm:$0xf]
  %v64 = vld [vmem:[%s1 + $0xac] sm:$0xf]
  %v65 = vld [vmem:[%s1 + $0xb0] sm:$0xf]
  %v66 = vld [vmem:[%s1 + $0xb4] sm:$0xf]
  %v67 = vld [vmem:[%s1 + $0xb8] sm:$0xf]
  %v68 = vld [vmem:[%s1 + $0xbc] sm:$0xf]
  %v69 = vld [vmem:[%s1 + $0xc0] sm:$0xf]
  %v70 = vld [vmem:[%s1 + $0xc4] sm:$0xf]
  %v71 = vld [vmem:[%s1 + $0xc8] sm:$0xf]
  %v72 = vld [vmem:[%s1 + $0xcc] sm:$0xf]
  %v73 = vld [vmem:[%s1 + $0xd0] sm:$0xf]
  %v74 = vld [vmem:[%s1 + $0xd4] sm:$0xf]
  %v75 = vld [vmem:[%s1 + $0xd8] sm:$0xf]
  %v76 = vld [vmem:[%s1 + $0xdc] sm:$0xf]
  %v77 = vld [vmem:[%s1 + $0xe0] sm:$0xf]
  %v78 = vld [vmem:[%s1 + $0xe4] sm:$0xf]
  %v79 = vld [vmem:[%s1 + $0xe8] sm:$0xf]
  %v80 = vld [vmem:[%s1 + $0xec] sm:$0xf]
  %v81 = vld [vmem:[%s1 + $0xf0] sm:$0xf]
  %v82 = vld [vmem:[%s1 + $0xf4] sm:$0xf]
  %v83 = vld [vmem:[%s1 + $0xf8] sm:$0xf]
  %v84 = vld [vmem:[%s1 + $0xfc] sm:$0xf]
  %v85 = vld [vmem:[%s1 + $0x100] sm:$0xf]
  %v86 = vld [vmem:[%s1 + $0x104] sm:$0xf]
  %v87 = vld [vmem:[%s1 + $0x108] sm:$0xf]
  %v88 = vld [vmem:[%s1 + $0x10c] sm:$0xf]
  %v89 = vld [vmem:[%s1 + $0x110] sm:$0xf]
  %v90 = vld [vmem:[%s1 + $0x114] sm:$0xf]
  %v91 = vld [vmem:[%s1 + $0x118] sm:$0xf]
  %v92 = vld [vmem:[%s1 + $0x11c] sm:$0xf]
  %v93 = vld [vmem:[%s2] sm:$0x1]
  %v95 = vlaneseq
  %v96 = vshrl.u32 %v95, 7
  %v97 = vsub.s32 0, %v96
  %v98 = vrot.slane %v93, %v97
  %v106 = vunpack.c.l.b16 %v15
  %v107 = vunpack.c.h.b16 %v15
  %v108 = vunpack.c.l.b16 %v16
  %v109 = vunpack.c.h.b16 %v16
  %v110 = vunpack.c.l.b16 %v17
  %v111 = vunpack.c.l.b16 %v18
  %v112 = vunpack.c.h.b16 %v18
  %v113 = vunpack.c.l.b16 %v19
  %v114 = vunpack.c.h.b16 %v19
  %v115 = vunpack.c.l.b16 %v20
  %v116 = vpack.c.b16 %v111, %v106
  %v117 = vpack.c.b16 %v112, %v107
  %v118 = vpack.c.b16 %v113, %v108
  %v119 = vpack.c.b16 %v114, %v109
  %v120 = vpack.c.b16 %v115, %v110
  %v197 = vunpack.c.l.b16 %v21
  %v198 = vunpack.c.l.b16 %v22
  %v199 = vunpack.c.l.b16 %v23
  %v200 = vunpack.c.l.b16 %v24
  %v201 = vunpack.c.l.b16 %v25
  %v202 = vunpack.c.l.b16 %v26
  %v203 = vunpack.c.l.b16 %v27
  %v204 = vunpack.c.l.b16 %v28
  %v205 = vunpack.c.l.b16 %v29
  %v206 = vunpack.c.l.b16 %v30
  %v207 = vunpack.c.l.b16 %v31
  %v208 = vunpack.c.l.b16 %v32
  %v209 = vunpack.c.l.b16 %v33
  %v210 = vunpack.c.l.b16 %v34
  %v211 = vunpack.c.l.b16 %v35
  %v212 = vunpack.c.l.b16 %v36
  %v213 = vunpack.c.l.b16 %v37
  %v214 = vunpack.c.l.b16 %v38
  %v215 = vunpack.c.l.b16 %v39
  %v216 = vunpack.c.l.b16 %v40
  %v217 = vunpack.c.l.b16 %v41
  %v218 = vunpack.c.l.b16 %v42
  %v219 = vunpack.c.l.b16 %v43
  %v220 = vunpack.c.l.b16 %v44
  %v221 = vunpack.c.l.b16 %v45
  %v222 = vunpack.c.l.b16 %v46
  %v223 = vunpack.c.l.b16 %v47
  %v224 = vunpack.c.l.b16 %v48
  %v225 = vunpack.c.l.b16 %v49
  %v226 = vunpack.c.l.b16 %v50
  %v227 = vunpack.c.l.b16 %v51
  %v228 = vunpack.c.l.b16 %v52
  %v229 = vunpack.c.l.b16 %v53
  %v230 = vunpack.c.l.b16 %v54
  %v231 = vunpack.c.l.b16 %v55
  %v232 = vunpack.c.l.b16 %v56
  %v233 = vunpack.c.l.b16 %v57
  %v234 = vunpack.c.l.b16 %v58
  %v235 = vunpack.c.l.b16 %v59
  %v236 = vunpack.c.l.b16 %v60
  %v237 = vunpack.c.l.b16 %v61
  %v238 = vunpack.c.l.b16 %v62
  %v239 = vunpack.c.l.b16 %v63
  %v240 = vunpack.c.l.b16 %v64
  %v241 = vunpack.c.l.b16 %v65
  %v242 = vunpack.c.l.b16 %v66
  %v243 = vunpack.c.l.b16 %v67
  %v244 = vunpack.c.l.b16 %v68
  %v245 = vunpack.c.l.b16 %v69
  %v246 = vunpack.c.l.b16 %v70
  %v247 = vunpack.c.l.b16 %v71
  %v248 = vunpack.c.l.b16 %v72
  %v249 = vunpack.c.l.b16 %v73
  %v250 = vunpack.c.l.b16 %v74
  %v251 = vunpack.c.l.b16 %v75
  %v252 = vunpack.c.l.b16 %v76
  %v253 = vunpack.c.l.b16 %v77
  %v254 = vunpack.c.l.b16 %v78
  %v255 = vunpack.c.l.b16 %v79
  %v256 = vunpack.c.l.b16 %v80
  %v257 = vunpack.c.l.b16 %v81
  %v258 = vunpack.c.l.b16 %v82
  %v259 = vunpack.c.l.b16 %v83
  %v260 = vunpack.c.l.b16 %v84
  %v261 = vunpack.c.l.b16 %v85
  %v262 = vunpack.c.l.b16 %v86
  %v263 = vunpack.c.l.b16 %v87
  %v264 = vunpack.c.l.b16 %v88
  %v265 = vunpack.c.l.b16 %v89
  %v266 = vunpack.c.l.b16 %v90
  %v267 = vunpack.c.l.b16 %v91
  %v268 = vunpack.c.l.b16 %v92
  %v269 = vpack.c.b16 %v198, %v197
  %v270 = vpack.c.b16 %v200, %v199
  %v271 = vpack.c.b16 %v202, %v201
  %v272 = vpack.c.b16 %v204, %v203
  %v273 = vpack.c.b16 %v206, %v205
  %v274 = vpack.c.b16 %v208, %v207
  %v275 = vpack.c.b16 %v210, %v209
  %v276 = vpack.c.b16 %v212, %v211
  %v277 = vpack.c.b16 %v214, %v213
  %v278 = vpack.c.b16 %v216, %v215
  %v279 = vpack.c.b16 %v218, %v217
  %v280 = vpack.c.b16 %v220, %v219
  %v281 = vpack.c.b16 %v222, %v221
  %v282 = vpack.c.b16 %v224, %v223
  %v283 = vpack.c.b16 %v226, %v225
  %v284 = vpack.c.b16 %v228, %v227
  %v285 = vpack.c.b16 %v230, %v229
  %v286 = vpack.c.b16 %v232, %v231
  %v287 = vpack.c.b16 %v234, %v233
  %v288 = vpack.c.b16 %v236, %v235
  %v289 = vpack.c.b16 %v238, %v237
  %v290 = vpack.c.b16 %v240, %v239
  %v291 = vpack.c.b16 %v242, %v241
  %v292 = vpack.c.b16 %v244, %v243
  %v293 = vpack.c.b16 %v246, %v245
  %v294 = vpack.c.b16 %v248, %v247
  %v295 = vpack.c.b16 %v250, %v249
  %v296 = vpack.c.b16 %v252, %v251
  %v297 = vpack.c.b16 %v254, %v253
  %v298 = vpack.c.b16 %v256, %v255
  %v299 = vpack.c.b16 %v258, %v257
  %v300 = vpack.c.b16 %v260, %v259
  %v301 = vpack.c.b16 %v262, %v261
  %v302 = vpack.c.b16 %v264, %v263
  %v303 = vpack.c.b16 %v266, %v265
  %v304 = vpack.c.b16 %v268, %v267
  %vm341 = vcmask 523264
  %v343 = vsel %vm341, %v120, 0
  %345 = vmatprep.subr.bf16.mxu0 0
  %346 = vmatpush1.bf16.msra.mxu0 %v269
  %347 = vmatprep.subr.bf16.mxu0 0
  %348 = vmatpush1.bf16.msra.mxu0 %v270
  %349 = vmatprep.subr.bf16.mxu0 0
  %350 = vmatpush1.bf16.msra.mxu0 %v271
  %351 = vmatprep.subr.bf16.mxu0 0
  %352 = vmatpush1.bf16.msra.mxu0 %v272
  %353 = vmatprep.subr.bf16.mxu0 0
  %354 = vmatpush1.bf16.msra.mxu0 %v273
  %355 = vmatprep.subr.bf16.mxu0 0
  %356 = vmatpush1.bf16.msra.mxu0 %v274
  %357 = vmatprep.subr.bf16.mxu0 0
  %358 = vmatpush1.bf16.msra.mxu0 %v275
  %359 = vmatprep.subr.bf16.mxu0 0
  %360 = vmatpush1.bf16.msra.mxu0 %v276
  %361 = vmatprep.subr.bf16.mxu0 0
  %362 = vmatpush1.bf16.msra.mxu0 %v277
  %363 = vmatprep.subr.bf16.mxu0 0
  %364 = vmatpush1.bf16.msra.mxu0 %v278
  %365 = vmatprep.subr.bf16.mxu0 0
  %366 = vmatpush1.bf16.msra.mxu0 %v279
  %367 = vmatprep.subr.bf16.mxu0 0
  %368 = vmatpush1.bf16.msra.mxu0 %v280
  %369 = vmatprep.subr.bf16.mxu0 0
  %370 = vmatpush1.bf16.msra.mxu0 %v281
  %371 = vmatprep.subr.bf16.mxu0 0
  %372 = vmatpush1.bf16.msra.mxu0 %v282
  %373 = vmatprep.subr.bf16.mxu0 0
  %374 = vmatpush1.bf16.msra.mxu0 %v283
  %375 = vmatprep.subr.bf16.mxu0 0
  %376 = vmatpush1.bf16.msra.mxu0 %v284
  %377 = vmatprep.mubr.bf16.mxu0 %v117
  %378 = vmatmul.mubr.bf16.gmra.mrb[0].mxu0 %v116
  %v379 = vpop.f32.mrb[0].mxu0
  %v380 = vadd.f32 %v98, %v379
  %v381 = vpop.f32.mrb[0].mxu0
  %v382 = vpop.f32.mrb[0].mxu0
  %v383 = vadd.f32 %v98, %v382
  %v384 = vpop.f32.mrb[0].mxu0
  %385 = vdwg.mxu0
  %386 = vmatprep.subr.bf16.mxu0 0
  %387 = vmatpush1.bf16.msra.mxu0 %v285
  %388 = vmatprep.subr.bf16.mxu0 0
  %389 = vmatpush1.bf16.msra.mxu0 %v286
  %390 = vmatprep.subr.bf16.mxu0 0
  %391 = vmatpush1.bf16.msra.mxu0 %v287
  %392 = vmatprep.subr.bf16.mxu0 0
  %393 = vmatpush1.bf16.msra.mxu0 %v288
  %394 = vmatprep.subr.bf16.mxu0 0
  %395 = vmatpush1.bf16.msra.mxu0 %v289
  %396 = vmatprep.subr.bf16.mxu0 0
  %397 = vmatpush1.bf16.msra.mxu0 %v290
  %398 = vmatprep.subr.bf16.mxu0 0
  %399 = vmatpush1.bf16.msra.mxu0 %v291
  %400 = vmatprep.subr.bf16.mxu0 0
  %401 = vmatpush1.bf16.msra.mxu0 %v292
  %402 = vmatprep.subr.bf16.mxu0 0
  %403 = vmatpush1.bf16.msra.mxu0 %v293
  %404 = vmatprep.subr.bf16.mxu0 0
  %405 = vmatpush1.bf16.msra.mxu0 %v294
  %406 = vmatprep.subr.bf16.mxu0 0
  %407 = vmatpush1.bf16.msra.mxu0 %v295
  %408 = vmatprep.subr.bf16.mxu0 0
  %409 = vmatpush1.bf16.msra.mxu0 %v296
  %410 = vmatprep.subr.bf16.mxu0 0
  %411 = vmatpush1.bf16.msra.mxu0 %v297
  %412 = vmatprep.subr.bf16.mxu0 0
  %413 = vmatpush1.bf16.msra.mxu0 %v298
  %414 = vmatprep.subr.bf16.mxu0 0
  %415 = vmatpush1.bf16.msra.mxu0 %v299
  %416 = vmatprep.subr.bf16.mxu0 0
  %417 = vmatpush1.bf16.msra.mxu0 %v300
  %418 = vmatprep.mubr.bf16.mxu0 %v119
  %419 = vmatmul.mubr.bf16.gmra.mrb[0].mxu0 %v118
  %v420 = vpop.f32.mrb[0].mxu0
  %v421 = vadd.f32 %v380, %v420
  %v422 = vpop.f32.mrb[0].mxu0
  %v423 = vpop.f32.mrb[0].mxu0
  %v424 = vadd.f32 %v383, %v423
  %v425 = vpop.f32.mrb[0].mxu0
  %426 = vdwg.mxu0
  %427 = vmatprep.subr.bf16.mxu0 0
  %428 = vmatpush1.bf16.msra.mxu0 %v301
  %429 = vmatprep.subr.bf16.mxu0 0
  %430 = vmatpush1.bf16.msra.mxu0 %v302
  %431 = vmatprep.subr.bf16.mxu0 0
  %432 = vmatpush1.bf16.msra.mxu0 %v303
  %433 = vmatprep.subr.bf16.mxu0 0
  %434 = vmatpush1.bf16.msra.mxu0 %v304
  %435 = vmatprep.subr.bf16.mxu0 0
  %436 = vmatpush1.bf16.msra.mxu0 0
  %437 = vmatprep.subr.bf16.mxu0 0
  %438 = vmatpush1.bf16.msra.mxu0 0
  %439 = vmatprep.subr.bf16.mxu0 0
  %440 = vmatpush1.bf16.msra.mxu0 0
  %441 = vmatprep.subr.bf16.mxu0 0
  %442 = vmatpush1.bf16.msra.mxu0 0
  %443 = vmatprep.subr.bf16.mxu0 0
  %444 = vmatpush1.bf16.msra.mxu0 0
  %445 = vmatprep.subr.bf16.mxu0 0
  %446 = vmatpush1.bf16.msra.mxu0 0
  %447 = vmatprep.subr.bf16.mxu0 0
  %448 = vmatpush1.bf16.msra.mxu0 0
  %449 = vmatprep.subr.bf16.mxu0 0
  %450 = vmatpush1.bf16.msra.mxu0 0
  %451 = vmatprep.subr.bf16.mxu0 0
  %452 = vmatpush1.bf16.msra.mxu0 0
  %453 = vmatprep.subr.bf16.mxu0 0
  %454 = vmatpush1.bf16.msra.mxu0 0
  %455 = vmatprep.subr.bf16.mxu0 0
  %456 = vmatpush1.bf16.msra.mxu0 0
  %457 = vmatprep.subr.bf16.mxu0 0
  %458 = vmatpush1.bf16.msra.mxu0 0
  %459 = vmatprep.mubr.bf16.mxu0 0
  %460 = vmatmul.mubr.bf16.gmra.mrb[0].mxu0 %v343
  %v461 = vpop.f32.mrb[0].mxu0
  %v462 = vadd.f32 %v421, %v461
  %v463 = vpop.f32.mrb[0].mxu0
  %v464 = vpop.f32.mrb[0].mxu0
  %v465 = vadd.f32 %v424, %v464
  %v466 = vpop.f32.mrb[0].mxu0
  %467 = vdwg.mxu0
  %v468 = vmax.f32 %v462, 0.0
  %v469 = vmax.f32 %v465, 0.0
  %470 = vst.msk [vmem:[%s3] sm:$0xff] %vm341, %v468
  %471 = vst.msk [vmem:[%s3 + $0x8] sm:$0xff] %vm341, %v469
  // Predicated region
  $region14: #{mininet_forward.66} parent=0 // pred_check
    _
  $region15: #{mininet_forward.66} parent=0 // pred_check_branch
    %473 = sbr.rel (0) target = $region17
  $region16: #{mininet_forward.66} parent=0 // pred_region
    _
  $region17: #{mininet_forward.66} parent=0 // pred_fallthru
    _
  // Predicated region
  $region18: #{mininet_forward.66} parent=0 // pred_check
    _
  $region19: #{mininet_forward.66} parent=0 // pred_check_branch
    %475 = sbr.rel (0) target = $region21
  $region20: #{mininet_forward.66} parent=0 // pred_region
    _
  $region21: #{mininet_forward.66} parent=0 // pred_fallthru
    _

// kernel: mininet_forward.68
$region0: #{mininet_forward.68}
  #allocation0 [shape = 'u32[]', space=smem, size = 0x4, offset = 0x4, fixed_abs, tag = 'smem constant byte address 0x4 - core index']
  #allocation1 [shape = 'u32[144,128]{1,0:T(1,128)}', space=vmem, size = 0x12000, scoped, tag = 'internal scratch']
  %s0 = inlined_call_operand.vmem [shape: f32[2,20,128], index: 0, kind: input, shape index: {}]
  %s1 = inlined_call_operand.vmem [shape: f32[9,1,128], index: 1, kind: input, shape index: {}]
  %s2 = inlined_call_operand.vmem [shape: f32[1,128], index: 2, kind: input, shape index: {}]
  %s3 = inlined_call_operand.vmem [shape: f32[9,1,128], index: 3, kind: input, shape index: {}]
  %s4 = inlined_call_operand.vmem [shape: f32[1,128], index: 4, kind: input, shape index: {}]
  %s5 = inlined_call_operand.vmem [shape: bf16[128,128], index: 5, kind: input, shape index: {}]
  %s6 = inlined_call_operand.vmem [shape: f32[1,128], index: 6, kind: input, shape index: {}]
  %s7 = inlined_call_operand.vmem [shape: f32[2,8,128], index: 7, kind: output, shape index: {}]
  %s8 = sld [smem:[#allocation0]]
  $region61: #{mininet_forward.68} parent=0
    _
  %s10 = ssub.s32 1, %s8
  %s11 = scalar_select 0, %s10, %s8
  loop: start=0, step=1, limit=4
  $region2: #{mininet_forward.68} parent=0 // loop_pre_header
    _
  $region3: #{mininet_forward.68} parent=0 // loop_header
    %s13 = sphi 0, %s17
    %p14 = scmp.ge.s32.totalorder %s13, 4
    %s23 = sphi 0, %s25
    %s26 = sphi 0, %s23
    %s27 = sphi 0, %s26
    %s43 = sphi 0, %s27
    %s47 = sphi 0, %s47
    %s49 = sphi 0, %s47
    %s50 = sphi 0, %s49
    %s64 = sphi 0, %s50
    %s68 = sphi 0, %s68
    %s70 = sphi 0, %s68
    %s71 = sphi 0, %s70
    %s85 = sphi 0, %s71
    %s89 = sphi 0, %s89
    %s91 = sphi 0, %s89
    %s92 = sphi 0, %s91
    %s106 = sphi 0, %s92
    %s110 = sphi 0, %s110
    %s112 = sphi 0, %s110
    %s113 = sphi 0, %s112
    %s127 = sphi 0, %s113
    %s131 = sphi 0, %s131
    %s133 = sphi 0, %s131
    %s134 = sphi 0, %s133
    %s148 = sphi 0, %s134
    %s152 = sphi 0, %s152
    %s154 = sphi 0, %s152
    %s155 = sphi 0, %s154
    %s169 = sphi 0, %s155
    %s175 = sphi 0, %s177
    %s178 = sphi 0, %s175
    %s179 = sphi 0, %s178
    %s195 = sphi 0, %s179
  $region4: #{mininet_forward.68} parent=0 // loop_header_branch
    %16 = sbr.rel (%p14) target = $region8
  $region5: #{mininet_forward.68} parent=0 // loop_body
    %s18 = ssub.s32 %s13, 1
    %s19 = ssub.s32 %s13, 2
    %s20 = sadd.s32 %s13, 1
    %s21 = ssub.s32 %s13, %s20
    %p22 = scmp.eq.s32.totalorder %s21, 0
    %s24 = sadd.s32 %s23, 1
    %s25 = scalar_select %p22, %s23, %s24
    %p28 = pneg %p22
    %p29 = scmp.eq.s32.totalorder %s13, 1
    %p30 = por %p28, %p29
    %p31 = scmp.ne.s32.totalorder %s23, %s26
    %p32 = scmp.eq.s32.totalorder %s13, 0
    %p33 = por %p31, %p32
    %p34 = scmp.ne.s32.totalorder %s23, %s26
    %p35 = scmp.eq.s32.totalorder %s18, 1
    %p36 = por %p34, %p35
    %p37 = scmp.ne.s32.totalorder %s26, %s27
    %p38 = scmp.eq.s32.totalorder %s18, 0
    %p39 = por %p37, %p38
    %p40 = scmp.ne.s32.totalorder %s26, %s27
    %p41 = scmp.eq.s32.totalorder %s19, 1
    %p42 = por %p40, %p41
    %p44 = scmp.ne.s32.totalorder %s27, %s43
    %p45 = scmp.eq.s32.totalorder %s19, 0
    %p46 = por %p44, %p45
    %s48 = sadd.s32 %s47, 1
    %p51 = scmp.eq.s32.totalorder %s13, 1
    %p52 = scmp.ne.s32.totalorder %s47, %s49
    %p53 = scmp.eq.s32.totalorder %s13, 0
    %p54 = por %p52, %p53
    %p55 = scmp.ne.s32.totalorder %s47, %s49
    %p56 = scmp.eq.s32.totalorder %s18, 1
    %p57 = por %p55, %p56
    %p58 = scmp.ne.s32.totalorder %s49, %s50
    %p59 = scmp.eq.s32.totalorder %s18, 0
    %p60 = por %p58, %p59
    %p61 = scmp.ne.s32.totalorder %s49, %s50
    %p62 = scmp.eq.s32.totalorder %s19, 1
    %p63 = por %p61, %p62
    %p65 = scmp.ne.s32.totalorder %s50, %s64
    %p66 = scmp.eq.s32.totalorder %s19, 0
    %p67 = por %p65, %p66
    %s69 = sadd.s32 %s68, 1
    %p72 = scmp.eq.s32.totalorder %s13, 1
    %p73 = scmp.ne.s32.totalorder %s68, %s70
    %p74 = scmp.eq.s32.totalorder %s13, 0
    %p75 = por %p73, %p74
    %p76 = scmp.ne.s32.totalorder %s68, %s70
    %p77 = scmp.eq.s32.totalorder %s18, 1
    %p78 = por %p76, %p77
    %p79 = scmp.ne.s32.totalorder %s70, %s71
    %p80 = scmp.eq.s32.totalorder %s18, 0
    %p81 = por %p79, %p80
    %p82 = scmp.ne.s32.totalorder %s70, %s71
    %p83 = scmp.eq.s32.totalorder %s19, 1
    %p84 = por %p82, %p83
    %p86 = scmp.ne.s32.totalorder %s71, %s85
    %p87 = scmp.eq.s32.totalorder %s19, 0
    %p88 = por %p86, %p87
    %s90 = sadd.s32 %s89, 1
    %p93 = scmp.eq.s32.totalorder %s13, 1
    %p94 = scmp.ne.s32.totalorder %s89, %s91
    %p95 = scmp.eq.s32.totalorder %s13, 0
    %p96 = por %p94, %p95
    %p97 = scmp.ne.s32.totalorder %s89, %s91
    %p98 = scmp.eq.s32.totalorder %s18, 1
    %p99 = por %p97, %p98
    %p100 = scmp.ne.s32.totalorder %s91, %s92
    %p101 = scmp.eq.s32.totalorder %s18, 0
    %p102 = por %p100, %p101
    %p103 = scmp.ne.s32.totalorder %s91, %s92
    %p104 = scmp.eq.s32.totalorder %s19, 1
    %p105 = por %p103, %p104
    %p107 = scmp.ne.s32.totalorder %s92, %s106
    %p108 = scmp.eq.s32.totalorder %s19, 0
    %p109 = por %p107, %p108
    %s111 = sadd.s32 %s110, 1
    %p114 = scmp.eq.s32.totalorder %s13, 1
    %p115 = scmp.ne.s32.totalorder %s110, %s112
    %p116 = scmp.eq.s32.totalorder %s13, 0
    %p117 = por %p115, %p116
    %p118 = scmp.ne.s32.totalorder %s110, %s112
    %p119 = scmp.eq.s32.totalorder %s18, 1
    %p120 = por %p118, %p119
    %p121 = scmp.ne.s32.totalorder %s112, %s113
    %p122 = scmp.eq.s32.totalorder %s18, 0
    %p123 = por %p121, %p122
    %p124 = scmp.ne.s32.totalorder %s112, %s113
    %p125 = scmp.eq.s32.totalorder %s19, 1
    %p126 = por %p124, %p125
    %p128 = scmp.ne.s32.totalorder %s113, %s127
    %p129 = scmp.eq.s32.totalorder %s19, 0
    %p130 = por %p128, %p129
    %s132 = sadd.s32 %s131, 1
    %p135 = scmp.eq.s32.totalorder %s13, 1
    %p136 = scmp.ne.s32.totalorder %s131, %s133
    %p137 = scmp.eq.s32.totalorder %s13, 0
    %p138 = por %p136, %p137
    %p139 = scmp.ne.s32.totalorder %s131, %s133
    %p140 = scmp.eq.s32.totalorder %s18, 1
    %p141 = por %p139, %p140
    %p142 = scmp.ne.s32.totalorder %s133, %s134
    %p143 = scmp.eq.s32.totalorder %s18, 0
    %p144 = por %p142, %p143
    %p145 = scmp.ne.s32.totalorder %s133, %s134
    %p146 = scmp.eq.s32.totalorder %s19, 1
    %p147 = por %p145, %p146
    %p149 = scmp.ne.s32.totalorder %s134, %s148
    %p150 = scmp.eq.s32.totalorder %s19, 0
    %p151 = por %p149, %p150
    %s153 = sadd.s32 %s152, 1
    %p156 = scmp.eq.s32.totalorder %s13, 1
    %p157 = scmp.ne.s32.totalorder %s152, %s154
    %p158 = scmp.eq.s32.totalorder %s13, 0
    %p159 = por %p157, %p158
    %p160 = scmp.ne.s32.totalorder %s152, %s154
    %p161 = scmp.eq.s32.totalorder %s18, 1
    %p162 = por %p160, %p161
    %p163 = scmp.ne.s32.totalorder %s154, %s155
    %p164 = scmp.eq.s32.totalorder %s18, 0
    %p165 = por %p163, %p164
    %p166 = scmp.ne.s32.totalorder %s154, %s155
    %p167 = scmp.eq.s32.totalorder %s19, 1
    %p168 = por %p166, %p167
    %p170 = scmp.ne.s32.totalorder %s155, %s169
    %p171 = scmp.eq.s32.totalorder %s19, 0
    %p172 = por %p170, %p171
    %s173 = ssub.s32 %s13, %s20
    %p174 = scmp.eq.s32.totalorder %s173, 0
    %s176 = sadd.s32 %s175, 1
    %s177 = scalar_select %p174, %s175, %s176
    %p180 = pneg %p174
    %p181 = scmp.eq.s32.totalorder %s13, 1
    %p182 = por %p180, %p181
    %p183 = scmp.ne.s32.totalorder %s175, %s178
    %p184 = scmp.eq.s32.totalorder %s13, 0
    %p185 = por %p183, %p184
    %p186 = scmp.ne.s32.totalorder %s175, %s178
    %p187 = scmp.eq.s32.totalorder %s18, 1
    %p188 = por %p186, %p187
    %p189 = scmp.ne.s32.totalorder %s178, %s179
    %p190 = scmp.eq.s32.totalorder %s18, 0
    %p191 = por %p189, %p190
    %p192 = scmp.ne.s32.totalorder %s178, %s179
    %p193 = scmp.eq.s32.totalorder %s19, 1
    %p194 = por %p192, %p193
    %p196 = scmp.ne.s32.totalorder %s179, %s195
    %p197 = scmp.eq.s32.totalorder %s19, 0
    %p198 = por %p196, %p197
    %p199 = scmp.le.s32.totalorder 1, %s13
    %p200 = scmp.lt.s32.totalorder %s13, 3
    %p201 = pnand %p199, %p200
    %p202 = pneg %p201
    // Predicated region
    $region9: #{mininet_forward.68} parent=5 // pred_check
      _
    $region10: #{mininet_forward.68} parent=5 // pred_check_branch
      %204 = sbr.rel (%p201) target = $region12
    $region11: #{mininet_forward.68} parent=5 // pred_region
      %s205 = ssub.s32 %s13, 1
      // Predicated region
      $region13: #{mininet_forward.68} parent=11 // pred_check
        %p206 = pneg %p60
      $region14: #{mininet_forward.68} parent=11 // pred_check_branch
        %208 = sbr.rel (%p206) target = $region16
      $region15: #{mininet_forward.68} parent=11 // pred_region
        _
      $region16: #{mininet_forward.68} parent=11 // pred_fallthru
        _
      // Predicated region
      $region17: #{mininet_forward.68} parent=11 // pred_check
        %p209 = pneg %p81
      $region18: #{mininet_forward.68} parent=11 // pred_check_branch
        %211 = sbr.rel (%p209) target = $region20
      $region19: #{mininet_forward.68} parent=11 // pred_region
        _
      $region20: #{mininet_forward.68} parent=11 // pred_fallthru
        _
      // Predicated region
      $region21: #{mininet_forward.68} parent=11 // pred_check
        %p212 = pneg %p102
      $region22: #{mininet_forward.68} parent=11 // pred_check_branch
        %214 = sbr.rel (%p212) target = $region24
      $region23: #{mininet_forward.68} parent=11 // pred_region
        _
      $region24: #{mininet_forward.68} parent=11 // pred_fallthru
        _
      // Predicated region
      $region25: #{mininet_forward.68} parent=11 // pred_check
        %p215 = pneg %p123
      $region26: #{mininet_forward.68} parent=11 // pred_check_branch
        %217 = sbr.rel (%p215) target = $region28
      $region27: #{mininet_forward.68} parent=11 // pred_region
        _
      $region28: #{mininet_forward.68} parent=11 // pred_fallthru
        _
      // Predicated region
      $region29: #{mininet_forward.68} parent=11 // pred_check
        %p218 = pneg %p144
      $region30: #{mininet_forward.68} parent=11 // pred_check_branch
        %220 = sbr.rel (%p218) target = $region32
      $region31: #{mininet_forward.68} parent=11 // pred_region
        _
      $region32: #{mininet_forward.68} parent=11 // pred_fallthru
        _
      // Predicated region
      $region33: #{mininet_forward.68} parent=11 // pred_check
        %p221 = pneg %p165
      $region34: #{mininet_forward.68} parent=11 // pred_check_branch
        %223 = sbr.rel (%p221) target = $region36
      $region35: #{mininet_forward.68} parent=11 // pred_region
        _
      $region36: #{mininet_forward.68} parent=11 // pred_fallthru
        _
    $region12: #{mininet_forward.68} parent=5 // pred_fallthru
      _
    %p224 = scmp.lt.s32.totalorder %s13, 2
    // Predicated region
    $region37: #{mininet_forward.68} parent=5 // pred_check
      %p225 = pneg %p224
    $region38: #{mininet_forward.68} parent=5 // pred_check_branch
      %227 = sbr.rel (%p225) target = $region40
    $region39: #{mininet_forward.68} parent=5 // pred_region
      // Predicated region
      $region41: #{mininet_forward.68} parent=39 // pred_check
        %p228 = pneg %p33
      $region42: #{mininet_forward.68} parent=39 // pred_check_branch
        %230 = sbr.rel (%p228) target = $region44
      $region43: #{mininet_forward.68} parent=39 // pred_region
        %p231 = scmp.lt.s32.totalorder %s13, 1
        %s232 = scalar_select %p231, %s13, 1
        %s233 = smul.addr %s232, 3
        %s234 = smul.addr %s233, 8
        %s235 = scalar_lea.vmem %s0, %s234
      $region44: #{mininet_forward.68} parent=39 // pred_fallthru
        _
    $region40: #{mininet_forward.68} parent=5 // pred_fallthru
      _
    %p236 = scmp.le.s32.totalorder 1, %s13
    %p237 = scmp.lt.s32.totalorder %s13, 3
    %p238 = pnand %p236, %p237
    %p239 = pneg %p238
    // Predicated region
    $region45: #{mininet_forward.68} parent=5 // pred_check
      _
    $region46: #{mininet_forward.68} parent=5 // pred_check_branch
      %241 = sbr.rel (%p238) target = $region48
    $region47: #{mininet_forward.68} parent=5 // pred_region
      %s242 = ssub.s32 %s13, 1
      %p243 = scmp.lt.s32.totalorder %s18, 1
      %s244 = scalar_select %p243, %s18, 1
      %s245 = smul.addr %s244, 3
      %s246 = smul.addr %s245, 8
      %s247 = scalar_lea.vmem %s0, %s246
      %p248 = pneg %p39
      %p249 = pneg %p36
      %p250 = pneg %p60
      %p251 = pneg %p57
      %p252 = pneg %p81
      %p253 = pneg %p78
      %p254 = pneg %p102
      %p255 = pneg %p99
      %p256 = pneg %p123
      %p257 = pneg %p120
      %p258 = pneg %p144
      %p259 = pneg %p141
      %p260 = pneg %p165
      %p261 = pneg %p162
      %p262 = pneg %p191
      %p263 = pneg %p188
      %p264 = scmp.lt.s32.totalorder %s18, 1
      %s265 = scalar_select %p264, %s18, 1
      %s266 = smul.addr %s265, 8
      %s267 = scalar_lea.vmem %s7, %s266
      %p268 = scmp.lt.s32.totalorder %s18, 1
      %s269 = scalar_select %p268, %s18, 1
      %s270 = smul.addr %s269, 3
      %s271 = smul.addr %s270, 8
      %s272 = scalar_lea.vmem %s0, %s271
      %p273 = scmp.lt.s32.totalorder %s18, 1
      %s274 = scalar_select %p273, %s18, 1
      %s275 = smul.addr %s274, 8
      %s276 = scalar_lea.vmem %s7, %s275
      %v278 = vld [vmem:[%s272 + $0x5] sm:$0xff]
      %s279 = scalar_lea.vmem %s1, 4
      %v280 = vld [vmem:[%s279] sm:$0x1]
      %v282 = vlaneseq
      %v283 = vshrl.u32 %v282, 7
      %v284 = vsub.s32 0, %v283
      %v285 = vrot.slane %v280, %v284
      %v287 = vmul.f32 %v278, %v285
      %s288 = scalar_lea.vmem %s3, 4
      %v289 = vld [vmem:[%s288] sm:$0x1]
      %v291 = vlaneseq
      %v292 = vshrl.u32 %v291, 7
      %v293 = vsub.s32 0, %v292
      %v294 = vrot.slane %v289, %v293
      %v296 = vmul.f32 %v278, %v294
      %v297 = vld [vmem:[%s272] sm:$0xff]
      %v298 = vld [vmem:[%s1] sm:$0x1]
      %v300 = vlaneseq
      %v301 = vshrl.u32 %v300, 7
      %v302 = vsub.s32 0, %v301
      %v303 = vrot.slane %v298, %v302
      %v305 = vmul.f32 %v297, %v303
      %v306 = vadd.f32 %v287, %v305
      %v307 = vld [vmem:[%s3] sm:$0x1]
      %v309 = vlaneseq
      %v310 = vshrl.u32 %v309, 7
      %v311 = vsub.s32 0, %v310
      %v312 = vrot.slane %v307, %v311
      %v314 = vmul.f32 %v297, %v312
      %v315 = vadd.f32 %v296, %v314
      %v316 = vld [vmem:[%s272 + $0x1] sm:$0xff]
      %s317 = scalar_lea.vmem %s1, 1
      %v318 = vld [vmem:[%s317] sm:$0x1]
      %v320 = vlaneseq
      %v321 = vshrl.u32 %v320, 7
      %v322 = vsub.s32 0, %v321
      %v323 = vrot.slane %v318, %v322
      %v325 = vmul.f32 %v316, %v323
      %v326 = vadd.f32 %v306, %v325
      %s327 = scalar_lea.vmem %s3, 1
      %v328 = vld [vmem:[%s327] sm:$0x1]
      %v330 = vlaneseq
      %v331 = vshrl.u32 %v330, 7
      %v332 = vsub.s32 0, %v331
      %v333 = vrot.slane %v328, %v332
      %v335 = vmul.f32 %v316, %v333
      %v336 = vadd.f32 %v315, %v335
      %v337 = vld [vmem:[%s272 + $0x2] sm:$0xff]
      %s338 = scalar_lea.vmem %s1, 2
      %v339 = vld [vmem:[%s338] sm:$0x1]
      %v341 = vlaneseq
      %v342 = vshrl.u32 %v341, 7
      %v343 = vsub.s32 0, %v342
      %v344 = vrot.slane %v339, %v343
      %v346 = vmul.f32 %v337, %v344
      %v347 = vadd.f32 %v326, %v346
      %s348 = scalar_lea.vmem %s3, 2
      %v349 = vld [vmem:[%s348] sm:$0x1]
      %v351 = vlaneseq
      %v352 = vshrl.u32 %v351, 7
      %v353 = vsub.s32 0, %v352
      %v354 = vrot.slane %v349, %v353
      %v356 = vmul.f32 %v337, %v354
      %v357 = vadd.f32 %v336, %v356
      %v358 = vld [vmem:[%s272 + $0x4] sm:$0xff]
      %s359 = scalar_lea.vmem %s1, 3
      %v360 = vld [vmem:[%s359] sm:$0x1]
      %v362 = vlaneseq
      %v363 = vshrl.u32 %v362, 7
      %v364 = vsub.s32 0, %v363
      %v365 = vrot.slane %v360, %v364
      %v367 = vmul.f32 %v358, %v365
      %v368 = vadd.f32 %v347, %v367
      %s369 = scalar_lea.vmem %s3, 3
      %v370 = vld [vmem:[%s369] sm:$0x1]
      %v372 = vlaneseq
      %v373 = vshrl.u32 %v372, 7
      %v374 = vsub.s32 0, %v373
      %v375 = vrot.slane %v370, %v374
      %v377 = vmul.f32 %v358, %v375
      %v378 = vadd.f32 %v357, %v377
      %v379 = vld [vmem:[%s272 + $0x6] sm:$0xff]
      %s380 = scalar_lea.vmem %s1, 5
      %v381 = vld [vmem:[%s380] sm:$0x1]
      %v383 = vlaneseq
      %v384 = vshrl.u32 %v383, 7
      %v385 = vsub.s32 0, %v384
      %v386 = vrot.slane %v381, %v385
      %v388 = vmul.f32 %v379, %v386
      %v389 = vadd.f32 %v368, %v388
      %s390 = scalar_lea.vmem %s3, 5
      %v391 = vld [vmem:[%s390] sm:$0x1]
      %v393 = vlaneseq
      %v394 = vshrl.u32 %v393, 7
      %v395 = vsub.s32 0, %v394
      %v396 = vrot.slane %v391, %v395
      %v398 = vmul.f32 %v379, %v396
      %v399 = vadd.f32 %v378, %v398
      %v400 = vld [vmem:[%s272 + $0x8] sm:$0xff]
      %s401 = scalar_lea.vmem %s1, 6
      %v402 = vld [vmem:[%s401] sm:$0x1]
      %v404 = vlaneseq
      %v405 = vshrl.u32 %v404, 7
      %v406 = vsub.s32 0, %v405
      %v407 = vrot.slane %v402, %v406
      %v409 = vmul.f32 %v400, %v407
      %v410 = vadd.f32 %v389, %v409
      %s411 = scalar_lea.vmem %s3, 6
      %v412 = vld [vmem:[%s411] sm:$0x1]
      %v414 = vlaneseq
      %v415 = vshrl.u32 %v414, 7
      %v416 = vsub.s32 0, %v415
      %v417 = vrot.slane %v412, %v416
      %v419 = vmul.f32 %v400, %v417
      %v420 = vadd.f32 %v399, %v419
      %v421 = vld [vmem:[%s272 + $0x9] sm:$0xff]
      %s422 = scalar_lea.vmem %s1, 7
      %v423 = vld [vmem:[%s422] sm:$0x1]
      %v425 = vlaneseq
      %v426 = vshrl.u32 %v425, 7
      %v427 = vsub.s32 0, %v426
      %v428 = vrot.slane %v423, %v427
      %v430 = vmul.f32 %v421, %v428
      %v431 = vadd.f32 %v410, %v430
      %s432 = scalar_lea.vmem %s3, 7
      %v433 = vld [vmem:[%s432] sm:$0x1]
      %v435 = vlaneseq
      %v436 = vshrl.u32 %v435, 7
      %v437 = vsub.s32 0, %v436
      %v438 = vrot.slane %v433, %v437
      %v440 = vmul.f32 %v421, %v438
      %v441 = vadd.f32 %v420, %v440
      %v442 = vld [vmem:[%s272 + $0xa] sm:$0xff]
      %s443 = scalar_lea.vmem %s1, 8
      %v444 = vld [vmem:[%s443] sm:$0x1]
      %v446 = vlaneseq
      %v447 = vshrl.u32 %v446, 7
      %v448 = vsub.s32 0, %v447
      %v449 = vrot.slane %v444, %v448
      %v451 = vmul.f32 %v442, %v449
      %v452 = vadd.f32 %v431, %v451
      %s453 = scalar_lea.vmem %s3, 8
      %v454 = vld [vmem:[%s453] sm:$0x1]
      %v456 = vlaneseq
      %v457 = vshrl.u32 %v456, 7
      %v458 = vsub.s32 0, %v457
      %v459 = vrot.slane %v454, %v458
      %v461 = vmul.f32 %v442, %v459
      %v462 = vadd.f32 %v441, %v461
      %v463 = vld [vmem:[%s2] sm:$0x1]
      %v465 = vlaneseq
      %v466 = vshrl.u32 %v465, 7
      %v467 = vsub.s32 0, %v466
      %v468 = vrot.slane %v463, %v467
      %v470 = vadd.f32 %v452, %v468
      %v471 = vmax.f32 %v470, 0.0
      %v472 = vld [vmem:[%s4] sm:$0x1]
      %v474 = vlaneseq
      %v475 = vshrl.u32 %v474, 7
      %v476 = vsub.s32 0, %v475
      %v477 = vrot.slane %v472, %v476
      %v479 = vadd.f32 %v462, %v477
      %v480 = vmax.f32 %v479, 0.0
      %v481 = vadd.f32 %v471, %v480
      %v482 = vpack.c.bf16 %v481, %v481
      %v483 = vld [vmem:[%s5] sm:$0xf]
      %v484 = vld [vmem:[%s5 + $0x4] sm:$0xf]
      %v485 = vld [vmem:[%s5 + $0x8] sm:$0xf]
      %v486 = vld [vmem:[%s5 + $0xc] sm:$0xf]
      %v487 = vld [vmem:[%s5 + $0x10] sm:$0xf]
      %v488 = vld [vmem:[%s5 + $0x14] sm:$0xf]
      %v489 = vld [vmem:[%s5 + $0x18] sm:$0xf]
      %v490 = vld [vmem:[%s5 + $0x1c] sm:$0xf]
      %v491 = vld [vmem:[%s5 + $0x20] sm:$0xf]
      %v492 = vld [vmem:[%s5 + $0x24] sm:$0xf]
      %v493 = vld [vmem:[%s5 + $0x28] sm:$0xf]
      %v494 = vld [vmem:[%s5 + $0x2c] sm:$0xf]
      %v495 = vld [vmem:[%s5 + $0x30] sm:$0xf]
      %v496 = vld [vmem:[%s5 + $0x34] sm:$0xf]
      %v497 = vld [vmem:[%s5 + $0x38] sm:$0xf]
      %v498 = vld [vmem:[%s5 + $0x3c] sm:$0xf]
      %v499 = vld [vmem:[%s6] sm:$0x1]
      %v501 = vlaneseq
      %v502 = vshrl.u32 %v501, 7
      %v503 = vsub.s32 0, %v502
      %v504 = vrot.slane %v499, %v503
      %v522 = vunpack.c.l.b16 %v483
      %v523 = vunpack.c.l.b16 %v484
      %v524 = vunpack.c.l.b16 %v485
      %v525 = vunpack.c.l.b16 %v486
      %v526 = vunpack.c.l.b16 %v487
      %v527 = vunpack.c.l.b16 %v488
      %v528 = vunpack.c.l.b16 %v489
      %v529 = vunpack.c.l.b16 %v490
      %v530 = vunpack.c.l.b16 %v491
      %v531 = vunpack.c.l.b16 %v492
      %v532 = vunpack.c.l.b16 %v493
      %v533 = vunpack.c.l.b16 %v494
      %v534 = vunpack.c.l.b16 %v495
      %v535 = vunpack.c.l.b16 %v496
      %v536 = vunpack.c.l.b16 %v497
      %v537 = vunpack.c.l.b16 %v498
      %v538 = vpack.c.b16 %v523, %v522
      %v539 = vpack.c.b16 %v525, %v524
      %v540 = vpack.c.b16 %v527, %v526
      %v541 = vpack.c.b16 %v529, %v528
      %v542 = vpack.c.b16 %v531, %v530
      %v543 = vpack.c.b16 %v533, %v532
      %v544 = vpack.c.b16 %v535, %v534
      %v545 = vpack.c.b16 %v537, %v536
      %554 = vmatprep.subr.bf16.mxu0 0
      %555 = vmatpush1.bf16.msra.mxu0 %v538
      %556 = vmatprep.subr.bf16.mxu0 0
      %557 = vmatpush1.bf16.msra.mxu0 %v539
      %558 = vmatprep.subr.bf16.mxu0 0
      %559 = vmatpush1.bf16.msra.mxu0 %v540
      %560 = vmatprep.subr.bf16.mxu0 0
      %561 = vmatpush1.bf16.msra.mxu0 %v541
      %562 = vmatprep.subr.bf16.mxu0 0
      %563 = vmatpush1.bf16.msra.mxu0 %v542
      %564 = vmatprep.subr.bf16.mxu0 0
      %565 = vmatpush1.bf16.msra.mxu0 %v543
      %566 = vmatprep.subr.bf16.mxu0 0
      %567 = vmatpush1.bf16.msra.mxu0 %v544
      %568 = vmatprep.subr.bf16.mxu0 0
      %569 = vmatpush1.bf16.msra.mxu0 %v545
      %570 = vmatprep.subr.bf16.mxu0 0
      %571 = vmatpush1.bf16.msra.mxu0 0
      %572 = vmatprep.subr.bf16.mxu0 0
      %573 = vmatpush1.bf16.msra.mxu0 0
      %574 = vmatprep.subr.bf16.mxu0 0
      %575 = vmatpush1.bf16.msra.mxu0 0
      %576 = vmatprep.subr.bf16.mxu0 0
      %577 = vmatpush1.bf16.msra.mxu0 0
      %578 = vmatprep.subr.bf16.mxu0 0
      %579 = vmatpush1.bf16.msra.mxu0 0
      %580 = vmatprep.subr.bf16.mxu0 0
      %581 = vmatpush1.bf16.msra.mxu0 0
      %582 = vmatprep.subr.bf16.mxu0 0
      %583 = vmatpush1.bf16.msra.mxu0 0
      %584 = vmatprep.subr.bf16.mxu0 0
      %585 = vmatpush1.bf16.msra.mxu0 0
      %586 = vmatprep.mubr.bf16.mxu0 0
      %587 = vmatmul.mubr.bf16.gmra.mrb[0].mxu0 %v482
      %v588 = vpop.f32.mrb[0].mxu0
      %v589 = vadd.f32 %v504, %v588
      %v590 = vpop.f32.mrb[0].mxu0
      %v591 = vpop.f32.mrb[0].mxu0
      %v592 = vpop.f32.mrb[0].mxu0
      %593 = vdwg.mxu0
      %v594 = vadd.f32 %v589, %v278
      %v595 = vmax.f32 %v594, 0.0
      %596 = vst [vmem:[%s276] sm:$0xff] %v595
      %p597 = scmp.lt.s32.totalorder %s18, 1
      %s598 = scalar_select %p597, %s18, 1
      %s599 = smul.addr %s598, 8
      %s600 = scalar_lea.vmem %s7, %s599
      // Predicated region
      $region49: #{mininet_forward.68} parent=47 // pred_check
        %p601 = pneg %p188
      $region50: #{mininet_forward.68} parent=47 // pred_check_branch
        %603 = sbr.rel (%p601) target = $region52
      $region51: #{mininet_forward.68} parent=47 // pred_region
        _
      $region52: #{mininet_forward.68} parent=47 // pred_fallthru
        _
    $region48: #{mininet_forward.68} parent=5 // pred_fallthru
      _
    %p604 = scmp.le.s32.totalorder 2, %s13
    // Predicated region
    $region53: #{mininet_forward.68} parent=5 // pred_check
      %p605 = pneg %p604
    $region54: #{mininet_forward.68} parent=5 // pred_check_branch
      %607 = sbr.rel (%p605) target = $region56
    $region55: #{mininet_forward.68} parent=5 // pred_region
      %s608 = ssub.s32 %s13, 2
      // Predicated region
      $region57: #{mininet_forward.68} parent=55 // pred_check
        %p609 = pneg %p194
      $region58: #{mininet_forward.68} parent=55 // pred_check_branch
        %611 = sbr.rel (%p609) target = $region60
      $region59: #{mininet_forward.68} parent=55 // pred_region
        %p612 = scmp.lt.s32.totalorder %s19, 1
        %s613 = scalar_select %p612, %s19, 1
        %s614 = smul.addr %s613, 8
        %s615 = scalar_lea.vmem %s7, %s614
      $region60: #{mininet_forward.68} parent=55 // pred_fallthru
        _
    $region56: #{mininet_forward.68} parent=5 // pred_fallthru
      _
  $region6: #{mininet_forward.68} parent=0 // loop_footer
    %s17 = sadd.s32 1, %s13
  $region7: #{mininet_forward.68} parent=0 // loop_footer_branch
    %12 = sbr.rel target = $region3
  $region8: #{mininet_forward.68} parent=0 // loop_exit
    _

// kernel: mininet_forward.69
$region0: #{mininet_forward.69}
  #allocation0 [shape = 'u32[]', space=smem, size = 0x4, offset = 0x4, fixed_abs, tag = 'smem constant byte address 0x4 - core index']
  #allocation1 [shape = 'u32[144,128]{1,0:T(1,128)}', space=vmem, size = 0x12000, scoped, tag = 'internal scratch']
  %s0 = inlined_call_operand.vmem [shape: f32[2,42,128], index: 0, kind: input, shape index: {}]
  %s1 = inlined_call_operand.vmem [shape: f32[9,1,128], index: 1, kind: input, shape index: {}]
  %s2 = inlined_call_operand.vmem [shape: f32[1,128], index: 2, kind: input, shape index: {}]
  %s3 = inlined_call_operand.vmem [shape: f32[9,1,128], index: 3, kind: input, shape index: {}]
  %s4 = inlined_call_operand.vmem [shape: f32[1,128], index: 4, kind: input, shape index: {}]
  %s5 = inlined_call_operand.vmem [shape: bf16[128,128], index: 5, kind: input, shape index: {}]
  %s6 = inlined_call_operand.vmem [shape: f32[1,128], index: 6, kind: input, shape index: {}]
  %s7 = inlined_call_operand.vmem [shape: f32[2,12,128], index: 7, kind: output, shape index: {}]
  %s8 = sld [smem:[#allocation0]]
  $region61: #{mininet_forward.69} parent=0
    _
  %s10 = ssub.s32 1, %s8
  %s11 = scalar_select 0, %s10, %s8
  loop: start=0, step=1, limit=4
  $region2: #{mininet_forward.69} parent=0 // loop_pre_header
    _
  $region3: #{mininet_forward.69} parent=0 // loop_header
    %s13 = sphi 0, %s17
    %p14 = scmp.ge.s32.totalorder %s13, 4
    %s23 = sphi 0, %s25
    %s26 = sphi 0, %s23
    %s27 = sphi 0, %s26
    %s43 = sphi 0, %s27
    %s47 = sphi 0, %s47
    %s49 = sphi 0, %s47
    %s50 = sphi 0, %s49
    %s64 = sphi 0, %s50
    %s68 = sphi 0, %s68
    %s70 = sphi 0, %s68
    %s71 = sphi 0, %s70
    %s85 = sphi 0, %s71
    %s89 = sphi 0, %s89
    %s91 = sphi 0, %s89
    %s92 = sphi 0, %s91
    %s106 = sphi 0, %s92
    %s110 = sphi 0, %s110
    %s112 = sphi 0, %s110
    %s113 = sphi 0, %s112
    %s127 = sphi 0, %s113
    %s131 = sphi 0, %s131
    %s133 = sphi 0, %s131
    %s134 = sphi 0, %s133
    %s148 = sphi 0, %s134
    %s152 = sphi 0, %s152
    %s154 = sphi 0, %s152
    %s155 = sphi 0, %s154
    %s169 = sphi 0, %s155
    %s175 = sphi 0, %s177
    %s178 = sphi 0, %s175
    %s179 = sphi 0, %s178
    %s195 = sphi 0, %s179
  $region4: #{mininet_forward.69} parent=0 // loop_header_branch
    %16 = sbr.rel (%p14) target = $region8
  $region5: #{mininet_forward.69} parent=0 // loop_body
    %s18 = ssub.s32 %s13, 1
    %s19 = ssub.s32 %s13, 2
    %s20 = sadd.s32 %s13, 1
    %s21 = ssub.s32 %s13, %s20
    %p22 = scmp.eq.s32.totalorder %s21, 0
    %s24 = sadd.s32 %s23, 1
    %s25 = scalar_select %p22, %s23, %s24
    %p28 = pneg %p22
    %p29 = scmp.eq.s32.totalorder %s13, 1
    %p30 = por %p28, %p29
    %p31 = scmp.ne.s32.totalorder %s23, %s26
    %p32 = scmp.eq.s32.totalorder %s13, 0
    %p33 = por %p31, %p32
    %p34 = scmp.ne.s32.totalorder %s23, %s26
    %p35 = scmp.eq.s32.totalorder %s18, 1
    %p36 = por %p34, %p35
    %p37 = scmp.ne.s32.totalorder %s26, %s27
    %p38 = scmp.eq.s32.totalorder %s18, 0
    %p39 = por %p37, %p38
    %p40 = scmp.ne.s32.totalorder %s26, %s27
    %p41 = scmp.eq.s32.totalorder %s19, 1
    %p42 = por %p40, %p41
    %p44 = scmp.ne.s32.totalorder %s27, %s43
    %p45 = scmp.eq.s32.totalorder %s19, 0
    %p46 = por %p44, %p45
    %s48 = sadd.s32 %s47, 1
    %p51 = scmp.eq.s32.totalorder %s13, 1
    %p52 = scmp.ne.s32.totalorder %s47, %s49
    %p53 = scmp.eq.s32.totalorder %s13, 0
    %p54 = por %p52, %p53
    %p55 = scmp.ne.s32.totalorder %s47, %s49
    %p56 = scmp.eq.s32.totalorder %s18, 1
    %p57 = por %p55, %p56
    %p58 = scmp.ne.s32.totalorder %s49, %s50
    %p59 = scmp.eq.s32.totalorder %s18, 0
    %p60 = por %p58, %p59
    %p61 = scmp.ne.s32.totalorder %s49, %s50
    %p62 = scmp.eq.s32.totalorder %s19, 1
    %p63 = por %p61, %p62
    %p65 = scmp.ne.s32.totalorder %s50, %s64
    %p66 = scmp.eq.s32.totalorder %s19, 0
    %p67 = por %p65, %p66
    %s69 = sadd.s32 %s68, 1
    %p72 = scmp.eq.s32.totalorder %s13, 1
    %p73 = scmp.ne.s32.totalorder %s68, %s70
    %p74 = scmp.eq.s32.totalorder %s13, 0
    %p75 = por %p73, %p74
    %p76 = scmp.ne.s32.totalorder %s68, %s70
    %p77 = scmp.eq.s32.totalorder %s18, 1
    %p78 = por %p76, %p77
    %p79 = scmp.ne.s32.totalorder %s70, %s71
    %p80 = scmp.eq.s32.totalorder %s18, 0
    %p81 = por %p79, %p80
    %p82 = scmp.ne.s32.totalorder %s70, %s71
    %p83 = scmp.eq.s32.totalorder %s19, 1
    %p84 = por %p82, %p83
    %p86 = scmp.ne.s32.totalorder %s71, %s85
    %p87 = scmp.eq.s32.totalorder %s19, 0
    %p88 = por %p86, %p87
    %s90 = sadd.s32 %s89, 1
    %p93 = scmp.eq.s32.totalorder %s13, 1
    %p94 = scmp.ne.s32.totalorder %s89, %s91
    %p95 = scmp.eq.s32.totalorder %s13, 0
    %p96 = por %p94, %p95
    %p97 = scmp.ne.s32.totalorder %s89, %s91
    %p98 = scmp.eq.s32.totalorder %s18, 1
    %p99 = por %p97, %p98
    %p100 = scmp.ne.s32.totalorder %s91, %s92
    %p101 = scmp.eq.s32.totalorder %s18, 0
    %p102 = por %p100, %p101
    %p103 = scmp.ne.s32.totalorder %s91, %s92
    %p104 = scmp.eq.s32.totalorder %s19, 1
    %p105 = por %p103, %p104
    %p107 = scmp.ne.s32.totalorder %s92, %s106
    %p108 = scmp.eq.s32.totalorder %s19, 0
    %p109 = por %p107, %p108
    %s111 = sadd.s32 %s110, 1
    %p114 = scmp.eq.s32.totalorder %s13, 1
    %p115 = scmp.ne.s32.totalorder %s110, %s112
    %p116 = scmp.eq.s32.totalorder %s13, 0
    %p117 = por %p115, %p116
    %p118 = scmp.ne.s32.totalorder %s110, %s112
    %p119 = scmp.eq.s32.totalorder %s18, 1
    %p120 = por %p118, %p119
    %p121 = scmp.ne.s32.totalorder %s112, %s113
    %p122 = scmp.eq.s32.totalorder %s18, 0
    %p123 = por %p121, %p122
    %p124 = scmp.ne.s32.totalorder %s112, %s113
    %p125 = scmp.eq.s32.totalorder %s19, 1
    %p126 = por %p124, %p125
    %p128 = scmp.ne.s32.totalorder %s113, %s127
    %p129 = scmp.eq.s32.totalorder %s19, 0
    %p130 = por %p128, %p129
    %s132 = sadd.s32 %s131, 1
    %p135 = scmp.eq.s32.totalorder %s13, 1
    %p136 = scmp.ne.s32.totalorder %s131, %s133
    %p137 = scmp.eq.s32.totalorder %s13, 0
    %p138 = por %p136, %p137
    %p139 = scmp.ne.s32.totalorder %s131, %s133
    %p140 = scmp.eq.s32.totalorder %s18, 1
    %p141 = por %p139, %p140
    %p142 = scmp.ne.s32.totalorder %s133, %s134
    %p143 = scmp.eq.s32.totalorder %s18, 0
    %p144 = por %p142, %p143
    %p145 = scmp.ne.s32.totalorder %s133, %s134
    %p146 = scmp.eq.s32.totalorder %s19, 1
    %p147 = por %p145, %p146
    %p149 = scmp.ne.s32.totalorder %s134, %s148
    %p150 = scmp.eq.s32.totalorder %s19, 0
    %p151 = por %p149, %p150
    %s153 = sadd.s32 %s152, 1
    %p156 = scmp.eq.s32.totalorder %s13, 1
    %p157 = scmp.ne.s32.totalorder %s152, %s154
    %p158 = scmp.eq.s32.totalorder %s13, 0
    %p159 = por %p157, %p158
    %p160 = scmp.ne.s32.totalorder %s152, %s154
    %p161 = scmp.eq.s32.totalorder %s18, 1
    %p162 = por %p160, %p161
    %p163 = scmp.ne.s32.totalorder %s154, %s155
    %p164 = scmp.eq.s32.totalorder %s18, 0
    %p165 = por %p163, %p164
    %p166 = scmp.ne.s32.totalorder %s154, %s155
    %p167 = scmp.eq.s32.totalorder %s19, 1
    %p168 = por %p166, %p167
    %p170 = scmp.ne.s32.totalorder %s155, %s169
    %p171 = scmp.eq.s32.totalorder %s19, 0
    %p172 = por %p170, %p171
    %s173 = ssub.s32 %s13, %s20
    %p174 = scmp.eq.s32.totalorder %s173, 0
    %s176 = sadd.s32 %s175, 1
    %s177 = scalar_select %p174, %s175, %s176
    %p180 = pneg %p174
    %p181 = scmp.eq.s32.totalorder %s13, 1
    %p182 = por %p180, %p181
    %p183 = scmp.ne.s32.totalorder %s175, %s178
    %p184 = scmp.eq.s32.totalorder %s13, 0
    %p185 = por %p183, %p184
    %p186 = scmp.ne.s32.totalorder %s175, %s178
    %p187 = scmp.eq.s32.totalorder %s18, 1
    %p188 = por %p186, %p187
    %p189 = scmp.ne.s32.totalorder %s178, %s179
    %p190 = scmp.eq.s32.totalorder %s18, 0
    %p191 = por %p189, %p190
    %p192 = scmp.ne.s32.totalorder %s178, %s179
    %p193 = scmp.eq.s32.totalorder %s19, 1
    %p194 = por %p192, %p193
    %p196 = scmp.ne.s32.totalorder %s179, %s195
    %p197 = scmp.eq.s32.totalorder %s19, 0
    %p198 = por %p196, %p197
    %p199 = scmp.le.s32.totalorder 1, %s13
    %p200 = scmp.lt.s32.totalorder %s13, 3
    %p201 = pnand %p199, %p200
    %p202 = pneg %p201
    // Predicated region
    $region9: #{mininet_forward.69} parent=5 // pred_check
      _
    $region10: #{mininet_forward.69} parent=5 // pred_check_branch
      %204 = sbr.rel (%p201) target = $region12
    $region11: #{mininet_forward.69} parent=5 // pred_region
      %s205 = ssub.s32 %s13, 1
      // Predicated region
      $region13: #{mininet_forward.69} parent=11 // pred_check
        %p206 = pneg %p60
      $region14: #{mininet_forward.69} parent=11 // pred_check_branch
        %208 = sbr.rel (%p206) target = $region16
      $region15: #{mininet_forward.69} parent=11 // pred_region
        _
      $region16: #{mininet_forward.69} parent=11 // pred_fallthru
        _
      // Predicated region
      $region17: #{mininet_forward.69} parent=11 // pred_check
        %p209 = pneg %p81
      $region18: #{mininet_forward.69} parent=11 // pred_check_branch
        %211 = sbr.rel (%p209) target = $region20
      $region19: #{mininet_forward.69} parent=11 // pred_region
        _
      $region20: #{mininet_forward.69} parent=11 // pred_fallthru
        _
      // Predicated region
      $region21: #{mininet_forward.69} parent=11 // pred_check
        %p212 = pneg %p102
      $region22: #{mininet_forward.69} parent=11 // pred_check_branch
        %214 = sbr.rel (%p212) target = $region24
      $region23: #{mininet_forward.69} parent=11 // pred_region
        _
      $region24: #{mininet_forward.69} parent=11 // pred_fallthru
        _
      // Predicated region
      $region25: #{mininet_forward.69} parent=11 // pred_check
        %p215 = pneg %p123
      $region26: #{mininet_forward.69} parent=11 // pred_check_branch
        %217 = sbr.rel (%p215) target = $region28
      $region27: #{mininet_forward.69} parent=11 // pred_region
        _
      $region28: #{mininet_forward.69} parent=11 // pred_fallthru
        _
      // Predicated region
      $region29: #{mininet_forward.69} parent=11 // pred_check
        %p218 = pneg %p144
      $region30: #{mininet_forward.69} parent=11 // pred_check_branch
        %220 = sbr.rel (%p218) target = $region32
      $region31: #{mininet_forward.69} parent=11 // pred_region
        _
      $region32: #{mininet_forward.69} parent=11 // pred_fallthru
        _
      // Predicated region
      $region33: #{mininet_forward.69} parent=11 // pred_check
        %p221 = pneg %p165
      $region34: #{mininet_forward.69} parent=11 // pred_check_branch
        %223 = sbr.rel (%p221) target = $region36
      $region35: #{mininet_forward.69} parent=11 // pred_region
        _
      $region36: #{mininet_forward.69} parent=11 // pred_fallthru
        _
    $region12: #{mininet_forward.69} parent=5 // pred_fallthru
      _
    %p224 = scmp.lt.s32.totalorder %s13, 2
    // Predicated region
    $region37: #{mininet_forward.69} parent=5 // pred_check
      %p225 = pneg %p224
    $region38: #{mininet_forward.69} parent=5 // pred_check_branch
      %227 = sbr.rel (%p225) target = $region40
    $region39: #{mininet_forward.69} parent=5 // pred_region
      // Predicated region
      $region41: #{mininet_forward.69} parent=39 // pred_check
        %p228 = pneg %p33
      $region42: #{mininet_forward.69} parent=39 // pred_check_branch
        %230 = sbr.rel (%p228) target = $region44
      $region43: #{mininet_forward.69} parent=39 // pred_region
        %p231 = scmp.lt.s32.totalorder %s13, 1
        %s232 = scalar_select %p231, %s13, 1
        %s233 = smul.addr %s232, 6
        %s234 = smul.addr %s233, 8
        %s235 = scalar_lea.vmem %s0, %s234
      $region44: #{mininet_forward.69} parent=39 // pred_fallthru
        _
    $region40: #{mininet_forward.69} parent=5 // pred_fallthru
      _
    %p236 = scmp.le.s32.totalorder 1, %s13
    %p237 = scmp.lt.s32.totalorder %s13, 3
    %p238 = pnand %p236, %p237
    %p239 = pneg %p238
    // Predicated region
    $region45: #{mininet_forward.69} parent=5 // pred_check
      _
    $region46: #{mininet_forward.69} parent=5 // pred_check_branch
      %241 = sbr.rel (%p238) target = $region48
    $region47: #{mininet_forward.69} parent=5 // pred_region
      %s242 = ssub.s32 %s13, 1
      %p243 = scmp.lt.s32.totalorder %s18, 1
      %s244 = scalar_select %p243, %s18, 1
      %s245 = smul.addr %s244, 6
      %s246 = smul.addr %s245, 8
      %s247 = scalar_lea.vmem %s0, %s246
      %p248 = pneg %p39
      %p249 = pneg %p36
      %p250 = pneg %p60
      %p251 = pneg %p57
      %p252 = pneg %p81
      %p253 = pneg %p78
      %p254 = pneg %p102
      %p255 = pneg %p99
      %p256 = pneg %p123
      %p257 = pneg %p120
      %p258 = pneg %p144
      %p259 = pneg %p141
      %p260 = pneg %p165
      %p261 = pneg %p162
      %p262 = pneg %p191
      %p263 = pneg %p188
      %p264 = scmp.lt.s32.totalorder %s18, 1
      %s265 = scalar_select %p264, %s18, 1
      %s266 = smul.addr %s265, 2
      %s267 = smul.addr %s266, 8
      %s268 = scalar_lea.vmem %s7, %s267
      %p269 = scmp.lt.s32.totalorder %s18, 1
      %s270 = scalar_select %p269, %s18, 1
      %s271 = smul.addr %s270, 6
      %s272 = smul.addr %s271, 8
      %s273 = scalar_lea.vmem %s0, %s272
      %p274 = scmp.lt.s32.totalorder %s18, 1
      %s275 = scalar_select %p274, %s18, 1
      %s276 = smul.addr %s275, 2
      %s277 = smul.addr %s276, 8
      %s278 = scalar_lea.vmem %s7, %s277
      %v280 = vld [vmem:[%s273 + $0xe] sm:$0xff]
      %v281 = vld [vmem:[%s273 + $0x16] sm:$0xf]
      %s282 = scalar_lea.vmem %s1, 4
      %v283 = vld [vmem:[%s282] sm:$0x1]
      %v285 = vlaneseq
      %v286 = vshrl.u32 %v285, 7
      %v287 = vsub.s32 0, %v286
      %v288 = vrot.slane %v283, %v287
      %v290 = vmul.f32 %v280, %v288
      %v291 = vmul.f32 %v281, %v288
      %s292 = scalar_lea.vmem %s3, 4
      %v293 = vld [vmem:[%s292] sm:$0x1]
      %v295 = vlaneseq
      %v296 = vshrl.u32 %v295, 7
      %v297 = vsub.s32 0, %v296
      %v298 = vrot.slane %v293, %v297
      %v300 = vmul.f32 %v280, %v298
      %v301 = vmul.f32 %v281, %v298
      %v302 = vld [vmem:[%s273 + $0x7] sm:$0xff]
      %v303 = vld [vmem:[%s273 + $0xf] sm:$0xf]
      %v304 = vld [vmem:[%s1] sm:$0x1]
      %v306 = vlaneseq
      %v307 = vshrl.u32 %v306, 7
      %v308 = vsub.s32 0, %v307
      %v309 = vrot.slane %v304, %v308
      %v311 = vmul.f32 %v302, %v309
      %v312 = vmul.f32 %v303, %v309
      %v313 = vadd.f32 %v290, %v311
      %v314 = vadd.f32 %v291, %v312
      %v315 = vld [vmem:[%s273] sm:$0xff]
      %v316 = vld [vmem:[%s273 + $0x8] sm:$0xf]
      %v317 = vld [vmem:[%s3] sm:$0x1]
      %v319 = vlaneseq
      %v320 = vshrl.u32 %v319, 7
      %v321 = vsub.s32 0, %v320
      %v322 = vrot.slane %v317, %v321
      %v324 = vmul.f32 %v315, %v322
      %v325 = vmul.f32 %v316, %v322
      %v326 = vadd.f32 %v300, %v324
      %v327 = vadd.f32 %v301, %v325
      %v328 = vld [vmem:[%s273 + $0x8] sm:$0xff]
      %v329 = vld [vmem:[%s273 + $0x10] sm:$0xf]
      %s330 = scalar_lea.vmem %s1, 1
      %v331 = vld [vmem:[%s330] sm:$0x1]
      %v333 = vlaneseq
      %v334 = vshrl.u32 %v333, 7
      %v335 = vsub.s32 0, %v334
      %v336 = vrot.slane %v331, %v335
      %v338 = vmul.f32 %v328, %v336
      %v339 = vmul.f32 %v329, %v336
      %v340 = vadd.f32 %v313, %v338
      %v341 = vadd.f32 %v314, %v339
      %v342 = vld [vmem:[%s273 + $0x2] sm:$0xff]
      %v343 = vld [vmem:[%s273 + $0xa] sm:$0xf]
      %s344 = scalar_lea.vmem %s3, 1
      %v345 = vld [vmem:[%s344] sm:$0x1]
      %v347 = vlaneseq
      %v348 = vshrl.u32 %v347, 7
      %v349 = vsub.s32 0, %v348
      %v350 = vrot.slane %v345, %v349
      %v352 = vmul.f32 %v342, %v350
      %v353 = vmul.f32 %v343, %v350
      %v354 = vadd.f32 %v326, %v352
      %v355 = vadd.f32 %v327, %v353
      %v356 = vld [vmem:[%s273 + $0x9] sm:$0xff]
      %v357 = vld [vmem:[%s273 + $0x11] sm:$0xf]
      %s358 = scalar_lea.vmem %s1, 2
      %v359 = vld [vmem:[%s358] sm:$0x1]
      %v361 = vlaneseq
      %v362 = vshrl.u32 %v361, 7
      %v363 = vsub.s32 0, %v362
      %v364 = vrot.slane %v359, %v363
      %v366 = vmul.f32 %v356, %v364
      %v367 = vmul.f32 %v357, %v364
      %v368 = vadd.f32 %v340, %v366
      %v369 = vadd.f32 %v341, %v367
      %v370 = vld [vmem:[%s273 + $0x4] sm:$0xff]
      %v371 = vld [vmem:[%s273 + $0xc] sm:$0xf]
      %s372 = scalar_lea.vmem %s3, 2
      %v373 = vld [vmem:[%s372] sm:$0x1]
      %v375 = vlaneseq
      %v376 = vshrl.u32 %v375, 7
      %v377 = vsub.s32 0, %v376
      %v378 = vrot.slane %v373, %v377
      %v380 = vmul.f32 %v370, %v378
      %v381 = vmul.f32 %v371, %v378
      %v382 = vadd.f32 %v354, %v380
      %v383 = vadd.f32 %v355, %v381
      %v384 = vld [vmem:[%s273 + $0xd] sm:$0xff]
      %v385 = vld [vmem:[%s273 + $0x15] sm:$0xf]
      %s386 = scalar_lea.vmem %s1, 3
      %v387 = vld [vmem:[%s386] sm:$0x1]
      %v389 = vlaneseq
      %v390 = vshrl.u32 %v389, 7
      %v391 = vsub.s32 0, %v390
      %v392 = vrot.slane %v387, %v391
      %v394 = vmul.f32 %v384, %v392
      %v395 = vmul.f32 %v385, %v392
      %v396 = vadd.f32 %v368, %v394
      %v397 = vadd.f32 %v369, %v395
      %v398 = vld [vmem:[%s273 + $0xc] sm:$0xff]
      %v399 = vld [vmem:[%s273 + $0x14] sm:$0xf]
      %s400 = scalar_lea.vmem %s3, 3
      %v401 = vld [vmem:[%s400] sm:$0x1]
      %v403 = vlaneseq
      %v404 = vshrl.u32 %v403, 7
      %v405 = vsub.s32 0, %v404
      %v406 = vrot.slane %v401, %v405
      %v408 = vmul.f32 %v398, %v406
      %v409 = vmul.f32 %v399, %v406
      %v410 = vadd.f32 %v382, %v408
      %v411 = vadd.f32 %v383, %v409
      %v412 = vld [vmem:[%s273 + $0xf] sm:$0xff]
      %v413 = vld [vmem:[%s273 + $0x17] sm:$0xf]
      %s414 = scalar_lea.vmem %s1, 5
      %v415 = vld [vmem:[%s414] sm:$0x1]
      %v417 = vlaneseq
      %v418 = vshrl.u32 %v417, 7
      %v419 = vsub.s32 0, %v418
      %v420 = vrot.slane %v415, %v419
      %v422 = vmul.f32 %v412, %v420
      %v423 = vmul.f32 %v413, %v420
      %v424 = vadd.f32 %v396, %v422
      %v425 = vadd.f32 %v397, %v423
      %v426 = vld [vmem:[%s273 + $0x10] sm:$0xff]
      %v427 = vld [vmem:[%s273 + $0x18] sm:$0xf]
      %s428 = scalar_lea.vmem %s3, 5
      %v429 = vld [vmem:[%s428] sm:$0x1]
      %v431 = vlaneseq
      %v432 = vshrl.u32 %v431, 7
      %v433 = vsub.s32 0, %v432
      %v434 = vrot.slane %v429, %v433
      %v436 = vmul.f32 %v426, %v434
      %v437 = vmul.f32 %v427, %v434
      %v438 = vadd.f32 %v410, %v436
      %v439 = vadd.f32 %v411, %v437
      %v440 = vld [vmem:[%s273 + $0x13] sm:$0xff]
      %v441 = vld [vmem:[%s273 + $0x1b] sm:$0xf]
      %s442 = scalar_lea.vmem %s1, 6
      %v443 = vld [vmem:[%s442] sm:$0x1]
      %v445 = vlaneseq
      %v446 = vshrl.u32 %v445, 7
      %v447 = vsub.s32 0, %v446
      %v448 = vrot.slane %v443, %v447
      %v450 = vmul.f32 %v440, %v448
      %v451 = vmul.f32 %v441, %v448
      %v452 = vadd.f32 %v424, %v450
      %v453 = vadd.f32 %v425, %v451
      %v454 = vld [vmem:[%s273 + $0x18] sm:$0xff]
      %v455 = vld [vmem:[%s273 + $0x20] sm:$0xf]
      %s456 = scalar_lea.vmem %s3, 6
      %v457 = vld [vmem:[%s456] sm:$0x1]
      %v459 = vlaneseq
      %v460 = vshrl.u32 %v459, 7
      %v461 = vsub.s32 0, %v460
      %v462 = vrot.slane %v457, %v461
      %v464 = vmul.f32 %v454, %v462
      %v465 = vmul.f32 %v455, %v462
      %v466 = vadd.f32 %v438, %v464
      %v467 = vadd.f32 %v439, %v465
      %v468 = vld [vmem:[%s273 + $0x14] sm:$0xff]
      %v469 = vld [vmem:[%s273 + $0x1c] sm:$0xf]
      %s470 = scalar_lea.vmem %s1, 7
      %v471 = vld [vmem:[%s470] sm:$0x1]
      %v473 = vlaneseq
      %v474 = vshrl.u32 %v473, 7
      %v475 = vsub.s32 0, %v474
      %v476 = vrot.slane %v471, %v475
      %v478 = vmul.f32 %v468, %v476
      %v479 = vmul.f32 %v469, %v476
      %v480 = vadd.f32 %v452, %v478
      %v481 = vadd.f32 %v453, %v479
      %v482 = vld [vmem:[%s273 + $0x1a] sm:$0xff]
      %v483 = vld [vmem:[%s273 + $0x22] sm:$0xf]
      %s484 = scalar_lea.vmem %s3, 7
      %v485 = vld [vmem:[%s484] sm:$0x1]
      %v487 = vlaneseq
      %v488 = vshrl.u32 %v487, 7
      %v489 = vsub.s32 0, %v488
      %v490 = vrot.slane %v485, %v489
      %v492 = vmul.f32 %v482, %v490
      %v493 = vmul.f32 %v483, %v490
      %v494 = vadd.f32 %v466, %v492
      %v495 = vadd.f32 %v467, %v493
      %v496 = vld [vmem:[%s273 + $0x15] sm:$0xff]
      %v497 = vld [vmem:[%s273 + $0x1d] sm:$0xf]
      %s498 = scalar_lea.vmem %s1, 8
      %v499 = vld [vmem:[%s498] sm:$0x1]
      %v501 = vlaneseq
      %v502 = vshrl.u32 %v501, 7
      %v503 = vsub.s32 0, %v502
      %v504 = vrot.slane %v499, %v503
      %v506 = vmul.f32 %v496, %v504
      %v507 = vmul.f32 %v497, %v504
      %v508 = vadd.f32 %v480, %v506
      %v509 = vadd.f32 %v481, %v507
      %v510 = vld [vmem:[%s273 + $0x1c] sm:$0xff]
      %v511 = vld [vmem:[%s273 + $0x24] sm:$0xf]
      %s512 = scalar_lea.vmem %s3, 8
      %v513 = vld [vmem:[%s512] sm:$0x1]
      %v515 = vlaneseq
      %v516 = vshrl.u32 %v515, 7
      %v517 = vsub.s32 0, %v516
      %v518 = vrot.slane %v513, %v517
      %v520 = vmul.f32 %v510, %v518
      %v521 = vmul.f32 %v511, %v518
      %v522 = vadd.f32 %v494, %v520
      %v523 = vadd.f32 %v495, %v521
      %v524 = vld [vmem:[%s2] sm:$0x1]
      %v526 = vlaneseq
      %v527 = vshrl.u32 %v526, 7
      %v528 = vsub.s32 0, %v527
      %v529 = vrot.slane %v524, %v528
      %v531 = vadd.f32 %v508, %v529
      %v532 = vadd.f32 %v509, %v529
      %v533 = vmax.f32 %v531, 0.0
      %v534 = vmax.f32 %v532, 0.0
      %v535 = vld [vmem:[%s4] sm:$0x1]
      %v537 = vlaneseq
      %v538 = vshrl.u32 %v537, 7
      %v539 = vsub.s32 0, %v538
      %v540 = vrot.slane %v535, %v539
      %v542 = vadd.f32 %v522, %v540
      %v543 = vadd.f32 %v523, %v540
      %v544 = vmax.f32 %v542, 0.0
      %v545 = vmax.f32 %v543, 0.0
      %v546 = vadd.f32 %v533, %v544
      %v547 = vadd.f32 %v534, %v545
      %v548 = vpack.c.bf16 %v547, %v546
      %v549 = vld [vmem:[%s5] sm:$0xf]
      %v550 = vld [vmem:[%s5 + $0x4] sm:$0xf]
      %v551 = vld [vmem:[%s5 + $0x8] sm:$0xf]
      %v552 = vld [vmem:[%s5 + $0xc] sm:$0xf]
      %v553 = vld [vmem:[%s5 + $0x10] sm:$0xf]
      %v554 = vld [vmem:[%s5 + $0x14] sm:$0xf]
      %v555 = vld [vmem:[%s5 + $0x18] sm:$0xf]
      %v556 = vld [vmem:[%s5 + $0x1c] sm:$0xf]
      %v557 = vld [vmem:[%s5 + $0x20] sm:$0xf]
      %v558 = vld [vmem:[%s5 + $0x24] sm:$0xf]
      %v559 = vld [vmem:[%s5 + $0x28] sm:$0xf]
      %v560 = vld [vmem:[%s5 + $0x2c] sm:$0xf]
      %v561 = vld [vmem:[%s5 + $0x30] sm:$0xf]
      %v562 = vld [vmem:[%s5 + $0x34] sm:$0xf]
      %v563 = vld [vmem:[%s5 + $0x38] sm:$0xf]
      %v564 = vld [vmem:[%s5 + $0x3c] sm:$0xf]
      %v565 = vld [vmem:[%s6] sm:$0x1]
      %v567 = vlaneseq
      %v568 = vshrl.u32 %v567, 7
      %v569 = vsub.s32 0, %v568
      %v570 = vrot.slane %v565, %v569
      %v588 = vunpack.c.l.b16 %v549
      %v589 = vunpack.c.l.b16 %v550
      %v590 = vunpack.c.l.b16 %v551
      %v591 = vunpack.c.l.b16 %v552
      %v592 = vunpack.c.l.b16 %v553
      %v593 = vunpack.c.l.b16 %v554
      %v594 = vunpack.c.l.b16 %v555
      %v595 = vunpack.c.l.b16 %v556
      %v596 = vunpack.c.l.b16 %v557
      %v597 = vunpack.c.l.b16 %v558
      %v598 = vunpack.c.l.b16 %v559
      %v599 = vunpack.c.l.b16 %v560
      %v600 = vunpack.c.l.b16 %v561
      %v601 = vunpack.c.l.b16 %v562
      %v602 = vunpack.c.l.b16 %v563
      %v603 = vunpack.c.l.b16 %v564
      %v604 = vpack.c.b16 %v589, %v588
      %v605 = vpack.c.b16 %v591, %v590
      %v606 = vpack.c.b16 %v593, %v592
      %v607 = vpack.c.b16 %v595, %v594
      %v608 = vpack.c.b16 %v597, %v596
      %v609 = vpack.c.b16 %v599, %v598
      %v610 = vpack.c.b16 %v601, %v600
      %v611 = vpack.c.b16 %v603, %v602
      %620 = vmatprep.subr.bf16.mxu0 0
      %621 = vmatpush1.bf16.msra.mxu0 %v604
      %622 = vmatprep.subr.bf16.mxu0 0
      %623 = vmatpush1.bf16.msra.mxu0 %v605
      %624 = vmatprep.subr.bf16.mxu0 0
      %625 = vmatpush1.bf16.msra.mxu0 %v606
      %626 = vmatprep.subr.bf16.mxu0 0
      %627 = vmatpush1.bf16.msra.mxu0 %v607
      %628 = vmatprep.subr.bf16.mxu0 0
      %629 = vmatpush1.bf16.msra.mxu0 %v608
      %630 = vmatprep.subr.bf16.mxu0 0
      %631 = vmatpush1.bf16.msra.mxu0 %v609
      %632 = vmatprep.subr.bf16.mxu0 0
      %633 = vmatpush1.bf16.msra.mxu0 %v610
      %634 = vmatprep.subr.bf16.mxu0 0
      %635 = vmatpush1.bf16.msra.mxu0 %v611
      %636 = vmatprep.subr.bf16.mxu0 0
      %637 = vmatpush1.bf16.msra.mxu0 0
      %638 = vmatprep.subr.bf16.mxu0 0
      %639 = vmatpush1.bf16.msra.mxu0 0
      %640 = vmatprep.subr.bf16.mxu0 0
      %641 = vmatpush1.bf16.msra.mxu0 0
      %642 = vmatprep.subr.bf16.mxu0 0
      %643 = vmatpush1.bf16.msra.mxu0 0
      %644 = vmatprep.subr.bf16.mxu0 0
      %645 = vmatpush1.bf16.msra.mxu0 0
      %646 = vmatprep.subr.bf16.mxu0 0
      %647 = vmatpush1.bf16.msra.mxu0 0
      %648 = vmatprep.subr.bf16.mxu0 0
      %649 = vmatpush1.bf16.msra.mxu0 0
      %650 = vmatprep.subr.bf16.mxu0 0
      %651 = vmatpush1.bf16.msra.mxu0 0
      %652 = vmatprep.mubr.bf16.mxu0 0
      %653 = vmatmul.mubr.bf16.gmra.mrb[0].mxu0 %v548
      %v654 = vpop.f32.mrb[0].mxu0
      %v655 = vadd.f32 %v570, %v654
      %v656 = vpop.f32.mrb[0].mxu0
      %v657 = vpop.f32.mrb[0].mxu0
      %v658 = vadd.f32 %v570, %v657
      %v659 = vpop.f32.mrb[0].mxu0
      %660 = vdwg.mxu0
      %v661 = vadd.f32 %v655, %v280
      %v662 = vadd.f32 %v658, %v281
      %v663 = vmax.f32 %v661, 0.0
      %v664 = vmax.f32 %v662, 0.0
      %665 = vst [vmem:[%s278] sm:$0xff] %v663
      %666 = vst [vmem:[%s278 + $0x8] sm:$0xf] %v664
      %p667 = scmp.lt.s32.totalorder %s18, 1
      %s668 = scalar_select %p667, %s18, 1
      %s669 = smul.addr %s668, 2
      %s670 = smul.addr %s669, 8
      %s671 = scalar_lea.vmem %s7, %s670
      // Predicated region
      $region49: #{mininet_forward.69} parent=47 // pred_check
        %p672 = pneg %p188
      $region50: #{mininet_forward.69} parent=47 // pred_check_branch
        %674 = sbr.rel (%p672) target = $region52
      $region51: #{mininet_forward.69} parent=47 // pred_region
        _
      $region52: #{mininet_forward.69} parent=47 // pred_fallthru
        _
    $region48: #{mininet_forward.69} parent=5 // pred_fallthru
      _
    %p675 = scmp.le.s32.totalorder 2, %s13
    // Predicated region
    $region53: #{mininet_forward.69} parent=5 // pred_check
      %p676 = pneg %p675
    $region54: #{mininet_forward.69} parent=5 // pred_check_branch
      %678 = sbr.rel (%p676) target = $region56
    $region55: #{mininet_forward.69} parent=5 // pred_region
      %s679 = ssub.s32 %s13, 2
      // Predicated region
      $region57: #{mininet_forward.69} parent=55 // pred_check
        %p680 = pneg %p194
      $region58: #{mininet_forward.69} parent=55 // pred_check_branch
        %682 = sbr.rel (%p680) target = $region60
      $region59: #{mininet_forward.69} parent=55 // pred_region
        %p683 = scmp.lt.s32.totalorder %s19, 1
        %s684 = scalar_select %p683, %s19, 1
        %s685 = smul.addr %s684, 2
        %s686 = smul.addr %s685, 8
        %s687 = scalar_lea.vmem %s7, %s686
      $region60: #{mininet_forward.69} parent=55 // pred_fallthru
        _
    $region56: #{mininet_forward.69} parent=5 // pred_fallthru
      _
  $region6: #{mininet_forward.69} parent=0 // loop_footer
    %s17 = sadd.s32 1, %s13
  $region7: #{mininet_forward.69} parent=0 // loop_footer_branch
    %12 = sbr.rel target = $region3
  $region8: #{mininet_forward.69} parent=0 // loop_exit
    _

// kernel: mininet_forward.71
$region0: #{mininet_forward.71}
  #allocation0 [shape = 'u32[]', space=smem, size = 0x4, offset = 0x4, fixed_abs, tag = 'smem constant byte address 0x4 - core index']
  #allocation1 [shape = 'u32[144,128]{1,0:T(1,128)}', space=vmem, size = 0x12000, scoped, tag = 'internal scratch']
  %s0 = inlined_call_operand.vmem [shape: f32[2,110,128], index: 0, kind: input, shape index: {}]
  %s1 = inlined_call_operand.vmem [shape: f32[9,1,128], index: 1, kind: input, shape index: {}]
  %s2 = inlined_call_operand.vmem [shape: f32[1,128], index: 2, kind: input, shape index: {}]
  %s3 = inlined_call_operand.vmem [shape: f32[9,1,128], index: 3, kind: input, shape index: {}]
  %s4 = inlined_call_operand.vmem [shape: f32[1,128], index: 4, kind: input, shape index: {}]
  %s5 = inlined_call_operand.vmem [shape: bf16[128,128], index: 5, kind: input, shape index: {}]
  %s6 = inlined_call_operand.vmem [shape: f32[1,128], index: 6, kind: input, shape index: {}]
  %s7 = inlined_call_operand.vmem [shape: f32[2,20,128], index: 7, kind: output, shape index: {}]
  %s8 = sld [smem:[#allocation0]]
  $region61: #{mininet_forward.71} parent=0
    _
  %s10 = ssub.s32 1, %s8
  %s11 = scalar_select 0, %s10, %s8
  loop: start=0, step=1, limit=4
  $region2: #{mininet_forward.71} parent=0 // loop_pre_header
    _
  $region3: #{mininet_forward.71} parent=0 // loop_header
    %s13 = sphi 0, %s17
    %p14 = scmp.ge.s32.totalorder %s13, 4
    %s23 = sphi 0, %s25
    %s26 = sphi 0, %s23
    %s27 = sphi 0, %s26
    %s43 = sphi 0, %s27
    %s47 = sphi 0, %s47
    %s49 = sphi 0, %s47
    %s50 = sphi 0, %s49
    %s64 = sphi 0, %s50
    %s68 = sphi 0, %s68
    %s70 = sphi 0, %s68
    %s71 = sphi 0, %s70
    %s85 = sphi 0, %s71
    %s89 = sphi 0, %s89
    %s91 = sphi 0, %s89
    %s92 = sphi 0, %s91
    %s106 = sphi 0, %s92
    %s110 = sphi 0, %s110
    %s112 = sphi 0, %s110
    %s113 = sphi 0, %s112
    %s127 = sphi 0, %s113
    %s131 = sphi 0, %s131
    %s133 = sphi 0, %s131
    %s134 = sphi 0, %s133
    %s148 = sphi 0, %s134
    %s152 = sphi 0, %s152
    %s154 = sphi 0, %s152
    %s155 = sphi 0, %s154
    %s169 = sphi 0, %s155
    %s175 = sphi 0, %s177
    %s178 = sphi 0, %s175
    %s179 = sphi 0, %s178
    %s195 = sphi 0, %s179
  $region4: #{mininet_forward.71} parent=0 // loop_header_branch
    %16 = sbr.rel (%p14) target = $region8
  $region5: #{mininet_forward.71} parent=0 // loop_body
    %s18 = ssub.s32 %s13, 1
    %s19 = ssub.s32 %s13, 2
    %s20 = sadd.s32 %s13, 1
    %s21 = ssub.s32 %s13, %s20
    %p22 = scmp.eq.s32.totalorder %s21, 0
    %s24 = sadd.s32 %s23, 1
    %s25 = scalar_select %p22, %s23, %s24
    %p28 = pneg %p22
    %p29 = scmp.eq.s32.totalorder %s13, 1
    %p30 = por %p28, %p29
    %p31 = scmp.ne.s32.totalorder %s23, %s26
    %p32 = scmp.eq.s32.totalorder %s13, 0
    %p33 = por %p31, %p32
    %p34 = scmp.ne.s32.totalorder %s23, %s26
    %p35 = scmp.eq.s32.totalorder %s18, 1
    %p36 = por %p34, %p35
    %p37 = scmp.ne.s32.totalorder %s26, %s27
    %p38 = scmp.eq.s32.totalorder %s18, 0
    %p39 = por %p37, %p38
    %p40 = scmp.ne.s32.totalorder %s26, %s27
    %p41 = scmp.eq.s32.totalorder %s19, 1
    %p42 = por %p40, %p41
    %p44 = scmp.ne.s32.totalorder %s27, %s43
    %p45 = scmp.eq.s32.totalorder %s19, 0
    %p46 = por %p44, %p45
    %s48 = sadd.s32 %s47, 1
    %p51 = scmp.eq.s32.totalorder %s13, 1
    %p52 = scmp.ne.s32.totalorder %s47, %s49
    %p53 = scmp.eq.s32.totalorder %s13, 0
    %p54 = por %p52, %p53
    %p55 = scmp.ne.s32.totalorder %s47, %s49
    %p56 = scmp.eq.s32.totalorder %s18, 1
    %p57 = por %p55, %p56
    %p58 = scmp.ne.s32.totalorder %s49, %s50
    %p59 = scmp.eq.s32.totalorder %s18, 0
    %p60 = por %p58, %p59
    %p61 = scmp.ne.s32.totalorder %s49, %s50
    %p62 = scmp.eq.s32.totalorder %s19, 1
    %p63 = por %p61, %p62
    %p65 = scmp.ne.s32.totalorder %s50, %s64
    %p66 = scmp.eq.s32.totalorder %s19, 0
    %p67 = por %p65, %p66
    %s69 = sadd.s32 %s68, 1
    %p72 = scmp.eq.s32.totalorder %s13, 1
    %p73 = scmp.ne.s32.totalorder %s68, %s70
    %p74 = scmp.eq.s32.totalorder %s13, 0
    %p75 = por %p73, %p74
    %p76 = scmp.ne.s32.totalorder %s68, %s70
    %p77 = scmp.eq.s32.totalorder %s18, 1
    %p78 = por %p76, %p77
    %p79 = scmp.ne.s32.totalorder %s70, %s71
    %p80 = scmp.eq.s32.totalorder %s18, 0
    %p81 = por %p79, %p80
    %p82 = scmp.ne.s32.totalorder %s70, %s71
    %p83 = scmp.eq.s32.totalorder %s19, 1
    %p84 = por %p82, %p83
    %p86 = scmp.ne.s32.totalorder %s71, %s85
    %p87 = scmp.eq.s32.totalorder %s19, 0
    %p88 = por %p86, %p87
    %s90 = sadd.s32 %s89, 1
    %p93 = scmp.eq.s32.totalorder %s13, 1
    %p94 = scmp.ne.s32.totalorder %s89, %s91
    %p95 = scmp.eq.s32.totalorder %s13, 0
    %p96 = por %p94, %p95
    %p97 = scmp.ne.s32.totalorder %s89, %s91
    %p98 = scmp.eq.s32.totalorder %s18, 1
    %p99 = por %p97, %p98
    %p100 = scmp.ne.s32.totalorder %s91, %s92
    %p101 = scmp.eq.s32.totalorder %s18, 0
    %p102 = por %p100, %p101
    %p103 = scmp.ne.s32.totalorder %s91, %s92
    %p104 = scmp.eq.s32.totalorder %s19, 1
    %p105 = por %p103, %p104
    %p107 = scmp.ne.s32.totalorder %s92, %s106
    %p108 = scmp.eq.s32.totalorder %s19, 0
    %p109 = por %p107, %p108
    %s111 = sadd.s32 %s110, 1
    %p114 = scmp.eq.s32.totalorder %s13, 1
    %p115 = scmp.ne.s32.totalorder %s110, %s112
    %p116 = scmp.eq.s32.totalorder %s13, 0
    %p117 = por %p115, %p116
    %p118 = scmp.ne.s32.totalorder %s110, %s112
    %p119 = scmp.eq.s32.totalorder %s18, 1
    %p120 = por %p118, %p119
    %p121 = scmp.ne.s32.totalorder %s112, %s113
    %p122 = scmp.eq.s32.totalorder %s18, 0
    %p123 = por %p121, %p122
    %p124 = scmp.ne.s32.totalorder %s112, %s113
    %p125 = scmp.eq.s32.totalorder %s19, 1
    %p126 = por %p124, %p125
    %p128 = scmp.ne.s32.totalorder %s113, %s127
    %p129 = scmp.eq.s32.totalorder %s19, 0
    %p130 = por %p128, %p129
    %s132 = sadd.s32 %s131, 1
    %p135 = scmp.eq.s32.totalorder %s13, 1
    %p136 = scmp.ne.s32.totalorder %s131, %s133
    %p137 = scmp.eq.s32.totalorder %s13, 0
    %p138 = por %p136, %p137
    %p139 = scmp.ne.s32.totalorder %s131, %s133
    %p140 = scmp.eq.s32.totalorder %s18, 1
    %p141 = por %p139, %p140
    %p142 = scmp.ne.s32.totalorder %s133, %s134
    %p143 = scmp.eq.s32.totalorder %s18, 0
    %p144 = por %p142, %p143
    %p145 = scmp.ne.s32.totalorder %s133, %s134
    %p146 = scmp.eq.s32.totalorder %s19, 1
    %p147 = por %p145, %p146
    %p149 = scmp.ne.s32.totalorder %s134, %s148
    %p150 = scmp.eq.s32.totalorder %s19, 0
    %p151 = por %p149, %p150
    %s153 = sadd.s32 %s152, 1
    %p156 = scmp.eq.s32.totalorder %s13, 1
    %p157 = scmp.ne.s32.totalorder %s152, %s154
    %p158 = scmp.eq.s32.totalorder %s13, 0
    %p159 = por %p157, %p158
    %p160 = scmp.ne.s32.totalorder %s152, %s154
    %p161 = scmp.eq.s32.totalorder %s18, 1
    %p162 = por %p160, %p161
    %p163 = scmp.ne.s32.totalorder %s154, %s155
    %p164 = scmp.eq.s32.totalorder %s18, 0
    %p165 = por %p163, %p164
    %p166 = scmp.ne.s32.totalorder %s154, %s155
    %p167 = scmp.eq.s32.totalorder %s19, 1
    %p168 = por %p166, %p167
    %p170 = scmp.ne.s32.totalorder %s155, %s169
    %p171 = scmp.eq.s32.totalorder %s19, 0
    %p172 = por %p170, %p171
    %s173 = ssub.s32 %s13, %s20
    %p174 = scmp.eq.s32.totalorder %s173, 0
    %s176 = sadd.s32 %s175, 1
    %s177 = scalar_select %p174, %s175, %s176
    %p180 = pneg %p174
    %p181 = scmp.eq.s32.totalorder %s13, 1
    %p182 = por %p180, %p181
    %p183 = scmp.ne.s32.totalorder %s175, %s178
    %p184 = scmp.eq.s32.totalorder %s13, 0
    %p185 = por %p183, %p184
    %p186 = scmp.ne.s32.totalorder %s175, %s178
    %p187 = scmp.eq.s32.totalorder %s18, 1
    %p188 = por %p186, %p187
    %p189 = scmp.ne.s32.totalorder %s178, %s179
    %p190 = scmp.eq.s32.totalorder %s18, 0
    %p191 = por %p189, %p190
    %p192 = scmp.ne.s32.totalorder %s178, %s179
    %p193 = scmp.eq.s32.totalorder %s19, 1
    %p194 = por %p192, %p193
    %p196 = scmp.ne.s32.totalorder %s179, %s195
    %p197 = scmp.eq.s32.totalorder %s19, 0
    %p198 = por %p196, %p197
    %p199 = scmp.le.s32.totalorder 1, %s13
    %p200 = scmp.lt.s32.totalorder %s13, 3
    %p201 = pnand %p199, %p200
    %p202 = pneg %p201
    // Predicated region
    $region9: #{mininet_forward.71} parent=5 // pred_check
      _
    $region10: #{mininet_forward.71} parent=5 // pred_check_branch
      %204 = sbr.rel (%p201) target = $region12
    $region11: #{mininet_forward.71} parent=5 // pred_region
      %s205 = ssub.s32 %s13, 1
      // Predicated region
      $region13: #{mininet_forward.71} parent=11 // pred_check
        %p206 = pneg %p60
      $region14: #{mininet_forward.71} parent=11 // pred_check_branch
        %208 = sbr.rel (%p206) target = $region16
      $region15: #{mininet_forward.71} parent=11 // pred_region
        _
      $region16: #{mininet_forward.71} parent=11 // pred_fallthru
        _
      // Predicated region
      $region17: #{mininet_forward.71} parent=11 // pred_check
        %p209 = pneg %p81
      $region18: #{mininet_forward.71} parent=11 // pred_check_branch
        %211 = sbr.rel (%p209) target = $region20
      $region19: #{mininet_forward.71} parent=11 // pred_region
        _
      $region20: #{mininet_forward.71} parent=11 // pred_fallthru
        _
      // Predicated region
      $region21: #{mininet_forward.71} parent=11 // pred_check
        %p212 = pneg %p102
      $region22: #{mininet_forward.71} parent=11 // pred_check_branch
        %214 = sbr.rel (%p212) target = $region24
      $region23: #{mininet_forward.71} parent=11 // pred_region
        _
      $region24: #{mininet_forward.71} parent=11 // pred_fallthru
        _
      // Predicated region
      $region25: #{mininet_forward.71} parent=11 // pred_check
        %p215 = pneg %p123
      $region26: #{mininet_forward.71} parent=11 // pred_check_branch
        %217 = sbr.rel (%p215) target = $region28
      $region27: #{mininet_forward.71} parent=11 // pred_region
        _
      $region28: #{mininet_forward.71} parent=11 // pred_fallthru
        _
      // Predicated region
      $region29: #{mininet_forward.71} parent=11 // pred_check
        %p218 = pneg %p144
      $region30: #{mininet_forward.71} parent=11 // pred_check_branch
        %220 = sbr.rel (%p218) target = $region32
      $region31: #{mininet_forward.71} parent=11 // pred_region
        _
      $region32: #{mininet_forward.71} parent=11 // pred_fallthru
        _
      // Predicated region
      $region33: #{mininet_forward.71} parent=11 // pred_check
        %p221 = pneg %p165
      $region34: #{mininet_forward.71} parent=11 // pred_check_branch
        %223 = sbr.rel (%p221) target = $region36
      $region35: #{mininet_forward.71} parent=11 // pred_region
        _
      $region36: #{mininet_forward.71} parent=11 // pred_fallthru
        _
    $region12: #{mininet_forward.71} parent=5 // pred_fallthru
      _
    %p224 = scmp.lt.s32.totalorder %s13, 2
    // Predicated region
    $region37: #{mininet_forward.71} parent=5 // pred_check
      %p225 = pneg %p224
    $region38: #{mininet_forward.71} parent=5 // pred_check_branch
      %227 = sbr.rel (%p225) target = $region40
    $region39: #{mininet_forward.71} parent=5 // pred_region
      // Predicated region
      $region41: #{mininet_forward.71} parent=39 // pred_check
        %p228 = pneg %p33
      $region42: #{mininet_forward.71} parent=39 // pred_check_branch
        %230 = sbr.rel (%p228) target = $region44
      $region43: #{mininet_forward.71} parent=39 // pred_region
        %p231 = scmp.lt.s32.totalorder %s13, 1
        %s232 = scalar_select %p231, %s13, 1
        %s233 = smul.addr %s232, 14
        %s234 = smul.addr %s233, 8
        %s235 = scalar_lea.vmem %s0, %s234
      $region44: #{mininet_forward.71} parent=39 // pred_fallthru
        _
    $region40: #{mininet_forward.71} parent=5 // pred_fallthru
      _
    %p236 = scmp.le.s32.totalorder 1, %s13
    %p237 = scmp.lt.s32.totalorder %s13, 3
    %p238 = pnand %p236, %p237
    %p239 = pneg %p238
    // Predicated region
    $region45: #{mininet_forward.71} parent=5 // pred_check
      _
    $region46: #{mininet_forward.71} parent=5 // pred_check_branch
      %241 = sbr.rel (%p238) target = $region48
    $region47: #{mininet_forward.71} parent=5 // pred_region
      %s242 = ssub.s32 %s13, 1
      %p243 = scmp.lt.s32.totalorder %s18, 1
      %s244 = scalar_select %p243, %s18, 1
      %s245 = smul.addr %s244, 14
      %s246 = smul.addr %s245, 8
      %s247 = scalar_lea.vmem %s0, %s246
      %p248 = pneg %p39
      %p249 = pneg %p36
      %p250 = pneg %p60
      %p251 = pneg %p57
      %p252 = pneg %p81
      %p253 = pneg %p78
      %p254 = pneg %p102
      %p255 = pneg %p99
      %p256 = pneg %p123
      %p257 = pneg %p120
      %p258 = pneg %p144
      %p259 = pneg %p141
      %p260 = pneg %p165
      %p261 = pneg %p162
      %p262 = pneg %p191
      %p263 = pneg %p188
      %p264 = scmp.lt.s32.totalorder %s18, 1
      %s265 = scalar_select %p264, %s18, 1
      %s266 = smul.addr %s265, 3
      %s267 = smul.addr %s266, 8
      %s268 = scalar_lea.vmem %s7, %s267
      %p269 = scmp.lt.s32.totalorder %s18, 1
      %s270 = scalar_select %p269, %s18, 1
      %s271 = smul.addr %s270, 14
      %s272 = smul.addr %s271, 8
      %s273 = scalar_lea.vmem %s0, %s272
      %p274 = scmp.lt.s32.totalorder %s18, 1
      %s275 = scalar_select %p274, %s18, 1
      %s276 = smul.addr %s275, 3
      %s277 = smul.addr %s276, 8
      %s278 = scalar_lea.vmem %s7, %s277
      %v280 = vld [vmem:[%s273 + $0x2c] sm:$0xff]
      %v281 = vld [vmem:[%s273 + $0x34] sm:$0xff]
      %v282 = vld [vmem:[%s273 + $0x3c] sm:$0xf]
      %s283 = scalar_lea.vmem %s1, 4
      %v284 = vld [vmem:[%s283] sm:$0x1]
      %v286 = vlaneseq
      %v287 = vshrl.u32 %v286, 7
      %v288 = vsub.s32 0, %v287
      %v289 = vrot.slane %v284, %v288
      %v291 = vmul.f32 %v280, %v289
      %v292 = vmul.f32 %v281, %v289
      %v293 = vmul.f32 %v282, %v289
      %s294 = scalar_lea.vmem %s3, 4
      %v295 = vld [vmem:[%s294] sm:$0x1]
      %v297 = vlaneseq
      %v298 = vshrl.u32 %v297, 7
      %v299 = vsub.s32 0, %v298
      %v300 = vrot.slane %v295, %v299
      %v302 = vmul.f32 %v280, %v300
      %v303 = vmul.f32 %v281, %v300
      %v304 = vmul.f32 %v282, %v300
      %v305 = vld [vmem:[%s273 + $0x21] sm:$0xff]
      %v306 = vld [vmem:[%s273 + $0x29] sm:$0xff]
      %v307 = vld [vmem:[%s273 + $0x31] sm:$0xf]
      %v308 = vld [vmem:[%s1] sm:$0x1]
      %v310 = vlaneseq
      %v311 = vshrl.u32 %v310, 7
      %v312 = vsub.s32 0, %v311
      %v313 = vrot.slane %v308, %v312
      %v315 = vmul.f32 %v305, %v313
      %v316 = vmul.f32 %v306, %v313
      %v317 = vmul.f32 %v307, %v313
      %v318 = vadd.f32 %v291, %v315
      %v319 = vadd.f32 %v292, %v316
      %v320 = vadd.f32 %v293, %v317
      %v321 = vld [vmem:[%s273] sm:$0xff]
      %v322 = vld [vmem:[%s273 + $0x8] sm:$0xff]
      %v323 = vld [vmem:[%s273 + $0x10] sm:$0xf]
      %v324 = vld [vmem:[%s3] sm:$0x1]
      %v326 = vlaneseq
      %v327 = vshrl.u32 %v326, 7
      %v328 = vsub.s32 0, %v327
      %v329 = vrot.slane %v324, %v328
      %v331 = vmul.f32 %v321, %v329
      %v332 = vmul.f32 %v322, %v329
      %v333 = vmul.f32 %v323, %v329
      %v334 = vadd.f32 %v302, %v331
      %v335 = vadd.f32 %v303, %v332
      %v336 = vadd.f32 %v304, %v333
      %v337 = vld [vmem:[%s273 + $0x22] sm:$0xff]
      %v338 = vld [vmem:[%s273 + $0x2a] sm:$0xff]
      %v339 = vld [vmem:[%s273 + $0x32] sm:$0xf]
      %s340 = scalar_lea.vmem %s1, 1
      %v341 = vld [vmem:[%s340] sm:$0x1]
      %v343 = vlaneseq
      %v344 = vshrl.u32 %v343, 7
      %v345 = vsub.s32 0, %v344
      %v346 = vrot.slane %v341, %v345
      %v348 = vmul.f32 %v337, %v346
      %v349 = vmul.f32 %v338, %v346
      %v350 = vmul.f32 %v339, %v346
      %v351 = vadd.f32 %v318, %v348
      %v352 = vadd.f32 %v319, %v349
      %v353 = vadd.f32 %v320, %v350
      %v354 = vld [vmem:[%s273 + $0x4] sm:$0xff]
      %v355 = vld [vmem:[%s273 + $0xc] sm:$0xff]
      %v356 = vld [vmem:[%s273 + $0x14] sm:$0xf]
      %s357 = scalar_lea.vmem %s3, 1
      %v358 = vld [vmem:[%s357] sm:$0x1]
      %v360 = vlaneseq
      %v361 = vshrl.u32 %v360, 7
      %v362 = vsub.s32 0, %v361
      %v363 = vrot.slane %v358, %v362
      %v365 = vmul.f32 %v354, %v363
      %v366 = vmul.f32 %v355, %v363
      %v367 = vmul.f32 %v356, %v363
      %v368 = vadd.f32 %v334, %v365
      %v369 = vadd.f32 %v335, %v366
      %v370 = vadd.f32 %v336, %v367
      %v371 = vld [vmem:[%s273 + $0x23] sm:$0xff]
      %v372 = vld [vmem:[%s273 + $0x2b] sm:$0xff]
      %v373 = vld [vmem:[%s273 + $0x33] sm:$0xf]
      %s374 = scalar_lea.vmem %s1, 2
      %v375 = vld [vmem:[%s374] sm:$0x1]
      %v377 = vlaneseq
      %v378 = vshrl.u32 %v377, 7
      %v379 = vsub.s32 0, %v378
      %v380 = vrot.slane %v375, %v379
      %v382 = vmul.f32 %v371, %v380
      %v383 = vmul.f32 %v372, %v380
      %v384 = vmul.f32 %v373, %v380
      %v385 = vadd.f32 %v351, %v382
      %v386 = vadd.f32 %v352, %v383
      %v387 = vadd.f32 %v353, %v384
      %v388 = vld [vmem:[%s273 + $0x10] sm:$0xff]
      %v389 = vld [vmem:[%s273 + $0x18] sm:$0xf]
      %s390 = scalar_lea.vmem %s3, 2
      %v391 = vld [vmem:[%s390] sm:$0x1]
      %v393 = vlaneseq
      %v394 = vshrl.u32 %v393, 7
      %v395 = vsub.s32 0, %v394
      %v396 = vrot.slane %v391, %v395
      %v398 = vmul.f32 %v322, %v396
      %v399 = vmul.f32 %v388, %v396
      %v400 = vmul.f32 %v389, %v396
      %v401 = vadd.f32 %v368, %v398
      %v402 = vadd.f32 %v369, %v399
      %v403 = vadd.f32 %v370, %v400
      %v404 = vld [vmem:[%s273 + $0x33] sm:$0xff]
      %v405 = vld [vmem:[%s273 + $0x3b] sm:$0xf]
      %s406 = scalar_lea.vmem %s1, 3
      %v407 = vld [vmem:[%s406] sm:$0x1]
      %v409 = vlaneseq
      %v410 = vshrl.u32 %v409, 7
      %v411 = vsub.s32 0, %v410
      %v412 = vrot.slane %v407, %v411
      %v414 = vmul.f32 %v372, %v412
      %v415 = vmul.f32 %v404, %v412
      %v416 = vmul.f32 %v405, %v412
      %v417 = vadd.f32 %v385, %v414
      %v418 = vadd.f32 %v386, %v415
      %v419 = vadd.f32 %v387, %v416
      %v420 = vld [vmem:[%s273 + $0x28] sm:$0xff]
      %v421 = vld [vmem:[%s273 + $0x30] sm:$0xff]
      %v422 = vld [vmem:[%s273 + $0x38] sm:$0xf]
      %s423 = scalar_lea.vmem %s3, 3
      %v424 = vld [vmem:[%s423] sm:$0x1]
      %v426 = vlaneseq
      %v427 = vshrl.u32 %v426, 7
      %v428 = vsub.s32 0, %v427
      %v429 = vrot.slane %v424, %v428
      %v431 = vmul.f32 %v420, %v429
      %v432 = vmul.f32 %v421, %v429
      %v433 = vmul.f32 %v422, %v429
      %v434 = vadd.f32 %v401, %v431
      %v435 = vadd.f32 %v402, %v432
      %v436 = vadd.f32 %v403, %v433
      %v437 = vld [vmem:[%s273 + $0x2d] sm:$0xff]
      %v438 = vld [vmem:[%s273 + $0x35] sm:$0xff]
      %v439 = vld [vmem:[%s273 + $0x3d] sm:$0xf]
      %s440 = scalar_lea.vmem %s1, 5
      %v441 = vld [vmem:[%s440] sm:$0x1]
      %v443 = vlaneseq
      %v444 = vshrl.u32 %v443, 7
      %v445 = vsub.s32 0, %v444
      %v446 = vrot.slane %v441, %v445
      %v448 = vmul.f32 %v437, %v446
      %v449 = vmul.f32 %v438, %v446
      %v450 = vmul.f32 %v439, %v446
      %v451 = vadd.f32 %v417, %v448
      %v452 = vadd.f32 %v418, %v449
      %v453 = vadd.f32 %v419, %v450
      %v454 = vld [vmem:[%s273 + $0x38] sm:$0xff]
      %v455 = vld [vmem:[%s273 + $0x40] sm:$0xf]
      %s456 = scalar_lea.vmem %s3, 5
      %v457 = vld [vmem:[%s456] sm:$0x1]
      %v459 = vlaneseq
      %v460 = vshrl.u32 %v459, 7
      %v461 = vsub.s32 0, %v460
      %v462 = vrot.slane %v457, %v461
      %v464 = vmul.f32 %v421, %v462
      %v465 = vmul.f32 %v454, %v462
      %v466 = vmul.f32 %v455, %v462
      %v467 = vadd.f32 %v434, %v464
      %v468 = vadd.f32 %v435, %v465
      %v469 = vadd.f32 %v436, %v466
      %v470 = vld [vmem:[%s273 + $0x3d] sm:$0xff]
      %v471 = vld [vmem:[%s273 + $0x45] sm:$0xf]
      %s472 = scalar_lea.vmem %s1, 6
      %v473 = vld [vmem:[%s472] sm:$0x1]
      %v475 = vlaneseq
      %v476 = vshrl.u32 %v475, 7
      %v477 = vsub.s32 0, %v476
      %v478 = vrot.slane %v473, %v477
      %v480 = vmul.f32 %v438, %v478
      %v481 = vmul.f32 %v470, %v478
      %v482 = vmul.f32 %v471, %v478
      %v483 = vadd.f32 %v451, %v480
      %v484 = vadd.f32 %v452, %v481
      %v485 = vadd.f32 %v453, %v482
      %v486 = vld [vmem:[%s273 + $0x50] sm:$0xff]
      %v487 = vld [vmem:[%s273 + $0x58] sm:$0xff]
      %v488 = vld [vmem:[%s273 + $0x60] sm:$0xf]
      %s489 = scalar_lea.vmem %s3, 6
      %v490 = vld [vmem:[%s489] sm:$0x1]
      %v492 = vlaneseq
      %v493 = vshrl.u32 %v492, 7
      %v494 = vsub.s32 0, %v493
      %v495 = vrot.slane %v490, %v494
      %v497 = vmul.f32 %v486, %v495
      %v498 = vmul.f32 %v487, %v495
      %v499 = vmul.f32 %v488, %v495
      %v500 = vadd.f32 %v467, %v497
      %v501 = vadd.f32 %v468, %v498
      %v502 = vadd.f32 %v469, %v499
      %v503 = vld [vmem:[%s273 + $0x36] sm:$0xff]
      %v504 = vld [vmem:[%s273 + $0x3e] sm:$0xff]
      %v505 = vld [vmem:[%s273 + $0x46] sm:$0xf]
      %s506 = scalar_lea.vmem %s1, 7
      %v507 = vld [vmem:[%s506] sm:$0x1]
      %v509 = vlaneseq
      %v510 = vshrl.u32 %v509, 7
      %v511 = vsub.s32 0, %v510
      %v512 = vrot.slane %v507, %v511
      %v514 = vmul.f32 %v503, %v512
      %v515 = vmul.f32 %v504, %v512
      %v516 = vmul.f32 %v505, %v512
      %v517 = vadd.f32 %v483, %v514
      %v518 = vadd.f32 %v484, %v515
      %v519 = vadd.f32 %v485, %v516
      %v520 = vld [vmem:[%s273 + $0x54] sm:$0xff]
      %v521 = vld [vmem:[%s273 + $0x5c] sm:$0xff]
      %v522 = vld [vmem:[%s273 + $0x64] sm:$0xf]
      %s523 = scalar_lea.vmem %s3, 7
      %v524 = vld [vmem:[%s523] sm:$0x1]
      %v526 = vlaneseq
      %v527 = vshrl.u32 %v526, 7
      %v528 = vsub.s32 0, %v527
      %v529 = vrot.slane %v524, %v528
      %v531 = vmul.f32 %v520, %v529
      %v532 = vmul.f32 %v521, %v529
      %v533 = vmul.f32 %v522, %v529
      %v534 = vadd.f32 %v500, %v531
      %v535 = vadd.f32 %v501, %v532
      %v536 = vadd.f32 %v502, %v533
      %v537 = vld [vmem:[%s273 + $0x37] sm:$0xff]
      %v538 = vld [vmem:[%s273 + $0x3f] sm:$0xff]
      %v539 = vld [vmem:[%s273 + $0x47] sm:$0xf]
      %s540 = scalar_lea.vmem %s1, 8
      %v541 = vld [vmem:[%s540] sm:$0x1]
      %v543 = vlaneseq
      %v544 = vshrl.u32 %v543, 7
      %v545 = vsub.s32 0, %v544
      %v546 = vrot.slane %v541, %v545
      %v548 = vmul.f32 %v537, %v546
      %v549 = vmul.f32 %v538, %v546
      %v550 = vmul.f32 %v539, %v546
      %v551 = vadd.f32 %v517, %v548
      %v552 = vadd.f32 %v518, %v549
      %v553 = vadd.f32 %v519, %v550
      %v554 = vld [vmem:[%s273 + $0x60] sm:$0xff]
      %v555 = vld [vmem:[%s273 + $0x68] sm:$0xf]
      %s556 = scalar_lea.vmem %s3, 8
      %v557 = vld [vmem:[%s556] sm:$0x1]
      %v559 = vlaneseq
      %v560 = vshrl.u32 %v559, 7
      %v561 = vsub.s32 0, %v560
      %v562 = vrot.slane %v557, %v561
      %v564 = vmul.f32 %v487, %v562
      %v565 = vmul.f32 %v554, %v562
      %v566 = vmul.f32 %v555, %v562
      %v567 = vadd.f32 %v534, %v564
      %v568 = vadd.f32 %v535, %v565
      %v569 = vadd.f32 %v536, %v566
      %v570 = vld [vmem:[%s2] sm:$0x1]
      %v572 = vlaneseq
      %v573 = vshrl.u32 %v572, 7
      %v574 = vsub.s32 0, %v573
      %v575 = vrot.slane %v570, %v574
      %v577 = vadd.f32 %v551, %v575
      %v578 = vadd.f32 %v552, %v575
      %v579 = vadd.f32 %v553, %v575
      %v580 = vmax.f32 %v577, 0.0
      %v581 = vmax.f32 %v578, 0.0
      %v582 = vmax.f32 %v579, 0.0
      %v583 = vld [vmem:[%s4] sm:$0x1]
      %v585 = vlaneseq
      %v586 = vshrl.u32 %v585, 7
      %v587 = vsub.s32 0, %v586
      %v588 = vrot.slane %v583, %v587
      %v590 = vadd.f32 %v567, %v588
      %v591 = vadd.f32 %v568, %v588
      %v592 = vadd.f32 %v569, %v588
      %v593 = vmax.f32 %v590, 0.0
      %v594 = vmax.f32 %v591, 0.0
      %v595 = vmax.f32 %v592, 0.0
      %v596 = vadd.f32 %v580, %v593
      %v597 = vadd.f32 %v581, %v594
      %v598 = vadd.f32 %v582, %v595
      %v599 = vpack.c.bf16 %v597, %v596
      %v600 = vpack.c.bf16 %v598, %v598
      %v601 = vld [vmem:[%s5] sm:$0xf]
      %v602 = vld [vmem:[%s5 + $0x4] sm:$0xf]
      %v603 = vld [vmem:[%s5 + $0x8] sm:$0xf]
      %v604 = vld [vmem:[%s5 + $0xc] sm:$0xf]
      %v605 = vld [vmem:[%s5 + $0x10] sm:$0xf]
      %v606 = vld [vmem:[%s5 + $0x14] sm:$0xf]
      %v607 = vld [vmem:[%s5 + $0x18] sm:$0xf]
      %v608 = vld [vmem:[%s5 + $0x1c] sm:$0xf]
      %v609 = vld [vmem:[%s5 + $0x20] sm:$0xf]
      %v610 = vld [vmem:[%s5 + $0x24] sm:$0xf]
      %v611 = vld [vmem:[%s5 + $0x28] sm:$0xf]
      %v612 = vld [vmem:[%s5 + $0x2c] sm:$0xf]
      %v613 = vld [vmem:[%s5 + $0x30] sm:$0xf]
      %v614 = vld [vmem:[%s5 + $0x34] sm:$0xf]
      %v615 = vld [vmem:[%s5 + $0x38] sm:$0xf]
      %v616 = vld [vmem:[%s5 + $0x3c] sm:$0xf]
      %v617 = vld [vmem:[%s6] sm:$0x1]
      %v619 = vlaneseq
      %v620 = vshrl.u32 %v619, 7
      %v621 = vsub.s32 0, %v620
      %v622 = vrot.slane %v617, %v621
      %v640 = vunpack.c.l.b16 %v601
      %v641 = vunpack.c.l.b16 %v602
      %v642 = vunpack.c.l.b16 %v603
      %v643 = vunpack.c.l.b16 %v604
      %v644 = vunpack.c.l.b16 %v605
      %v645 = vunpack.c.l.b16 %v606
      %v646 = vunpack.c.l.b16 %v607
      %v647 = vunpack.c.l.b16 %v608
      %v648 = vunpack.c.l.b16 %v609
      %v649 = vunpack.c.l.b16 %v610
      %v650 = vunpack.c.l.b16 %v611
      %v651 = vunpack.c.l.b16 %v612
      %v652 = vunpack.c.l.b16 %v613
      %v653 = vunpack.c.l.b16 %v614
      %v654 = vunpack.c.l.b16 %v615
      %v655 = vunpack.c.l.b16 %v616
      %v656 = vpack.c.b16 %v641, %v640
      %v657 = vpack.c.b16 %v643, %v642
      %v658 = vpack.c.b16 %v645, %v644
      %v659 = vpack.c.b16 %v647, %v646
      %v660 = vpack.c.b16 %v649, %v648
      %v661 = vpack.c.b16 %v651, %v650
      %v662 = vpack.c.b16 %v653, %v652
      %v663 = vpack.c.b16 %v655, %v654
      %672 = vmatprep.subr.bf16.mxu0 0
      %673 = vmatpush1.bf16.msra.mxu0 %v656
      %674 = vmatprep.subr.bf16.mxu0 0
      %675 = vmatpush1.bf16.msra.mxu0 %v657
      %676 = vmatprep.subr.bf16.mxu0 0
      %677 = vmatpush1.bf16.msra.mxu0 %v658
      %678 = vmatprep.subr.bf16.mxu0 0
      %679 = vmatpush1.bf16.msra.mxu0 %v659
      %680 = vmatprep.subr.bf16.mxu0 0
      %681 = vmatpush1.bf16.msra.mxu0 %v660
      %682 = vmatprep.subr.bf16.mxu0 0
      %683 = vmatpush1.bf16.msra.mxu0 %v661
      %684 = vmatprep.subr.bf16.mxu0 0
      %685 = vmatpush1.bf16.msra.mxu0 %v662
      %686 = vmatprep.subr.bf16.mxu0 0
      %687 = vmatpush1.bf16.msra.mxu0 %v663
      %688 = vmatprep.subr.bf16.mxu0 0
      %689 = vmatpush1.bf16.msra.mxu0 0
      %690 = vmatprep.subr.bf16.mxu0 0
      %691 = vmatpush1.bf16.msra.mxu0 0
      %692 = vmatprep.subr.bf16.mxu0 0
      %693 = vmatpush1.bf16.msra.mxu0 0
      %694 = vmatprep.subr.bf16.mxu0 0
      %695 = vmatpush1.bf16.msra.mxu0 0
      %696 = vmatprep.subr.bf16.mxu0 0
      %697 = vmatpush1.bf16.msra.mxu0 0
      %698 = vmatprep.subr.bf16.mxu0 0
      %699 = vmatpush1.bf16.msra.mxu0 0
      %700 = vmatprep.subr.bf16.mxu0 0
      %701 = vmatpush1.bf16.msra.mxu0 0
      %702 = vmatprep.subr.bf16.mxu0 0
      %703 = vmatpush1.bf16.msra.mxu0 0
      %704 = vmatprep.mubr.bf16.mxu0 0
      %705 = vmatmul.mubr.bf16.gmra.mrb[0].mxu0 %v599
      %v706 = vpop.f32.mrb[0].mxu0
      %v707 = vadd.f32 %v622, %v706
      %v708 = vpop.f32.mrb[0].mxu0
      %v709 = vpop.f32.mrb[0].mxu0
      %v710 = vadd.f32 %v622, %v709
      %v711 = vpop.f32.mrb[0].mxu0
      %712 = vmatprep.mubr.bf16.mxu0 0
      %713 = vmatmul.mubr.bf16.gmra.mrb[0].mxu0 %v600
      %v714 = vpop.f32.mrb[0].mxu0
      %v715 = vadd.f32 %v622, %v714
      %v716 = vpop.f32.mrb[0].mxu0
      %v717 = vpop.f32.mrb[0].mxu0
      %v718 = vpop.f32.mrb[0].mxu0
      %719 = vdwg.mxu0
      %v720 = vadd.f32 %v707, %v280
      %v721 = vadd.f32 %v710, %v281
      %v722 = vadd.f32 %v715, %v282
      %v723 = vmax.f32 %v720, 0.0
      %v724 = vmax.f32 %v721, 0.0
      %v725 = vmax.f32 %v722, 0.0
      %726 = vst [vmem:[%s278] sm:$0xff] %v723
      %727 = vst [vmem:[%s278 + $0x8] sm:$0xff] %v724
      %728 = vst [vmem:[%s278 + $0x10] sm:$0xf] %v725
      %p729 = scmp.lt.s32.totalorder %s18, 1
      %s730 = scalar_select %p729, %s18, 1
      %s731 = smul.addr %s730, 3
      %s732 = smul.addr %s731, 8
      %s733 = scalar_lea.vmem %s7, %s732
      // Predicated region
      $region49: #{mininet_forward.71} parent=47 // pred_check
        %p734 = pneg %p188
      $region50: #{mininet_forward.71} parent=47 // pred_check_branch
        %736 = sbr.rel (%p734) target = $region52
      $region51: #{mininet_forward.71} parent=47 // pred_region
        _
      $region52: #{mininet_forward.71} parent=47 // pred_fallthru
        _
    $region48: #{mininet_forward.71} parent=5 // pred_fallthru
      _
    %p737 = scmp.le.s32.totalorder 2, %s13
    // Predicated region
    $region53: #{mininet_forward.71} parent=5 // pred_check
      %p738 = pneg %p737
    $region54: #{mininet_forward.71} parent=5 // pred_check_branch
      %740 = sbr.rel (%p738) target = $region56
    $region55: #{mininet_forward.71} parent=5 // pred_region
      %s741 = ssub.s32 %s13, 2
      // Predicated region
      $region57: #{mininet_forward.71} parent=55 // pred_check
        %p742 = pneg %p194
      $region58: #{mininet_forward.71} parent=55 // pred_check_branch
        %744 = sbr.rel (%p742) target = $region60
      $region59: #{mininet_forward.71} parent=55 // pred_region
        %p745 = scmp.lt.s32.totalorder %s19, 1
        %s746 = scalar_select %p745, %s19, 1
        %s747 = smul.addr %s746, 3
        %s748 = smul.addr %s747, 8
        %s749 = scalar_lea.vmem %s7, %s748
      $region60: #{mininet_forward.71} parent=55 // pred_fallthru
        _
    $region56: #{mininet_forward.71} parent=5 // pred_fallthru
      _
  $region6: #{mininet_forward.71} parent=0 // loop_footer
    %s17 = sadd.s32 1, %s13
  $region7: #{mininet_forward.71} parent=0 // loop_footer_branch
    %12 = sbr.rel target = $region3
  $region8: #{mininet_forward.71} parent=0 // loop_exit
    _

// kernel: mininet_forward.73
$region0: #{mininet_forward.73}
  #allocation0 [shape = 'u32[]', space=smem, size = 0x4, offset = 0x4, fixed_abs, tag = 'smem constant byte address 0x4 - core index']
  #allocation1 [shape = 'u32[144,128]{1,0:T(1,128)}', space=vmem, size = 0x12000, scoped, tag = 'internal scratch']
  %s0 = inlined_call_operand.vmem [shape: f32[2,342,128], index: 0, kind: input, shape index: {}]
  %s1 = inlined_call_operand.vmem [shape: f32[9,1,128], index: 1, kind: input, shape index: {}]
  %s2 = inlined_call_operand.vmem [shape: f32[1,128], index: 2, kind: input, shape index: {}]
  %s3 = inlined_call_operand.vmem [shape: f32[9,1,128], index: 3, kind: input, shape index: {}]
  %s4 = inlined_call_operand.vmem [shape: f32[1,128], index: 4, kind: input, shape index: {}]
  %s5 = inlined_call_operand.vmem [shape: bf16[128,128], index: 5, kind: input, shape index: {}]
  %s6 = inlined_call_operand.vmem [shape: f32[1,128], index: 6, kind: input, shape index: {}]
  %s7 = inlined_call_operand.vmem [shape: f32[2,36,128], index: 7, kind: output, shape index: {}]
  %s8 = sld [smem:[#allocation0]]
  $region61: #{mininet_forward.73} parent=0
    _
  %s10 = ssub.s32 1, %s8
  %s11 = scalar_select 0, %s10, %s8
  loop: start=0, step=1, limit=4
  $region2: #{mininet_forward.73} parent=0 // loop_pre_header
    _
  $region3: #{mininet_forward.73} parent=0 // loop_header
    %s13 = sphi 0, %s17
    %p14 = scmp.ge.s32.totalorder %s13, 4
    %s23 = sphi 0, %s25
    %s26 = sphi 0, %s23
    %s27 = sphi 0, %s26
    %s43 = sphi 0, %s27
    %s47 = sphi 0, %s47
    %s49 = sphi 0, %s47
    %s50 = sphi 0, %s49
    %s64 = sphi 0, %s50
    %s68 = sphi 0, %s68
    %s70 = sphi 0, %s68
    %s71 = sphi 0, %s70
    %s85 = sphi 0, %s71
    %s89 = sphi 0, %s89
    %s91 = sphi 0, %s89
    %s92 = sphi 0, %s91
    %s106 = sphi 0, %s92
    %s110 = sphi 0, %s110
    %s112 = sphi 0, %s110
    %s113 = sphi 0, %s112
    %s127 = sphi 0, %s113
    %s131 = sphi 0, %s131
    %s133 = sphi 0, %s131
    %s134 = sphi 0, %s133
    %s148 = sphi 0, %s134
    %s152 = sphi 0, %s152
    %s154 = sphi 0, %s152
    %s155 = sphi 0, %s154
    %s169 = sphi 0, %s155
    %s175 = sphi 0, %s177
    %s178 = sphi 0, %s175
    %s179 = sphi 0, %s178
    %s195 = sphi 0, %s179
  $region4: #{mininet_forward.73} parent=0 // loop_header_branch
    %16 = sbr.rel (%p14) target = $region8
  $region5: #{mininet_forward.73} parent=0 // loop_body
    %s18 = ssub.s32 %s13, 1
    %s19 = ssub.s32 %s13, 2
    %s20 = sadd.s32 %s13, 1
    %s21 = ssub.s32 %s13, %s20
    %p22 = scmp.eq.s32.totalorder %s21, 0
    %s24 = sadd.s32 %s23, 1
    %s25 = scalar_select %p22, %s23, %s24
    %p28 = pneg %p22
    %p29 = scmp.eq.s32.totalorder %s13, 1
    %p30 = por %p28, %p29
    %p31 = scmp.ne.s32.totalorder %s23, %s26
    %p32 = scmp.eq.s32.totalorder %s13, 0
    %p33 = por %p31, %p32
    %p34 = scmp.ne.s32.totalorder %s23, %s26
    %p35 = scmp.eq.s32.totalorder %s18, 1
    %p36 = por %p34, %p35
    %p37 = scmp.ne.s32.totalorder %s26, %s27
    %p38 = scmp.eq.s32.totalorder %s18, 0
    %p39 = por %p37, %p38
    %p40 = scmp.ne.s32.totalorder %s26, %s27
    %p41 = scmp.eq.s32.totalorder %s19, 1
    %p42 = por %p40, %p41
    %p44 = scmp.ne.s32.totalorder %s27, %s43
    %p45 = scmp.eq.s32.totalorder %s19, 0
    %p46 = por %p44, %p45
    %s48 = sadd.s32 %s47, 1
    %p51 = scmp.eq.s32.totalorder %s13, 1
    %p52 = scmp.ne.s32.totalorder %s47, %s49
    %p53 = scmp.eq.s32.totalorder %s13, 0
    %p54 = por %p52, %p53
    %p55 = scmp.ne.s32.totalorder %s47, %s49
    %p56 = scmp.eq.s32.totalorder %s18, 1
    %p57 = por %p55, %p56
    %p58 = scmp.ne.s32.totalorder %s49, %s50
    %p59 = scmp.eq.s32.totalorder %s18, 0
    %p60 = por %p58, %p59
    %p61 = scmp.ne.s32.totalorder %s49, %s50
    %p62 = scmp.eq.s32.totalorder %s19, 1
    %p63 = por %p61, %p62
    %p65 = scmp.ne.s32.totalorder %s50, %s64
    %p66 = scmp.eq.s32.totalorder %s19, 0
    %p67 = por %p65, %p66
    %s69 = sadd.s32 %s68, 1
    %p72 = scmp.eq.s32.totalorder %s13, 1
    %p73 = scmp.ne.s32.totalorder %s68, %s70
    %p74 = scmp.eq.s32.totalorder %s13, 0
    %p75 = por %p73, %p74
    %p76 = scmp.ne.s32.totalorder %s68, %s70
    %p77 = scmp.eq.s32.totalorder %s18, 1
    %p78 = por %p76, %p77
    %p79 = scmp.ne.s32.totalorder %s70, %s71
    %p80 = scmp.eq.s32.totalorder %s18, 0
    %p81 = por %p79, %p80
    %p82 = scmp.ne.s32.totalorder %s70, %s71
    %p83 = scmp.eq.s32.totalorder %s19, 1
    %p84 = por %p82, %p83
    %p86 = scmp.ne.s32.totalorder %s71, %s85
    %p87 = scmp.eq.s32.totalorder %s19, 0
    %p88 = por %p86, %p87
    %s90 = sadd.s32 %s89, 1
    %p93 = scmp.eq.s32.totalorder %s13, 1
    %p94 = scmp.ne.s32.totalorder %s89, %s91
    %p95 = scmp.eq.s32.totalorder %s13, 0
    %p96 = por %p94, %p95
    %p97 = scmp.ne.s32.totalorder %s89, %s91
    %p98 = scmp.eq.s32.totalorder %s18, 1
    %p99 = por %p97, %p98
    %p100 = scmp.ne.s32.totalorder %s91, %s92
    %p101 = scmp.eq.s32.totalorder %s18, 0
    %p102 = por %p100, %p101
    %p103 = scmp.ne.s32.totalorder %s91, %s92
    %p104 = scmp.eq.s32.totalorder %s19, 1
    %p105 = por %p103, %p104
    %p107 = scmp.ne.s32.totalorder %s92, %s106
    %p108 = scmp.eq.s32.totalorder %s19, 0
    %p109 = por %p107, %p108
    %s111 = sadd.s32 %s110, 1
    %p114 = scmp.eq.s32.totalorder %s13, 1
    %p115 = scmp.ne.s32.totalorder %s110, %s112
    %p116 = scmp.eq.s32.totalorder %s13, 0
    %p117 = por %p115, %p116
    %p118 = scmp.ne.s32.totalorder %s110, %s112
    %p119 = scmp.eq.s32.totalorder %s18, 1
    %p120 = por %p118, %p119
    %p121 = scmp.ne.s32.totalorder %s112, %s113
    %p122 = scmp.eq.s32.totalorder %s18, 0
    %p123 = por %p121, %p122
    %p124 = scmp.ne.s32.totalorder %s112, %s113
    %p125 = scmp.eq.s32.totalorder %s19, 1
    %p126 = por %p124, %p125
    %p128 = scmp.ne.s32.totalorder %s113, %s127
    %p129 = scmp.eq.s32.totalorder %s19, 0
    %p130 = por %p128, %p129
    %s132 = sadd.s32 %s131, 1
    %p135 = scmp.eq.s32.totalorder %s13, 1
    %p136 = scmp.ne.s32.totalorder %s131, %s133
    %p137 = scmp.eq.s32.totalorder %s13, 0
    %p138 = por %p136, %p137
    %p139 = scmp.ne.s32.totalorder %s131, %s133
    %p140 = scmp.eq.s32.totalorder %s18, 1
    %p141 = por %p139, %p140
    %p142 = scmp.ne.s32.totalorder %s133, %s134
    %p143 = scmp.eq.s32.totalorder %s18, 0
    %p144 = por %p142, %p143
    %p145 = scmp.ne.s32.totalorder %s133, %s134
    %p146 = scmp.eq.s32.totalorder %s19, 1
    %p147 = por %p145, %p146
    %p149 = scmp.ne.s32.totalorder %s134, %s148
    %p150 = scmp.eq.s32.totalorder %s19, 0
    %p151 = por %p149, %p150
    %s153 = sadd.s32 %s152, 1
    %p156 = scmp.eq.s32.totalorder %s13, 1
    %p157 = scmp.ne.s32.totalorder %s152, %s154
    %p158 = scmp.eq.s32.totalorder %s13, 0
    %p159 = por %p157, %p158
    %p160 = scmp.ne.s32.totalorder %s152, %s154
    %p161 = scmp.eq.s32.totalorder %s18, 1
    %p162 = por %p160, %p161
    %p163 = scmp.ne.s32.totalorder %s154, %s155
    %p164 = scmp.eq.s32.totalorder %s18, 0
    %p165 = por %p163, %p164
    %p166 = scmp.ne.s32.totalorder %s154, %s155
    %p167 = scmp.eq.s32.totalorder %s19, 1
    %p168 = por %p166, %p167
    %p170 = scmp.ne.s32.totalorder %s155, %s169
    %p171 = scmp.eq.s32.totalorder %s19, 0
    %p172 = por %p170, %p171
    %s173 = ssub.s32 %s13, %s20
    %p174 = scmp.eq.s32.totalorder %s173, 0
    %s176 = sadd.s32 %s175, 1
    %s177 = scalar_select %p174, %s175, %s176
    %p180 = pneg %p174
    %p181 = scmp.eq.s32.totalorder %s13, 1
    %p182 = por %p180, %p181
    %p183 = scmp.ne.s32.totalorder %s175, %s178
    %p184 = scmp.eq.s32.totalorder %s13, 0
    %p185 = por %p183, %p184
    %p186 = scmp.ne.s32.totalorder %s175, %s178
    %p187 = scmp.eq.s32.totalorder %s18, 1
    %p188 = por %p186, %p187
    %p189 = scmp.ne.s32.totalorder %s178, %s179
    %p190 = scmp.eq.s32.totalorder %s18, 0
    %p191 = por %p189, %p190
    %p192 = scmp.ne.s32.totalorder %s178, %s179
    %p193 = scmp.eq.s32.totalorder %s19, 1
    %p194 = por %p192, %p193
    %p196 = scmp.ne.s32.totalorder %s179, %s195
    %p197 = scmp.eq.s32.totalorder %s19, 0
    %p198 = por %p196, %p197
    %p199 = scmp.le.s32.totalorder 1, %s13
    %p200 = scmp.lt.s32.totalorder %s13, 3
    %p201 = pnand %p199, %p200
    %p202 = pneg %p201
    // Predicated region
    $region9: #{mininet_forward.73} parent=5 // pred_check
      _
    $region10: #{mininet_forward.73} parent=5 // pred_check_branch
      %204 = sbr.rel (%p201) target = $region12
    $region11: #{mininet_forward.73} parent=5 // pred_region
      %s205 = ssub.s32 %s13, 1
      // Predicated region
      $region13: #{mininet_forward.73} parent=11 // pred_check
        %p206 = pneg %p60
      $region14: #{mininet_forward.73} parent=11 // pred_check_branch
        %208 = sbr.rel (%p206) target = $region16
      $region15: #{mininet_forward.73} parent=11 // pred_region
        _
      $region16: #{mininet_forward.73} parent=11 // pred_fallthru
        _
      // Predicated region
      $region17: #{mininet_forward.73} parent=11 // pred_check
        %p209 = pneg %p81
      $region18: #{mininet_forward.73} parent=11 // pred_check_branch
        %211 = sbr.rel (%p209) target = $region20
      $region19: #{mininet_forward.73} parent=11 // pred_region
        _
      $region20: #{mininet_forward.73} parent=11 // pred_fallthru
        _
      // Predicated region
      $region21: #{mininet_forward.73} parent=11 // pred_check
        %p212 = pneg %p102
      $region22: #{mininet_forward.73} parent=11 // pred_check_branch
        %214 = sbr.rel (%p212) target = $region24
      $region23: #{mininet_forward.73} parent=11 // pred_region
        _
      $region24: #{mininet_forward.73} parent=11 // pred_fallthru
        _
      // Predicated region
      $region25: #{mininet_forward.73} parent=11 // pred_check
        %p215 = pneg %p123
      $region26: #{mininet_forward.73} parent=11 // pred_check_branch
        %217 = sbr.rel (%p215) target = $region28
      $region27: #{mininet_forward.73} parent=11 // pred_region
        _
      $region28: #{mininet_forward.73} parent=11 // pred_fallthru
        _
      // Predicated region
      $region29: #{mininet_forward.73} parent=11 // pred_check
        %p218 = pneg %p144
      $region30: #{mininet_forward.73} parent=11 // pred_check_branch
        %220 = sbr.rel (%p218) target = $region32
      $region31: #{mininet_forward.73} parent=11 // pred_region
        _
      $region32: #{mininet_forward.73} parent=11 // pred_fallthru
        _
      // Predicated region
      $region33: #{mininet_forward.73} parent=11 // pred_check
        %p221 = pneg %p165
      $region34: #{mininet_forward.73} parent=11 // pred_check_branch
        %223 = sbr.rel (%p221) target = $region36
      $region35: #{mininet_forward.73} parent=11 // pred_region
        _
      $region36: #{mininet_forward.73} parent=11 // pred_fallthru
        _
    $region12: #{mininet_forward.73} parent=5 // pred_fallthru
      _
    %p224 = scmp.lt.s32.totalorder %s13, 2
    // Predicated region
    $region37: #{mininet_forward.73} parent=5 // pred_check
      %p225 = pneg %p224
    $region38: #{mininet_forward.73} parent=5 // pred_check_branch
      %227 = sbr.rel (%p225) target = $region40
    $region39: #{mininet_forward.73} parent=5 // pred_region
      // Predicated region
      $region41: #{mininet_forward.73} parent=39 // pred_check
        %p228 = pneg %p33
      $region42: #{mininet_forward.73} parent=39 // pred_check_branch
        %230 = sbr.rel (%p228) target = $region44
      $region43: #{mininet_forward.73} parent=39 // pred_region
        %p231 = scmp.lt.s32.totalorder %s13, 1
        %s232 = scalar_select %p231, %s13, 1
        %s233 = smul.addr %s232, 43
        %s234 = smul.addr %s233, 8
        %s235 = scalar_lea.vmem %s0, %s234
      $region44: #{mininet_forward.73} parent=39 // pred_fallthru
        _
    $region40: #{mininet_forward.73} parent=5 // pred_fallthru
      _
    %p236 = scmp.le.s32.totalorder 1, %s13
    %p237 = scmp.lt.s32.totalorder %s13, 3
    %p238 = pnand %p236, %p237
    %p239 = pneg %p238
    // Predicated region
    $region45: #{mininet_forward.73} parent=5 // pred_check
      _
    $region46: #{mininet_forward.73} parent=5 // pred_check_branch
      %241 = sbr.rel (%p238) target = $region48
    $region47: #{mininet_forward.73} parent=5 // pred_region
      %s242 = ssub.s32 %s13, 1
      %p243 = scmp.lt.s32.totalorder %s18, 1
      %s244 = scalar_select %p243, %s18, 1
      %s245 = smul.addr %s244, 43
      %s246 = smul.addr %s245, 8
      %s247 = scalar_lea.vmem %s0, %s246
      %p248 = pneg %p39
      %p249 = pneg %p36
      %p250 = pneg %p60
      %p251 = pneg %p57
      %p252 = pneg %p81
      %p253 = pneg %p78
      %p254 = pneg %p102
      %p255 = pneg %p99
      %p256 = pneg %p123
      %p257 = pneg %p120
      %p258 = pneg %p144
      %p259 = pneg %p141
      %p260 = pneg %p165
      %p261 = pneg %p162
      %p262 = pneg %p191
      %p263 = pneg %p188
      %p264 = scmp.lt.s32.totalorder %s18, 1
      %s265 = scalar_select %p264, %s18, 1
      %s266 = smul.addr %s265, 5
      %s267 = smul.addr %s266, 8
      %s268 = scalar_lea.vmem %s7, %s267
      %p269 = scmp.lt.s32.totalorder %s18, 1
      %s270 = scalar_select %p269, %s18, 1
      %s271 = smul.addr %s270, 43
      %s272 = smul.addr %s271, 8
      %s273 = scalar_lea.vmem %s0, %s272
      %p274 = scmp.lt.s32.totalorder %s18, 1
      %s275 = scalar_select %p274, %s18, 1
      %s276 = smul.addr %s275, 5
      %s277 = smul.addr %s276, 8
      %s278 = scalar_lea.vmem %s7, %s277
      %v280 = vld [vmem:[%s273 + $0x98] sm:$0xff]
      %v281 = vld [vmem:[%s273 + $0xa0] sm:$0xff]
      %v282 = vld [vmem:[%s273 + $0xa8] sm:$0xff]
      %v283 = vld [vmem:[%s273 + $0xb0] sm:$0xff]
      %v284 = vld [vmem:[%s273 + $0xb8] sm:$0xf]
      %s285 = scalar_lea.vmem %s1, 4
      %v286 = vld [vmem:[%s285] sm:$0x1]
      %v288 = vlaneseq
      %v289 = vshrl.u32 %v288, 7
      %v290 = vsub.s32 0, %v289
      %v291 = vrot.slane %v286, %v290
      %v293 = vmul.f32 %v280, %v291
      %v294 = vmul.f32 %v281, %v291
      %v295 = vmul.f32 %v282, %v291
      %v296 = vmul.f32 %v283, %v291
      %v297 = vmul.f32 %v284, %v291
      %s298 = scalar_lea.vmem %s3, 4
      %v299 = vld [vmem:[%s298] sm:$0x1]
      %v301 = vlaneseq
      %v302 = vshrl.u32 %v301, 7
      %v303 = vsub.s32 0, %v302
      %v304 = vrot.slane %v299, %v303
      %v306 = vmul.f32 %v280, %v304
      %v307 = vmul.f32 %v281, %v304
      %v308 = vmul.f32 %v282, %v304
      %v309 = vmul.f32 %v283, %v304
      %v310 = vmul.f32 %v284, %v304
      %v311 = vld [vmem:[%s273 + $0x85] sm:$0xff]
      %v312 = vld [vmem:[%s273 + $0x8d] sm:$0xff]
      %v313 = vld [vmem:[%s273 + $0x95] sm:$0xff]
      %v314 = vld [vmem:[%s273 + $0x9d] sm:$0xff]
      %v315 = vld [vmem:[%s273 + $0xa5] sm:$0xf]
      %v316 = vld [vmem:[%s1] sm:$0x1]
      %v318 = vlaneseq
      %v319 = vshrl.u32 %v318, 7
      %v320 = vsub.s32 0, %v319
      %v321 = vrot.slane %v316, %v320
      %v323 = vmul.f32 %v311, %v321
      %v324 = vmul.f32 %v312, %v321
      %v325 = vmul.f32 %v313, %v321
      %v326 = vmul.f32 %v314, %v321
      %v327 = vmul.f32 %v315, %v321
      %v328 = vadd.f32 %v293, %v323
      %v329 = vadd.f32 %v294, %v324
      %v330 = vadd.f32 %v295, %v325
      %v331 = vadd.f32 %v296, %v326
      %v332 = vadd.f32 %v297, %v327
      %v333 = vld [vmem:[%s273] sm:$0xff]
      %v334 = vld [vmem:[%s273 + $0x8] sm:$0xff]
      %v335 = vld [vmem:[%s273 + $0x10] sm:$0xff]
      %v336 = vld [vmem:[%s273 + $0x18] sm:$0xff]
      %v337 = vld [vmem:[%s273 + $0x20] sm:$0xf]
      %v338 = vld [vmem:[%s3] sm:$0x1]
      %v340 = vlaneseq
      %v341 = vshrl.u32 %v340, 7
      %v342 = vsub.s32 0, %v341
      %v343 = vrot.slane %v338, %v342
      %v345 = vmul.f32 %v333, %v343
      %v346 = vmul.f32 %v334, %v343
      %v347 = vmul.f32 %v335, %v343
      %v348 = vmul.f32 %v336, %v343
      %v349 = vmul.f32 %v337, %v343
      %v350 = vadd.f32 %v306, %v345
      %v351 = vadd.f32 %v307, %v346
      %v352 = vadd.f32 %v308, %v347
      %v353 = vadd.f32 %v309, %v348
      %v354 = vadd.f32 %v310, %v349
      %v355 = vld [vmem:[%s273 + $0x86] sm:$0xff]
      %v356 = vld [vmem:[%s273 + $0x8e] sm:$0xff]
      %v357 = vld [vmem:[%s273 + $0x96] sm:$0xff]
      %v358 = vld [vmem:[%s273 + $0x9e] sm:$0xff]
      %v359 = vld [vmem:[%s273 + $0xa6] sm:$0xf]
      %s360 = scalar_lea.vmem %s1, 1
      %v361 = vld [vmem:[%s360] sm:$0x1]
      %v363 = vlaneseq
      %v364 = vshrl.u32 %v363, 7
      %v365 = vsub.s32 0, %v364
      %v366 = vrot.slane %v361, %v365
      %v368 = vmul.f32 %v355, %v366
      %v369 = vmul.f32 %v356, %v366
      %v370 = vmul.f32 %v357, %v366
      %v371 = vmul.f32 %v358, %v366
      %v372 = vmul.f32 %v359, %v366
      %v373 = vadd.f32 %v328, %v368
      %v374 = vadd.f32 %v329, %v369
      %v375 = vadd.f32 %v330, %v370
      %v376 = vadd.f32 %v331, %v371
      %v377 = vadd.f32 %v332, %v372
      %v378 = vld [vmem:[%s273 + $0x20] sm:$0xff]
      %v379 = vld [vmem:[%s273 + $0x28] sm:$0xf]
      %s380 = scalar_lea.vmem %s3, 1
      %v381 = vld [vmem:[%s380] sm:$0x1]
      %v383 = vlaneseq
      %v384 = vshrl.u32 %v383, 7
      %v385 = vsub.s32 0, %v384
      %v386 = vrot.slane %v381, %v385
      %v388 = vmul.f32 %v334, %v386
      %v389 = vmul.f32 %v335, %v386
      %v390 = vmul.f32 %v336, %v386
      %v391 = vmul.f32 %v378, %v386
      %v392 = vmul.f32 %v379, %v386
      %v393 = vadd.f32 %v350, %v388
      %v394 = vadd.f32 %v351, %v389
      %v395 = vadd.f32 %v352, %v390
      %v396 = vadd.f32 %v353, %v391
      %v397 = vadd.f32 %v354, %v392
      %v398 = vld [vmem:[%s273 + $0x87] sm:$0xff]
      %v399 = vld [vmem:[%s273 + $0x8f] sm:$0xff]
      %v400 = vld [vmem:[%s273 + $0x97] sm:$0xff]
      %v401 = vld [vmem:[%s273 + $0x9f] sm:$0xff]
      %v402 = vld [vmem:[%s273 + $0xa7] sm:$0xf]
      %s403 = scalar_lea.vmem %s1, 2
      %v404 = vld [vmem:[%s403] sm:$0x1]
      %v406 = vlaneseq
      %v407 = vshrl.u32 %v406, 7
      %v408 = vsub.s32 0, %v407
      %v409 = vrot.slane %v404, %v408
      %v411 = vmul.f32 %v398, %v409
      %v412 = vmul.f32 %v399, %v409
      %v413 = vmul.f32 %v400, %v409
      %v414 = vmul.f32 %v401, %v409
      %v415 = vmul.f32 %v402, %v409
      %v416 = vadd.f32 %v373, %v411
      %v417 = vadd.f32 %v374, %v412
      %v418 = vadd.f32 %v375, %v413
      %v419 = vadd.f32 %v376, %v414
      %v420 = vadd.f32 %v377, %v415
      %v421 = vld [vmem:[%s273 + $0x28] sm:$0xff]
      %v422 = vld [vmem:[%s273 + $0x30] sm:$0xf]
      %s423 = scalar_lea.vmem %s3, 2
      %v424 = vld [vmem:[%s423] sm:$0x1]
      %v426 = vlaneseq
      %v427 = vshrl.u32 %v426, 7
      %v428 = vsub.s32 0, %v427
      %v429 = vrot.slane %v424, %v428
      %v431 = vmul.f32 %v335, %v429
      %v432 = vmul.f32 %v336, %v429
      %v433 = vmul.f32 %v378, %v429
      %v434 = vmul.f32 %v421, %v429
      %v435 = vmul.f32 %v422, %v429
      %v436 = vadd.f32 %v393, %v431
      %v437 = vadd.f32 %v394, %v432
      %v438 = vadd.f32 %v395, %v433
      %v439 = vadd.f32 %v396, %v434
      %v440 = vadd.f32 %v397, %v435
      %v441 = vld [vmem:[%s273 + $0xa7] sm:$0xff]
      %v442 = vld [vmem:[%s273 + $0xaf] sm:$0xff]
      %v443 = vld [vmem:[%s273 + $0xb7] sm:$0xf]
      %s444 = scalar_lea.vmem %s1, 3
      %v445 = vld [vmem:[%s444] sm:$0x1]
      %v447 = vlaneseq
      %v448 = vshrl.u32 %v447, 7
      %v449 = vsub.s32 0, %v448
      %v450 = vrot.slane %v445, %v449
      %v452 = vmul.f32 %v400, %v450
      %v453 = vmul.f32 %v401, %v450
      %v454 = vmul.f32 %v441, %v450
      %v455 = vmul.f32 %v442, %v450
      %v456 = vmul.f32 %v443, %v450
      %v457 = vadd.f32 %v416, %v452
      %v458 = vadd.f32 %v417, %v453
      %v459 = vadd.f32 %v418, %v454
      %v460 = vadd.f32 %v419, %v455
      %v461 = vadd.f32 %v420, %v456
      %v462 = vld [vmem:[%s273 + $0x90] sm:$0xff]
      %v463 = vld [vmem:[%s273 + $0xb0] sm:$0xf]
      %s464 = scalar_lea.vmem %s3, 3
      %v465 = vld [vmem:[%s464] sm:$0x1]
      %v467 = vlaneseq
      %v468 = vshrl.u32 %v467, 7
      %v469 = vsub.s32 0, %v468
      %v470 = vrot.slane %v465, %v469
      %v472 = vmul.f32 %v462, %v470
      %v473 = vmul.f32 %v280, %v470
      %v474 = vmul.f32 %v281, %v470
      %v475 = vmul.f32 %v282, %v470
      %v476 = vmul.f32 %v463, %v470
      %v477 = vadd.f32 %v436, %v472
      %v478 = vadd.f32 %v437, %v473
      %v479 = vadd.f32 %v438, %v474
      %v480 = vadd.f32 %v439, %v475
      %v481 = vadd.f32 %v440, %v476
      %v482 = vld [vmem:[%s273 + $0x99] sm:$0xff]
      %v483 = vld [vmem:[%s273 + $0xa1] sm:$0xff]
      %v484 = vld [vmem:[%s273 + $0xa9] sm:$0xff]
      %v485 = vld [vmem:[%s273 + $0xb1] sm:$0xff]
      %v486 = vld [vmem:[%s273 + $0xb9] sm:$0xf]
      %s487 = scalar_lea.vmem %s1, 5
      %v488 = vld [vmem:[%s487] sm:$0x1]
      %v490 = vlaneseq
      %v491 = vshrl.u32 %v490, 7
      %v492 = vsub.s32 0, %v491
      %v493 = vrot.slane %v488, %v492
      %v495 = vmul.f32 %v482, %v493
      %v496 = vmul.f32 %v483, %v493
      %v497 = vmul.f32 %v484, %v493
      %v498 = vmul.f32 %v485, %v493
      %v499 = vmul.f32 %v486, %v493
      %v500 = vadd.f32 %v457, %v495
      %v501 = vadd.f32 %v458, %v496
      %v502 = vadd.f32 %v459, %v497
      %v503 = vadd.f32 %v460, %v498
      %v504 = vadd.f32 %v461, %v499
      %v505 = vld [vmem:[%s273 + $0xb8] sm:$0xff]
      %v506 = vld [vmem:[%s273 + $0xc0] sm:$0xf]
      %s507 = scalar_lea.vmem %s3, 5
      %v508 = vld [vmem:[%s507] sm:$0x1]
      %v510 = vlaneseq
      %v511 = vshrl.u32 %v510, 7
      %v512 = vsub.s32 0, %v511
      %v513 = vrot.slane %v508, %v512
      %v515 = vmul.f32 %v281, %v513
      %v516 = vmul.f32 %v282, %v513
      %v517 = vmul.f32 %v283, %v513
      %v518 = vmul.f32 %v505, %v513
      %v519 = vmul.f32 %v506, %v513
      %v520 = vadd.f32 %v477, %v515
      %v521 = vadd.f32 %v478, %v516
      %v522 = vadd.f32 %v479, %v517
      %v523 = vadd.f32 %v480, %v518
      %v524 = vadd.f32 %v481, %v519
      %v525 = vld [vmem:[%s273 + $0xb9] sm:$0xff]
      %v526 = vld [vmem:[%s273 + $0xc1] sm:$0xff]
      %v527 = vld [vmem:[%s273 + $0xc9] sm:$0xf]
      %s528 = scalar_lea.vmem %s1, 6
      %v529 = vld [vmem:[%s528] sm:$0x1]
      %v531 = vlaneseq
      %v532 = vshrl.u32 %v531, 7
      %v533 = vsub.s32 0, %v532
      %v534 = vrot.slane %v529, %v533
      %v536 = vmul.f32 %v484, %v534
      %v537 = vmul.f32 %v485, %v534
      %v538 = vmul.f32 %v525, %v534
      %v539 = vmul.f32 %v526, %v534
      %v540 = vmul.f32 %v527, %v534
      %v541 = vadd.f32 %v500, %v536
      %v542 = vadd.f32 %v501, %v537
      %v543 = vadd.f32 %v502, %v538
      %v544 = vadd.f32 %v503, %v539
      %v545 = vadd.f32 %v504, %v540
      %v546 = vld [vmem:[%s273 + $0x120] sm:$0xff]
      %v547 = vld [vmem:[%s273 + $0x128] sm:$0xff]
      %v548 = vld [vmem:[%s273 + $0x130] sm:$0xff]
      %v549 = vld [vmem:[%s273 + $0x138] sm:$0xff]
      %v550 = vld [vmem:[%s273 + $0x140] sm:$0xf]
      %s551 = scalar_lea.vmem %s3, 6
      %v552 = vld [vmem:[%s551] sm:$0x1]
      %v554 = vlaneseq
      %v555 = vshrl.u32 %v554, 7
      %v556 = vsub.s32 0, %v555
      %v557 = vrot.slane %v552, %v556
      %v559 = vmul.f32 %v546, %v557
      %v560 = vmul.f32 %v547, %v557
      %v561 = vmul.f32 %v548, %v557
      %v562 = vmul.f32 %v549, %v557
      %v563 = vmul.f32 %v550, %v557
      %v564 = vadd.f32 %v520, %v559
      %v565 = vadd.f32 %v521, %v560
      %v566 = vadd.f32 %v522, %v561
      %v567 = vadd.f32 %v523, %v562
      %v568 = vadd.f32 %v524, %v563
      %v569 = vld [vmem:[%s273 + $0xaa] sm:$0xff]
      %v570 = vld [vmem:[%s273 + $0xb2] sm:$0xff]
      %v571 = vld [vmem:[%s273 + $0xba] sm:$0xff]
      %v572 = vld [vmem:[%s273 + $0xc2] sm:$0xff]
      %v573 = vld [vmem:[%s273 + $0xca] sm:$0xf]
      %s574 = scalar_lea.vmem %s1, 7
      %v575 = vld [vmem:[%s574] sm:$0x1]
      %v577 = vlaneseq
      %v578 = vshrl.u32 %v577, 7
      %v579 = vsub.s32 0, %v578
      %v580 = vrot.slane %v575, %v579
      %v582 = vmul.f32 %v569, %v580
      %v583 = vmul.f32 %v570, %v580
      %v584 = vmul.f32 %v571, %v580
      %v585 = vmul.f32 %v572, %v580
      %v586 = vmul.f32 %v573, %v580
      %v587 = vadd.f32 %v541, %v582
      %v588 = vadd.f32 %v542, %v583
      %v589 = vadd.f32 %v543, %v584
      %v590 = vadd.f32 %v544, %v585
      %v591 = vadd.f32 %v545, %v586
      %v592 = vld [vmem:[%s273 + $0x140] sm:$0xff]
      %v593 = vld [vmem:[%s273 + $0x148] sm:$0xf]
      %s594 = scalar_lea.vmem %s3, 7
      %v595 = vld [vmem:[%s594] sm:$0x1]
      %v597 = vlaneseq
      %v598 = vshrl.u32 %v597, 7
      %v599 = vsub.s32 0, %v598
      %v600 = vrot.slane %v595, %v599
      %v602 = vmul.f32 %v547, %v600
      %v603 = vmul.f32 %v548, %v600
      %v604 = vmul.f32 %v549, %v600
      %v605 = vmul.f32 %v592, %v600
      %v606 = vmul.f32 %v593, %v600
      %v607 = vadd.f32 %v564, %v602
      %v608 = vadd.f32 %v565, %v603
      %v609 = vadd.f32 %v566, %v604
      %v610 = vadd.f32 %v567, %v605
      %v611 = vadd.f32 %v568, %v606
      %v612 = vld [vmem:[%s273 + $0xab] sm:$0xff]
      %v613 = vld [vmem:[%s273 + $0xb3] sm:$0xff]
      %v614 = vld [vmem:[%s273 + $0xbb] sm:$0xff]
      %v615 = vld [vmem:[%s273 + $0xc3] sm:$0xff]
      %v616 = vld [vmem:[%s273 + $0xcb] sm:$0xf]
      %s617 = scalar_lea.vmem %s1, 8
      %v618 = vld [vmem:[%s617] sm:$0x1]
      %v620 = vlaneseq
      %v621 = vshrl.u32 %v620, 7
      %v622 = vsub.s32 0, %v621
      %v623 = vrot.slane %v618, %v622
      %v625 = vmul.f32 %v612, %v623
      %v626 = vmul.f32 %v613, %v623
      %v627 = vmul.f32 %v614, %v623
      %v628 = vmul.f32 %v615, %v623
      %v629 = vmul.f32 %v616, %v623
      %v630 = vadd.f32 %v587, %v625
      %v631 = vadd.f32 %v588, %v626
      %v632 = vadd.f32 %v589, %v627
      %v633 = vadd.f32 %v590, %v628
      %v634 = vadd.f32 %v591, %v629
      %v635 = vld [vmem:[%s273 + $0x148] sm:$0xff]
      %v636 = vld [vmem:[%s273 + $0x150] sm:$0xf]
      %s637 = scalar_lea.vmem %s3, 8
      %v638 = vld [vmem:[%s637] sm:$0x1]
      %v640 = vlaneseq
      %v641 = vshrl.u32 %v640, 7
      %v642 = vsub.s32 0, %v641
      %v643 = vrot.slane %v638, %v642
      %v645 = vmul.f32 %v548, %v643
      %v646 = vmul.f32 %v549, %v643
      %v647 = vmul.f32 %v592, %v643
      %v648 = vmul.f32 %v635, %v643
      %v649 = vmul.f32 %v636, %v643
      %v650 = vadd.f32 %v607, %v645
      %v651 = vadd.f32 %v608, %v646
      %v652 = vadd.f32 %v609, %v647
      %v653 = vadd.f32 %v610, %v648
      %v654 = vadd.f32 %v611, %v649
      %v655 = vld [vmem:[%s2] sm:$0x1]
      %v657 = vlaneseq
      %v658 = vshrl.u32 %v657, 7
      %v659 = vsub.s32 0, %v658
      %v660 = vrot.slane %v655, %v659
      %v662 = vadd.f32 %v630, %v660
      %v663 = vadd.f32 %v631, %v660
      %v664 = vadd.f32 %v632, %v660
      %v665 = vadd.f32 %v633, %v660
      %v666 = vadd.f32 %v634, %v660
      %v667 = vmax.f32 %v662, 0.0
      %v668 = vmax.f32 %v663, 0.0
      %v669 = vmax.f32 %v664, 0.0
      %v670 = vmax.f32 %v665, 0.0
      %v671 = vmax.f32 %v666, 0.0
      %v672 = vld [vmem:[%s4] sm:$0x1]
      %v674 = vlaneseq
      %v675 = vshrl.u32 %v674, 7
      %v676 = vsub.s32 0, %v675
      %v677 = vrot.slane %v672, %v676
      %v679 = vadd.f32 %v650, %v677
      %v680 = vadd.f32 %v651, %v677
      %v681 = vadd.f32 %v652, %v677
      %v682 = vadd.f32 %v653, %v677
      %v683 = vadd.f32 %v654, %v677
      %v684 = vmax.f32 %v679, 0.0
      %v685 = vmax.f32 %v680, 0.0
      %v686 = vmax.f32 %v681, 0.0
      %v687 = vmax.f32 %v682, 0.0
      %v688 = vmax.f32 %v683, 0.0
      %v689 = vadd.f32 %v667, %v684
      %v690 = vadd.f32 %v668, %v685
      %v691 = vadd.f32 %v669, %v686
      %v692 = vadd.f32 %v670, %v687
      %v693 = vadd.f32 %v671, %v688
      %v694 = vpack.c.bf16 %v690, %v689
      %v695 = vpack.c.bf16 %v692, %v691
      %v696 = vpack.c.bf16 %v693, %v693
      %v697 = vld [vmem:[%s5] sm:$0xf]
      %v698 = vld [vmem:[%s5 + $0x4] sm:$0xf]
      %v699 = vld [vmem:[%s5 + $0x8] sm:$0xf]
      %v700 = vld [vmem:[%s5 + $0xc] sm:$0xf]
      %v701 = vld [vmem:[%s5 + $0x10] sm:$0xf]
      %v702 = vld [vmem:[%s5 + $0x14] sm:$0xf]
      %v703 = vld [vmem:[%s5 + $0x18] sm:$0xf]
      %v704 = vld [vmem:[%s5 + $0x1c] sm:$0xf]
      %v705 = vld [vmem:[%s5 + $0x20] sm:$0xf]
      %v706 = vld [vmem:[%s5 + $0x24] sm:$0xf]
      %v707 = vld [vmem:[%s5 + $0x28] sm:$0xf]
      %v708 = vld [vmem:[%s5 + $0x2c] sm:$0xf]
      %v709 = vld [vmem:[%s5 + $0x30] sm:$0xf]
      %v710 = vld [vmem:[%s5 + $0x34] sm:$0xf]
      %v711 = vld [vmem:[%s5 + $0x38] sm:$0xf]
      %v712 = vld [vmem:[%s5 + $0x3c] sm:$0xf]
      %v713 = vld [vmem:[%s6] sm:$0x1]
      %v715 = vlaneseq
      %v716 = vshrl.u32 %v715, 7
      %v717 = vsub.s32 0, %v716
      %v718 = vrot.slane %v713, %v717
      %v736 = vunpack.c.l.b16 %v697
      %v737 = vunpack.c.l.b16 %v698
      %v738 = vunpack.c.l.b16 %v699
      %v739 = vunpack.c.l.b16 %v700
      %v740 = vunpack.c.l.b16 %v701
      %v741 = vunpack.c.l.b16 %v702
      %v742 = vunpack.c.l.b16 %v703
      %v743 = vunpack.c.l.b16 %v704
      %v744 = vunpack.c.l.b16 %v705
      %v745 = vunpack.c.l.b16 %v706
      %v746 = vunpack.c.l.b16 %v707
      %v747 = vunpack.c.l.b16 %v708
      %v748 = vunpack.c.l.b16 %v709
      %v749 = vunpack.c.l.b16 %v710
      %v750 = vunpack.c.l.b16 %v711
      %v751 = vunpack.c.l.b16 %v712
      %v752 = vpack.c.b16 %v737, %v736
      %v753 = vpack.c.b16 %v739, %v738
      %v754 = vpack.c.b16 %v741, %v740
      %v755 = vpack.c.b16 %v743, %v742
      %v756 = vpack.c.b16 %v745, %v744
      %v757 = vpack.c.b16 %v747, %v746
      %v758 = vpack.c.b16 %v749, %v748
      %v759 = vpack.c.b16 %v751, %v750
      %768 = vmatprep.subr.bf16.mxu0 0
      %769 = vmatpush1.bf16.msra.mxu0 %v752
      %770 = vmatprep.subr.bf16.mxu0 0
      %771 = vmatpush1.bf16.msra.mxu0 %v753
      %772 = vmatprep.subr.bf16.mxu0 0
      %773 = vmatpush1.bf16.msra.mxu0 %v754
      %774 = vmatprep.subr.bf16.mxu0 0
      %775 = vmatpush1.bf16.msra.mxu0 %v755
      %776 = vmatprep.subr.bf16.mxu0 0
      %777 = vmatpush1.bf16.msra.mxu0 %v756
      %778 = vmatprep.subr.bf16.mxu0 0
      %779 = vmatpush1.bf16.msra.mxu0 %v757
      %780 = vmatprep.subr.bf16.mxu0 0
      %781 = vmatpush1.bf16.msra.mxu0 %v758
      %782 = vmatprep.subr.bf16.mxu0 0
      %783 = vmatpush1.bf16.msra.mxu0 %v759
      %784 = vmatprep.subr.bf16.mxu0 0
      %785 = vmatpush1.bf16.msra.mxu0 0
      %786 = vmatprep.subr.bf16.mxu0 0
      %787 = vmatpush1.bf16.msra.mxu0 0
      %788 = vmatprep.subr.bf16.mxu0 0
      %789 = vmatpush1.bf16.msra.mxu0 0
      %790 = vmatprep.subr.bf16.mxu0 0
      %791 = vmatpush1.bf16.msra.mxu0 0
      %792 = vmatprep.subr.bf16.mxu0 0
      %793 = vmatpush1.bf16.msra.mxu0 0
      %794 = vmatprep.subr.bf16.mxu0 0
      %795 = vmatpush1.bf16.msra.mxu0 0
      %796 = vmatprep.subr.bf16.mxu0 0
      %797 = vmatpush1.bf16.msra.mxu0 0
      %798 = vmatprep.subr.bf16.mxu0 0
      %799 = vmatpush1.bf16.msra.mxu0 0
      %800 = vmatprep.mubr.bf16.mxu0 0
      %801 = vmatmul.mubr.bf16.gmra.mrb[0].mxu0 %v694
      %v802 = vpop.f32.mrb[0].mxu0
      %v803 = vadd.f32 %v718, %v802
      %v804 = vpop.f32.mrb[0].mxu0
      %v805 = vpop.f32.mrb[0].mxu0
      %v806 = vadd.f32 %v718, %v805
      %v807 = vpop.f32.mrb[0].mxu0
      %808 = vmatprep.mubr.bf16.mxu0 0
      %809 = vmatmul.mubr.bf16.gmra.mrb[0].mxu0 %v695
      %v810 = vpop.f32.mrb[0].mxu0
      %v811 = vadd.f32 %v718, %v810
      %v812 = vpop.f32.mrb[0].mxu0
      %v813 = vpop.f32.mrb[0].mxu0
      %v814 = vadd.f32 %v718, %v813
      %v815 = vpop.f32.mrb[0].mxu0
      %816 = vmatprep.mubr.bf16.mxu0 0
      %817 = vmatmul.mubr.bf16.gmra.mrb[0].mxu0 %v696
      %v818 = vpop.f32.mrb[0].mxu0
      %v819 = vadd.f32 %v718, %v818
      %v820 = vpop.f32.mrb[0].mxu0
      %v821 = vpop.f32.mrb[0].mxu0
      %v822 = vpop.f32.mrb[0].mxu0
      %823 = vdwg.mxu0
      %v824 = vadd.f32 %v803, %v280
      %v825 = vadd.f32 %v806, %v281
      %v826 = vadd.f32 %v811, %v282
      %v827 = vadd.f32 %v814, %v283
      %v828 = vadd.f32 %v819, %v284
      %v829 = vmax.f32 %v824, 0.0
      %v830 = vmax.f32 %v825, 0.0
      %v831 = vmax.f32 %v826, 0.0
      %v832 = vmax.f32 %v827, 0.0
      %v833 = vmax.f32 %v828, 0.0
      %834 = vst [vmem:[%s278] sm:$0xff] %v829
      %835 = vst [vmem:[%s278 + $0x8] sm:$0xff] %v830
      %836 = vst [vmem:[%s278 + $0x10] sm:$0xff] %v831
      %837 = vst [vmem:[%s278 + $0x18] sm:$0xff] %v832
      %838 = vst [vmem:[%s278 + $0x20] sm:$0xf] %v833
      %p839 = scmp.lt.s32.totalorder %s18, 1
      %s840 = scalar_select %p839, %s18, 1
      %s841 = smul.addr %s840, 5
      %s842 = smul.addr %s841, 8
      %s843 = scalar_lea.vmem %s7, %s842
      // Predicated region
      $region49: #{mininet_forward.73} parent=47 // pred_check
        %p844 = pneg %p188
      $region50: #{mininet_forward.73} parent=47 // pred_check_branch
        %846 = sbr.rel (%p844) target = $region52
      $region51: #{mininet_forward.73} parent=47 // pred_region
        _
      $region52: #{mininet_forward.73} parent=47 // pred_fallthru
        _
    $region48: #{mininet_forward.73} parent=5 // pred_fallthru
      _
    %p847 = scmp.le.s32.totalorder 2, %s13
    // Predicated region
    $region53: #{mininet_forward.73} parent=5 // pred_check
      %p848 = pneg %p847
    $region54: #{mininet_forward.73} parent=5 // pred_check_branch
      %850 = sbr.rel (%p848) target = $region56
    $region55: #{mininet_forward.73} parent=5 // pred_region
      %s851 = ssub.s32 %s13, 2
      // Predicated region
      $region57: #{mininet_forward.73} parent=55 // pred_check
        %p852 = pneg %p194
      $region58: #{mininet_forward.73} parent=55 // pred_check_branch
        %854 = sbr.rel (%p852) target = $region60
      $region59: #{mininet_forward.73} parent=55 // pred_region
        %p855 = scmp.lt.s32.totalorder %s19, 1
        %s856 = scalar_select %p855, %s19, 1
        %s857 = smul.addr %s856, 5
        %s858 = smul.addr %s857, 8
        %s859 = scalar_lea.vmem %s7, %s858
      $region60: #{mininet_forward.73} parent=55 // pred_fallthru
        _
    $region56: #{mininet_forward.73} parent=5 // pred_fallthru
      _
  $region6: #{mininet_forward.73} parent=0 // loop_footer
    %s17 = sadd.s32 1, %s13
  $region7: #{mininet_forward.73} parent=0 // loop_footer_branch
    %12 = sbr.rel target = $region3
  $region8: #{mininet_forward.73} parent=0 // loop_exit
    _

// kernel: mininet_forward.85
$region0: #{mininet_forward.85}
  #allocation0 [shape = 'u32[]', space=smem, size = 0x4, offset = 0x4, fixed_abs, tag = 'smem constant byte address 0x4 - core index']
  #allocation1 [shape = 'u32[144,128]{1,0:T(1,128)}', space=vmem, size = 0x12000, scoped, tag = 'internal scratch']
  %s0 = inlined_call_operand.vmem [shape: bf16[16,256], index: 0, kind: input, shape index: {}]
  %s1 = inlined_call_operand.vmem [shape: bf16[256,64], index: 1, kind: input, shape index: {}]
  %s2 = inlined_call_operand.vmem [shape: f32[1,64], index: 2, kind: input, shape index: {}]
  %s3 = inlined_call_operand.vmem [shape: f32[16,64], index: 3, kind: output, shape index: {}]
  %s4 = sld [smem:[#allocation0]]
  $region22: #{mininet_forward.85} parent=0
    _
  %s6 = ssub.s32 1, %s4
  %s7 = scalar_select 0, %s6, %s4
  // Predicated region
  $region2: #{mininet_forward.85} parent=0 // pred_check
    _
  $region3: #{mininet_forward.85} parent=0 // pred_check_branch
    %9 = sbr.rel (0) target = $region5
  $region4: #{mininet_forward.85} parent=0 // pred_region
    _
  $region5: #{mininet_forward.85} parent=0 // pred_fallthru
    _
  // Predicated region
  $region6: #{mininet_forward.85} parent=0 // pred_check
    _
  $region7: #{mininet_forward.85} parent=0 // pred_check_branch
    %11 = sbr.rel (0) target = $region9
  $region8: #{mininet_forward.85} parent=0 // pred_region
    _
  $region9: #{mininet_forward.85} parent=0 // pred_fallthru
    _
  // Predicated region
  $region10: #{mininet_forward.85} parent=0 // pred_check
    _
  $region11: #{mininet_forward.85} parent=0 // pred_check_branch
    %13 = sbr.rel (0) target = $region13
  $region12: #{mininet_forward.85} parent=0 // pred_region
    _
  $region13: #{mininet_forward.85} parent=0 // pred_fallthru
    _
  %v15 = vld [vmem:[%s0] sm:$0xff]
  %v16 = vld [vmem:[%s0 + $0x8] sm:$0xff]
  %v17 = vld [vmem:[%s1] sm:$0xf]
  %v18 = vld [vmem:[%s1 + $0x4] sm:$0xf]
  %v19 = vld [vmem:[%s1 + $0x8] sm:$0xf]
  %v20 = vld [vmem:[%s1 + $0xc] sm:$0xf]
  %v21 = vld [vmem:[%s1 + $0x10] sm:$0xf]
  %v22 = vld [vmem:[%s1 + $0x14] sm:$0xf]
  %v23 = vld [vmem:[%s1 + $0x18] sm:$0xf]
  %v24 = vld [vmem:[%s1 + $0x1c] sm:$0xf]
  %v25 = vld [vmem:[%s1 + $0x20] sm:$0xf]
  %v26 = vld [vmem:[%s1 + $0x24] sm:$0xf]
  %v27 = vld [vmem:[%s1 + $0x28] sm:$0xf]
  %v28 = vld [vmem:[%s1 + $0x2c] sm:$0xf]
  %v29 = vld [vmem:[%s1 + $0x30] sm:$0xf]
  %v30 = vld [vmem:[%s1 + $0x34] sm:$0xf]
  %v31 = vld [vmem:[%s1 + $0x38] sm:$0xf]
  %v32 = vld [vmem:[%s1 + $0x3c] sm:$0xf]
  %v33 = vld [vmem:[%s1 + $0x40] sm:$0xf]
  %v34 = vld [vmem:[%s1 + $0x44] sm:$0xf]
  %v35 = vld [vmem:[%s1 + $0x48] sm:$0xf]
  %v36 = vld [vmem:[%s1 + $0x4c] sm:$0xf]
  %v37 = vld [vmem:[%s1 + $0x50] sm:$0xf]
  %v38 = vld [vmem:[%s1 + $0x54] sm:$0xf]
  %v39 = vld [vmem:[%s1 + $0x58] sm:$0xf]
  %v40 = vld [vmem:[%s1 + $0x5c] sm:$0xf]
  %v41 = vld [vmem:[%s1 + $0x60] sm:$0xf]
  %v42 = vld [vmem:[%s1 + $0x64] sm:$0xf]
  %v43 = vld [vmem:[%s1 + $0x68] sm:$0xf]
  %v44 = vld [vmem:[%s1 + $0x6c] sm:$0xf]
  %v45 = vld [vmem:[%s1 + $0x70] sm:$0xf]
  %v46 = vld [vmem:[%s1 + $0x74] sm:$0xf]
  %v47 = vld [vmem:[%s1 + $0x78] sm:$0xf]
  %v48 = vld [vmem:[%s1 + $0x7c] sm:$0xf]
  %v49 = vld [vmem:[%s2] sm:$0x1]
  %v51 = vlaneseq
  %v52 = vshrl.u32 %v51, 7
  %v53 = vsub.s32 0, %v52
  %v54 = vrot.slane %v49, %v53
  %v58 = vunpack.c.l.b16 %v15
  %v59 = vunpack.c.h.b16 %v15
  %v60 = vunpack.c.l.b16 %v16
  %v61 = vunpack.c.h.b16 %v16
  %v62 = vpack.c.b16 %v60, %v58
  %v63 = vpack.c.b16 %v61, %v59
  %v98 = vunpack.c.l.b16 %v17
  %v99 = vunpack.c.l.b16 %v18
  %v100 = vunpack.c.l.b16 %v19
  %v101 = vunpack.c.l.b16 %v20
  %v102 = vunpack.c.l.b16 %v21
  %v103 = vunpack.c.l.b16 %v22
  %v104 = vunpack.c.l.b16 %v23
  %v105 = vunpack.c.l.b16 %v24
  %v106 = vunpack.c.l.b16 %v25
  %v107 = vunpack.c.l.b16 %v26
  %v108 = vunpack.c.l.b16 %v27
  %v109 = vunpack.c.l.b16 %v28
  %v110 = vunpack.c.l.b16 %v29
  %v111 = vunpack.c.l.b16 %v30
  %v112 = vunpack.c.l.b16 %v31
  %v113 = vunpack.c.l.b16 %v32
  %v114 = vunpack.c.l.b16 %v33
  %v115 = vunpack.c.l.b16 %v34
  %v116 = vunpack.c.l.b16 %v35
  %v117 = vunpack.c.l.b16 %v36
  %v118 = vunpack.c.l.b16 %v37
  %v119 = vunpack.c.l.b16 %v38
  %v120 = vunpack.c.l.b16 %v39
  %v121 = vunpack.c.l.b16 %v40
  %v122 = vunpack.c.l.b16 %v41
  %v123 = vunpack.c.l.b16 %v42
  %v124 = vunpack.c.l.b16 %v43
  %v125 = vunpack.c.l.b16 %v44
  %v126 = vunpack.c.l.b16 %v45
  %v127 = vunpack.c.l.b16 %v46
  %v128 = vunpack.c.l.b16 %v47
  %v129 = vunpack.c.l.b16 %v48
  %v130 = vpack.c.b16 %v99, %v98
  %v131 = vpack.c.b16 %v101, %v100
  %v132 = vpack.c.b16 %v103, %v102
  %v133 = vpack.c.b16 %v105, %v104
  %v134 = vpack.c.b16 %v107, %v106
  %v135 = vpack.c.b16 %v109, %v108
  %v136 = vpack.c.b16 %v111, %v110
  %v137 = vpack.c.b16 %v113, %v112
  %v138 = vpack.c.b16 %v115, %v114
  %v139 = vpack.c.b16 %v117, %v116
  %v140 = vpack.c.b16 %v119, %v118
  %v141 = vpack.c.b16 %v121, %v120
  %v142 = vpack.c.b16 %v123, %v122
  %v143 = vpack.c.b16 %v125, %v124
  %v144 = vpack.c.b16 %v127, %v126
  %v145 = vpack.c.b16 %v129, %v128
  %162 = vmatprep.subr.bf16.mxu0 0
  %163 = vmatpush1.bf16.msra.mxu0 %v130
  %164 = vmatprep.subr.bf16.mxu0 0
  %165 = vmatpush1.bf16.msra.mxu0 %v131
  %166 = vmatprep.subr.bf16.mxu0 0
  %167 = vmatpush1.bf16.msra.mxu0 %v132
  %168 = vmatprep.subr.bf16.mxu0 0
  %169 = vmatpush1.bf16.msra.mxu0 %v133
  %170 = vmatprep.subr.bf16.mxu0 0
  %171 = vmatpush1.bf16.msra.mxu0 %v134
  %172 = vmatprep.subr.bf16.mxu0 0
  %173 = vmatpush1.bf16.msra.mxu0 %v135
  %174 = vmatprep.subr.bf16.mxu0 0
  %175 = vmatpush1.bf16.msra.mxu0 %v136
  %176 = vmatprep.subr.bf16.mxu0 0
  %177 = vmatpush1.bf16.msra.mxu0 %v137
  %178 = vmatprep.subr.bf16.mxu0 0
  %179 = vmatpush1.bf16.msra.mxu0 %v138
  %180 = vmatprep.subr.bf16.mxu0 0
  %181 = vmatpush1.bf16.msra.mxu0 %v139
  %182 = vmatprep.subr.bf16.mxu0 0
  %183 = vmatpush1.bf16.msra.mxu0 %v140
  %184 = vmatprep.subr.bf16.mxu0 0
  %185 = vmatpush1.bf16.msra.mxu0 %v141
  %186 = vmatprep.subr.bf16.mxu0 0
  %187 = vmatpush1.bf16.msra.mxu0 %v142
  %188 = vmatprep.subr.bf16.mxu0 0
  %189 = vmatpush1.bf16.msra.mxu0 %v143
  %190 = vmatprep.subr.bf16.mxu0 0
  %191 = vmatpush1.bf16.msra.mxu0 %v144
  %192 = vmatprep.subr.bf16.mxu0 0
  %193 = vmatpush1.bf16.msra.mxu0 %v145
  %194 = vmatprep.mubr.bf16.mxu0 %v63
  %195 = vmatmul.mubr.bf16.gmra.mrb[0].mxu0 %v62
  %v196 = vpop.f32.mrb[0].mxu0
  %v197 = vadd.f32 %v54, %v196
  %v198 = vpop.f32.mrb[0].mxu0
  %v199 = vpop.f32.mrb[0].mxu0
  %v200 = vadd.f32 %v54, %v199
  %v201 = vpop.f32.mrb[0].mxu0
  %202 = vdwg.mxu0
  %v203 = vmax.f32 %v197, 0.0
  %v204 = vmax.f32 %v200, 0.0
  %vm205 = vcmask 523264
  %206 = vst.msk [vmem:[%s3] sm:$0xff] %vm205, %v203
  %207 = vst.msk [vmem:[%s3 + $0x8] sm:$0xff] %vm205, %v204
  // Predicated region
  $region14: #{mininet_forward.85} parent=0 // pred_check
    _
  $region15: #{mininet_forward.85} parent=0 // pred_check_branch
    %209 = sbr.rel (0) target = $region17
  $region16: #{mininet_forward.85} parent=0 // pred_region
    _
  $region17: #{mininet_forward.85} parent=0 // pred_fallthru
    _
  // Predicated region
  $region18: #{mininet_forward.85} parent=0 // pred_check
    _
  $region19: #{mininet_forward.85} parent=0 // pred_check_branch
    %211 = sbr.rel (0) target = $region21
  $region20: #{mininet_forward.85} parent=0 // pred_region
    _
  $region21: #{mininet_forward.85} parent=0 // pred_fallthru
    _

// kernel: mininet_forward.75
$region0: #{mininet_forward.75}
  #allocation0 [shape = 'u32[]', space=smem, size = 0x4, offset = 0x4, fixed_abs, tag = 'smem constant byte address 0x4 - core index']
  #allocation1 [shape = 'u32[144,128]{1,0:T(1,128)}', space=vmem, size = 0x12000, scoped, tag = 'internal scratch']
  %s0 = inlined_call_operand.vmem [shape: f32[2,1190,128], index: 0, kind: input, shape index: {}]
  %s1 = inlined_call_operand.vmem [shape: f32[9,1,128], index: 1, kind: input, shape index: {}]
  %s2 = inlined_call_operand.vmem [shape: f32[1,128], index: 2, kind: input, shape index: {}]
  %s3 = inlined_call_operand.vmem [shape: f32[9,1,128], index: 3, kind: input, shape index: {}]
  %s4 = inlined_call_operand.vmem [shape: f32[1,128], index: 4, kind: input, shape index: {}]
  %s5 = inlined_call_operand.vmem [shape: bf16[128,128], index: 5, kind: input, shape index: {}]
  %s6 = inlined_call_operand.vmem [shape: f32[1,128], index: 6, kind: input, shape index: {}]
  %s7 = inlined_call_operand.vmem [shape: f32[2,68,128], index: 7, kind: output, shape index: {}]
  %s8 = sld [smem:[#allocation0]]
  $region61: #{mininet_forward.75} parent=0
    _
  %s10 = ssub.s32 1, %s8
  %s11 = scalar_select 0, %s10, %s8
  loop: start=0, step=1, limit=4
  $region2: #{mininet_forward.75} parent=0 // loop_pre_header
    _
  $region3: #{mininet_forward.75} parent=0 // loop_header
    %s13 = sphi 0, %s17
    %p14 = scmp.ge.s32.totalorder %s13, 4
    %s23 = sphi 0, %s25
    %s26 = sphi 0, %s23
    %s27 = sphi 0, %s26
    %s43 = sphi 0, %s27
    %s47 = sphi 0, %s47
    %s49 = sphi 0, %s47
    %s50 = sphi 0, %s49
    %s64 = sphi 0, %s50
    %s68 = sphi 0, %s68
    %s70 = sphi 0, %s68
    %s71 = sphi 0, %s70
    %s85 = sphi 0, %s71
    %s89 = sphi 0, %s89
    %s91 = sphi 0, %s89
    %s92 = sphi 0, %s91
    %s106 = sphi 0, %s92
    %s110 = sphi 0, %s110
    %s112 = sphi 0, %s110
    %s113 = sphi 0, %s112
    %s127 = sphi 0, %s113
    %s131 = sphi 0, %s131
    %s133 = sphi 0, %s131
    %s134 = sphi 0, %s133
    %s148 = sphi 0, %s134
    %s152 = sphi 0, %s152
    %s154 = sphi 0, %s152
    %s155 = sphi 0, %s154
    %s169 = sphi 0, %s155
    %s175 = sphi 0, %s177
    %s178 = sphi 0, %s175
    %s179 = sphi 0, %s178
    %s195 = sphi 0, %s179
  $region4: #{mininet_forward.75} parent=0 // loop_header_branch
    %16 = sbr.rel (%p14) target = $region8
  $region5: #{mininet_forward.75} parent=0 // loop_body
    %s18 = ssub.s32 %s13, 1
    %s19 = ssub.s32 %s13, 2
    %s20 = sadd.s32 %s13, 1
    %s21 = ssub.s32 %s13, %s20
    %p22 = scmp.eq.s32.totalorder %s21, 0
    %s24 = sadd.s32 %s23, 1
    %s25 = scalar_select %p22, %s23, %s24
    %p28 = pneg %p22
    %p29 = scmp.eq.s32.totalorder %s13, 1
    %p30 = por %p28, %p29
    %p31 = scmp.ne.s32.totalorder %s23, %s26
    %p32 = scmp.eq.s32.totalorder %s13, 0
    %p33 = por %p31, %p32
    %p34 = scmp.ne.s32.totalorder %s23, %s26
    %p35 = scmp.eq.s32.totalorder %s18, 1
    %p36 = por %p34, %p35
    %p37 = scmp.ne.s32.totalorder %s26, %s27
    %p38 = scmp.eq.s32.totalorder %s18, 0
    %p39 = por %p37, %p38
    %p40 = scmp.ne.s32.totalorder %s26, %s27
    %p41 = scmp.eq.s32.totalorder %s19, 1
    %p42 = por %p40, %p41
    %p44 = scmp.ne.s32.totalorder %s27, %s43
    %p45 = scmp.eq.s32.totalorder %s19, 0
    %p46 = por %p44, %p45
    %s48 = sadd.s32 %s47, 1
    %p51 = scmp.eq.s32.totalorder %s13, 1
    %p52 = scmp.ne.s32.totalorder %s47, %s49
    %p53 = scmp.eq.s32.totalorder %s13, 0
    %p54 = por %p52, %p53
    %p55 = scmp.ne.s32.totalorder %s47, %s49
    %p56 = scmp.eq.s32.totalorder %s18, 1
    %p57 = por %p55, %p56
    %p58 = scmp.ne.s32.totalorder %s49, %s50
    %p59 = scmp.eq.s32.totalorder %s18, 0
    %p60 = por %p58, %p59
    %p61 = scmp.ne.s32.totalorder %s49, %s50
    %p62 = scmp.eq.s32.totalorder %s19, 1
    %p63 = por %p61, %p62
    %p65 = scmp.ne.s32.totalorder %s50, %s64
    %p66 = scmp.eq.s32.totalorder %s19, 0
    %p67 = por %p65, %p66
    %s69 = sadd.s32 %s68, 1
    %p72 = scmp.eq.s32.totalorder %s13, 1
    %p73 = scmp.ne.s32.totalorder %s68, %s70
    %p74 = scmp.eq.s32.totalorder %s13, 0
    %p75 = por %p73, %p74
    %p76 = scmp.ne.s32.totalorder %s68, %s70
    %p77 = scmp.eq.s32.totalorder %s18, 1
    %p78 = por %p76, %p77
    %p79 = scmp.ne.s32.totalorder %s70, %s71
    %p80 = scmp.eq.s32.totalorder %s18, 0
    %p81 = por %p79, %p80
    %p82 = scmp.ne.s32.totalorder %s70, %s71
    %p83 = scmp.eq.s32.totalorder %s19, 1
    %p84 = por %p82, %p83
    %p86 = scmp.ne.s32.totalorder %s71, %s85
    %p87 = scmp.eq.s32.totalorder %s19, 0
    %p88 = por %p86, %p87
    %s90 = sadd.s32 %s89, 1
    %p93 = scmp.eq.s32.totalorder %s13, 1
    %p94 = scmp.ne.s32.totalorder %s89, %s91
    %p95 = scmp.eq.s32.totalorder %s13, 0
    %p96 = por %p94, %p95
    %p97 = scmp.ne.s32.totalorder %s89, %s91
    %p98 = scmp.eq.s32.totalorder %s18, 1
    %p99 = por %p97, %p98
    %p100 = scmp.ne.s32.totalorder %s91, %s92
    %p101 = scmp.eq.s32.totalorder %s18, 0
    %p102 = por %p100, %p101
    %p103 = scmp.ne.s32.totalorder %s91, %s92
    %p104 = scmp.eq.s32.totalorder %s19, 1
    %p105 = por %p103, %p104
    %p107 = scmp.ne.s32.totalorder %s92, %s106
    %p108 = scmp.eq.s32.totalorder %s19, 0
    %p109 = por %p107, %p108
    %s111 = sadd.s32 %s110, 1
    %p114 = scmp.eq.s32.totalorder %s13, 1
    %p115 = scmp.ne.s32.totalorder %s110, %s112
    %p116 = scmp.eq.s32.totalorder %s13, 0
    %p117 = por %p115, %p116
    %p118 = scmp.ne.s32.totalorder %s110, %s112
    %p119 = scmp.eq.s32.totalorder %s18, 1
    %p120 = por %p118, %p119
    %p121 = scmp.ne.s32.totalorder %s112, %s113
    %p122 = scmp.eq.s32.totalorder %s18, 0
    %p123 = por %p121, %p122
    %p124 = scmp.ne.s32.totalorder %s112, %s113
    %p125 = scmp.eq.s32.totalorder %s19, 1
    %p126 = por %p124, %p125
    %p128 = scmp.ne.s32.totalorder %s113, %s127
    %p129 = scmp.eq.s32.totalorder %s19, 0
    %p130 = por %p128, %p129
    %s132 = sadd.s32 %s131, 1
    %p135 = scmp.eq.s32.totalorder %s13, 1
    %p136 = scmp.ne.s32.totalorder %s131, %s133
    %p137 = scmp.eq.s32.totalorder %s13, 0
    %p138 = por %p136, %p137
    %p139 = scmp.ne.s32.totalorder %s131, %s133
    %p140 = scmp.eq.s32.totalorder %s18, 1
    %p141 = por %p139, %p140
    %p142 = scmp.ne.s32.totalorder %s133, %s134
    %p143 = scmp.eq.s32.totalorder %s18, 0
    %p144 = por %p142, %p143
    %p145 = scmp.ne.s32.totalorder %s133, %s134
    %p146 = scmp.eq.s32.totalorder %s19, 1
    %p147 = por %p145, %p146
    %p149 = scmp.ne.s32.totalorder %s134, %s148
    %p150 = scmp.eq.s32.totalorder %s19, 0
    %p151 = por %p149, %p150
    %s153 = sadd.s32 %s152, 1
    %p156 = scmp.eq.s32.totalorder %s13, 1
    %p157 = scmp.ne.s32.totalorder %s152, %s154
    %p158 = scmp.eq.s32.totalorder %s13, 0
    %p159 = por %p157, %p158
    %p160 = scmp.ne.s32.totalorder %s152, %s154
    %p161 = scmp.eq.s32.totalorder %s18, 1
    %p162 = por %p160, %p161
    %p163 = scmp.ne.s32.totalorder %s154, %s155
    %p164 = scmp.eq.s32.totalorder %s18, 0
    %p165 = por %p163, %p164
    %p166 = scmp.ne.s32.totalorder %s154, %s155
    %p167 = scmp.eq.s32.totalorder %s19, 1
    %p168 = por %p166, %p167
    %p170 = scmp.ne.s32.totalorder %s155, %s169
    %p171 = scmp.eq.s32.totalorder %s19, 0
    %p172 = por %p170, %p171
    %s173 = ssub.s32 %s13, %s20
    %p174 = scmp.eq.s32.totalorder %s173, 0
    %s176 = sadd.s32 %s175, 1
    %s177 = scalar_select %p174, %s175, %s176
    %p180 = pneg %p174
    %p181 = scmp.eq.s32.totalorder %s13, 1
    %p182 = por %p180, %p181
    %p183 = scmp.ne.s32.totalorder %s175, %s178
    %p184 = scmp.eq.s32.totalorder %s13, 0
    %p185 = por %p183, %p184
    %p186 = scmp.ne.s32.totalorder %s175, %s178
    %p187 = scmp.eq.s32.totalorder %s18, 1
    %p188 = por %p186, %p187
    %p189 = scmp.ne.s32.totalorder %s178, %s179
    %p190 = scmp.eq.s32.totalorder %s18, 0
    %p191 = por %p189, %p190
    %p192 = scmp.ne.s32.totalorder %s178, %s179
    %p193 = scmp.eq.s32.totalorder %s19, 1
    %p194 = por %p192, %p193
    %p196 = scmp.ne.s32.totalorder %s179, %s195
    %p197 = scmp.eq.s32.totalorder %s19, 0
    %p198 = por %p196, %p197
    %p199 = scmp.le.s32.totalorder 1, %s13
    %p200 = scmp.lt.s32.totalorder %s13, 3
    %p201 = pnand %p199, %p200
    %p202 = pneg %p201
    // Predicated region
    $region9: #{mininet_forward.75} parent=5 // pred_check
      _
    $region10: #{mininet_forward.75} parent=5 // pred_check_branch
      %204 = sbr.rel (%p201) target = $region12
    $region11: #{mininet_forward.75} parent=5 // pred_region
      %s205 = ssub.s32 %s13, 1
      // Predicated region
      $region13: #{mininet_forward.75} parent=11 // pred_check
        %p206 = pneg %p60
      $region14: #{mininet_forward.75} parent=11 // pred_check_branch
        %208 = sbr.rel (%p206) target = $region16
      $region15: #{mininet_forward.75} parent=11 // pred_region
        _
      $region16: #{mininet_forward.75} parent=11 // pred_fallthru
        _
      // Predicated region
      $region17: #{mininet_forward.75} parent=11 // pred_check
        %p209 = pneg %p81
      $region18: #{mininet_forward.75} parent=11 // pred_check_branch
        %211 = sbr.rel (%p209) target = $region20
      $region19: #{mininet_forward.75} parent=11 // pred_region
        _
      $region20: #{mininet_forward.75} parent=11 // pred_fallthru
        _
      // Predicated region
      $region21: #{mininet_forward.75} parent=11 // pred_check
        %p212 = pneg %p102
      $region22: #{mininet_forward.75} parent=11 // pred_check_branch
        %214 = sbr.rel (%p212) target = $region24
      $region23: #{mininet_forward.75} parent=11 // pred_region
        _
      $region24: #{mininet_forward.75} parent=11 // pred_fallthru
        _
      // Predicated region
      $region25: #{mininet_forward.75} parent=11 // pred_check
        %p215 = pneg %p123
      $region26: #{mininet_forward.75} parent=11 // pred_check_branch
        %217 = sbr.rel (%p215) target = $region28
      $region27: #{mininet_forward.75} parent=11 // pred_region
        _
      $region28: #{mininet_forward.75} parent=11 // pred_fallthru
        _
      // Predicated region
      $region29: #{mininet_forward.75} parent=11 // pred_check
        %p218 = pneg %p144
      $region30: #{mininet_forward.75} parent=11 // pred_check_branch
        %220 = sbr.rel (%p218) target = $region32
      $region31: #{mininet_forward.75} parent=11 // pred_region
        _
      $region32: #{mininet_forward.75} parent=11 // pred_fallthru
        _
      // Predicated region
      $region33: #{mininet_forward.75} parent=11 // pred_check
        %p221 = pneg %p165
      $region34: #{mininet_forward.75} parent=11 // pred_check_branch
        %223 = sbr.rel (%p221) target = $region36
      $region35: #{mininet_forward.75} parent=11 // pred_region
        _
      $region36: #{mininet_forward.75} parent=11 // pred_fallthru
        _
    $region12: #{mininet_forward.75} parent=5 // pred_fallthru
      _
    %p224 = scmp.lt.s32.totalorder %s13, 2
    // Predicated region
    $region37: #{mininet_forward.75} parent=5 // pred_check
      %p225 = pneg %p224
    $region38: #{mininet_forward.75} parent=5 // pred_check_branch
      %227 = sbr.rel (%p225) target = $region40
    $region39: #{mininet_forward.75} parent=5 // pred_region
      // Predicated region
      $region41: #{mininet_forward.75} parent=39 // pred_check
        %p228 = pneg %p33
      $region42: #{mininet_forward.75} parent=39 // pred_check_branch
        %230 = sbr.rel (%p228) target = $region44
      $region43: #{mininet_forward.75} parent=39 // pred_region
        %p231 = scmp.lt.s32.totalorder %s13, 1
        %s232 = scalar_select %p231, %s13, 1
        %s233 = smul.addr %s232, 149
        %s234 = smul.addr %s233, 8
        %s235 = scalar_lea.vmem %s0, %s234
      $region44: #{mininet_forward.75} parent=39 // pred_fallthru
        _
    $region40: #{mininet_forward.75} parent=5 // pred_fallthru
      _
    %p236 = scmp.le.s32.totalorder 1, %s13
    %p237 = scmp.lt.s32.totalorder %s13, 3
    %p238 = pnand %p236, %p237
    %p239 = pneg %p238
    // Predicated region
    $region45: #{mininet_forward.75} parent=5 // pred_check
      _
    $region46: #{mininet_forward.75} parent=5 // pred_check_branch
      %241 = sbr.rel (%p238) target = $region48
    $region47: #{mininet_forward.75} parent=5 // pred_region
      %s242 = ssub.s32 %s13, 1
      %p243 = scmp.lt.s32.totalorder %s18, 1
      %s244 = scalar_select %p243, %s18, 1
      %s245 = smul.addr %s244, 149
      %s246 = smul.addr %s245, 8
      %s247 = scalar_lea.vmem %s0, %s246
      %p248 = pneg %p39
      %p249 = pneg %p36
      %p250 = pneg %p60
      %p251 = pneg %p57
      %p252 = pneg %p81
      %p253 = pneg %p78
      %p254 = pneg %p102
      %p255 = pneg %p99
      %p256 = pneg %p123
      %p257 = pneg %p120
      %p258 = pneg %p144
      %p259 = pneg %p141
      %p260 = pneg %p165
      %p261 = pneg %p162
      %p262 = pneg %p191
      %p263 = pneg %p188
      %p264 = scmp.lt.s32.totalorder %s18, 1
      %s265 = scalar_select %p264, %s18, 1
      %s266 = smul.addr %s265, 9
      %s267 = smul.addr %s266, 8
      %s268 = scalar_lea.vmem %s7, %s267
      %p269 = scmp.lt.s32.totalorder %s18, 1
      %s270 = scalar_select %p269, %s18, 1
      %s271 = smul.addr %s270, 149
      %s272 = smul.addr %s271, 8
      %s273 = scalar_lea.vmem %s0, %s272
      %p274 = scmp.lt.s32.totalorder %s18, 1
      %s275 = scalar_select %p274, %s18, 1
      %s276 = smul.addr %s275, 9
      %s277 = smul.addr %s276, 8
      %s278 = scalar_lea.vmem %s7, %s277
      %v280 = vld [vmem:[%s273 + $0x230] sm:$0xff]
      %v281 = vld [vmem:[%s273 + $0x238] sm:$0xff]
      %v282 = vld [vmem:[%s273 + $0x240] sm:$0xff]
      %v283 = vld [vmem:[%s273 + $0x248] sm:$0xff]
      %v284 = vld [vmem:[%s273 + $0x250] sm:$0xff]
      %v285 = vld [vmem:[%s273 + $0x258] sm:$0xff]
      %v286 = vld [vmem:[%s273 + $0x260] sm:$0xff]
      %v287 = vld [vmem:[%s273 + $0x268] sm:$0xff]
      %v288 = vld [vmem:[%s273 + $0x270] sm:$0xf]
      %s289 = scalar_lea.vmem %s1, 4
      %v290 = vld [vmem:[%s289] sm:$0x1]
      %v292 = vlaneseq
      %v293 = vshrl.u32 %v292, 7
      %v294 = vsub.s32 0, %v293
      %v295 = vrot.slane %v290, %v294
      %v297 = vmul.f32 %v280, %v295
      %v298 = vmul.f32 %v281, %v295
      %v299 = vmul.f32 %v282, %v295
      %v300 = vmul.f32 %v283, %v295
      %v301 = vmul.f32 %v284, %v295
      %v302 = vmul.f32 %v285, %v295
      %v303 = vmul.f32 %v286, %v295
      %v304 = vmul.f32 %v287, %v295
      %v305 = vmul.f32 %v288, %v295
      %s306 = scalar_lea.vmem %s3, 4
      %v307 = vld [vmem:[%s306] sm:$0x1]
      %v309 = vlaneseq
      %v310 = vshrl.u32 %v309, 7
      %v311 = vsub.s32 0, %v310
      %v312 = vrot.slane %v307, %v311
      %v314 = vmul.f32 %v280, %v312
      %v315 = vmul.f32 %v281, %v312
      %v316 = vmul.f32 %v282, %v312
      %v317 = vmul.f32 %v283, %v312
      %v318 = vmul.f32 %v284, %v312
      %v319 = vmul.f32 %v285, %v312
      %v320 = vmul.f32 %v286, %v312
      %v321 = vmul.f32 %v287, %v312
      %v322 = vmul.f32 %v288, %v312
      %v323 = vld [vmem:[%s273 + $0x20d] sm:$0xff]
      %v324 = vld [vmem:[%s273 + $0x215] sm:$0xff]
      %v325 = vld [vmem:[%s273 + $0x21d] sm:$0xff]
      %v326 = vld [vmem:[%s273 + $0x225] sm:$0xff]
      %v327 = vld [vmem:[%s273 + $0x22d] sm:$0xff]
      %v328 = vld [vmem:[%s273 + $0x235] sm:$0xff]
      %v329 = vld [vmem:[%s273 + $0x23d] sm:$0xff]
      %v330 = vld [vmem:[%s273 + $0x245] sm:$0xff]
      %v331 = vld [vmem:[%s273 + $0x24d] sm:$0xf]
      %v332 = vld [vmem:[%s1] sm:$0x1]
      %v334 = vlaneseq
      %v335 = vshrl.u32 %v334, 7
      %v336 = vsub.s32 0, %v335
      %v337 = vrot.slane %v332, %v336
      %v339 = vmul.f32 %v323, %v337
      %v340 = vmul.f32 %v324, %v337
      %v341 = vmul.f32 %v325, %v337
      %v342 = vmul.f32 %v326, %v337
      %v343 = vmul.f32 %v327, %v337
      %v344 = vmul.f32 %v328, %v337
      %v345 = vmul.f32 %v329, %v337
      %v346 = vmul.f32 %v330, %v337
      %v347 = vmul.f32 %v331, %v337
      %v348 = vadd.f32 %v297, %v339
      %v349 = vadd.f32 %v298, %v340
      %v350 = vadd.f32 %v299, %v341
      %v351 = vadd.f32 %v300, %v342
      %v352 = vadd.f32 %v301, %v343
      %v353 = vadd.f32 %v302, %v344
      %v354 = vadd.f32 %v303, %v345
      %v355 = vadd.f32 %v304, %v346
      %v356 = vadd.f32 %v305, %v347
      %v357 = vld [vmem:[%s273] sm:$0xff]
      %v358 = vld [vmem:[%s273 + $0x8] sm:$0xff]
      %v359 = vld [vmem:[%s273 + $0x10] sm:$0xff]
      %v360 = vld [vmem:[%s273 + $0x18] sm:$0xff]
      %v361 = vld [vmem:[%s273 + $0x20] sm:$0xff]
      %v362 = vld [vmem:[%s273 + $0x28] sm:$0xff]
      %v363 = vld [vmem:[%s273 + $0x30] sm:$0xff]
      %v364 = vld [vmem:[%s273 + $0x38] sm:$0xff]
      %v365 = vld [vmem:[%s273 + $0x40] sm:$0xf]
      %v366 = vld [vmem:[%s3] sm:$0x1]
      %v368 = vlaneseq
      %v369 = vshrl.u32 %v368, 7
      %v370 = vsub.s32 0, %v369
      %v371 = vrot.slane %v366, %v370
      %v373 = vmul.f32 %v357, %v371
      %v374 = vmul.f32 %v358, %v371
      %v375 = vmul.f32 %v359, %v371
      %v376 = vmul.f32 %v360, %v371
      %v377 = vmul.f32 %v361, %v371
      %v378 = vmul.f32 %v362, %v371
      %v379 = vmul.f32 %v363, %v371
      %v380 = vmul.f32 %v364, %v371
      %v381 = vmul.f32 %v365, %v371
      %v382 = vadd.f32 %v314, %v373
      %v383 = vadd.f32 %v315, %v374
      %v384 = vadd.f32 %v316, %v375
      %v385 = vadd.f32 %v317, %v376
      %v386 = vadd.f32 %v318, %v377
      %v387 = vadd.f32 %v319, %v378
      %v388 = vadd.f32 %v320, %v379
      %v389 = vadd.f32 %v321, %v380
      %v390 = vadd.f32 %v322, %v381
      %v391 = vld [vmem:[%s273 + $0x20e] sm:$0xff]
      %v392 = vld [vmem:[%s273 + $0x216] sm:$0xff]
      %v393 = vld [vmem:[%s273 + $0x21e] sm:$0xff]
      %v394 = vld [vmem:[%s273 + $0x226] sm:$0xff]
      %v395 = vld [vmem:[%s273 + $0x22e] sm:$0xff]
      %v396 = vld [vmem:[%s273 + $0x236] sm:$0xff]
      %v397 = vld [vmem:[%s273 + $0x23e] sm:$0xff]
      %v398 = vld [vmem:[%s273 + $0x246] sm:$0xff]
      %v399 = vld [vmem:[%s273 + $0x24e] sm:$0xf]
      %s400 = scalar_lea.vmem %s1, 1
      %v401 = vld [vmem:[%s400] sm:$0x1]
      %v403 = vlaneseq
      %v404 = vshrl.u32 %v403, 7
      %v405 = vsub.s32 0, %v404
      %v406 = vrot.slane %v401, %v405
      %v408 = vmul.f32 %v391, %v406
      %v409 = vmul.f32 %v392, %v406
      %v410 = vmul.f32 %v393, %v406
      %v411 = vmul.f32 %v394, %v406
      %v412 = vmul.f32 %v395, %v406
      %v413 = vmul.f32 %v396, %v406
      %v414 = vmul.f32 %v397, %v406
      %v415 = vmul.f32 %v398, %v406
      %v416 = vmul.f32 %v399, %v406
      %v417 = vadd.f32 %v348, %v408
      %v418 = vadd.f32 %v349, %v409
      %v419 = vadd.f32 %v350, %v410
      %v420 = vadd.f32 %v351, %v411
      %v421 = vadd.f32 %v352, %v412
      %v422 = vadd.f32 %v353, %v413
      %v423 = vadd.f32 %v354, %v414
      %v424 = vadd.f32 %v355, %v415
      %v425 = vadd.f32 %v356, %v416
      %v426 = vld [vmem:[%s273 + $0x40] sm:$0xff]
      %v427 = vld [vmem:[%s273 + $0x48] sm:$0xff]
      %v428 = vld [vmem:[%s273 + $0x50] sm:$0xf]
      %s429 = scalar_lea.vmem %s3, 1
      %v430 = vld [vmem:[%s429] sm:$0x1]
      %v432 = vlaneseq
      %v433 = vshrl.u32 %v432, 7
      %v434 = vsub.s32 0, %v433
      %v435 = vrot.slane %v430, %v434
      %v437 = vmul.f32 %v359, %v435
      %v438 = vmul.f32 %v360, %v435
      %v439 = vmul.f32 %v361, %v435
      %v440 = vmul.f32 %v362, %v435
      %v441 = vmul.f32 %v363, %v435
      %v442 = vmul.f32 %v364, %v435
      %v443 = vmul.f32 %v426, %v435
      %v444 = vmul.f32 %v427, %v435
      %v445 = vmul.f32 %v428, %v435
      %v446 = vadd.f32 %v382, %v437
      %v447 = vadd.f32 %v383, %v438
      %v448 = vadd.f32 %v384, %v439
      %v449 = vadd.f32 %v385, %v440
      %v450 = vadd.f32 %v386, %v441
      %v451 = vadd.f32 %v387, %v442
      %v452 = vadd.f32 %v388, %v443
      %v453 = vadd.f32 %v389, %v444
      %v454 = vadd.f32 %v390, %v445
      %v455 = vld [vmem:[%s273 + $0x20f] sm:$0xff]
      %v456 = vld [vmem:[%s273 + $0x217] sm:$0xff]
      %v457 = vld [vmem:[%s273 + $0x21f] sm:$0xff]
      %v458 = vld [vmem:[%s273 + $0x227] sm:$0xff]
      %v459 = vld [vmem:[%s273 + $0x22f] sm:$0xff]
      %v460 = vld [vmem:[%s273 + $0x237] sm:$0xff]
      %v461 = vld [vmem:[%s273 + $0x23f] sm:$0xff]
      %v462 = vld [vmem:[%s273 + $0x247] sm:$0xff]
      %v463 = vld [vmem:[%s273 + $0x24f] sm:$0xf]
      %s464 = scalar_lea.vmem %s1, 2
      %v465 = vld [vmem:[%s464] sm:$0x1]
      %v467 = vlaneseq
      %v468 = vshrl.u32 %v467, 7
      %v469 = vsub.s32 0, %v468
      %v470 = vrot.slane %v465, %v469
      %v472 = vmul.f32 %v455, %v470
      %v473 = vmul.f32 %v456, %v470
      %v474 = vmul.f32 %v457, %v470
      %v475 = vmul.f32 %v458, %v470
      %v476 = vmul.f32 %v459, %v470
      %v477 = vmul.f32 %v460, %v470
      %v478 = vmul.f32 %v461, %v470
      %v479 = vmul.f32 %v462, %v470
      %v480 = vmul.f32 %v463, %v470
      %v481 = vadd.f32 %v417, %v472
      %v482 = vadd.f32 %v418, %v473
      %v483 = vadd.f32 %v419, %v474
      %v484 = vadd.f32 %v420, %v475
      %v485 = vadd.f32 %v421, %v476
      %v486 = vadd.f32 %v422, %v477
      %v487 = vadd.f32 %v423, %v478
      %v488 = vadd.f32 %v424, %v479
      %v489 = vadd.f32 %v425, %v480
      %v490 = vld [vmem:[%s273 + $0x50] sm:$0xff]
      %v491 = vld [vmem:[%s273 + $0x58] sm:$0xff]
      %v492 = vld [vmem:[%s273 + $0x60] sm:$0xf]
      %s493 = scalar_lea.vmem %s3, 2
      %v494 = vld [vmem:[%s493] sm:$0x1]
      %v496 = vlaneseq
      %v497 = vshrl.u32 %v496, 7
      %v498 = vsub.s32 0, %v497
      %v499 = vrot.slane %v494, %v498
      %v501 = vmul.f32 %v361, %v499
      %v502 = vmul.f32 %v362, %v499
      %v503 = vmul.f32 %v363, %v499
      %v504 = vmul.f32 %v364, %v499
      %v505 = vmul.f32 %v426, %v499
      %v506 = vmul.f32 %v427, %v499
      %v507 = vmul.f32 %v490, %v499
      %v508 = vmul.f32 %v491, %v499
      %v509 = vmul.f32 %v492, %v499
      %v510 = vadd.f32 %v446, %v501
      %v511 = vadd.f32 %v447, %v502
      %v512 = vadd.f32 %v448, %v503
      %v513 = vadd.f32 %v449, %v504
      %v514 = vadd.f32 %v450, %v505
      %v515 = vadd.f32 %v451, %v506
      %v516 = vadd.f32 %v452, %v507
      %v517 = vadd.f32 %v453, %v508
      %v518 = vadd.f32 %v454, %v509
      %v519 = vld [vmem:[%s273 + $0x24f] sm:$0xff]
      %v520 = vld [vmem:[%s273 + $0x257] sm:$0xff]
      %v521 = vld [vmem:[%s273 + $0x25f] sm:$0xff]
      %v522 = vld [vmem:[%s273 + $0x267] sm:$0xff]
      %v523 = vld [vmem:[%s273 + $0x26f] sm:$0xf]
      %s524 = scalar_lea.vmem %s1, 3
      %v525 = vld [vmem:[%s524] sm:$0x1]
      %v527 = vlaneseq
      %v528 = vshrl.u32 %v527, 7
      %v529 = vsub.s32 0, %v528
      %v530 = vrot.slane %v525, %v529
      %v532 = vmul.f32 %v459, %v530
      %v533 = vmul.f32 %v460, %v530
      %v534 = vmul.f32 %v461, %v530
      %v535 = vmul.f32 %v462, %v530
      %v536 = vmul.f32 %v519, %v530
      %v537 = vmul.f32 %v520, %v530
      %v538 = vmul.f32 %v521, %v530
      %v539 = vmul.f32 %v522, %v530
      %v540 = vmul.f32 %v523, %v530
      %v541 = vadd.f32 %v481, %v532
      %v542 = vadd.f32 %v482, %v533
      %v543 = vadd.f32 %v483, %v534
      %v544 = vadd.f32 %v484, %v535
      %v545 = vadd.f32 %v485, %v536
      %v546 = vadd.f32 %v486, %v537
      %v547 = vadd.f32 %v487, %v538
      %v548 = vadd.f32 %v488, %v539
      %v549 = vadd.f32 %v489, %v540
      %v550 = vld [vmem:[%s273 + $0x220] sm:$0xff]
      %v551 = vld [vmem:[%s273 + $0x228] sm:$0xff]
      %v552 = vld [vmem:[%s273 + $0x260] sm:$0xf]
      %s553 = scalar_lea.vmem %s3, 3
      %v554 = vld [vmem:[%s553] sm:$0x1]
      %v556 = vlaneseq
      %v557 = vshrl.u32 %v556, 7
      %v558 = vsub.s32 0, %v557
      %v559 = vrot.slane %v554, %v558
      %v561 = vmul.f32 %v550, %v559
      %v562 = vmul.f32 %v551, %v559
      %v563 = vmul.f32 %v280, %v559
      %v564 = vmul.f32 %v281, %v559
      %v565 = vmul.f32 %v282, %v559
      %v566 = vmul.f32 %v283, %v559
      %v567 = vmul.f32 %v284, %v559
      %v568 = vmul.f32 %v285, %v559
      %v569 = vmul.f32 %v552, %v559
      %v570 = vadd.f32 %v510, %v561
      %v571 = vadd.f32 %v511, %v562
      %v572 = vadd.f32 %v512, %v563
      %v573 = vadd.f32 %v513, %v564
      %v574 = vadd.f32 %v514, %v565
      %v575 = vadd.f32 %v515, %v566
      %v576 = vadd.f32 %v516, %v567
      %v577 = vadd.f32 %v517, %v568
      %v578 = vadd.f32 %v518, %v569
      %v579 = vld [vmem:[%s273 + $0x231] sm:$0xff]
      %v580 = vld [vmem:[%s273 + $0x239] sm:$0xff]
      %v581 = vld [vmem:[%s273 + $0x241] sm:$0xff]
      %v582 = vld [vmem:[%s273 + $0x249] sm:$0xff]
      %v583 = vld [vmem:[%s273 + $0x251] sm:$0xff]
      %v584 = vld [vmem:[%s273 + $0x259] sm:$0xff]
      %v585 = vld [vmem:[%s273 + $0x261] sm:$0xff]
      %v586 = vld [vmem:[%s273 + $0x269] sm:$0xff]
      %v587 = vld [vmem:[%s273 + $0x271] sm:$0xf]
      %s588 = scalar_lea.vmem %s1, 5
      %v589 = vld [vmem:[%s588] sm:$0x1]
      %v591 = vlaneseq
      %v592 = vshrl.u32 %v591, 7
      %v593 = vsub.s32 0, %v592
      %v594 = vrot.slane %v589, %v593
      %v596 = vmul.f32 %v579, %v594
      %v597 = vmul.f32 %v580, %v594
      %v598 = vmul.f32 %v581, %v594
      %v599 = vmul.f32 %v582, %v594
      %v600 = vmul.f32 %v583, %v594
      %v601 = vmul.f32 %v584, %v594
      %v602 = vmul.f32 %v585, %v594
      %v603 = vmul.f32 %v586, %v594
      %v604 = vmul.f32 %v587, %v594
      %v605 = vadd.f32 %v541, %v596
      %v606 = vadd.f32 %v542, %v597
      %v607 = vadd.f32 %v543, %v598
      %v608 = vadd.f32 %v544, %v599
      %v609 = vadd.f32 %v545, %v600
      %v610 = vadd.f32 %v546, %v601
      %v611 = vadd.f32 %v547, %v602
      %v612 = vadd.f32 %v548, %v603
      %v613 = vadd.f32 %v549, %v604
      %v614 = vld [vmem:[%s273 + $0x270] sm:$0xff]
      %v615 = vld [vmem:[%s273 + $0x278] sm:$0xff]
      %v616 = vld [vmem:[%s273 + $0x280] sm:$0xf]
      %s617 = scalar_lea.vmem %s3, 5
      %v618 = vld [vmem:[%s617] sm:$0x1]
      %v620 = vlaneseq
      %v621 = vshrl.u32 %v620, 7
      %v622 = vsub.s32 0, %v621
      %v623 = vrot.slane %v618, %v622
      %v625 = vmul.f32 %v282, %v623
      %v626 = vmul.f32 %v283, %v623
      %v627 = vmul.f32 %v284, %v623
      %v628 = vmul.f32 %v285, %v623
      %v629 = vmul.f32 %v286, %v623
      %v630 = vmul.f32 %v287, %v623
      %v631 = vmul.f32 %v614, %v623
      %v632 = vmul.f32 %v615, %v623
      %v633 = vmul.f32 %v616, %v623
      %v634 = vadd.f32 %v570, %v625
      %v635 = vadd.f32 %v571, %v626
      %v636 = vadd.f32 %v572, %v627
      %v637 = vadd.f32 %v573, %v628
      %v638 = vadd.f32 %v574, %v629
      %v639 = vadd.f32 %v575, %v630
      %v640 = vadd.f32 %v576, %v631
      %v641 = vadd.f32 %v577, %v632
      %v642 = vadd.f32 %v578, %v633
      %v643 = vld [vmem:[%s273 + $0x271] sm:$0xff]
      %v644 = vld [vmem:[%s273 + $0x279] sm:$0xff]
      %v645 = vld [vmem:[%s273 + $0x281] sm:$0xff]
      %v646 = vld [vmem:[%s273 + $0x289] sm:$0xff]
      %v647 = vld [vmem:[%s273 + $0x291] sm:$0xf]
      %s648 = scalar_lea.vmem %s1, 6
      %v649 = vld [vmem:[%s648] sm:$0x1]
      %v651 = vlaneseq
      %v652 = vshrl.u32 %v651, 7
      %v653 = vsub.s32 0, %v652
      %v654 = vrot.slane %v649, %v653
      %v656 = vmul.f32 %v583, %v654
      %v657 = vmul.f32 %v584, %v654
      %v658 = vmul.f32 %v585, %v654
      %v659 = vmul.f32 %v586, %v654
      %v660 = vmul.f32 %v643, %v654
      %v661 = vmul.f32 %v644, %v654
      %v662 = vmul.f32 %v645, %v654
      %v663 = vmul.f32 %v646, %v654
      %v664 = vmul.f32 %v647, %v654
      %v665 = vadd.f32 %v605, %v656
      %v666 = vadd.f32 %v606, %v657
      %v667 = vadd.f32 %v607, %v658
      %v668 = vadd.f32 %v608, %v659
      %v669 = vadd.f32 %v609, %v660
      %v670 = vadd.f32 %v610, %v661
      %v671 = vadd.f32 %v611, %v662
      %v672 = vadd.f32 %v612, %v663
      %v673 = vadd.f32 %v613, %v664
      %v674 = vld [vmem:[%s273 + $0x440] sm:$0xff]
      %v675 = vld [vmem:[%s273 + $0x448] sm:$0xff]
      %v676 = vld [vmem:[%s273 + $0x450] sm:$0xff]
      %v677 = vld [vmem:[%s273 + $0x458] sm:$0xff]
      %v678 = vld [vmem:[%s273 + $0x460] sm:$0xff]
      %v679 = vld [vmem:[%s273 + $0x468] sm:$0xff]
      %v680 = vld [vmem:[%s273 + $0x470] sm:$0xff]
      %v681 = vld [vmem:[%s273 + $0x478] sm:$0xff]
      %v682 = vld [vmem:[%s273 + $0x480] sm:$0xf]
      %s683 = scalar_lea.vmem %s3, 6
      %v684 = vld [vmem:[%s683] sm:$0x1]
      %v686 = vlaneseq
      %v687 = vshrl.u32 %v686, 7
      %v688 = vsub.s32 0, %v687
      %v689 = vrot.slane %v684, %v688
      %v691 = vmul.f32 %v674, %v689
      %v692 = vmul.f32 %v675, %v689
      %v693 = vmul.f32 %v676, %v689
      %v694 = vmul.f32 %v677, %v689
      %v695 = vmul.f32 %v678, %v689
      %v696 = vmul.f32 %v679, %v689
      %v697 = vmul.f32 %v680, %v689
      %v698 = vmul.f32 %v681, %v689
      %v699 = vmul.f32 %v682, %v689
      %v700 = vadd.f32 %v634, %v691
      %v701 = vadd.f32 %v635, %v692
      %v702 = vadd.f32 %v636, %v693
      %v703 = vadd.f32 %v637, %v694
      %v704 = vadd.f32 %v638, %v695
      %v705 = vadd.f32 %v639, %v696
      %v706 = vadd.f32 %v640, %v697
      %v707 = vadd.f32 %v641, %v698
      %v708 = vadd.f32 %v642, %v699
      %v709 = vld [vmem:[%s273 + $0x252] sm:$0xff]
      %v710 = vld [vmem:[%s273 + $0x25a] sm:$0xff]
      %v711 = vld [vmem:[%s273 + $0x262] sm:$0xff]
      %v712 = vld [vmem:[%s273 + $0x26a] sm:$0xff]
      %v713 = vld [vmem:[%s273 + $0x272] sm:$0xff]
      %v714 = vld [vmem:[%s273 + $0x27a] sm:$0xff]
      %v715 = vld [vmem:[%s273 + $0x282] sm:$0xff]
      %v716 = vld [vmem:[%s273 + $0x28a] sm:$0xff]
      %v717 = vld [vmem:[%s273 + $0x292] sm:$0xf]
      %s718 = scalar_lea.vmem %s1, 7
      %v719 = vld [vmem:[%s718] sm:$0x1]
      %v721 = vlaneseq
      %v722 = vshrl.u32 %v721, 7
      %v723 = vsub.s32 0, %v722
      %v724 = vrot.slane %v719, %v723
      %v726 = vmul.f32 %v709, %v724
      %v727 = vmul.f32 %v710, %v724
      %v728 = vmul.f32 %v711, %v724
      %v729 = vmul.f32 %v712, %v724
      %v730 = vmul.f32 %v713, %v724
      %v731 = vmul.f32 %v714, %v724
      %v732 = vmul.f32 %v715, %v724
      %v733 = vmul.f32 %v716, %v724
      %v734 = vmul.f32 %v717, %v724
      %v735 = vadd.f32 %v665, %v726
      %v736 = vadd.f32 %v666, %v727
      %v737 = vadd.f32 %v667, %v728
      %v738 = vadd.f32 %v668, %v729
      %v739 = vadd.f32 %v669, %v730
      %v740 = vadd.f32 %v670, %v731
      %v741 = vadd.f32 %v671, %v732
      %v742 = vadd.f32 %v672, %v733
      %v743 = vadd.f32 %v673, %v734
      %v744 = vld [vmem:[%s273 + $0x480] sm:$0xff]
      %v745 = vld [vmem:[%s273 + $0x488] sm:$0xff]
      %v746 = vld [vmem:[%s273 + $0x490] sm:$0xf]
      %s747 = scalar_lea.vmem %s3, 7
      %v748 = vld [vmem:[%s747] sm:$0x1]
      %v750 = vlaneseq
      %v751 = vshrl.u32 %v750, 7
      %v752 = vsub.s32 0, %v751
      %v753 = vrot.slane %v748, %v752
      %v755 = vmul.f32 %v676, %v753
      %v756 = vmul.f32 %v677, %v753
      %v757 = vmul.f32 %v678, %v753
      %v758 = vmul.f32 %v679, %v753
      %v759 = vmul.f32 %v680, %v753
      %v760 = vmul.f32 %v681, %v753
      %v761 = vmul.f32 %v744, %v753
      %v762 = vmul.f32 %v745, %v753
      %v763 = vmul.f32 %v746, %v753
      %v764 = vadd.f32 %v700, %v755
      %v765 = vadd.f32 %v701, %v756
      %v766 = vadd.f32 %v702, %v757
      %v767 = vadd.f32 %v703, %v758
      %v768 = vadd.f32 %v704, %v759
      %v769 = vadd.f32 %v705, %v760
      %v770 = vadd.f32 %v706, %v761
      %v771 = vadd.f32 %v707, %v762
      %v772 = vadd.f32 %v708, %v763
      %v773 = vld [vmem:[%s273 + $0x253] sm:$0xff]
      %v774 = vld [vmem:[%s273 + $0x25b] sm:$0xff]
      %v775 = vld [vmem:[%s273 + $0x263] sm:$0xff]
      %v776 = vld [vmem:[%s273 + $0x26b] sm:$0xff]
      %v777 = vld [vmem:[%s273 + $0x273] sm:$0xff]
      %v778 = vld [vmem:[%s273 + $0x27b] sm:$0xff]
      %v779 = vld [vmem:[%s273 + $0x283] sm:$0xff]
      %v780 = vld [vmem:[%s273 + $0x28b] sm:$0xff]
      %v781 = vld [vmem:[%s273 + $0x293] sm:$0xf]
      %s782 = scalar_lea.vmem %s1, 8
      %v783 = vld [vmem:[%s782] sm:$0x1]
      %v785 = vlaneseq
      %v786 = vshrl.u32 %v785, 7
      %v787 = vsub.s32 0, %v786
      %v788 = vrot.slane %v783, %v787
      %v790 = vmul.f32 %v773, %v788
      %v791 = vmul.f32 %v774, %v788
      %v792 = vmul.f32 %v775, %v788
      %v793 = vmul.f32 %v776, %v788
      %v794 = vmul.f32 %v777, %v788
      %v795 = vmul.f32 %v778, %v788
      %v796 = vmul.f32 %v779, %v788
      %v797 = vmul.f32 %v780, %v788
      %v798 = vmul.f32 %v781, %v788
      %v799 = vadd.f32 %v735, %v790
      %v800 = vadd.f32 %v736, %v791
      %v801 = vadd.f32 %v737, %v792
      %v802 = vadd.f32 %v738, %v793
      %v803 = vadd.f32 %v739, %v794
      %v804 = vadd.f32 %v740, %v795
      %v805 = vadd.f32 %v741, %v796
      %v806 = vadd.f32 %v742, %v797
      %v807 = vadd.f32 %v743, %v798
      %v808 = vld [vmem:[%s273 + $0x490] sm:$0xff]
      %v809 = vld [vmem:[%s273 + $0x498] sm:$0xff]
      %v810 = vld [vmem:[%s273 + $0x4a0] sm:$0xf]
      %s811 = scalar_lea.vmem %s3, 8
      %v812 = vld [vmem:[%s811] sm:$0x1]
      %v814 = vlaneseq
      %v815 = vshrl.u32 %v814, 7
      %v816 = vsub.s32 0, %v815
      %v817 = vrot.slane %v812, %v816
      %v819 = vmul.f32 %v678, %v817
      %v820 = vmul.f32 %v679, %v817
      %v821 = vmul.f32 %v680, %v817
      %v822 = vmul.f32 %v681, %v817
      %v823 = vmul.f32 %v744, %v817
      %v824 = vmul.f32 %v745, %v817
      %v825 = vmul.f32 %v808, %v817
      %v826 = vmul.f32 %v809, %v817
      %v827 = vmul.f32 %v810, %v817
      %v828 = vadd.f32 %v764, %v819
      %v829 = vadd.f32 %v765, %v820
      %v830 = vadd.f32 %v766, %v821
      %v831 = vadd.f32 %v767, %v822
      %v832 = vadd.f32 %v768, %v823
      %v833 = vadd.f32 %v769, %v824
      %v834 = vadd.f32 %v770, %v825
      %v835 = vadd.f32 %v771, %v826
      %v836 = vadd.f32 %v772, %v827
      %v837 = vld [vmem:[%s2] sm:$0x1]
      %v839 = vlaneseq
      %v840 = vshrl.u32 %v839, 7
      %v841 = vsub.s32 0, %v840
      %v842 = vrot.slane %v837, %v841
      %v844 = vadd.f32 %v799, %v842
      %v845 = vadd.f32 %v800, %v842
      %v846 = vadd.f32 %v801, %v842
      %v847 = vadd.f32 %v802, %v842
      %v848 = vadd.f32 %v803, %v842
      %v849 = vadd.f32 %v804, %v842
      %v850 = vadd.f32 %v805, %v842
      %v851 = vadd.f32 %v806, %v842
      %v852 = vadd.f32 %v807, %v842
      %v853 = vmax.f32 %v844, 0.0
      %v854 = vmax.f32 %v845, 0.0
      %v855 = vmax.f32 %v846, 0.0
      %v856 = vmax.f32 %v847, 0.0
      %v857 = vmax.f32 %v848, 0.0
      %v858 = vmax.f32 %v849, 0.0
      %v859 = vmax.f32 %v850, 0.0
      %v860 = vmax.f32 %v851, 0.0
      %v861 = vmax.f32 %v852, 0.0
      %v862 = vld [vmem:[%s4] sm:$0x1]
      %v864 = vlaneseq
      %v865 = vshrl.u32 %v864, 7
      %v866 = vsub.s32 0, %v865
      %v867 = vrot.slane %v862, %v866
      %v869 = vadd.f32 %v828, %v867
      %v870 = vadd.f32 %v829, %v867
      %v871 = vadd.f32 %v830, %v867
      %v872 = vadd.f32 %v831, %v867
      %v873 = vadd.f32 %v832, %v867
      %v874 = vadd.f32 %v833, %v867
      %v875 = vadd.f32 %v834, %v867
      %v876 = vadd.f32 %v835, %v867
      %v877 = vadd.f32 %v836, %v867
      %v878 = vmax.f32 %v869, 0.0
      %v879 = vmax.f32 %v870, 0.0
      %v880 = vmax.f32 %v871, 0.0
      %v881 = vmax.f32 %v872, 0.0
      %v882 = vmax.f32 %v873, 0.0
      %v883 = vmax.f32 %v874, 0.0
      %v884 = vmax.f32 %v875, 0.0
      %v885 = vmax.f32 %v876, 0.0
      %v886 = vmax.f32 %v877, 0.0
      %v887 = vadd.f32 %v853, %v878
      %v888 = vadd.f32 %v854, %v879
      %v889 = vadd.f32 %v855, %v880
      %v890 = vadd.f32 %v856, %v881
      %v891 = vadd.f32 %v857, %v882
      %v892 = vadd.f32 %v858, %v883
      %v893 = vadd.f32 %v859, %v884
      %v894 = vadd.f32 %v860, %v885
      %v895 = vadd.f32 %v861, %v886
      %v896 = vpack.c.bf16 %v888, %v887
      %v897 = vpack.c.bf16 %v890, %v889
      %v898 = vpack.c.bf16 %v892, %v891
      %v899 = vpack.c.bf16 %v894, %v893
      %v900 = vpack.c.bf16 %v895, %v895
      %v901 = vld [vmem:[%s5] sm:$0xf]
      %v902 = vld [vmem:[%s5 + $0x4] sm:$0xf]
      %v903 = vld [vmem:[%s5 + $0x8] sm:$0xf]
      %v904 = vld [vmem:[%s5 + $0xc] sm:$0xf]
      %v905 = vld [vmem:[%s5 + $0x10] sm:$0xf]
      %v906 = vld [vmem:[%s5 + $0x14] sm:$0xf]
      %v907 = vld [vmem:[%s5 + $0x18] sm:$0xf]
      %v908 = vld [vmem:[%s5 + $0x1c] sm:$0xf]
      %v909 = vld [vmem:[%s5 + $0x20] sm:$0xf]
      %v910 = vld [vmem:[%s5 + $0x24] sm:$0xf]
      %v911 = vld [vmem:[%s5 + $0x28] sm:$0xf]
      %v912 = vld [vmem:[%s5 + $0x2c] sm:$0xf]
      %v913 = vld [vmem:[%s5 + $0x30] sm:$0xf]
      %v914 = vld [vmem:[%s5 + $0x34] sm:$0xf]
      %v915 = vld [vmem:[%s5 + $0x38] sm:$0xf]
      %v916 = vld [vmem:[%s5 + $0x3c] sm:$0xf]
      %v917 = vld [vmem:[%s6] sm:$0x1]
      %v919 = vlaneseq
      %v920 = vshrl.u32 %v919, 7
      %v921 = vsub.s32 0, %v920
      %v922 = vrot.slane %v917, %v921
      %v940 = vunpack.c.l.b16 %v901
      %v941 = vunpack.c.l.b16 %v902
      %v942 = vunpack.c.l.b16 %v903
      %v943 = vunpack.c.l.b16 %v904
      %v944 = vunpack.c.l.b16 %v905
      %v945 = vunpack.c.l.b16 %v906
      %v946 = vunpack.c.l.b16 %v907
      %v947 = vunpack.c.l.b16 %v908
      %v948 = vunpack.c.l.b16 %v909
      %v949 = vunpack.c.l.b16 %v910
      %v950 = vunpack.c.l.b16 %v911
      %v951 = vunpack.c.l.b16 %v912
      %v952 = vunpack.c.l.b16 %v913
      %v953 = vunpack.c.l.b16 %v914
      %v954 = vunpack.c.l.b16 %v915
      %v955 = vunpack.c.l.b16 %v916
      %v956 = vpack.c.b16 %v941, %v940
      %v957 = vpack.c.b16 %v943, %v942
      %v958 = vpack.c.b16 %v945, %v944
      %v959 = vpack.c.b16 %v947, %v946
      %v960 = vpack.c.b16 %v949, %v948
      %v961 = vpack.c.b16 %v951, %v950
      %v962 = vpack.c.b16 %v953, %v952
      %v963 = vpack.c.b16 %v955, %v954
      %972 = vmatprep.subr.bf16.mxu0 0
      %973 = vmatpush1.bf16.msra.mxu0 %v956
      %974 = vmatprep.subr.bf16.mxu0 0
      %975 = vmatpush1.bf16.msra.mxu0 %v957
      %976 = vmatprep.subr.bf16.mxu0 0
      %977 = vmatpush1.bf16.msra.mxu0 %v958
      %978 = vmatprep.subr.bf16.mxu0 0
      %979 = vmatpush1.bf16.msra.mxu0 %v959
      %980 = vmatprep.subr.bf16.mxu0 0
      %981 = vmatpush1.bf16.msra.mxu0 %v960
      %982 = vmatprep.subr.bf16.mxu0 0
      %983 = vmatpush1.bf16.msra.mxu0 %v961
      %984 = vmatprep.subr.bf16.mxu0 0
      %985 = vmatpush1.bf16.msra.mxu0 %v962
      %986 = vmatprep.subr.bf16.mxu0 0
      %987 = vmatpush1.bf16.msra.mxu0 %v963
      %988 = vmatprep.subr.bf16.mxu0 0
      %989 = vmatpush1.bf16.msra.mxu0 0
      %990 = vmatprep.subr.bf16.mxu0 0
      %991 = vmatpush1.bf16.msra.mxu0 0
      %992 = vmatprep.subr.bf16.mxu0 0
      %993 = vmatpush1.bf16.msra.mxu0 0
      %994 = vmatprep.subr.bf16.mxu0 0
      %995 = vmatpush1.bf16.msra.mxu0 0
      %996 = vmatprep.subr.bf16.mxu0 0
      %997 = vmatpush1.bf16.msra.mxu0 0
      %998 = vmatprep.subr.bf16.mxu0 0
      %999 = vmatpush1.bf16.msra.mxu0 0
      %1000 = vmatprep.subr.bf16.mxu0 0
      %1001 = vmatpush1.bf16.msra.mxu0 0
      %1002 = vmatprep.subr.bf16.mxu0 0
      %1003 = vmatpush1.bf16.msra.mxu0 0
      %1004 = vmatprep.mubr.bf16.mxu0 0
      %1005 = vmatmul.mubr.bf16.gmra.mrb[0].mxu0 %v896
      %v1006 = vpop.f32.mrb[0].mxu0
      %v1007 = vadd.f32 %v922, %v1006
      %v1008 = vpop.f32.mrb[0].mxu0
      %v1009 = vpop.f32.mrb[0].mxu0
      %v1010 = vadd.f32 %v922, %v1009
      %v1011 = vpop.f32.mrb[0].mxu0
      %1012 = vmatprep.mubr.bf16.mxu0 0
      %1013 = vmatmul.mubr.bf16.gmra.mrb[0].mxu0 %v897
      %v1014 = vpop.f32.mrb[0].mxu0
      %v1015 = vadd.f32 %v922, %v1014
      %v1016 = vpop.f32.mrb[0].mxu0
      %v1017 = vpop.f32.mrb[0].mxu0
      %v1018 = vadd.f32 %v922, %v1017
      %v1019 = vpop.f32.mrb[0].mxu0
      %1020 = vmatprep.mubr.bf16.mxu0 0
      %1021 = vmatmul.mubr.bf16.gmra.mrb[0].mxu0 %v898
      %v1022 = vpop.f32.mrb[0].mxu0
      %v1023 = vadd.f32 %v922, %v1022
      %v1024 = vpop.f32.mrb[0].mxu0
      %v1025 = vpop.f32.mrb[0].mxu0
      %v1026 = vadd.f32 %v922, %v1025
      %v1027 = vpop.f32.mrb[0].mxu0
      %1028 = vmatprep.mubr.bf16.mxu0 0
      %1029 = vmatmul.mubr.bf16.gmra.mrb[0].mxu0 %v899
      %v1030 = vpop.f32.mrb[0].mxu0
      %v1031 = vadd.f32 %v922, %v1030
      %v1032 = vpop.f32.mrb[0].mxu0
      %v1033 = vpop.f32.mrb[0].mxu0
      %v1034 = vadd.f32 %v922, %v1033
      %v1035 = vpop.f32.mrb[0].mxu0
      %1036 = vmatprep.mubr.bf16.mxu0 0
      %1037 = vmatmul.mubr.bf16.gmra.mrb[0].mxu0 %v900
      %v1038 = vpop.f32.mrb[0].mxu0
      %v1039 = vadd.f32 %v922, %v1038
      %v1040 = vpop.f32.mrb[0].mxu0
      %v1041 = vpop.f32.mrb[0].mxu0
      %v1042 = vpop.f32.mrb[0].mxu0
      %1043 = vdwg.mxu0
      %v1044 = vadd.f32 %v1007, %v280
      %v1045 = vadd.f32 %v1010, %v281
      %v1046 = vadd.f32 %v1015, %v282
      %v1047 = vadd.f32 %v1018, %v283
      %v1048 = vadd.f32 %v1023, %v284
      %v1049 = vadd.f32 %v1026, %v285
      %v1050 = vadd.f32 %v1031, %v286
      %v1051 = vadd.f32 %v1034, %v287
      %v1052 = vadd.f32 %v1039, %v288
      %v1053 = vmax.f32 %v1044, 0.0
      %v1054 = vmax.f32 %v1045, 0.0
      %v1055 = vmax.f32 %v1046, 0.0
      %v1056 = vmax.f32 %v1047, 0.0
      %v1057 = vmax.f32 %v1048, 0.0
      %v1058 = vmax.f32 %v1049, 0.0
      %v1059 = vmax.f32 %v1050, 0.0
      %v1060 = vmax.f32 %v1051, 0.0
      %v1061 = vmax.f32 %v1052, 0.0
      %1062 = vst [vmem:[%s278] sm:$0xff] %v1053
      %1063 = vst [vmem:[%s278 + $0x8] sm:$0xff] %v1054
      %1064 = vst [vmem:[%s278 + $0x10] sm:$0xff] %v1055
      %1065 = vst [vmem:[%s278 + $0x18] sm:$0xff] %v1056
      %1066 = vst [vmem:[%s278 + $0x20] sm:$0xff] %v1057
      %1067 = vst [vmem:[%s278 + $0x28] sm:$0xff] %v1058
      %1068 = vst [vmem:[%s278 + $0x30] sm:$0xff] %v1059
      %1069 = vst [vmem:[%s278 + $0x38] sm:$0xff] %v1060
      %1070 = vst [vmem:[%s278 + $0x40] sm:$0xf] %v1061
      %p1071 = scmp.lt.s32.totalorder %s18, 1
      %s1072 = scalar_select %p1071, %s18, 1
      %s1073 = smul.addr %s1072, 9
      %s1074 = smul.addr %s1073, 8
      %s1075 = scalar_lea.vmem %s7, %s1074
      // Predicated region
      $region49: #{mininet_forward.75} parent=47 // pred_check
        %p1076 = pneg %p188
      $region50: #{mininet_forward.75} parent=47 // pred_check_branch
        %1078 = sbr.rel (%p1076) target = $region52
      $region51: #{mininet_forward.75} parent=47 // pred_region
        _
      $region52: #{mininet_forward.75} parent=47 // pred_fallthru
        _
    $region48: #{mininet_forward.75} parent=5 // pred_fallthru
      _
    %p1079 = scmp.le.s32.totalorder 2, %s13
    // Predicated region
    $region53: #{mininet_forward.75} parent=5 // pred_check
      %p1080 = pneg %p1079
    $region54: #{mininet_forward.75} parent=5 // pred_check_branch
      %1082 = sbr.rel (%p1080) target = $region56
    $region55: #{mininet_forward.75} parent=5 // pred_region
      %s1083 = ssub.s32 %s13, 2
      // Predicated region
      $region57: #{mininet_forward.75} parent=55 // pred_check
        %p1084 = pneg %p194
      $region58: #{mininet_forward.75} parent=55 // pred_check_branch
        %1086 = sbr.rel (%p1084) target = $region60
      $region59: #{mininet_forward.75} parent=55 // pred_region
        %p1087 = scmp.lt.s32.totalorder %s19, 1
        %s1088 = scalar_select %p1087, %s19, 1
        %s1089 = smul.addr %s1088, 9
        %s1090 = smul.addr %s1089, 8
        %s1091 = scalar_lea.vmem %s7, %s1090
      $region60: #{mininet_forward.75} parent=55 // pred_fallthru
        _
    $region56: #{mininet_forward.75} parent=5 // pred_fallthru
      _
  $region6: #{mininet_forward.75} parent=0 // loop_footer
    %s17 = sadd.s32 1, %s13
  $region7: #{mininet_forward.75} parent=0 // loop_footer_branch
    %12 = sbr.rel target = $region3
  $region8: #{mininet_forward.75} parent=0 // loop_exit
    _

// kernel: mininet_forward.84
$region0: #{mininet_forward.84}
  #allocation0 [shape = 'u32[]', space=smem, size = 0x4, offset = 0x4, fixed_abs, tag = 'smem constant byte address 0x4 - core index']
  #allocation1 [shape = 'u32[144,128]{1,0:T(1,128)}', space=vmem, size = 0x12000, scoped, tag = 'internal scratch']
  %s0 = inlined_call_operand.vmem [shape: bf16[16,128], index: 0, kind: input, shape index: {}]
  %s1 = inlined_call_operand.vmem [shape: bf16[128,64], index: 1, kind: input, shape index: {}]
  %s2 = inlined_call_operand.vmem [shape: f32[1,64], index: 2, kind: input, shape index: {}]
  %s3 = inlined_call_operand.vmem [shape: f32[16,64], index: 3, kind: output, shape index: {}]
  %s4 = sld [smem:[#allocation0]]
  $region22: #{mininet_forward.84} parent=0
    _
  %s6 = ssub.s32 1, %s4
  %s7 = scalar_select 0, %s6, %s4
  // Predicated region
  $region2: #{mininet_forward.84} parent=0 // pred_check
    _
  $region3: #{mininet_forward.84} parent=0 // pred_check_branch
    %9 = sbr.rel (0) target = $region5
  $region4: #{mininet_forward.84} parent=0 // pred_region
    _
  $region5: #{mininet_forward.84} parent=0 // pred_fallthru
    _
  // Predicated region
  $region6: #{mininet_forward.84} parent=0 // pred_check
    _
  $region7: #{mininet_forward.84} parent=0 // pred_check_branch
    %11 = sbr.rel (0) target = $region9
  $region8: #{mininet_forward.84} parent=0 // pred_region
    _
  $region9: #{mininet_forward.84} parent=0 // pred_fallthru
    _
  // Predicated region
  $region10: #{mininet_forward.84} parent=0 // pred_check
    _
  $region11: #{mininet_forward.84} parent=0 // pred_check_branch
    %13 = sbr.rel (0) target = $region13
  $region12: #{mininet_forward.84} parent=0 // pred_region
    _
  $region13: #{mininet_forward.84} parent=0 // pred_fallthru
    _
  %v15 = vld [vmem:[%s0] sm:$0xf]
  %v16 = vld [vmem:[%s0 + $0x4] sm:$0xf]
  %v17 = vld [vmem:[%s1] sm:$0xf]
  %v18 = vld [vmem:[%s1 + $0x4] sm:$0xf]
  %v19 = vld [vmem:[%s1 + $0x8] sm:$0xf]
  %v20 = vld [vmem:[%s1 + $0xc] sm:$0xf]
  %v21 = vld [vmem:[%s1 + $0x10] sm:$0xf]
  %v22 = vld [vmem:[%s1 + $0x14] sm:$0xf]
  %v23 = vld [vmem:[%s1 + $0x18] sm:$0xf]
  %v24 = vld [vmem:[%s1 + $0x1c] sm:$0xf]
  %v25 = vld [vmem:[%s1 + $0x20] sm:$0xf]
  %v26 = vld [vmem:[%s1 + $0x24] sm:$0xf]
  %v27 = vld [vmem:[%s1 + $0x28] sm:$0xf]
  %v28 = vld [vmem:[%s1 + $0x2c] sm:$0xf]
  %v29 = vld [vmem:[%s1 + $0x30] sm:$0xf]
  %v30 = vld [vmem:[%s1 + $0x34] sm:$0xf]
  %v31 = vld [vmem:[%s1 + $0x38] sm:$0xf]
  %v32 = vld [vmem:[%s1 + $0x3c] sm:$0xf]
  %v33 = vld [vmem:[%s2] sm:$0x1]
  %v35 = vlaneseq
  %v36 = vshrl.u32 %v35, 7
  %v37 = vsub.s32 0, %v36
  %v38 = vrot.slane %v33, %v37
  %v42 = vunpack.c.l.b16 %v15
  %v43 = vunpack.c.l.b16 %v16
  %v44 = vpack.c.b16 %v43, %v42
  %v62 = vunpack.c.l.b16 %v17
  %v63 = vunpack.c.l.b16 %v18
  %v64 = vunpack.c.l.b16 %v19
  %v65 = vunpack.c.l.b16 %v20
  %v66 = vunpack.c.l.b16 %v21
  %v67 = vunpack.c.l.b16 %v22
  %v68 = vunpack.c.l.b16 %v23
  %v69 = vunpack.c.l.b16 %v24
  %v70 = vunpack.c.l.b16 %v25
  %v71 = vunpack.c.l.b16 %v26
  %v72 = vunpack.c.l.b16 %v27
  %v73 = vunpack.c.l.b16 %v28
  %v74 = vunpack.c.l.b16 %v29
  %v75 = vunpack.c.l.b16 %v30
  %v76 = vunpack.c.l.b16 %v31
  %v77 = vunpack.c.l.b16 %v32
  %v78 = vpack.c.b16 %v63, %v62
  %v79 = vpack.c.b16 %v65, %v64
  %v80 = vpack.c.b16 %v67, %v66
  %v81 = vpack.c.b16 %v69, %v68
  %v82 = vpack.c.b16 %v71, %v70
  %v83 = vpack.c.b16 %v73, %v72
  %v84 = vpack.c.b16 %v75, %v74
  %v85 = vpack.c.b16 %v77, %v76
  %94 = vmatprep.subr.bf16.mxu0 0
  %95 = vmatpush1.bf16.msra.mxu0 %v78
  %96 = vmatprep.subr.bf16.mxu0 0
  %97 = vmatpush1.bf16.msra.mxu0 %v79
  %98 = vmatprep.subr.bf16.mxu0 0
  %99 = vmatpush1.bf16.msra.mxu0 %v80
  %100 = vmatprep.subr.bf16.mxu0 0
  %101 = vmatpush1.bf16.msra.mxu0 %v81
  %102 = vmatprep.subr.bf16.mxu0 0
  %103 = vmatpush1.bf16.msra.mxu0 %v82
  %104 = vmatprep.subr.bf16.mxu0 0
  %105 = vmatpush1.bf16.msra.mxu0 %v83
  %106 = vmatprep.subr.bf16.mxu0 0
  %107 = vmatpush1.bf16.msra.mxu0 %v84
  %108 = vmatprep.subr.bf16.mxu0 0
  %109 = vmatpush1.bf16.msra.mxu0 %v85
  %110 = vmatprep.subr.bf16.mxu0 0
  %111 = vmatpush1.bf16.msra.mxu0 0
  %112 = vmatprep.subr.bf16.mxu0 0
  %113 = vmatpush1.bf16.msra.mxu0 0
  %114 = vmatprep.subr.bf16.mxu0 0
  %115 = vmatpush1.bf16.msra.mxu0 0
  %116 = vmatprep.subr.bf16.mxu0 0
  %117 = vmatpush1.bf16.msra.mxu0 0
  %118 = vmatprep.subr.bf16.mxu0 0
  %119 = vmatpush1.bf16.msra.mxu0 0
  %120 = vmatprep.subr.bf16.mxu0 0
  %121 = vmatpush1.bf16.msra.mxu0 0
  %122 = vmatprep.subr.bf16.mxu0 0
  %123 = vmatpush1.bf16.msra.mxu0 0
  %124 = vmatprep.subr.bf16.mxu0 0
  %125 = vmatpush1.bf16.msra.mxu0 0
  %126 = vmatprep.mubr.bf16.mxu0 0
  %127 = vmatmul.mubr.bf16.gmra.mrb[0].mxu0 %v44
  %v128 = vpop.f32.mrb[0].mxu0
  %v129 = vadd.f32 %v38, %v128
  %v130 = vpop.f32.mrb[0].mxu0
  %v131 = vpop.f32.mrb[0].mxu0
  %v132 = vadd.f32 %v38, %v131
  %v133 = vpop.f32.mrb[0].mxu0
  %134 = vdwg.mxu0
  %v135 = vmax.f32 %v129, 0.0
  %v136 = vmax.f32 %v132, 0.0
  %vm137 = vcmask 523264
  %138 = vst.msk [vmem:[%s3] sm:$0xff] %vm137, %v135
  %139 = vst.msk [vmem:[%s3 + $0x8] sm:$0xff] %vm137, %v136
  // Predicated region
  $region14: #{mininet_forward.84} parent=0 // pred_check
    _
  $region15: #{mininet_forward.84} parent=0 // pred_check_branch
    %141 = sbr.rel (0) target = $region17
  $region16: #{mininet_forward.84} parent=0 // pred_region
    _
  $region17: #{mininet_forward.84} parent=0 // pred_fallthru
    _
  // Predicated region
  $region18: #{mininet_forward.84} parent=0 // pred_check
    _
  $region19: #{mininet_forward.84} parent=0 // pred_check_branch
    %143 = sbr.rel (0) target = $region21
  $region20: #{mininet_forward.84} parent=0 // pred_region
    _
  $region21: #{mininet_forward.84} parent=0 // pred_fallthru
    _

// kernel: mininet_forward.87
$region0: #{mininet_forward.87}
  #allocation0 [shape = 'u32[]', space=smem, size = 0x4, offset = 0x4, fixed_abs, tag = 'smem constant byte address 0x4 - core index']
  #allocation1 [shape = 'u32[144,128]{1,0:T(1,128)}', space=vmem, size = 0x12000, scoped, tag = 'internal scratch']
  %s0 = inlined_call_operand.vmem [shape: bf16[16,512], index: 0, kind: input, shape index: {}]
  %s1 = inlined_call_operand.vmem [shape: bf16[512,64], index: 1, kind: input, shape index: {}]
  %s2 = inlined_call_operand.vmem [shape: f32[1,64], index: 2, kind: input, shape index: {}]
  %s3 = inlined_call_operand.vmem [shape: f32[16,64], index: 3, kind: output, shape index: {}]
  %s4 = sld [smem:[#allocation0]]
  $region22: #{mininet_forward.87} parent=0
    _
  %s6 = ssub.s32 1, %s4
  %s7 = scalar_select 0, %s6, %s4
  // Predicated region
  $region2: #{mininet_forward.87} parent=0 // pred_check
    _
  $region3: #{mininet_forward.87} parent=0 // pred_check_branch
    %9 = sbr.rel (0) target = $region5
  $region4: #{mininet_forward.87} parent=0 // pred_region
    _
  $region5: #{mininet_forward.87} parent=0 // pred_fallthru
    _
  // Predicated region
  $region6: #{mininet_forward.87} parent=0 // pred_check
    _
  $region7: #{mininet_forward.87} parent=0 // pred_check_branch
    %11 = sbr.rel (0) target = $region9
  $region8: #{mininet_forward.87} parent=0 // pred_region
    _
  $region9: #{mininet_forward.87} parent=0 // pred_fallthru
    _
  // Predicated region
  $region10: #{mininet_forward.87} parent=0 // pred_check
    _
  $region11: #{mininet_forward.87} parent=0 // pred_check_branch
    %13 = sbr.rel (0) target = $region13
  $region12: #{mininet_forward.87} parent=0 // pred_region
    _
  $region13: #{mininet_forward.87} parent=0 // pred_fallthru
    _
  %v15 = vld [vmem:[%s0] sm:$0xff]
  %v16 = vld [vmem:[%s0 + $0x8] sm:$0xff]
  %v17 = vld [vmem:[%s0 + $0x10] sm:$0xff]
  %v18 = vld [vmem:[%s0 + $0x18] sm:$0xff]
  %v19 = vld [vmem:[%s1] sm:$0xf]
  %v20 = vld [vmem:[%s1 + $0x4] sm:$0xf]
  %v21 = vld [vmem:[%s1 + $0x8] sm:$0xf]
  %v22 = vld [vmem:[%s1 + $0xc] sm:$0xf]
  %v23 = vld [vmem:[%s1 + $0x10] sm:$0xf]
  %v24 = vld [vmem:[%s1 + $0x14] sm:$0xf]
  %v25 = vld [vmem:[%s1 + $0x18] sm:$0xf]
  %v26 = vld [vmem:[%s1 + $0x1c] sm:$0xf]
  %v27 = vld [vmem:[%s1 + $0x20] sm:$0xf]
  %v28 = vld [vmem:[%s1 + $0x24] sm:$0xf]
  %v29 = vld [vmem:[%s1 + $0x28] sm:$0xf]
  %v30 = vld [vmem:[%s1 + $0x2c] sm:$0xf]
  %v31 = vld [vmem:[%s1 + $0x30] sm:$0xf]
  %v32 = vld [vmem:[%s1 + $0x34] sm:$0xf]
  %v33 = vld [vmem:[%s1 + $0x38] sm:$0xf]
  %v34 = vld [vmem:[%s1 + $0x3c] sm:$0xf]
  %v35 = vld [vmem:[%s1 + $0x40] sm:$0xf]
  %v36 = vld [vmem:[%s1 + $0x44] sm:$0xf]
  %v37 = vld [vmem:[%s1 + $0x48] sm:$0xf]
  %v38 = vld [vmem:[%s1 + $0x4c] sm:$0xf]
  %v39 = vld [vmem:[%s1 + $0x50] sm:$0xf]
  %v40 = vld [vmem:[%s1 + $0x54] sm:$0xf]
  %v41 = vld [vmem:[%s1 + $0x58] sm:$0xf]
  %v42 = vld [vmem:[%s1 + $0x5c] sm:$0xf]
  %v43 = vld [vmem:[%s1 + $0x60] sm:$0xf]
  %v44 = vld [vmem:[%s1 + $0x64] sm:$0xf]
  %v45 = vld [vmem:[%s1 + $0x68] sm:$0xf]
  %v46 = vld [vmem:[%s1 + $0x6c] sm:$0xf]
  %v47 = vld [vmem:[%s1 + $0x70] sm:$0xf]
  %v48 = vld [vmem:[%s1 + $0x74] sm:$0xf]
  %v49 = vld [vmem:[%s1 + $0x78] sm:$0xf]
  %v50 = vld [vmem:[%s1 + $0x7c] sm:$0xf]
  %v51 = vld [vmem:[%s1 + $0x80] sm:$0xf]
  %v52 = vld [vmem:[%s1 + $0x84] sm:$0xf]
  %v53 = vld [vmem:[%s1 + $0x88] sm:$0xf]
  %v54 = vld [vmem:[%s1 + $0x8c] sm:$0xf]
  %v55 = vld [vmem:[%s1 + $0x90] sm:$0xf]
  %v56 = vld [vmem:[%s1 + $0x94] sm:$0xf]
  %v57 = vld [vmem:[%s1 + $0x98] sm:$0xf]
  %v58 = vld [vmem:[%s1 + $0x9c] sm:$0xf]
  %v59 = vld [vmem:[%s1 + $0xa0] sm:$0xf]
  %v60 = vld [vmem:[%s1 + $0xa4] sm:$0xf]
  %v61 = vld [vmem:[%s1 + $0xa8] sm:$0xf]
  %v62 = vld [vmem:[%s1 + $0xac] sm:$0xf]
  %v63 = vld [vmem:[%s1 + $0xb0] sm:$0xf]
  %v64 = vld [vmem:[%s1 + $0xb4] sm:$0xf]
  %v65 = vld [vmem:[%s1 + $0xb8] sm:$0xf]
  %v66 = vld [vmem:[%s1 + $0xbc] sm:$0xf]
  %v67 = vld [vmem:[%s1 + $0xc0] sm:$0xf]
  %v68 = vld [vmem:[%s1 + $0xc4] sm:$0xf]
  %v69 = vld [vmem:[%s1 + $0xc8] sm:$0xf]
  %v70 = vld [vmem:[%s1 + $0xcc] sm:$0xf]
  %v71 = vld [vmem:[%s1 + $0xd0] sm:$0xf]
  %v72 = vld [vmem:[%s1 + $0xd4] sm:$0xf]
  %v73 = vld [vmem:[%s1 + $0xd8] sm:$0xf]
  %v74 = vld [vmem:[%s1 + $0xdc] sm:$0xf]
  %v75 = vld [vmem:[%s1 + $0xe0] sm:$0xf]
  %v76 = vld [vmem:[%s1 + $0xe4] sm:$0xf]
  %v77 = vld [vmem:[%s1 + $0xe8] sm:$0xf]
  %v78 = vld [vmem:[%s1 + $0xec] sm:$0xf]
  %v79 = vld [vmem:[%s1 + $0xf0] sm:$0xf]
  %v80 = vld [vmem:[%s1 + $0xf4] sm:$0xf]
  %v81 = vld [vmem:[%s1 + $0xf8] sm:$0xf]
  %v82 = vld [vmem:[%s1 + $0xfc] sm:$0xf]
  %v83 = vld [vmem:[%s2] sm:$0x1]
  %v85 = vlaneseq
  %v86 = vshrl.u32 %v85, 7
  %v87 = vsub.s32 0, %v86
  %v88 = vrot.slane %v83, %v87
  %v94 = vunpack.c.l.b16 %v15
  %v95 = vunpack.c.h.b16 %v15
  %v96 = vunpack.c.l.b16 %v16
  %v97 = vunpack.c.h.b16 %v16
  %v98 = vunpack.c.l.b16 %v17
  %v99 = vunpack.c.h.b16 %v17
  %v100 = vunpack.c.l.b16 %v18
  %v101 = vunpack.c.h.b16 %v18
  %v102 = vpack.c.b16 %v98, %v94
  %v103 = vpack.c.b16 %v99, %v95
  %v104 = vpack.c.b16 %v100, %v96
  %v105 = vpack.c.b16 %v101, %v97
  %v174 = vunpack.c.l.b16 %v19
  %v175 = vunpack.c.l.b16 %v20
  %v176 = vunpack.c.l.b16 %v21
  %v177 = vunpack.c.l.b16 %v22
  %v178 = vunpack.c.l.b16 %v23
  %v179 = vunpack.c.l.b16 %v24
  %v180 = vunpack.c.l.b16 %v25
  %v181 = vunpack.c.l.b16 %v26
  %v182 = vunpack.c.l.b16 %v27
  %v183 = vunpack.c.l.b16 %v28
  %v184 = vunpack.c.l.b16 %v29
  %v185 = vunpack.c.l.b16 %v30
  %v186 = vunpack.c.l.b16 %v31
  %v187 = vunpack.c.l.b16 %v32
  %v188 = vunpack.c.l.b16 %v33
  %v189 = vunpack.c.l.b16 %v34
  %v190 = vunpack.c.l.b16 %v35
  %v191 = vunpack.c.l.b16 %v36
  %v192 = vunpack.c.l.b16 %v37
  %v193 = vunpack.c.l.b16 %v38
  %v194 = vunpack.c.l.b16 %v39
  %v195 = vunpack.c.l.b16 %v40
  %v196 = vunpack.c.l.b16 %v41
  %v197 = vunpack.c.l.b16 %v42
  %v198 = vunpack.c.l.b16 %v43
  %v199 = vunpack.c.l.b16 %v44
  %v200 = vunpack.c.l.b16 %v45
  %v201 = vunpack.c.l.b16 %v46
  %v202 = vunpack.c.l.b16 %v47
  %v203 = vunpack.c.l.b16 %v48
  %v204 = vunpack.c.l.b16 %v49
  %v205 = vunpack.c.l.b16 %v50
  %v206 = vunpack.c.l.b16 %v51
  %v207 = vunpack.c.l.b16 %v52
  %v208 = vunpack.c.l.b16 %v53
  %v209 = vunpack.c.l.b16 %v54
  %v210 = vunpack.c.l.b16 %v55
  %v211 = vunpack.c.l.b16 %v56
  %v212 = vunpack.c.l.b16 %v57
  %v213 = vunpack.c.l.b16 %v58
  %v214 = vunpack.c.l.b16 %v59
  %v215 = vunpack.c.l.b16 %v60
  %v216 = vunpack.c.l.b16 %v61
  %v217 = vunpack.c.l.b16 %v62
  %v218 = vunpack.c.l.b16 %v63
  %v219 = vunpack.c.l.b16 %v64
  %v220 = vunpack.c.l.b16 %v65
  %v221 = vunpack.c.l.b16 %v66
  %v222 = vunpack.c.l.b16 %v67
  %v223 = vunpack.c.l.b16 %v68
  %v224 = vunpack.c.l.b16 %v69
  %v225 = vunpack.c.l.b16 %v70
  %v226 = vunpack.c.l.b16 %v71
  %v227 = vunpack.c.l.b16 %v72
  %v228 = vunpack.c.l.b16 %v73
  %v229 = vunpack.c.l.b16 %v74
  %v230 = vunpack.c.l.b16 %v75
  %v231 = vunpack.c.l.b16 %v76
  %v232 = vunpack.c.l.b16 %v77
  %v233 = vunpack.c.l.b16 %v78
  %v234 = vunpack.c.l.b16 %v79
  %v235 = vunpack.c.l.b16 %v80
  %v236 = vunpack.c.l.b16 %v81
  %v237 = vunpack.c.l.b16 %v82
  %v238 = vpack.c.b16 %v175, %v174
  %v239 = vpack.c.b16 %v177, %v176
  %v240 = vpack.c.b16 %v179, %v178
  %v241 = vpack.c.b16 %v181, %v180
  %v242 = vpack.c.b16 %v183, %v182
  %v243 = vpack.c.b16 %v185, %v184
  %v244 = vpack.c.b16 %v187, %v186
  %v245 = vpack.c.b16 %v189, %v188
  %v246 = vpack.c.b16 %v191, %v190
  %v247 = vpack.c.b16 %v193, %v192
  %v248 = vpack.c.b16 %v195, %v194
  %v249 = vpack.c.b16 %v197, %v196
  %v250 = vpack.c.b16 %v199, %v198
  %v251 = vpack.c.b16 %v201, %v200
  %v252 = vpack.c.b16 %v203, %v202
  %v253 = vpack.c.b16 %v205, %v204
  %v254 = vpack.c.b16 %v207, %v206
  %v255 = vpack.c.b16 %v209, %v208
  %v256 = vpack.c.b16 %v211, %v210
  %v257 = vpack.c.b16 %v213, %v212
  %v258 = vpack.c.b16 %v215, %v214
  %v259 = vpack.c.b16 %v217, %v216
  %v260 = vpack.c.b16 %v219, %v218
  %v261 = vpack.c.b16 %v221, %v220
  %v262 = vpack.c.b16 %v223, %v222
  %v263 = vpack.c.b16 %v225, %v224
  %v264 = vpack.c.b16 %v227, %v226
  %v265 = vpack.c.b16 %v229, %v228
  %v266 = vpack.c.b16 %v231, %v230
  %v267 = vpack.c.b16 %v233, %v232
  %v268 = vpack.c.b16 %v235, %v234
  %v269 = vpack.c.b16 %v237, %v236
  %302 = vmatprep.subr.bf16.mxu0 0
  %303 = vmatpush1.bf16.msra.mxu0 %v238
  %304 = vmatprep.subr.bf16.mxu0 0
  %305 = vmatpush1.bf16.msra.mxu0 %v239
  %306 = vmatprep.subr.bf16.mxu0 0
  %307 = vmatpush1.bf16.msra.mxu0 %v240
  %308 = vmatprep.subr.bf16.mxu0 0
  %309 = vmatpush1.bf16.msra.mxu0 %v241
  %310 = vmatprep.subr.bf16.mxu0 0
  %311 = vmatpush1.bf16.msra.mxu0 %v242
  %312 = vmatprep.subr.bf16.mxu0 0
  %313 = vmatpush1.bf16.msra.mxu0 %v243
  %314 = vmatprep.subr.bf16.mxu0 0
  %315 = vmatpush1.bf16.msra.mxu0 %v244
  %316 = vmatprep.subr.bf16.mxu0 0
  %317 = vmatpush1.bf16.msra.mxu0 %v245
  %318 = vmatprep.subr.bf16.mxu0 0
  %319 = vmatpush1.bf16.msra.mxu0 %v246
  %320 = vmatprep.subr.bf16.mxu0 0
  %321 = vmatpush1.bf16.msra.mxu0 %v247
  %322 = vmatprep.subr.bf16.mxu0 0
  %323 = vmatpush1.bf16.msra.mxu0 %v248
  %324 = vmatprep.subr.bf16.mxu0 0
  %325 = vmatpush1.bf16.msra.mxu0 %v249
  %326 = vmatprep.subr.bf16.mxu0 0
  %327 = vmatpush1.bf16.msra.mxu0 %v250
  %328 = vmatprep.subr.bf16.mxu0 0
  %329 = vmatpush1.bf16.msra.mxu0 %v251
  %330 = vmatprep.subr.bf16.mxu0 0
  %331 = vmatpush1.bf16.msra.mxu0 %v252
  %332 = vmatprep.subr.bf16.mxu0 0
  %333 = vmatpush1.bf16.msra.mxu0 %v253
  %334 = vmatprep.mubr.bf16.mxu0 %v103
  %335 = vmatmul.mubr.bf16.gmra.mrb[0].mxu0 %v102
  %v336 = vpop.f32.mrb[0].mxu0
  %v337 = vadd.f32 %v88, %v336
  %v338 = vpop.f32.mrb[0].mxu0
  %v339 = vpop.f32.mrb[0].mxu0
  %v340 = vadd.f32 %v88, %v339
  %v341 = vpop.f32.mrb[0].mxu0
  %342 = vdwg.mxu0
  %343 = vmatprep.subr.bf16.mxu0 0
  %344 = vmatpush1.bf16.msra.mxu0 %v254
  %345 = vmatprep.subr.bf16.mxu0 0
  %346 = vmatpush1.bf16.msra.mxu0 %v255
  %347 = vmatprep.subr.bf16.mxu0 0
  %348 = vmatpush1.bf16.msra.mxu0 %v256
  %349 = vmatprep.subr.bf16.mxu0 0
  %350 = vmatpush1.bf16.msra.mxu0 %v257
  %351 = vmatprep.subr.bf16.mxu0 0
  %352 = vmatpush1.bf16.msra.mxu0 %v258
  %353 = vmatprep.subr.bf16.mxu0 0
  %354 = vmatpush1.bf16.msra.mxu0 %v259
  %355 = vmatprep.subr.bf16.mxu0 0
  %356 = vmatpush1.bf16.msra.mxu0 %v260
  %357 = vmatprep.subr.bf16.mxu0 0
  %358 = vmatpush1.bf16.msra.mxu0 %v261
  %359 = vmatprep.subr.bf16.mxu0 0
  %360 = vmatpush1.bf16.msra.mxu0 %v262
  %361 = vmatprep.subr.bf16.mxu0 0
  %362 = vmatpush1.bf16.msra.mxu0 %v263
  %363 = vmatprep.subr.bf16.mxu0 0
  %364 = vmatpush1.bf16.msra.mxu0 %v264
  %365 = vmatprep.subr.bf16.mxu0 0
  %366 = vmatpush1.bf16.msra.mxu0 %v265
  %367 = vmatprep.subr.bf16.mxu0 0
  %368 = vmatpush1.bf16.msra.mxu0 %v266
  %369 = vmatprep.subr.bf16.mxu0 0
  %370 = vmatpush1.bf16.msra.mxu0 %v267
  %371 = vmatprep.subr.bf16.mxu0 0
  %372 = vmatpush1.bf16.msra.mxu0 %v268
  %373 = vmatprep.subr.bf16.mxu0 0
  %374 = vmatpush1.bf16.msra.mxu0 %v269
  %375 = vmatprep.mubr.bf16.mxu0 %v105
  %376 = vmatmul.mubr.bf16.gmra.mrb[0].mxu0 %v104
  %v377 = vpop.f32.mrb[0].mxu0
  %v378 = vadd.f32 %v337, %v377
  %v379 = vpop.f32.mrb[0].mxu0
  %v380 = vpop.f32.mrb[0].mxu0
  %v381 = vadd.f32 %v340, %v380
  %v382 = vpop.f32.mrb[0].mxu0
  %383 = vdwg.mxu0
  %v384 = vmax.f32 %v378, 0.0
  %v385 = vmax.f32 %v381, 0.0
  %vm386 = vcmask 523264
  %387 = vst.msk [vmem:[%s3] sm:$0xff] %vm386, %v384
  %388 = vst.msk [vmem:[%s3 + $0x8] sm:$0xff] %vm386, %v385
  // Predicated region
  $region14: #{mininet_forward.87} parent=0 // pred_check
    _
  $region15: #{mininet_forward.87} parent=0 // pred_check_branch
    %390 = sbr.rel (0) target = $region17
  $region16: #{mininet_forward.87} parent=0 // pred_region
    _
  $region17: #{mininet_forward.87} parent=0 // pred_fallthru
    _
  // Predicated region
  $region18: #{mininet_forward.87} parent=0 // pred_check
    _
  $region19: #{mininet_forward.87} parent=0 // pred_check_branch
    %392 = sbr.rel (0) target = $region21
  $region20: #{mininet_forward.87} parent=0 // pred_region
    _
  $region21: #{mininet_forward.87} parent=0 // pred_fallthru
    _

// kernel: mininet_forward.92
$region0: #{mininet_forward.92}
  #allocation0 [shape = 'u32[]', space=smem, size = 0x4, offset = 0x4, fixed_abs, tag = 'smem constant byte address 0x4 - core index']
  #allocation1 [shape = 'u32[144,128]{1,0:T(1,128)}', space=vmem, size = 0x12000, scoped, tag = 'internal scratch']
  %s0 = inlined_call_operand.vmem [shape: bf16[32,64], index: 0, kind: input, shape index: {}]
  %s1 = inlined_call_operand.vmem [shape: bf16[64,5], index: 1, kind: input, shape index: {}]
  %s2 = inlined_call_operand.vmem [shape: f32[1,5], index: 2, kind: input, shape index: {}]
  %s3 = inlined_call_operand.vmem [shape: f32[32,5], index: 3, kind: output, shape index: {}]
  %s4 = sld [smem:[#allocation0]]
  $region22: #{mininet_forward.92} parent=0
    _
  %s6 = ssub.s32 1, %s4
  %s7 = scalar_select 0, %s6, %s4
  // Predicated region
  $region2: #{mininet_forward.92} parent=0 // pred_check
    _
  $region3: #{mininet_forward.92} parent=0 // pred_check_branch
    %9 = sbr.rel (0) target = $region5
  $region4: #{mininet_forward.92} parent=0 // pred_region
    _
  $region5: #{mininet_forward.92} parent=0 // pred_fallthru
    _
  // Predicated region
  $region6: #{mininet_forward.92} parent=0 // pred_check
    _
  $region7: #{mininet_forward.92} parent=0 // pred_check_branch
    %11 = sbr.rel (0) target = $region9
  $region8: #{mininet_forward.92} parent=0 // pred_region
    _
  $region9: #{mininet_forward.92} parent=0 // pred_fallthru
    _
  // Predicated region
  $region10: #{mininet_forward.92} parent=0 // pred_check
    _
  $region11: #{mininet_forward.92} parent=0 // pred_check_branch
    %13 = sbr.rel (0) target = $region13
  $region12: #{mininet_forward.92} parent=0 // pred_region
    _
  $region13: #{mininet_forward.92} parent=0 // pred_fallthru
    _
  %v15 = vld [vmem:[%s0] sm:$0xf]
  %v16 = vld [vmem:[%s0 + $0x4] sm:$0xf]
  %v17 = vld [vmem:[%s0 + $0x8] sm:$0xf]
  %v18 = vld [vmem:[%s0 + $0xc] sm:$0xf]
  %v19 = vld [vmem:[%s1] sm:$0xf]
  %v20 = vld [vmem:[%s1 + $0x4] sm:$0xf]
  %v21 = vld [vmem:[%s1 + $0x8] sm:$0xf]
  %v22 = vld [vmem:[%s1 + $0xc] sm:$0xf]
  %v23 = vld [vmem:[%s1 + $0x10] sm:$0xf]
  %v24 = vld [vmem:[%s1 + $0x14] sm:$0xf]
  %v25 = vld [vmem:[%s1 + $0x18] sm:$0xf]
  %v26 = vld [vmem:[%s1 + $0x1c] sm:$0xf]
  %v27 = vld [vmem:[%s2] sm:$0x1]
  %v29 = vlaneseq
  %v30 = vshrl.u32 %v29, 7
  %v31 = vsub.s32 0, %v30
  %v32 = vrot.slane %v27, %v31
  %v38 = vunpack.c.l.b16 %v15
  %v39 = vunpack.c.l.b16 %v16
  %v40 = vunpack.c.l.b16 %v17
  %v41 = vunpack.c.l.b16 %v18
  %v42 = vpack.c.b16 %v39, %v38
  %v43 = vpack.c.b16 %v41, %v40
  %v52 = vunpack.c.l.b16 %v19
  %v53 = vunpack.c.l.b16 %v20
  %v54 = vunpack.c.l.b16 %v21
  %v55 = vunpack.c.l.b16 %v22
  %v56 = vunpack.c.l.b16 %v23
  %v57 = vunpack.c.l.b16 %v24
  %v58 = vunpack.c.l.b16 %v25
  %v59 = vunpack.c.l.b16 %v26
  %v60 = vpack.c.b16 %v53, %v52
  %v61 = vpack.c.b16 %v55, %v54
  %v62 = vpack.c.b16 %v57, %v56
  %v63 = vpack.c.b16 %v59, %v58
  %vm68 = vcmask 523264
  %v70 = vsel %vm68, %v42, 0
  %v73 = vsel %vm68, %v43, 0
  %75 = vmatprep.subr.bf16.mxu0 0
  %76 = vmatpush1.bf16.msra.mxu0 %v60
  %77 = vmatprep.subr.bf16.mxu0 0
  %78 = vmatpush1.bf16.msra.mxu0 %v61
  %79 = vmatprep.subr.bf16.mxu0 0
  %80 = vmatpush1.bf16.msra.mxu0 %v62
  %81 = vmatprep.subr.bf16.mxu0 0
  %82 = vmatpush1.bf16.msra.mxu0 %v63
  %83 = vmatprep.subr.bf16.mxu0 0
  %84 = vmatpush1.bf16.msra.mxu0 0
  %85 = vmatprep.subr.bf16.mxu0 0
  %86 = vmatpush1.bf16.msra.mxu0 0
  %87 = vmatprep.subr.bf16.mxu0 0
  %88 = vmatpush1.bf16.msra.mxu0 0
  %89 = vmatprep.subr.bf16.mxu0 0
  %90 = vmatpush1.bf16.msra.mxu0 0
  %91 = vmatprep.subr.bf16.mxu0 0
  %92 = vmatpush1.bf16.msra.mxu0 0
  %93 = vmatprep.subr.bf16.mxu0 0
  %94 = vmatpush1.bf16.msra.mxu0 0
  %95 = vmatprep.subr.bf16.mxu0 0
  %96 = vmatpush1.bf16.msra.mxu0 0
  %97 = vmatprep.subr.bf16.mxu0 0
  %98 = vmatpush1.bf16.msra.mxu0 0
  %99 = vmatprep.subr.bf16.mxu0 0
  %100 = vmatpush1.bf16.msra.mxu0 0
  %101 = vmatprep.subr.bf16.mxu0 0
  %102 = vmatpush1.bf16.msra.mxu0 0
  %103 = vmatprep.subr.bf16.mxu0 0
  %104 = vmatpush1.bf16.msra.mxu0 0
  %105 = vmatprep.subr.bf16.mxu0 0
  %106 = vmatpush1.bf16.msra.mxu0 0
  %107 = vmatprep.mubr.bf16.mxu0 0
  %108 = vmatmul.mubr.bf16.gmra.mrb[0].mxu0 %v70
  %v109 = vpop.f32.mrb[0].mxu0
  %v110 = vadd.f32 %v32, %v109
  %v111 = vpop.f32.mrb[0].mxu0
  %v112 = vpop.f32.mrb[0].mxu0
  %v113 = vadd.f32 %v32, %v112
  %v114 = vpop.f32.mrb[0].mxu0
  %115 = vmatprep.mubr.bf16.mxu0 0
  %116 = vmatmul.mubr.bf16.gmra.mrb[0].mxu0 %v73
  %v117 = vpop.f32.mrb[0].mxu0
  %v118 = vadd.f32 %v32, %v117
  %v119 = vpop.f32.mrb[0].mxu0
  %v120 = vpop.f32.mrb[0].mxu0
  %v121 = vadd.f32 %v32, %v120
  %v122 = vpop.f32.mrb[0].mxu0
  %123 = vdwg.mxu0
  %vm124 = vcmask 39936
  %125 = vst.msk [vmem:[%s3] sm:$0xff] %vm124, %v110
  %126 = vst.msk [vmem:[%s3 + $0x8] sm:$0xff] %vm124, %v113
  %127 = vst.msk [vmem:[%s3 + $0x10] sm:$0xff] %vm124, %v118
  %128 = vst.msk [vmem:[%s3 + $0x18] sm:$0xff] %vm124, %v121
  // Predicated region
  $region14: #{mininet_forward.92} parent=0 // pred_check
    _
  $region15: #{mininet_forward.92} parent=0 // pred_check_branch
    %130 = sbr.rel (0) target = $region17
  $region16: #{mininet_forward.92} parent=0 // pred_region
    _
  $region17: #{mininet_forward.92} parent=0 // pred_fallthru
    _
  // Predicated region
  $region18: #{mininet_forward.92} parent=0 // pred_check
    _
  $region19: #{mininet_forward.92} parent=0 // pred_check_branch
    %132 = sbr.rel (0) target = $region21
  $region20: #{mininet_forward.92} parent=0 // pred_region
    _
  $region21: #{mininet_forward.92} parent=0 // pred_fallthru
    _

// kernel: mininet_forward.93
$region0: #{mininet_forward.93}
  #allocation0 [shape = 'u32[]', space=smem, size = 0x4, offset = 0x4, fixed_abs, tag = 'smem constant byte address 0x4 - core index']
  #allocation1 [shape = 'u32[144,128]{1,0:T(1,128)}', space=vmem, size = 0x12000, scoped, tag = 'internal scratch']
  %s0 = inlined_call_operand.vmem [shape: bf16[32,128], index: 0, kind: input, shape index: {}]
  %s1 = inlined_call_operand.vmem [shape: bf16[128,5], index: 1, kind: input, shape index: {}]
  %s2 = inlined_call_operand.vmem [shape: f32[1,5], index: 2, kind: input, shape index: {}]
  %s3 = inlined_call_operand.vmem [shape: f32[32,5], index: 3, kind: output, shape index: {}]
  %s4 = sld [smem:[#allocation0]]
  $region22: #{mininet_forward.93} parent=0
    _
  %s6 = ssub.s32 1, %s4
  %s7 = scalar_select 0, %s6, %s4
  // Predicated region
  $region2: #{mininet_forward.93} parent=0 // pred_check
    _
  $region3: #{mininet_forward.93} parent=0 // pred_check_branch
    %9 = sbr.rel (0) target = $region5
  $region4: #{mininet_forward.93} parent=0 // pred_region
    _
  $region5: #{mininet_forward.93} parent=0 // pred_fallthru
    _
  // Predicated region
  $region6: #{mininet_forward.93} parent=0 // pred_check
    _
  $region7: #{mininet_forward.93} parent=0 // pred_check_branch
    %11 = sbr.rel (0) target = $region9
  $region8: #{mininet_forward.93} parent=0 // pred_region
    _
  $region9: #{mininet_forward.93} parent=0 // pred_fallthru
    _
  // Predicated region
  $region10: #{mininet_forward.93} parent=0 // pred_check
    _
  $region11: #{mininet_forward.93} parent=0 // pred_check_branch
    %13 = sbr.rel (0) target = $region13
  $region12: #{mininet_forward.93} parent=0 // pred_region
    _
  $region13: #{mininet_forward.93} parent=0 // pred_fallthru
    _
  %v15 = vld [vmem:[%s0] sm:$0xf]
  %v16 = vld [vmem:[%s0 + $0x4] sm:$0xf]
  %v17 = vld [vmem:[%s0 + $0x8] sm:$0xf]
  %v18 = vld [vmem:[%s0 + $0xc] sm:$0xf]
  %v19 = vld [vmem:[%s1] sm:$0xf]
  %v20 = vld [vmem:[%s1 + $0x4] sm:$0xf]
  %v21 = vld [vmem:[%s1 + $0x8] sm:$0xf]
  %v22 = vld [vmem:[%s1 + $0xc] sm:$0xf]
  %v23 = vld [vmem:[%s1 + $0x10] sm:$0xf]
  %v24 = vld [vmem:[%s1 + $0x14] sm:$0xf]
  %v25 = vld [vmem:[%s1 + $0x18] sm:$0xf]
  %v26 = vld [vmem:[%s1 + $0x1c] sm:$0xf]
  %v27 = vld [vmem:[%s1 + $0x20] sm:$0xf]
  %v28 = vld [vmem:[%s1 + $0x24] sm:$0xf]
  %v29 = vld [vmem:[%s1 + $0x28] sm:$0xf]
  %v30 = vld [vmem:[%s1 + $0x2c] sm:$0xf]
  %v31 = vld [vmem:[%s1 + $0x30] sm:$0xf]
  %v32 = vld [vmem:[%s1 + $0x34] sm:$0xf]
  %v33 = vld [vmem:[%s1 + $0x38] sm:$0xf]
  %v34 = vld [vmem:[%s1 + $0x3c] sm:$0xf]
  %v35 = vld [vmem:[%s2] sm:$0x1]
  %v37 = vlaneseq
  %v38 = vshrl.u32 %v37, 7
  %v39 = vsub.s32 0, %v38
  %v40 = vrot.slane %v35, %v39
  %v46 = vunpack.c.l.b16 %v15
  %v47 = vunpack.c.l.b16 %v16
  %v48 = vunpack.c.l.b16 %v17
  %v49 = vunpack.c.l.b16 %v18
  %v50 = vpack.c.b16 %v47, %v46
  %v51 = vpack.c.b16 %v49, %v48
  %v70 = vunpack.c.l.b16 %v19
  %v71 = vunpack.c.l.b16 %v20
  %v72 = vunpack.c.l.b16 %v21
  %v73 = vunpack.c.l.b16 %v22
  %v74 = vunpack.c.l.b16 %v23
  %v75 = vunpack.c.l.b16 %v24
  %v76 = vunpack.c.l.b16 %v25
  %v77 = vunpack.c.l.b16 %v26
  %v78 = vunpack.c.l.b16 %v27
  %v79 = vunpack.c.l.b16 %v28
  %v80 = vunpack.c.l.b16 %v29
  %v81 = vunpack.c.l.b16 %v30
  %v82 = vunpack.c.l.b16 %v31
  %v83 = vunpack.c.l.b16 %v32
  %v84 = vunpack.c.l.b16 %v33
  %v85 = vunpack.c.l.b16 %v34
  %v86 = vpack.c.b16 %v71, %v70
  %v87 = vpack.c.b16 %v73, %v72
  %v88 = vpack.c.b16 %v75, %v74
  %v89 = vpack.c.b16 %v77, %v76
  %v90 = vpack.c.b16 %v79, %v78
  %v91 = vpack.c.b16 %v81, %v80
  %v92 = vpack.c.b16 %v83, %v82
  %v93 = vpack.c.b16 %v85, %v84
  %102 = vmatprep.subr.bf16.mxu0 0
  %103 = vmatpush1.bf16.msra.mxu0 %v86
  %104 = vmatprep.subr.bf16.mxu0 0
  %105 = vmatpush1.bf16.msra.mxu0 %v87
  %106 = vmatprep.subr.bf16.mxu0 0
  %107 = vmatpush1.bf16.msra.mxu0 %v88
  %108 = vmatprep.subr.bf16.mxu0 0
  %109 = vmatpush1.bf16.msra.mxu0 %v89
  %110 = vmatprep.subr.bf16.mxu0 0
  %111 = vmatpush1.bf16.msra.mxu0 %v90
  %112 = vmatprep.subr.bf16.mxu0 0
  %113 = vmatpush1.bf16.msra.mxu0 %v91
  %114 = vmatprep.subr.bf16.mxu0 0
  %115 = vmatpush1.bf16.msra.mxu0 %v92
  %116 = vmatprep.subr.bf16.mxu0 0
  %117 = vmatpush1.bf16.msra.mxu0 %v93
  %118 = vmatprep.subr.bf16.mxu0 0
  %119 = vmatpush1.bf16.msra.mxu0 0
  %120 = vmatprep.subr.bf16.mxu0 0
  %121 = vmatpush1.bf16.msra.mxu0 0
  %122 = vmatprep.subr.bf16.mxu0 0
  %123 = vmatpush1.bf16.msra.mxu0 0
  %124 = vmatprep.subr.bf16.mxu0 0
  %125 = vmatpush1.bf16.msra.mxu0 0
  %126 = vmatprep.subr.bf16.mxu0 0
  %127 = vmatpush1.bf16.msra.mxu0 0
  %128 = vmatprep.subr.bf16.mxu0 0
  %129 = vmatpush1.bf16.msra.mxu0 0
  %130 = vmatprep.subr.bf16.mxu0 0
  %131 = vmatpush1.bf16.msra.mxu0 0
  %132 = vmatprep.subr.bf16.mxu0 0
  %133 = vmatpush1.bf16.msra.mxu0 0
  %134 = vmatprep.mubr.bf16.mxu0 0
  %135 = vmatmul.mubr.bf16.gmra.mrb[0].mxu0 %v50
  %v136 = vpop.f32.mrb[0].mxu0
  %v137 = vadd.f32 %v40, %v136
  %v138 = vpop.f32.mrb[0].mxu0
  %v139 = vpop.f32.mrb[0].mxu0
  %v140 = vadd.f32 %v40, %v139
  %v141 = vpop.f32.mrb[0].mxu0
  %142 = vmatprep.mubr.bf16.mxu0 0
  %143 = vmatmul.mubr.bf16.gmra.mrb[0].mxu0 %v51
  %v144 = vpop.f32.mrb[0].mxu0
  %v145 = vadd.f32 %v40, %v144
  %v146 = vpop.f32.mrb[0].mxu0
  %v147 = vpop.f32.mrb[0].mxu0
  %v148 = vadd.f32 %v40, %v147
  %v149 = vpop.f32.mrb[0].mxu0
  %150 = vdwg.mxu0
  %vm151 = vcmask 39936
  %152 = vst.msk [vmem:[%s3] sm:$0xff] %vm151, %v137
  %153 = vst.msk [vmem:[%s3 + $0x8] sm:$0xff] %vm151, %v140
  %154 = vst.msk [vmem:[%s3 + $0x10] sm:$0xff] %vm151, %v145
  %155 = vst.msk [vmem:[%s3 + $0x18] sm:$0xff] %vm151, %v148
  // Predicated region
  $region14: #{mininet_forward.93} parent=0 // pred_check
    _
  $region15: #{mininet_forward.93} parent=0 // pred_check_branch
    %157 = sbr.rel (0) target = $region17
  $region16: #{mininet_forward.93} parent=0 // pred_region
    _
  $region17: #{mininet_forward.93} parent=0 // pred_fallthru
    _
  // Predicated region
  $region18: #{mininet_forward.93} parent=0 // pred_check
    _
  $region19: #{mininet_forward.93} parent=0 // pred_check_branch
    %159 = sbr.rel (0) target = $region21
  $region20: #{mininet_forward.93} parent=0 // pred_region
    _
  $region21: #{mininet_forward.93} parent=0 // pred_fallthru
    _

// kernel: mininet_forward.95
$region0: #{mininet_forward.95}
  #allocation0 [shape = 'u32[]', space=smem, size = 0x4, offset = 0x4, fixed_abs, tag = 'smem constant byte address 0x4 - core index']
  #allocation1 [shape = 'u32[144,128]{1,0:T(1,128)}', space=vmem, size = 0x12000, scoped, tag = 'internal scratch']
  %s0 = inlined_call_operand.vmem [shape: bf16[32,256], index: 0, kind: input, shape index: {}]
  %s1 = inlined_call_operand.vmem [shape: bf16[256,5], index: 1, kind: input, shape index: {}]
  %s2 = inlined_call_operand.vmem [shape: f32[1,5], index: 2, kind: input, shape index: {}]
  %s3 = inlined_call_operand.vmem [shape: f32[32,5], index: 3, kind: output, shape index: {}]
  %s4 = sld [smem:[#allocation0]]
  $region22: #{mininet_forward.95} parent=0
    _
  %s6 = ssub.s32 1, %s4
  %s7 = scalar_select 0, %s6, %s4
  // Predicated region
  $region2: #{mininet_forward.95} parent=0 // pred_check
    _
  $region3: #{mininet_forward.95} parent=0 // pred_check_branch
    %9 = sbr.rel (0) target = $region5
  $region4: #{mininet_forward.95} parent=0 // pred_region
    _
  $region5: #{mininet_forward.95} parent=0 // pred_fallthru
    _
  // Predicated region
  $region6: #{mininet_forward.95} parent=0 // pred_check
    _
  $region7: #{mininet_forward.95} parent=0 // pred_check_branch
    %11 = sbr.rel (0) target = $region9
  $region8: #{mininet_forward.95} parent=0 // pred_region
    _
  $region9: #{mininet_forward.95} parent=0 // pred_fallthru
    _
  // Predicated region
  $region10: #{mininet_forward.95} parent=0 // pred_check
    _
  $region11: #{mininet_forward.95} parent=0 // pred_check_branch
    %13 = sbr.rel (0) target = $region13
  $region12: #{mininet_forward.95} parent=0 // pred_region
    _
  $region13: #{mininet_forward.95} parent=0 // pred_fallthru
    _
  %v15 = vld [vmem:[%s0] sm:$0xff]
  %v16 = vld [vmem:[%s0 + $0x8] sm:$0xff]
  %v17 = vld [vmem:[%s0 + $0x10] sm:$0xff]
  %v18 = vld [vmem:[%s0 + $0x18] sm:$0xff]
  %v19 = vld [vmem:[%s1] sm:$0xf]
  %v20 = vld [vmem:[%s1 + $0x4] sm:$0xf]
  %v21 = vld [vmem:[%s1 + $0x8] sm:$0xf]
  %v22 = vld [vmem:[%s1 + $0xc] sm:$0xf]
  %v23 = vld [vmem:[%s1 + $0x10] sm:$0xf]
  %v24 = vld [vmem:[%s1 + $0x14] sm:$0xf]
  %v25 = vld [vmem:[%s1 + $0x18] sm:$0xf]
  %v26 = vld [vmem:[%s1 + $0x1c] sm:$0xf]
  %v27 = vld [vmem:[%s1 + $0x20] sm:$0xf]
  %v28 = vld [vmem:[%s1 + $0x24] sm:$0xf]
  %v29 = vld [vmem:[%s1 + $0x28] sm:$0xf]
  %v30 = vld [vmem:[%s1 + $0x2c] sm:$0xf]
  %v31 = vld [vmem:[%s1 + $0x30] sm:$0xf]
  %v32 = vld [vmem:[%s1 + $0x34] sm:$0xf]
  %v33 = vld [vmem:[%s1 + $0x38] sm:$0xf]
  %v34 = vld [vmem:[%s1 + $0x3c] sm:$0xf]
  %v35 = vld [vmem:[%s1 + $0x40] sm:$0xf]
  %v36 = vld [vmem:[%s1 + $0x44] sm:$0xf]
  %v37 = vld [vmem:[%s1 + $0x48] sm:$0xf]
  %v38 = vld [vmem:[%s1 + $0x4c] sm:$0xf]
  %v39 = vld [vmem:[%s1 + $0x50] sm:$0xf]
  %v40 = vld [vmem:[%s1 + $0x54] sm:$0xf]
  %v41 = vld [vmem:[%s1 + $0x58] sm:$0xf]
  %v42 = vld [vmem:[%s1 + $0x5c] sm:$0xf]
  %v43 = vld [vmem:[%s1 + $0x60] sm:$0xf]
  %v44 = vld [vmem:[%s1 + $0x64] sm:$0xf]
  %v45 = vld [vmem:[%s1 + $0x68] sm:$0xf]
  %v46 = vld [vmem:[%s1 + $0x6c] sm:$0xf]
  %v47 = vld [vmem:[%s1 + $0x70] sm:$0xf]
  %v48 = vld [vmem:[%s1 + $0x74] sm:$0xf]
  %v49 = vld [vmem:[%s1 + $0x78] sm:$0xf]
  %v50 = vld [vmem:[%s1 + $0x7c] sm:$0xf]
  %v51 = vld [vmem:[%s2] sm:$0x1]
  %v53 = vlaneseq
  %v54 = vshrl.u32 %v53, 7
  %v55 = vsub.s32 0, %v54
  %v56 = vrot.slane %v51, %v55
  %v62 = vunpack.c.l.b16 %v15
  %v63 = vunpack.c.h.b16 %v15
  %v64 = vunpack.c.l.b16 %v16
  %v65 = vunpack.c.h.b16 %v16
  %v66 = vunpack.c.l.b16 %v17
  %v67 = vunpack.c.h.b16 %v17
  %v68 = vunpack.c.l.b16 %v18
  %v69 = vunpack.c.h.b16 %v18
  %v70 = vpack.c.b16 %v64, %v62
  %v71 = vpack.c.b16 %v65, %v63
  %v72 = vpack.c.b16 %v68, %v66
  %v73 = vpack.c.b16 %v69, %v67
  %v110 = vunpack.c.l.b16 %v19
  %v111 = vunpack.c.l.b16 %v20
  %v112 = vunpack.c.l.b16 %v21
  %v113 = vunpack.c.l.b16 %v22
  %v114 = vunpack.c.l.b16 %v23
  %v115 = vunpack.c.l.b16 %v24
  %v116 = vunpack.c.l.b16 %v25
  %v117 = vunpack.c.l.b16 %v26
  %v118 = vunpack.c.l.b16 %v27
  %v119 = vunpack.c.l.b16 %v28
  %v120 = vunpack.c.l.b16 %v29
  %v121 = vunpack.c.l.b16 %v30
  %v122 = vunpack.c.l.b16 %v31
  %v123 = vunpack.c.l.b16 %v32
  %v124 = vunpack.c.l.b16 %v33
  %v125 = vunpack.c.l.b16 %v34
  %v126 = vunpack.c.l.b16 %v35
  %v127 = vunpack.c.l.b16 %v36
  %v128 = vunpack.c.l.b16 %v37
  %v129 = vunpack.c.l.b16 %v38
  %v130 = vunpack.c.l.b16 %v39
  %v131 = vunpack.c.l.b16 %v40
  %v132 = vunpack.c.l.b16 %v41
  %v133 = vunpack.c.l.b16 %v42
  %v134 = vunpack.c.l.b16 %v43
  %v135 = vunpack.c.l.b16 %v44
  %v136 = vunpack.c.l.b16 %v45
  %v137 = vunpack.c.l.b16 %v46
  %v138 = vunpack.c.l.b16 %v47
  %v139 = vunpack.c.l.b16 %v48
  %v140 = vunpack.c.l.b16 %v49
  %v141 = vunpack.c.l.b16 %v50
  %v142 = vpack.c.b16 %v111, %v110
  %v143 = vpack.c.b16 %v113, %v112
  %v144 = vpack.c.b16 %v115, %v114
  %v145 = vpack.c.b16 %v117, %v116
  %v146 = vpack.c.b16 %v119, %v118
  %v147 = vpack.c.b16 %v121, %v120
  %v148 = vpack.c.b16 %v123, %v122
  %v149 = vpack.c.b16 %v125, %v124
  %v150 = vpack.c.b16 %v127, %v126
  %v151 = vpack.c.b16 %v129, %v128
  %v152 = vpack.c.b16 %v131, %v130
  %v153 = vpack.c.b16 %v133, %v132
  %v154 = vpack.c.b16 %v135, %v134
  %v155 = vpack.c.b16 %v137, %v136
  %v156 = vpack.c.b16 %v139, %v138
  %v157 = vpack.c.b16 %v141, %v140
  %174 = vmatprep.subr.bf16.mxu0 0
  %175 = vmatpush1.bf16.msra.mxu0 %v142
  %176 = vmatprep.subr.bf16.mxu0 0
  %177 = vmatpush1.bf16.msra.mxu0 %v143
  %178 = vmatprep.subr.bf16.mxu0 0
  %179 = vmatpush1.bf16.msra.mxu0 %v144
  %180 = vmatprep.subr.bf16.mxu0 0
  %181 = vmatpush1.bf16.msra.mxu0 %v145
  %182 = vmatprep.subr.bf16.mxu0 0
  %183 = vmatpush1.bf16.msra.mxu0 %v146
  %184 = vmatprep.subr.bf16.mxu0 0
  %185 = vmatpush1.bf16.msra.mxu0 %v147
  %186 = vmatprep.subr.bf16.mxu0 0
  %187 = vmatpush1.bf16.msra.mxu0 %v148
  %188 = vmatprep.subr.bf16.mxu0 0
  %189 = vmatpush1.bf16.msra.mxu0 %v149
  %190 = vmatprep.subr.bf16.mxu0 0
  %191 = vmatpush1.bf16.msra.mxu0 %v150
  %192 = vmatprep.subr.bf16.mxu0 0
  %193 = vmatpush1.bf16.msra.mxu0 %v151
  %194 = vmatprep.subr.bf16.mxu0 0
  %195 = vmatpush1.bf16.msra.mxu0 %v152
  %196 = vmatprep.subr.bf16.mxu0 0
  %197 = vmatpush1.bf16.msra.mxu0 %v153
  %198 = vmatprep.subr.bf16.mxu0 0
  %199 = vmatpush1.bf16.msra.mxu0 %v154
  %200 = vmatprep.subr.bf16.mxu0 0
  %201 = vmatpush1.bf16.msra.mxu0 %v155
  %202 = vmatprep.subr.bf16.mxu0 0
  %203 = vmatpush1.bf16.msra.mxu0 %v156
  %204 = vmatprep.subr.bf16.mxu0 0
  %205 = vmatpush1.bf16.msra.mxu0 %v157
  %206 = vmatprep.mubr.bf16.mxu0 %v71
  %207 = vmatmul.mubr.bf16.gmra.mrb[0].mxu0 %v70
  %v208 = vpop.f32.mrb[0].mxu0
  %v209 = vadd.f32 %v56, %v208
  %v210 = vpop.f32.mrb[0].mxu0
  %v211 = vpop.f32.mrb[0].mxu0
  %v212 = vadd.f32 %v56, %v211
  %v213 = vpop.f32.mrb[0].mxu0
  %214 = vmatprep.mubr.bf16.mxu0 %v73
  %215 = vmatmul.mubr.bf16.gmra.mrb[0].mxu0 %v72
  %v216 = vpop.f32.mrb[0].mxu0
  %v217 = vadd.f32 %v56, %v216
  %v218 = vpop.f32.mrb[0].mxu0
  %v219 = vpop.f32.mrb[0].mxu0
  %v220 = vadd.f32 %v56, %v219
  %v221 = vpop.f32.mrb[0].mxu0
  %222 = vdwg.mxu0
  %vm223 = vcmask 39936
  %224 = vst.msk [vmem:[%s3] sm:$0xff] %vm223, %v209
  %225 = vst.msk [vmem:[%s3 + $0x8] sm:$0xff] %vm223, %v212
  %226 = vst.msk [vmem:[%s3 + $0x10] sm:$0xff] %vm223, %v217
  %227 = vst.msk [vmem:[%s3 + $0x18] sm:$0xff] %vm223, %v220
  // Predicated region
  $region14: #{mininet_forward.95} parent=0 // pred_check
    _
  $region15: #{mininet_forward.95} parent=0 // pred_check_branch
    %229 = sbr.rel (0) target = $region17
  $region16: #{mininet_forward.95} parent=0 // pred_region
    _
  $region17: #{mininet_forward.95} parent=0 // pred_fallthru
    _
  // Predicated region
  $region18: #{mininet_forward.95} parent=0 // pred_check
    _
  $region19: #{mininet_forward.95} parent=0 // pred_check_branch
    %231 = sbr.rel (0) target = $region21
  $region20: #{mininet_forward.95} parent=0 // pred_region
    _
  $region21: #{mininet_forward.95} parent=0 // pred_fallthru
    _

</llo_original>
